<compile_context>
chip_gen: v7x
topology: tpu7x:2x2x1
jax: 0.10.0
libtpu: 0.0.40
codegen_flags: <defaults>
</compile_context>

<pallas_src>
import functools

import jax
import jax.numpy as jnp
from jax.experimental import pallas as pl
from jax.experimental.pallas import tpu as pltpu


# ----------------------------------------------------------------------------
# Pallas kernels
# ----------------------------------------------------------------------------
def _matmul_bias_act_single_kernel(x_ref, w_ref, b_ref, o_ref, *, relu):
    """o = act(x @ w + b); whole K in one step -> no accumulator scratch."""
    x = x_ref[...]
    if x.dtype != w_ref.dtype:
        x = x.astype(w_ref.dtype)
    out = jnp.dot(x, w_ref[...], preferred_element_type=jnp.float32) + b_ref[...]
    if relu:
        out = jnp.maximum(out, 0.0)
    o_ref[...] = out.astype(o_ref.dtype)


def _matmul_bias_act_multi_kernel(x_ref, w_ref, b_ref, o_ref, acc_ref, *, relu):
    """K tiled over grid axis 1; f32 accumulator, bias/ReLU epilogue at last step."""
    k = pl.program_id(1)

    @pl.when(k == 0)
    def _():
        acc_ref[...] = jnp.zeros_like(acc_ref)

    x = x_ref[...]
    if x.dtype != w_ref.dtype:
        x = x.astype(w_ref.dtype)
    acc_ref[...] += jnp.dot(x, w_ref[...], preferred_element_type=jnp.float32)

    @pl.when(k == pl.num_programs(1) - 1)
    def _():
        out = acc_ref[...] + b_ref[...]
        if relu:
            out = jnp.maximum(out, 0.0)
        o_ref[...] = out.astype(o_ref.dtype)


def matmul_bias_act(x, w, b, *, relu, tm=None, tk=None, out_dtype=None):
    """x: (M, K), w: (K, N), b: (N,) -> act(x @ w + b), (M, N).

    Grid = (M // tm ["parallel"], K // tk ["arbitrary"]); f32 accumulation.
    """
    M, K = x.shape
    Kw, N = w.shape
    assert K == Kw, (K, Kw)
    if out_dtype is None:
        out_dtype = x.dtype
    if tm is None or tm >= M:
        tm = M
    if tk is None or tk >= K:
        tk = K
    assert M % tm == 0 and K % tk == 0, (M, tm, K, tk)
    nk = K // tk

    bias = b.reshape(1, N).astype(jnp.float32)

    if nk == 1:
        kernel = functools.partial(_matmul_bias_act_single_kernel, relu=relu)
        scratch = []
    else:
        kernel = functools.partial(_matmul_bias_act_multi_kernel, relu=relu)
        scratch = [pltpu.VMEM((tm, N), jnp.float32)]

    return pl.pallas_call(
        kernel,
        out_shape=jax.ShapeDtypeStruct((M, N), out_dtype),
        grid_spec=pltpu.PrefetchScalarGridSpec(
            num_scalar_prefetch=0,
            grid=(M // tm, nk),
            in_specs=[
                pl.BlockSpec((tm, tk), lambda i, k: (i, k)),
                pl.BlockSpec((tk, N), lambda i, k: (k, 0)),
                pl.BlockSpec((1, N), lambda i, k: (0, 0)),
            ],
            out_specs=pl.BlockSpec((tm, N), lambda i, k: (i, 0)),
            scratch_shapes=scratch,
        ),
        compiler_params=pltpu.CompilerParams(
            dimension_semantics=("parallel", "arbitrary"),
        ),
    )(x, w, bias)


def _fc2_logsoftmax_kernel(x_ref, w_ref, b_ref, o_ref):
    """o = log_softmax(x @ w + b, axis=-1); all epilogue math in f32."""
    x = x_ref[...]
    if x.dtype != w_ref.dtype:
        x = x.astype(w_ref.dtype)
    logits = jnp.dot(x, w_ref[...], preferred_element_type=jnp.float32) + b_ref[...]
    m = jnp.max(logits, axis=-1, keepdims=True)
    s = logits - m
    lse = jnp.log(jnp.sum(jnp.exp(s), axis=-1, keepdims=True))
    o_ref[...] = (s - lse).astype(o_ref.dtype)


def fc2_log_softmax(x, w, b):
    M, K = x.shape
    Kw, N = w.shape
    assert K == Kw
    return pl.pallas_call(
        _fc2_logsoftmax_kernel,
        out_shape=jax.ShapeDtypeStruct((M, N), jnp.float32),
    )(x, w, b.reshape(1, N).astype(jnp.float32))


# ----------------------------------------------------------------------------
# Plain-JAX glue: im2col (layout transform only; matmul happens in Pallas)
# ----------------------------------------------------------------------------
def im2col(x, kh, kw):
    """x: (N, H, W, C) NHWC -> ((N*OH*OW, KH*KW*C), (N, OH, OW)).

    Patch feature index = (i*KW + j)*C + c, matching pack_conv_weight below.
    """
    N, H, W, C = x.shape
    OH, OW = H - kh + 1, W - kw + 1
    cols = []
    for i in range(kh):
        for j in range(kw):
            cols.append(x[:, i : i + OH, j : j + OW, :])
    patches = jnp.concatenate(cols, axis=-1)  # (N, OH, OW, KH*KW*C)
    return patches.reshape(N * OH * OW, kh * kw * C), (N, OH, OW)


def pack_conv_weight(w):
    """PyTorch conv weight (Cout, Cin, KH, KW) -> matmul weight (KH*KW*Cin, Cout)."""
    cout, cin, kh, kw = w.shape
    return jnp.transpose(w, (2, 3, 1, 0)).reshape(kh * kw * cin, cout)


# ----------------------------------------------------------------------------
# Parameter init (deterministic, synthetic — matches the module's shapes)
# ----------------------------------------------------------------------------
def init_params(key):
    ks = jax.random.split(key, 8)

    def uniform(k, shape, fan_in):
        bound = 1.0 / jnp.sqrt(jnp.float32(fan_in))
        return jax.random.uniform(
            k, shape, dtype=jnp.float32, minval=-bound, maxval=bound
        )

    w1 = uniform(ks[0], (34, 1, 5, 5), 1 * 5 * 5)
    b1 = uniform(ks[1], (34,), 1 * 5 * 5)
    w2 = uniform(ks[2], (64, 34, 5, 5), 34 * 5 * 5)
    b2 = uniform(ks[3], (64,), 34 * 5 * 5)
    wf1 = uniform(ks[4], (512, 20 * 20 * 64), 20 * 20 * 64)
    bf1 = uniform(ks[5], (512,), 20 * 20 * 64)
    wf2 = uniform(ks[6], (10, 512), 512)
    bf2 = uniform(ks[7], (10,), 512)

    # Fold PyTorch's NCHW flatten (feature = c*400 + h*20 + w) into fc1's
    # weight so the runtime can flatten the NHWC conv2 matmul output directly
    # (feature = (h*20 + w)*64 + c).
    wf1m = (
        wf1.T.reshape(64, 20, 20, 512)      # [c, h, w, out]
        .transpose(1, 2, 0, 3)              # [h, w, c, out]
        .reshape(20 * 20 * 64, 512)
    )

    return {
        "w1m": pack_conv_weight(w1).astype(jnp.bfloat16), "b1": b1,
        "w2m": pack_conv_weight(w2).astype(jnp.bfloat16), "b2": b2,
        "wf1m": wf1m.astype(jnp.bfloat16), "bf1": bf1,     # (25600, 512) bf16
        "wf2m": wf2.T, "bf2": bf2,                         # (512, 10) f32 (tiny)
    }


# ----------------------------------------------------------------------------
# Forward pass
# ----------------------------------------------------------------------------
@jax.jit
def net_forward(x_nchw, params):
    # layout: input NCHW (PyTorch convention); internal conv activations NHWC,
    # streamed as bf16 (MXU-native); all accumulation / epilogues in f32.
    x = jnp.transpose(x_nchw, (0, 2, 3, 1)).astype(jnp.bfloat16)  # (N, 28, 28, 1)

    # conv1 + ReLU  (28x28 -> 24x24, 34 channels)
    p, (N, OH, OW) = im2col(x, 5, 5)                        # (N*576, 25) bf16
    y = matmul_bias_act(p, params["w1m"], params["b1"], relu=True,
                        tm=576, out_dtype=jnp.bfloat16)
    x = y.reshape(N, OH, OW, 34)

    # conv2 + ReLU  (24x24 -> 20x20, 64 channels)
    # TODO(synk): im2col expansion is still done in XLA; an in-kernel 5x5 tap
    # accumulation would remove its HBM round-trip at larger batch sizes.
    p, (N, OH, OW) = im2col(x, 5, 5)                        # (N*400, 850) bf16
    y = matmul_bias_act(p, params["w2m"], params["b2"], relu=True,
                        tm=400, out_dtype=jnp.bfloat16)

    # PyTorch's view(-1, 20*20*64) flattens NCHW; that permutation was folded
    # into wf1m at init, so a plain contiguous reshape of the NHWC matmul
    # output is exactly equivalent here.
    flat = y.reshape(N, 20 * 20 * 64)                       # (N, 25600) bf16

    # TODO(synk): Dropout(p=0.3) is identity in eval mode; training-mode
    # stochastic masking (pltpu.prng_*) not implemented here.

    # fc1 + ReLU: K = 25600 tiled by 3200 (bf16 weight tile 3.3 MB, x2 buffers
    # -> safe inside v5e's 16 MiB default scoped VMEM); f32 accumulation.
    h = matmul_bias_act(flat, params["wf1m"], params["bf1"], relu=True,
                        tk=3200, out_dtype=jnp.float32)

    # fc2 + log_softmax fused into a single Pallas kernel.
    return fc2_log_softmax(h, params["wf2m"], params["bf2"])


# ----------------------------------------------------------------------------
if __name__ == "__main__":
    key = jax.random.PRNGKey(0)
    pkey, xkey = jax.random.split(key)

    params = init_params(pkey)
    # MNIST-like input implied by the module: (batch, 1, 28, 28)
    x = jax.random.normal(xkey, (2, 1, 28, 28), dtype=jnp.float32)

    out = net_forward(x, params)
    jax.block_until_ready(out)

    assert out.shape == (2, 10), out.shape
    # log_softmax rows must (approximately) exponentiate-sum to 1
    assert jnp.allclose(jnp.sum(jnp.exp(out), axis=1), 1.0, atol=1e-4)

    print("KERNEL_OK")
</pallas_src>

<mosaic_0001>
module attributes {stable_mosaic.version = 11 : i64} {
  func.func @_matmul_bias_act_single_kernel(%arg0: i32, %arg1: i32, %arg2: memref<576x25xbf16, #tpu.memory_space<vmem>>, %arg3: memref<25x34xbf16, #tpu.memory_space<vmem>>, %arg4: memref<1x34xf32, #tpu.memory_space<vmem>>, %arg5: memref<576x34xbf16, #tpu.memory_space<vmem>>) attributes {dimension_semantics = [#tpu.dimension_semantics<parallel>, #tpu.dimension_semantics<arbitrary>], iteration_bounds = array<i64: 2, 1>, scalar_prefetch = 0 : i64, scratch_operands = 0 : i64, tpu.core_type = #tpu.core_type<tc>, window_params = [{transform_indices = @transform_0, window_bounds = array<i64: 576, 25>}, {transform_indices = @transform_1, window_bounds = array<i64: 25, 34>}, {pipeline_mode = #tpu.pipeline_mode<synchronous>, transform_indices = @transform_2, window_bounds = array<i64: 1, 34>}, {transform_indices = @transform_3, window_bounds = array<i64: 576, 34>}]} {
    %c0 = arith.constant 0 : index
    %c0_0 = arith.constant 0 : index
    %0 = vector.load %arg2[%c0, %c0_0] : memref<576x25xbf16, #tpu.memory_space<vmem>>, vector<576x25xbf16>
    %c0_1 = arith.constant 0 : index
    %c0_2 = arith.constant 0 : index
    %1 = vector.load %arg3[%c0_1, %c0_2] : memref<25x34xbf16, #tpu.memory_space<vmem>>, vector<25x34xbf16>
    %cst = arith.constant dense<0.000000e+00> : vector<576x34xf32>
    %2 = tpu.matmul %0, %1, %cst {dimension_numbers = #tpu.dot_dimension_numbers<[1], [0], [0], [1], [0, 0, 1, 1], [], []>} : vector<576x25xbf16>, vector<25x34xbf16>, vector<576x34xf32> -> vector<576x34xf32>
    %c0_3 = arith.constant 0 : index
    %c0_4 = arith.constant 0 : index
    %3 = vector.load %arg4[%c0_3, %c0_4] : memref<1x34xf32, #tpu.memory_space<vmem>>, vector<1x34xf32>
    %4 = vector.broadcast %3 : vector<1x34xf32> to vector<576x34xf32>
    %5 = arith.addf %2, %4 : vector<576x34xf32>
    %cst_5 = arith.constant 0.000000e+00 : f32
    %6 = vector.broadcast %cst_5 : f32 to vector<576x34xf32>
    %7 = arith.maximumf %5, %6 : vector<576x34xf32>
    %8 = arith.truncf %7 : vector<576x34xf32> to vector<576x34xbf16>
    %c0_6 = arith.constant 0 : index
    %c0_7 = arith.constant 0 : index
    %9 = vector.load %arg5[%c0_6, %c0_7] : memref<576x34xbf16, #tpu.memory_space<vmem>>, vector<576x34xbf16>
    tpu.vector_store %arg5[%c0_6, %c0_7], %8 {strides = array<i32>} : memref<576x34xbf16, #tpu.memory_space<vmem>>, vector<576x34xbf16>,
    return
  }
  func.func @transform_0(%arg0: i32, %arg1: i32) -> (i32, i32) {
    %c0_i32 = arith.constant 0 : i32
    return %arg0, %arg1 : i32, i32
  }
  func.func @transform_1(%arg0: i32, %arg1: i32) -> (i32, i32) {
    %c0_i32 = arith.constant 0 : i32
    %c0_i32_0 = arith.constant 0 : i32
    return %arg1, %c0_i32 : i32, i32
  }
  func.func @transform_2(%arg0: i32, %arg1: i32) -> (i32, i32) {
    %c0_i32 = arith.constant 0 : i32
    %c0_i32_0 = arith.constant 0 : i32
    %c0_i32_1 = arith.constant 0 : i32
    return %c0_i32, %c0_i32_0 : i32, i32
  }
  func.func @transform_3(%arg0: i32, %arg1: i32) -> (i32, i32) {
    %c0_i32 = arith.constant 0 : i32
    %c0_i32_0 = arith.constant 0 : i32
    return %arg0, %c0_i32 : i32, i32
  }
}

module attributes {stable_mosaic.version = 11 : i64} {
  func.func @_matmul_bias_act_single_kernel(%arg0: i32, %arg1: i32, %arg2: memref<400x850xbf16, #tpu.memory_space<vmem>>, %arg3: memref<850x64xbf16, #tpu.memory_space<vmem>>, %arg4: memref<1x64xf32, #tpu.memory_space<vmem>>, %arg5: memref<400x64xbf16, #tpu.memory_space<vmem>>) attributes {dimension_semantics = [#tpu.dimension_semantics<parallel>, #tpu.dimension_semantics<arbitrary>], iteration_bounds = array<i64: 2, 1>, scalar_prefetch = 0 : i64, scratch_operands = 0 : i64, tpu.core_type = #tpu.core_type<tc>, window_params = [{transform_indices = @transform_0, window_bounds = array<i64: 400, 850>}, {transform_indices = @transform_1, window_bounds = array<i64: 850, 64>}, {pipeline_mode = #tpu.pipeline_mode<synchronous>, transform_indices = @transform_2, window_bounds = array<i64: 1, 64>}, {transform_indices = @transform_3, window_bounds = array<i64: 400, 64>}]} {
    %c0 = arith.constant 0 : index
    %c0_0 = arith.constant 0 : index
    %0 = vector.load %arg2[%c0, %c0_0] : memref<400x850xbf16, #tpu.memory_space<vmem>>, vector<400x850xbf16>
    %c0_1 = arith.constant 0 : index
    %c0_2 = arith.constant 0 : index
    %1 = vector.load %arg3[%c0_1, %c0_2] : memref<850x64xbf16, #tpu.memory_space<vmem>>, vector<850x64xbf16>
    %cst = arith.constant dense<0.000000e+00> : vector<400x64xf32>
    %2 = tpu.matmul %0, %1, %cst {dimension_numbers = #tpu.dot_dimension_numbers<[1], [0], [0], [1], [0, 0, 1, 1], [], []>} : vector<400x850xbf16>, vector<850x64xbf16>, vector<400x64xf32> -> vector<400x64xf32>
    %c0_3 = arith.constant 0 : index
    %c0_4 = arith.constant 0 : index
    %3 = vector.load %arg4[%c0_3, %c0_4] : memref<1x64xf32, #tpu.memory_space<vmem>>, vector<1x64xf32>
    %4 = vector.broadcast %3 : vector<1x64xf32> to vector<400x64xf32>
    %5 = arith.addf %2, %4 : vector<400x64xf32>
    %cst_5 = arith.constant 0.000000e+00 : f32
    %6 = vector.broadcast %cst_5 : f32 to vector<400x64xf32>
    %7 = arith.maximumf %5, %6 : vector<400x64xf32>
    %8 = arith.truncf %7 : vector<400x64xf32> to vector<400x64xbf16>
    %c0_6 = arith.constant 0 : index
    %c0_7 = arith.constant 0 : index
    %9 = vector.load %arg5[%c0_6, %c0_7] : memref<400x64xbf16, #tpu.memory_space<vmem>>, vector<400x64xbf16>
    tpu.vector_store %arg5[%c0_6, %c0_7], %8 {strides = array<i32>} : memref<400x64xbf16, #tpu.memory_space<vmem>>, vector<400x64xbf16>,
    return
  }
  func.func @transform_0(%arg0: i32, %arg1: i32) -> (i32, i32) {
    %c0_i32 = arith.constant 0 : i32
    return %arg0, %arg1 : i32, i32
  }
  func.func @transform_1(%arg0: i32, %arg1: i32) -> (i32, i32) {
    %c0_i32 = arith.constant 0 : i32
    %c0_i32_0 = arith.constant 0 : i32
    return %arg1, %c0_i32 : i32, i32
  }
  func.func @transform_2(%arg0: i32, %arg1: i32) -> (i32, i32) {
    %c0_i32 = arith.constant 0 : i32
    %c0_i32_0 = arith.constant 0 : i32
    %c0_i32_1 = arith.constant 0 : i32
    return %c0_i32, %c0_i32_0 : i32, i32
  }
  func.func @transform_3(%arg0: i32, %arg1: i32) -> (i32, i32) {
    %c0_i32 = arith.constant 0 : i32
    %c0_i32_0 = arith.constant 0 : i32
    return %arg0, %c0_i32 : i32, i32
  }
}

module attributes {stable_mosaic.version = 11 : i64} {
  func.func @_matmul_bias_act_multi_kernel(%arg0: i32, %arg1: i32, %arg2: memref<2x3200xbf16, #tpu.memory_space<vmem>>, %arg3: memref<3200x512xbf16, #tpu.memory_space<vmem>>, %arg4: memref<1x512xf32, #tpu.memory_space<vmem>>, %arg5: memref<2x512xf32, #tpu.memory_space<vmem>>, %arg6: memref<2x512xf32, #tpu.memory_space<vmem>>) attributes {dimension_semantics = [#tpu.dimension_semantics<parallel>, #tpu.dimension_semantics<arbitrary>], iteration_bounds = array<i64: 1, 8>, scalar_prefetch = 0 : i64, scratch_operands = 1 : i64, tpu.core_type = #tpu.core_type<tc>, window_params = [{transform_indices = @transform_0, window_bounds = array<i64: 2, 3200>}, {transform_indices = @transform_1, window_bounds = array<i64: 3200, 512>}, {pipeline_mode = #tpu.pipeline_mode<synchronous>, transform_indices = @transform_2, window_bounds = array<i64: 1, 512>}, {transform_indices = @transform_3, window_bounds = array<i64: 2, 512>}]} {
    %c0_i32 = arith.constant 0 : i32
    %0 = arith.cmpi eq, %arg1, %c0_i32 : i32
    %1 = arith.extui %0 : i1 to i32
    %c0_i32_0 = arith.constant 0 : i32
    %2 = arith.cmpi ne, %1, %c0_i32_0 : i32
    scf.if %2 {
      %cst_9 = arith.constant 0.000000e+00 : f32
      %12 = vector.broadcast %cst_9 : f32 to vector<2x512xf32>
      %c0_10 = arith.constant 0 : index
      %c0_11 = arith.constant 0 : index
      %13 = vector.load %arg6[%c0_10, %c0_11] : memref<2x512xf32, #tpu.memory_space<vmem>>, vector<2x512xf32>
      tpu.vector_store %arg6[%c0_10, %c0_11], %12 {strides = array<i32>} : memref<2x512xf32, #tpu.memory_space<vmem>>, vector<2x512xf32>,
    } else {
    }
    %c0 = arith.constant 0 : index
    %c0_1 = arith.constant 0 : index
    %3 = vector.load %arg2[%c0, %c0_1] : memref<2x3200xbf16, #tpu.memory_space<vmem>>, vector<2x3200xbf16>
    %c0_2 = arith.constant 0 : index
    %c0_3 = arith.constant 0 : index
    %4 = vector.load %arg6[%c0_2, %c0_3] : memref<2x512xf32, #tpu.memory_space<vmem>>, vector<2x512xf32>
    %c0_4 = arith.constant 0 : index
    %c0_5 = arith.constant 0 : index
    %5 = vector.load %arg3[%c0_4, %c0_5] : memref<3200x512xbf16, #tpu.memory_space<vmem>>, vector<3200x512xbf16>
    %cst = arith.constant dense<0.000000e+00> : vector<2x512xf32>
    %6 = tpu.matmul %3, %5, %cst {dimension_numbers = #tpu.dot_dimension_numbers<[1], [0], [0], [1], [0, 0, 1, 1], [], []>} : vector<2x3200xbf16>, vector<3200x512xbf16>, vector<2x512xf32> -> vector<2x512xf32>
    %7 = arith.addf %4, %6 : vector<2x512xf32>
    %c0_6 = arith.constant 0 : index
    %c0_7 = arith.constant 0 : index
    %8 = vector.load %arg6[%c0_6, %c0_7] : memref<2x512xf32, #tpu.memory_space<vmem>>, vector<2x512xf32>
    tpu.vector_store %arg6[%c0_6, %c0_7], %7 {strides = array<i32>} : memref<2x512xf32, #tpu.memory_space<vmem>>, vector<2x512xf32>,
    %c7_i32 = arith.constant 7 : i32
    %9 = arith.cmpi eq, %arg1, %c7_i32 : i32
    %10 = arith.extui %9 : i1 to i32
    %c0_i32_8 = arith.constant 0 : i32
    %11 = arith.cmpi ne, %10, %c0_i32_8 : i32
    scf.if %11 {
      %c0_9 = arith.constant 0 : index
      %c0_10 = arith.constant 0 : index
      %12 = vector.load %arg6[%c0_9, %c0_10] : memref<2x512xf32, #tpu.memory_space<vmem>>, vector<2x512xf32>
      %c0_11 = arith.constant 0 : index
      %c0_12 = arith.constant 0 : index
      %13 = vector.load %arg4[%c0_11, %c0_12] : memref<1x512xf32, #tpu.memory_space<vmem>>, vector<1x512xf32>
      %14 = vector.broadcast %13 : vector<1x512xf32> to vector<2x512xf32>
      %15 = arith.addf %12, %14 : vector<2x512xf32>
      %cst_13 = arith.constant 0.000000e+00 : f32
      %16 = vector.broadcast %cst_13 : f32 to vector<2x512xf32>
      %17 = arith.maximumf %15, %16 : vector<2x512xf32>
      %c0_14 = arith.constant 0 : index
      %c0_15 = arith.constant 0 : index
      %18 = vector.load %arg5[%c0_14, %c0_15] : memref<2x512xf32, #tpu.memory_space<vmem>>, vector<2x512xf32>
      tpu.vector_store %arg5[%c0_14, %c0_15], %17 {strides = array<i32>} : memref<2x512xf32, #tpu.memory_space<vmem>>, vector<2x512xf32>,
    } else {
    }
    return
  }
  func.func @transform_0(%arg0: i32, %arg1: i32) -> (i32, i32) {
    %c0_i32 = arith.constant 0 : i32
    return %arg0, %arg1 : i32, i32
  }
  func.func @transform_1(%arg0: i32, %arg1: i32) -> (i32, i32) {
    %c0_i32 = arith.constant 0 : i32
    %c0_i32_0 = arith.constant 0 : i32
    return %arg1, %c0_i32 : i32, i32
  }
  func.func @transform_2(%arg0: i32, %arg1: i32) -> (i32, i32) {
    %c0_i32 = arith.constant 0 : i32
    %c0_i32_0 = arith.constant 0 : i32
    %c0_i32_1 = arith.constant 0 : i32
    return %c0_i32, %c0_i32_0 : i32, i32
  }
  func.func @transform_3(%arg0: i32, %arg1: i32) -> (i32, i32) {
    %c0_i32 = arith.constant 0 : i32
    %c0_i32_0 = arith.constant 0 : i32
    return %arg0, %c0_i32 : i32, i32
  }
}

module attributes {stable_mosaic.version = 11 : i64} {
  func.func @_fc2_logsoftmax_kernel(%arg0: memref<2x512xf32, #tpu.memory_space<vmem>>, %arg1: memref<512x10xf32, #tpu.memory_space<vmem>>, %arg2: memref<1x10xf32, #tpu.memory_space<vmem>>, %arg3: memref<2x10xf32, #tpu.memory_space<vmem>>) attributes {dimension_semantics = [], scalar_prefetch = 0 : i64, scratch_operands = 0 : i64, tpu.core_type = #tpu.core_type<tc>} {
    %c0 = arith.constant 0 : index
    %c0_0 = arith.constant 0 : index
    %0 = vector.load %arg0[%c0, %c0_0] : memref<2x512xf32, #tpu.memory_space<vmem>>, vector<2x512xf32>
    %c0_1 = arith.constant 0 : index
    %c0_2 = arith.constant 0 : index
    %1 = vector.load %arg1[%c0_1, %c0_2] : memref<512x10xf32, #tpu.memory_space<vmem>>, vector<512x10xf32>
    %cst = arith.constant dense<0.000000e+00> : vector<2x10xf32>
    %2 = tpu.matmul %0, %1, %cst {dimension_numbers = #tpu.dot_dimension_numbers<[1], [0], [0], [1], [0, 0, 1, 1], [], []>} : vector<2x512xf32>, vector<512x10xf32>, vector<2x10xf32> -> vector<2x10xf32>
    %c0_3 = arith.constant 0 : index
    %c0_4 = arith.constant 0 : index
    %3 = vector.load %arg2[%c0_3, %c0_4] : memref<1x10xf32, #tpu.memory_space<vmem>>, vector<1x10xf32>
    %4 = vector.broadcast %3 : vector<1x10xf32> to vector<2x10xf32>
    %5 = arith.addf %2, %4 : vector<2x10xf32>
    %cst_5 = arith.constant dense<0xFF800000> : vector<2xf32>
    %6 = vector.multi_reduction <maximumf>, %5, %cst_5 [1] : vector<2x10xf32> to vector<2xf32>
    %7 = vector.shape_cast %6 : vector<2xf32> to vector<2x1xf32>
    %8 = vector.broadcast %7 : vector<2x1xf32> to vector<2x10xf32>
    %9 = arith.subf %5, %8 : vector<2x10xf32>
    %10 = math.exp %9 : vector<2x10xf32>
    %cst_6 = arith.constant dense<0.000000e+00> : vector<2xf32>
    %11 = vector.multi_reduction <add>, %10, %cst_6 [1] : vector<2x10xf32> to vector<2xf32>
    %12 = vector.shape_cast %11 : vector<2xf32> to vector<2x1xf32>
    %13 = math.log %12 : vector<2x1xf32>
    %14 = vector.broadcast %13 : vector<2x1xf32> to vector<2x10xf32>
    %15 = arith.subf %9, %14 : vector<2x10xf32>
    %c0_7 = arith.constant 0 : index
    %c0_8 = arith.constant 0 : index
    %16 = vector.load %arg3[%c0_7, %c0_8] : memref<2x10xf32, #tpu.memory_space<vmem>>, vector<2x10xf32>
    tpu.vector_store %arg3[%c0_7, %c0_8], %15 {strides = array<i32>} : memref<2x10xf32, #tpu.memory_space<vmem>>, vector<2x10xf32>,
    return
  }
}

</mosaic_0001>

<llo_original>
// kernel: net_forward.4
$region0: #{net_forward.4}
  #allocation0 [shape = 'u32[]', space=smem, size = 0x4, offset = 0x4, fixed_abs, tag = 'smem constant byte address 0x4 - core index']
  #allocation1 [shape = 'u32[144,128]{1,0:T(1,128)}', space=vmem, size = 0x12000, scoped, tag = 'internal scratch']
  %s0 = inlined_call_operand.vmem [shape: bf16[1152,25], index: 0, kind: input, shape index: {}]
  %s1 = inlined_call_operand.hbm [shape: bf16[25,34], index: 1, kind: input, shape index: {}]
  %s2 = inlined_call_operand.hbm [shape: f32[1,34], index: 2, kind: input, shape index: {}]
  %s3 = inlined_call_operand.vmem [shape: bf16[1152,34], index: 3, kind: output, shape index: {}]
  %s4 = sld [smem:[#allocation0]]
  $region53: #{net_forward.4} parent=0
    _
  %s6 = ssub.s32 1, %s4
  %s7 = scalar_select 0, %s6, %s4
  $region1: #{net_forward.4} parent=0
    #allocation2 [shape = 'u8[8192]{0}', space=vmem, size = 0x2000, scoped, tag = 'input window, operand 1, single buffered']
    #allocation3 [shape = 's32[2]{0}', space=sflag, size = 0x8, scoped, tag = 'scoped memory for net_forward.4']
    #allocation4 [shape = 'u8[512]{0}', space=vmem, size = 0x400, scoped, tag = 'input window, operand 2, single buffered']
    #allocation5 [shape = 's32[1]{0}', space=sflag, size = 0x4, scoped, tag = 'scoped memory for net_forward.4']
    %8 = vsyncpa [#allocation3], 0
    %9 = vsyncpa [#allocation5], 0
    loop: start=0, step=1, limit=4
    $region2: #{net_forward.4} parent=1 // loop_pre_header
      _
    $region3: #{net_forward.4} parent=1 // loop_header
      %s11 = sphi 0, %s15
      %p12 = scmp.ge.s32.totalorder %s11, 4
      %s18 = sphi 0, %s30
      %s19 = sphi 0, %s26
      %s20 = sphi 0, %s18
      %s21 = sphi 0, %s19
      %s22 = sphi 0, %s20
      %s23 = sphi 0, %s21
      %s35 = sphi 0, %s37
      %s38 = sphi 0, %s35
      %s39 = sphi 0, %s38
      %s55 = sphi 0, %s39
      %s61 = sphi 0, %s63
      %s64 = sphi 0, %s61
      %s65 = sphi 0, %s64
      %s81 = sphi 0, %s65
      %s85 = sphi 0, %s85
      %s87 = sphi 0, %s85
      %s88 = sphi 0, %s87
      %s102 = sphi 0, %s88
      %s108 = sphi 0, %s110
      %s111 = sphi 0, %s108
      %s112 = sphi 0, %s111
      %s128 = sphi 0, %s112
    $region4: #{net_forward.4} parent=1 // loop_header_branch
      %14 = sbr.rel (%p12) target = $region8
    $region5: #{net_forward.4} parent=1 // loop_body
      %s16 = ssub.s32 %s11, 1
      %s17 = ssub.s32 %s11, 2
      %s24 = sadd.s32 1, %s19
      %p25 = scmp.ge.s32.totalorder %s24, 1
      %s26 = scalar_select %p25, 0, %s24
      %s27 = sadd.s32 1, %s18
      %s28 = scalar_select %p25, %s27, %s18
      %p29 = scmp.ge.s32.totalorder %s28, 2
      %s30 = scalar_select %p29, 0, %s28
      %s31 = ssub.s32 %s18, %s30
      %s32 = ssub.s32 %s19, %s26
      %s33 = sor.u32 %s31, %s32
      %p34 = scmp.eq.s32.totalorder %s33, 0
      %s36 = sadd.s32 %s35, 1
      %s37 = scalar_select %p34, %s35, %s36
      %p40 = pneg %p34
      %p41 = scmp.eq.s32.totalorder %s11, 1
      %p42 = por %p40, %p41
      %p43 = scmp.ne.s32.totalorder %s35, %s38
      %p44 = scmp.eq.s32.totalorder %s11, 0
      %p45 = por %p43, %p44
      %p46 = scmp.ne.s32.totalorder %s35, %s38
      %p47 = scmp.eq.s32.totalorder %s16, 1
      %p48 = por %p46, %p47
      %p49 = scmp.ne.s32.totalorder %s38, %s39
      %p50 = scmp.eq.s32.totalorder %s16, 0
      %p51 = por %p49, %p50
      %p52 = scmp.ne.s32.totalorder %s38, %s39
      %p53 = scmp.eq.s32.totalorder %s17, 1
      %p54 = por %p52, %p53
      %p56 = scmp.ne.s32.totalorder %s39, %s55
      %p57 = scmp.eq.s32.totalorder %s17, 0
      %p58 = por %p56, %p57
      %s59 = ssub.s32 %s19, %s26
      %p60 = scmp.eq.s32.totalorder %s59, 0
      %s62 = sadd.s32 %s61, 1
      %s63 = scalar_select %p60, %s61, %s62
      %p66 = pneg %p60
      %p67 = scmp.eq.s32.totalorder %s11, 1
      %p68 = por %p66, %p67
      %p69 = scmp.ne.s32.totalorder %s61, %s64
      %p70 = scmp.eq.s32.totalorder %s11, 0
      %p71 = por %p69, %p70
      %p72 = scmp.ne.s32.totalorder %s61, %s64
      %p73 = scmp.eq.s32.totalorder %s16, 1
      %p74 = por %p72, %p73
      %p75 = scmp.ne.s32.totalorder %s64, %s65
      %p76 = scmp.eq.s32.totalorder %s16, 0
      %p77 = por %p75, %p76
      %p78 = scmp.ne.s32.totalorder %s64, %s65
      %p79 = scmp.eq.s32.totalorder %s17, 1
      %p80 = por %p78, %p79
      %p82 = scmp.ne.s32.totalorder %s65, %s81
      %p83 = scmp.eq.s32.totalorder %s17, 0
      %p84 = por %p82, %p83
      %s86 = sadd.s32 %s85, 1
      %p89 = scmp.eq.s32.totalorder %s11, 1
      %p90 = scmp.ne.s32.totalorder %s85, %s87
      %p91 = scmp.eq.s32.totalorder %s11, 0
      %p92 = por %p90, %p91
      %p93 = scmp.ne.s32.totalorder %s85, %s87
      %p94 = scmp.eq.s32.totalorder %s16, 1
      %p95 = por %p93, %p94
      %p96 = scmp.ne.s32.totalorder %s87, %s88
      %p97 = scmp.eq.s32.totalorder %s16, 0
      %p98 = por %p96, %p97
      %p99 = scmp.ne.s32.totalorder %s87, %s88
      %p100 = scmp.eq.s32.totalorder %s17, 1
      %p101 = por %p99, %p100
      %p103 = scmp.ne.s32.totalorder %s88, %s102
      %p104 = scmp.eq.s32.totalorder %s17, 0
      %p105 = por %p103, %p104
      %s106 = ssub.s32 %s18, %s30
      %p107 = scmp.eq.s32.totalorder %s106, 0
      %s109 = sadd.s32 %s108, 1
      %s110 = scalar_select %p107, %s108, %s109
      %p113 = pneg %p107
      %p114 = scmp.eq.s32.totalorder %s11, 1
      %p115 = por %p113, %p114
      %p116 = scmp.ne.s32.totalorder %s108, %s111
      %p117 = scmp.eq.s32.totalorder %s11, 0
      %p118 = por %p116, %p117
      %p119 = scmp.ne.s32.totalorder %s108, %s111
      %p120 = scmp.eq.s32.totalorder %s16, 1
      %p121 = por %p119, %p120
      %p122 = scmp.ne.s32.totalorder %s111, %s112
      %p123 = scmp.eq.s32.totalorder %s16, 0
      %p124 = por %p122, %p123
      %p125 = scmp.ne.s32.totalorder %s111, %s112
      %p126 = scmp.eq.s32.totalorder %s17, 1
      %p127 = por %p125, %p126
      %p129 = scmp.ne.s32.totalorder %s112, %s128
      %p130 = scmp.eq.s32.totalorder %s17, 0
      %p131 = por %p129, %p130
      %p132 = scmp.le.s32.totalorder 1, %s11
      %p133 = scmp.lt.s32.totalorder %s11, 3
      %p134 = pnand %p132, %p133
      %p135 = pneg %p134
      // Predicated region
      $region9: #{net_forward.4} parent=5 // pred_check
        _
      $region10: #{net_forward.4} parent=5 // pred_check_branch
        %137 = sbr.rel (%p134) target = $region12
      $region11: #{net_forward.4} parent=5 // pred_region
        %s138 = ssub.s32 %s11, 1
        // Predicated region
        $region13: #{net_forward.4} parent=11 // pred_check
          %p139 = pneg %p77
        $region14: #{net_forward.4} parent=11 // pred_check_branch
          %141 = sbr.rel (%p139) target = $region16
        $region15: #{net_forward.4} parent=11 // pred_region
          %s142 = smul.u32 4, %s21
          %s144 = ssub.s32 256, 256
          %145 = vsyncadd [#allocation3], %s144
          %s146 = smul.addr %s142, 64
          %s147 = scalar_lea.hbm %s1, %s146
          %s148 = sshll.u32 [#allocation2], 4
          %s149 = int_to_ptr.vmem [resolvable:$true] %s148
          %154 = dma.hbm_to_vmem [thread:$0]  %s147, 256, %s149, [#allocation3], 64, 64, 4
        $region16: #{net_forward.4} parent=11 // pred_fallthru
          _
        // Predicated region
        $region17: #{net_forward.4} parent=11 // pred_check
          %p155 = pneg %p98
        $region18: #{net_forward.4} parent=11 // pred_check_branch
          %157 = sbr.rel (%p155) target = $region20
        $region19: #{net_forward.4} parent=11 // pred_region
          %s159 = ssub.s32 16, 16
          %160 = vsyncadd [#allocation5], %s159
          %s162 = sshll.u32 [#allocation4], 4
          %s163 = int_to_ptr.vmem [resolvable:$true] %s162
          %165 = dma.hbm_to_vmem [thread:$0]  %s2, 16, %s163, [#allocation5]
        $region20: #{net_forward.4} parent=11 // pred_fallthru
          _
      $region12: #{net_forward.4} parent=5 // pred_fallthru
        _
      %p166 = scmp.lt.s32.totalorder %s11, 2
      // Predicated region
      $region21: #{net_forward.4} parent=5 // pred_check
        %p167 = pneg %p166
      $region22: #{net_forward.4} parent=5 // pred_check_branch
        %169 = sbr.rel (%p167) target = $region24
      $region23: #{net_forward.4} parent=5 // pred_region
        // Predicated region
        $region25: #{net_forward.4} parent=23 // pred_check
          %p170 = pneg %p45
        $region26: #{net_forward.4} parent=23 // pred_check_branch
          %172 = sbr.rel (%p170) target = $region28
        $region27: #{net_forward.4} parent=23 // pred_region
          %s173 = smul.u32 72, %s18
          %p174 = scmp.lt.s32.totalorder %s173, 143
          %s175 = scalar_select %p174, %s173, 143
          %p176 = scmp.lt.s32.totalorder %s19, 0
          %s177 = scalar_select %p176, %s19, 0
          %s178 = sadd.s32 %s177, %s175
          %s179 = smul.addr %s178, 4
          %s180 = scalar_lea.vmem %s0, %s179
          %s181 = smul.u32 72, %s18
        $region28: #{net_forward.4} parent=23 // pred_fallthru
          _
      $region24: #{net_forward.4} parent=5 // pred_fallthru
        _
      %p182 = scmp.le.s32.totalorder 1, %s11
      %p183 = scmp.lt.s32.totalorder %s11, 3
      %p184 = pnand %p182, %p183
      %p185 = pneg %p184
      // Predicated region
      $region29: #{net_forward.4} parent=5 // pred_check
        _
      $region30: #{net_forward.4} parent=5 // pred_check_branch
        %187 = sbr.rel (%p184) target = $region32
      $region31: #{net_forward.4} parent=5 // pred_region
        %s188 = ssub.s32 %s11, 1
        // Predicated region
        $region33: #{net_forward.4} parent=31 // pred_check
          %p189 = pneg %p77
        $region34: #{net_forward.4} parent=31 // pred_check_branch
          %191 = sbr.rel (%p189) target = $region36
        $region35: #{net_forward.4} parent=31 // pred_region
          %192 = dma.done [#allocation3], 256
        $region36: #{net_forward.4} parent=31 // pred_fallthru
          _
        // Predicated region
        $region37: #{net_forward.4} parent=31 // pred_check
          %p193 = pneg %p98
        $region38: #{net_forward.4} parent=31 // pred_check_branch
          %195 = sbr.rel (%p193) target = $region40
        $region39: #{net_forward.4} parent=31 // pred_region
          %196 = dma.done [#allocation5], 16
        $region40: #{net_forward.4} parent=31 // pred_fallthru
          _
        %s197 = smul.u32 72, %s20
        %p198 = scmp.lt.s32.totalorder %s197, 143
        %s199 = scalar_select %p198, %s197, 143
        %p200 = scmp.lt.s32.totalorder %s21, 0
        %s201 = scalar_select %p200, %s21, 0
        %s202 = sadd.s32 %s201, %s199
        %s203 = smul.addr %s202, 4
        %s204 = scalar_lea.vmem %s0, %s203
        %p205 = pneg %p51
        %p206 = pneg %p48
        %p207 = pneg %p77
        %p208 = pneg %p74
        %p209 = pneg %p98
        %p210 = pneg %p95
        %p211 = pneg %p124
        %p212 = pneg %p121
        %s213 = smul.u32 72, %s20
        %p214 = scmp.lt.s32.totalorder %s213, 143
        %s215 = scalar_select %p214, %s213, 143
        %s216 = smul.addr %s215, 4
        %s217 = scalar_lea.vmem %s3, %s216
        %s218 = smul.u32 72, %s20
        %p219 = scmp.lt.s32.totalorder %s218, 143
        %s220 = scalar_select %p219, %s218, 143
        %p221 = scmp.lt.s32.totalorder %s21, 0
        %s222 = scalar_select %p221, %s21, 0
        %s223 = sadd.s32 %s222, %s220
        %s224 = smul.addr %s223, 4
        %s225 = scalar_lea.vmem %s0, %s224
        %s226 = smul.u32 72, %s20
        %s227 = smul.u32 4, %s21
        %s228 = smul.u32 72, %s20
        %p229 = scmp.lt.s32.totalorder %s228, 143
        %s230 = scalar_select %p229, %s228, 143
        %s231 = smul.addr %s230, 4
        %s232 = scalar_lea.vmem %s3, %s231
        %s233 = smul.u32 72, %s20
        %v235 = vld [vmem:[%s225] sm:$0xf]
        %v236 = vld [vmem:[%s225 + $0x4] sm:$0xf]
        %v237 = vld [vmem:[%s225 + $0x8] sm:$0xf]
        %v238 = vld [vmem:[%s225 + $0xc] sm:$0xf]
        %v239 = vld [vmem:[%s225 + $0x10] sm:$0xf]
        %v240 = vld [vmem:[%s225 + $0x14] sm:$0xf]
        %v241 = vld [vmem:[%s225 + $0x18] sm:$0xf]
        %v242 = vld [vmem:[%s225 + $0x1c] sm:$0xf]
        %v243 = vld [vmem:[%s225 + $0x20] sm:$0xf]
        %v244 = vld [vmem:[%s225 + $0x24] sm:$0xf]
        %v245 = vld [vmem:[%s225 + $0x28] sm:$0xf]
        %v246 = vld [vmem:[%s225 + $0x2c] sm:$0xf]
        %v247 = vld [vmem:[%s225 + $0x30] sm:$0xf]
        %v248 = vld [vmem:[%s225 + $0x34] sm:$0xf]
        %v249 = vld [vmem:[%s225 + $0x38] sm:$0xf]
        %v250 = vld [vmem:[%s225 + $0x3c] sm:$0xf]
        %v251 = vld [vmem:[%s225 + $0x40] sm:$0xf]
        %v252 = vld [vmem:[%s225 + $0x44] sm:$0xf]
        %v253 = vld [vmem:[%s225 + $0x48] sm:$0xf]
        %v254 = vld [vmem:[%s225 + $0x4c] sm:$0xf]
        %v255 = vld [vmem:[%s225 + $0x50] sm:$0xf]
        %v256 = vld [vmem:[%s225 + $0x54] sm:$0xf]
        %v257 = vld [vmem:[%s225 + $0x58] sm:$0xf]
        %v258 = vld [vmem:[%s225 + $0x5c] sm:$0xf]
        %v259 = vld [vmem:[%s225 + $0x60] sm:$0xf]
        %v260 = vld [vmem:[%s225 + $0x64] sm:$0xf]
        %v261 = vld [vmem:[%s225 + $0x68] sm:$0xf]
        %v262 = vld [vmem:[%s225 + $0x6c] sm:$0xf]
        %v263 = vld [vmem:[%s225 + $0x70] sm:$0xf]
        %v264 = vld [vmem:[%s225 + $0x74] sm:$0xf]
        %v265 = vld [vmem:[%s225 + $0x78] sm:$0xf]
        %v266 = vld [vmem:[%s225 + $0x7c] sm:$0xf]
        %v267 = vld [vmem:[%s225 + $0x80] sm:$0xf]
        %v268 = vld [vmem:[%s225 + $0x84] sm:$0xf]
        %v269 = vld [vmem:[%s225 + $0x88] sm:$0xf]
        %v270 = vld [vmem:[%s225 + $0x8c] sm:$0xf]
        %v271 = vld [vmem:[%s225 + $0x90] sm:$0xf]
        %v272 = vld [vmem:[%s225 + $0x94] sm:$0xf]
        %v273 = vld [vmem:[%s225 + $0x98] sm:$0xf]
        %v274 = vld [vmem:[%s225 + $0x9c] sm:$0xf]
        %v275 = vld [vmem:[%s225 + $0xa0] sm:$0xf]
        %v276 = vld [vmem:[%s225 + $0xa4] sm:$0xf]
        %v277 = vld [vmem:[%s225 + $0xa8] sm:$0xf]
        %v278 = vld [vmem:[%s225 + $0xac] sm:$0xf]
        %v279 = vld [vmem:[%s225 + $0xb0] sm:$0xf]
        %v280 = vld [vmem:[%s225 + $0xb4] sm:$0xf]
        %v281 = vld [vmem:[%s225 + $0xb8] sm:$0xf]
        %v282 = vld [vmem:[%s225 + $0xbc] sm:$0xf]
        %v283 = vld [vmem:[%s225 + $0xc0] sm:$0xf]
        %v284 = vld [vmem:[%s225 + $0xc4] sm:$0xf]
        %v285 = vld [vmem:[%s225 + $0xc8] sm:$0xf]
        %v286 = vld [vmem:[%s225 + $0xcc] sm:$0xf]
        %v287 = vld [vmem:[%s225 + $0xd0] sm:$0xf]
        %v288 = vld [vmem:[%s225 + $0xd4] sm:$0xf]
        %v289 = vld [vmem:[%s225 + $0xd8] sm:$0xf]
        %v290 = vld [vmem:[%s225 + $0xdc] sm:$0xf]
        %v291 = vld [vmem:[%s225 + $0xe0] sm:$0xf]
        %v292 = vld [vmem:[%s225 + $0xe4] sm:$0xf]
        %v293 = vld [vmem:[%s225 + $0xe8] sm:$0xf]
        %v294 = vld [vmem:[%s225 + $0xec] sm:$0xf]
        %v295 = vld [vmem:[%s225 + $0xf0] sm:$0xf]
        %v296 = vld [vmem:[%s225 + $0xf4] sm:$0xf]
        %v297 = vld [vmem:[%s225 + $0xf8] sm:$0xf]
        %v298 = vld [vmem:[%s225 + $0xfc] sm:$0xf]
        %v299 = vld [vmem:[%s225 + $0x100] sm:$0xf]
        %v300 = vld [vmem:[%s225 + $0x104] sm:$0xf]
        %v301 = vld [vmem:[%s225 + $0x108] sm:$0xf]
        %v302 = vld [vmem:[%s225 + $0x10c] sm:$0xf]
        %v303 = vld [vmem:[%s225 + $0x110] sm:$0xf]
        %v304 = vld [vmem:[%s225 + $0x114] sm:$0xf]
        %v305 = vld [vmem:[%s225 + $0x118] sm:$0xf]
        %v306 = vld [vmem:[%s225 + $0x11c] sm:$0xf]
        %v307 = vld [vmem:[#allocation2] sm:$0xf]
        %v308 = vld [vmem:[#allocation2 + $0x4] sm:$0xf]
        %v309 = vld [vmem:[#allocation2 + $0x8] sm:$0xf]
        %v310 = vld [vmem:[#allocation2 + $0xc] sm:$0x1]
        %v311 = vld [vmem:[#allocation4] sm:$0x1]
        %v313 = vlaneseq
        %v314 = vshrl.u32 %v313, 7
        %v315 = vsub.s32 0, %v314
        %v316 = vrot.slane %v311, %v315
        %v390 = vunpack.c.l.b16 %v235
        %v391 = vunpack.c.l.b16 %v236
        %v392 = vunpack.c.l.b16 %v237
        %v393 = vunpack.c.l.b16 %v238
        %v394 = vunpack.c.l.b16 %v239
        %v395 = vunpack.c.l.b16 %v240
        %v396 = vunpack.c.l.b16 %v241
        %v397 = vunpack.c.l.b16 %v242
        %v398 = vunpack.c.l.b16 %v243
        %v399 = vunpack.c.l.b16 %v244
        %v400 = vunpack.c.l.b16 %v245
        %v401 = vunpack.c.l.b16 %v246
        %v402 = vunpack.c.l.b16 %v247
        %v403 = vunpack.c.l.b16 %v248
        %v404 = vunpack.c.l.b16 %v249
        %v405 = vunpack.c.l.b16 %v250
        %v406 = vunpack.c.l.b16 %v251
        %v407 = vunpack.c.l.b16 %v252
        %v408 = vunpack.c.l.b16 %v253
        %v409 = vunpack.c.l.b16 %v254
        %v410 = vunpack.c.l.b16 %v255
        %v411 = vunpack.c.l.b16 %v256
        %v412 = vunpack.c.l.b16 %v257
        %v413 = vunpack.c.l.b16 %v258
        %v414 = vunpack.c.l.b16 %v259
        %v415 = vunpack.c.l.b16 %v260
        %v416 = vunpack.c.l.b16 %v261
        %v417 = vunpack.c.l.b16 %v262
        %v418 = vunpack.c.l.b16 %v263
        %v419 = vunpack.c.l.b16 %v264
        %v420 = vunpack.c.l.b16 %v265
        %v421 = vunpack.c.l.b16 %v266
        %v422 = vunpack.c.l.b16 %v267
        %v423 = vunpack.c.l.b16 %v268
        %v424 = vunpack.c.l.b16 %v269
        %v425 = vunpack.c.l.b16 %v270
        %v426 = vunpack.c.l.b16 %v271
        %v427 = vunpack.c.l.b16 %v272
        %v428 = vunpack.c.l.b16 %v273
        %v429 = vunpack.c.l.b16 %v274
        %v430 = vunpack.c.l.b16 %v275
        %v431 = vunpack.c.l.b16 %v276
        %v432 = vunpack.c.l.b16 %v277
        %v433 = vunpack.c.l.b16 %v278
        %v434 = vunpack.c.l.b16 %v279
        %v435 = vunpack.c.l.b16 %v280
        %v436 = vunpack.c.l.b16 %v281
        %v437 = vunpack.c.l.b16 %v282
        %v438 = vunpack.c.l.b16 %v283
        %v439 = vunpack.c.l.b16 %v284
        %v440 = vunpack.c.l.b16 %v285
        %v441 = vunpack.c.l.b16 %v286
        %v442 = vunpack.c.l.b16 %v287
        %v443 = vunpack.c.l.b16 %v288
        %v444 = vunpack.c.l.b16 %v289
        %v445 = vunpack.c.l.b16 %v290
        %v446 = vunpack.c.l.b16 %v291
        %v447 = vunpack.c.l.b16 %v292
        %v448 = vunpack.c.l.b16 %v293
        %v449 = vunpack.c.l.b16 %v294
        %v450 = vunpack.c.l.b16 %v295
        %v451 = vunpack.c.l.b16 %v296
        %v452 = vunpack.c.l.b16 %v297
        %v453 = vunpack.c.l.b16 %v298
        %v454 = vunpack.c.l.b16 %v299
        %v455 = vunpack.c.l.b16 %v300
        %v456 = vunpack.c.l.b16 %v301
        %v457 = vunpack.c.l.b16 %v302
        %v458 = vunpack.c.l.b16 %v303
        %v459 = vunpack.c.l.b16 %v304
        %v460 = vunpack.c.l.b16 %v305
        %v461 = vunpack.c.l.b16 %v306
        %v462 = vpack.c.b16 %v391, %v390
        %v463 = vpack.c.b16 %v393, %v392
        %v464 = vpack.c.b16 %v395, %v394
        %v465 = vpack.c.b16 %v397, %v396
        %v466 = vpack.c.b16 %v399, %v398
        %v467 = vpack.c.b16 %v401, %v400
        %v468 = vpack.c.b16 %v403, %v402
        %v469 = vpack.c.b16 %v405, %v404
        %v470 = vpack.c.b16 %v407, %v406
        %v471 = vpack.c.b16 %v409, %v408
        %v472 = vpack.c.b16 %v411, %v410
        %v473 = vpack.c.b16 %v413, %v412
        %v474 = vpack.c.b16 %v415, %v414
        %v475 = vpack.c.b16 %v417, %v416
        %v476 = vpack.c.b16 %v419, %v418
        %v477 = vpack.c.b16 %v421, %v420
        %v478 = vpack.c.b16 %v423, %v422
        %v479 = vpack.c.b16 %v425, %v424
        %v480 = vpack.c.b16 %v427, %v426
        %v481 = vpack.c.b16 %v429, %v428
        %v482 = vpack.c.b16 %v431, %v430
        %v483 = vpack.c.b16 %v433, %v432
        %v484 = vpack.c.b16 %v435, %v434
        %v485 = vpack.c.b16 %v437, %v436
        %v486 = vpack.c.b16 %v439, %v438
        %v487 = vpack.c.b16 %v441, %v440
        %v488 = vpack.c.b16 %v443, %v442
        %v489 = vpack.c.b16 %v445, %v444
        %v490 = vpack.c.b16 %v447, %v446
        %v491 = vpack.c.b16 %v449, %v448
        %v492 = vpack.c.b16 %v451, %v450
        %v493 = vpack.c.b16 %v453, %v452
        %v494 = vpack.c.b16 %v455, %v454
        %v495 = vpack.c.b16 %v457, %v456
        %v496 = vpack.c.b16 %v459, %v458
        %v497 = vpack.c.b16 %v461, %v460
        %v502 = vunpack.c.l.b16 %v307
        %v503 = vunpack.c.l.b16 %v308
        %v504 = vunpack.c.l.b16 %v309
        %v505 = vunpack.c.l.b16 %v310
        %v506 = vpack.c.b16 %v503, %v502
        %v507 = vpack.c.b16 %v505, %v504
        %vm509 = vcmask 203776
        %v511 = vsel %vm509, %v462, 0
        %v514 = vsel %vm509, %v463, 0
        %v517 = vsel %vm509, %v464, 0
        %v520 = vsel %vm509, %v465, 0
        %v523 = vsel %vm509, %v466, 0
        %v526 = vsel %vm509, %v467, 0
        %v529 = vsel %vm509, %v468, 0
        %v532 = vsel %vm509, %v469, 0
        %v535 = vsel %vm509, %v470, 0
        %v538 = vsel %vm509, %v471, 0
        %v541 = vsel %vm509, %v472, 0
        %v544 = vsel %vm509, %v473, 0
        %v547 = vsel %vm509, %v474, 0
        %v550 = vsel %vm509, %v475, 0
        %v553 = vsel %vm509, %v476, 0
        %v556 = vsel %vm509, %v477, 0
        %v559 = vsel %vm509, %v478, 0
        %v562 = vsel %vm509, %v479, 0
        %v565 = vsel %vm509, %v480, 0
        %v568 = vsel %vm509, %v481, 0
        %v571 = vsel %vm509, %v482, 0
        %v574 = vsel %vm509, %v483, 0
        %v577 = vsel %vm509, %v484, 0
        %v580 = vsel %vm509, %v485, 0
        %v583 = vsel %vm509, %v486, 0
        %v586 = vsel %vm509, %v487, 0
        %v589 = vsel %vm509, %v488, 0
        %v592 = vsel %vm509, %v489, 0
        %v595 = vsel %vm509, %v490, 0
        %v598 = vsel %vm509, %v491, 0
        %v601 = vsel %vm509, %v492, 0
        %v604 = vsel %vm509, %v493, 0
        %v607 = vsel %vm509, %v494, 0
        %v610 = vsel %vm509, %v495, 0
        %v613 = vsel %vm509, %v496, 0
        %v616 = vsel %vm509, %v497, 0
        %vm618 = vcmask 1043456
        %vm619 = vcmask 1044480
        %v620 = vsel %vm618, 4294967295, 65535
        %v621 = vsel %vm619, %v620, 0
        %v623 = vand.u32 %v507, %v621
        %625 = vmatprep.subr.bf16.mxu0 0
        %626 = vmatpush1.bf16.msra.mxu0 %v506
        %627 = vmatprep.subr.bf16.mxu0 0
        %628 = vmatpush1.bf16.msra.mxu0 %v623
        %629 = vmatprep.subr.bf16.mxu0 0
        %630 = vmatpush1.bf16.msra.mxu0 0
        %631 = vmatprep.subr.bf16.mxu0 0
        %632 = vmatpush1.bf16.msra.mxu0 0
        %633 = vmatprep.subr.bf16.mxu0 0
        %634 = vmatpush1.bf16.msra.mxu0 0
        %635 = vmatprep.subr.bf16.mxu0 0
        %636 = vmatpush1.bf16.msra.mxu0 0
        %637 = vmatprep.subr.bf16.mxu0 0
        %638 = vmatpush1.bf16.msra.mxu0 0
        %639 = vmatprep.subr.bf16.mxu0 0
        %640 = vmatpush1.bf16.msra.mxu0 0
        %641 = vmatprep.subr.bf16.mxu0 0
        %642 = vmatpush1.bf16.msra.mxu0 0
        %643 = vmatprep.subr.bf16.mxu0 0
        %644 = vmatpush1.bf16.msra.mxu0 0
        %645 = vmatprep.subr.bf16.mxu0 0
        %646 = vmatpush1.bf16.msra.mxu0 0
        %647 = vmatprep.subr.bf16.mxu0 0
        %648 = vmatpush1.bf16.msra.mxu0 0
        %649 = vmatprep.subr.bf16.mxu0 0
        %650 = vmatpush1.bf16.msra.mxu0 0
        %651 = vmatprep.subr.bf16.mxu0 0
        %652 = vmatpush1.bf16.msra.mxu0 0
        %653 = vmatprep.subr.bf16.mxu0 0
        %654 = vmatpush1.bf16.msra.mxu0 0
        %655 = vmatprep.subr.bf16.mxu0 0
        %656 = vmatpush1.bf16.msra.mxu0 0
        %657 = vmatprep.mubr.bf16.mxu0 0
        %658 = vmatmul.mubr.bf16.gmra.mrb[0].mxu0 %v511
        %v659 = vpop.f32.mrb[0].mxu0
        %v660 = vadd.f32 %v316, %v659
        %v661 = vpop.f32.mrb[0].mxu0
        %v662 = vpop.f32.mrb[0].mxu0
        %v663 = vadd.f32 %v316, %v662
        %v664 = vpop.f32.mrb[0].mxu0
        %665 = vmatprep.mubr.bf16.mxu0 0
        %666 = vmatmul.mubr.bf16.gmra.mrb[0].mxu0 %v514
        %v667 = vpop.f32.mrb[0].mxu0
        %v668 = vadd.f32 %v316, %v667
        %v669 = vpop.f32.mrb[0].mxu0
        %v670 = vpop.f32.mrb[0].mxu0
        %v671 = vadd.f32 %v316, %v670
        %v672 = vpop.f32.mrb[0].mxu0
        %673 = vmatprep.mubr.bf16.mxu0 0
        %674 = vmatmul.mubr.bf16.gmra.mrb[0].mxu0 %v517
        %v675 = vpop.f32.mrb[0].mxu0
        %v676 = vadd.f32 %v316, %v675
        %v677 = vpop.f32.mrb[0].mxu0
        %v678 = vpop.f32.mrb[0].mxu0
        %v679 = vadd.f32 %v316, %v678
        %v680 = vpop.f32.mrb[0].mxu0
        %681 = vmatprep.mubr.bf16.mxu0 0
        %682 = vmatmul.mubr.bf16.gmra.mrb[0].mxu0 %v520
        %v683 = vpop.f32.mrb[0].mxu0
        %v684 = vadd.f32 %v316, %v683
        %v685 = vpop.f32.mrb[0].mxu0
        %v686 = vpop.f32.mrb[0].mxu0
        %v687 = vadd.f32 %v316, %v686
        %v688 = vpop.f32.mrb[0].mxu0
        %689 = vmatprep.mubr.bf16.mxu0 0
        %690 = vmatmul.mubr.bf16.gmra.mrb[0].mxu0 %v523
        %v691 = vpop.f32.mrb[0].mxu0
        %v692 = vadd.f32 %v316, %v691
        %v693 = vpop.f32.mrb[0].mxu0
        %v694 = vpop.f32.mrb[0].mxu0
        %v695 = vadd.f32 %v316, %v694
        %v696 = vpop.f32.mrb[0].mxu0
        %697 = vmatprep.mubr.bf16.mxu0 0
        %698 = vmatmul.mubr.bf16.gmra.mrb[0].mxu0 %v526
        %v699 = vpop.f32.mrb[0].mxu0
        %v700 = vadd.f32 %v316, %v699
        %v701 = vpop.f32.mrb[0].mxu0
        %v702 = vpop.f32.mrb[0].mxu0
        %v703 = vadd.f32 %v316, %v702
        %v704 = vpop.f32.mrb[0].mxu0
        %705 = vmatprep.mubr.bf16.mxu0 0
        %706 = vmatmul.mubr.bf16.gmra.mrb[0].mxu0 %v529
        %v707 = vpop.f32.mrb[0].mxu0
        %v708 = vadd.f32 %v316, %v707
        %v709 = vpop.f32.mrb[0].mxu0
        %v710 = vpop.f32.mrb[0].mxu0
        %v711 = vadd.f32 %v316, %v710
        %v712 = vpop.f32.mrb[0].mxu0
        %713 = vmatprep.mubr.bf16.mxu0 0
        %714 = vmatmul.mubr.bf16.gmra.mrb[0].mxu0 %v532
        %v715 = vpop.f32.mrb[0].mxu0
        %v716 = vadd.f32 %v316, %v715
        %v717 = vpop.f32.mrb[0].mxu0
        %v718 = vpop.f32.mrb[0].mxu0
        %v719 = vadd.f32 %v316, %v718
        %v720 = vpop.f32.mrb[0].mxu0
        %721 = vmatprep.mubr.bf16.mxu0 0
        %722 = vmatmul.mubr.bf16.gmra.mrb[0].mxu0 %v535
        %v723 = vpop.f32.mrb[0].mxu0
        %v724 = vadd.f32 %v316, %v723
        %v725 = vpop.f32.mrb[0].mxu0
        %v726 = vpop.f32.mrb[0].mxu0
        %v727 = vadd.f32 %v316, %v726
        %v728 = vpop.f32.mrb[0].mxu0
        %729 = vmatprep.mubr.bf16.mxu0 0
        %730 = vmatmul.mubr.bf16.gmra.mrb[0].mxu0 %v538
        %v731 = vpop.f32.mrb[0].mxu0
        %v732 = vadd.f32 %v316, %v731
        %v733 = vpop.f32.mrb[0].mxu0
        %v734 = vpop.f32.mrb[0].mxu0
        %v735 = vadd.f32 %v316, %v734
        %v736 = vpop.f32.mrb[0].mxu0
        %737 = vmatprep.mubr.bf16.mxu0 0
        %738 = vmatmul.mubr.bf16.gmra.mrb[0].mxu0 %v541
        %v739 = vpop.f32.mrb[0].mxu0
        %v740 = vadd.f32 %v316, %v739
        %v741 = vpop.f32.mrb[0].mxu0
        %v742 = vpop.f32.mrb[0].mxu0
        %v743 = vadd.f32 %v316, %v742
        %v744 = vpop.f32.mrb[0].mxu0
        %745 = vmatprep.mubr.bf16.mxu0 0
        %746 = vmatmul.mubr.bf16.gmra.mrb[0].mxu0 %v544
        %v747 = vpop.f32.mrb[0].mxu0
        %v748 = vadd.f32 %v316, %v747
        %v749 = vpop.f32.mrb[0].mxu0
        %v750 = vpop.f32.mrb[0].mxu0
        %v751 = vadd.f32 %v316, %v750
        %v752 = vpop.f32.mrb[0].mxu0
        %753 = vmatprep.mubr.bf16.mxu0 0
        %754 = vmatmul.mubr.bf16.gmra.mrb[0].mxu0 %v547
        %v755 = vpop.f32.mrb[0].mxu0
        %v756 = vadd.f32 %v316, %v755
        %v757 = vpop.f32.mrb[0].mxu0
        %v758 = vpop.f32.mrb[0].mxu0
        %v759 = vadd.f32 %v316, %v758
        %v760 = vpop.f32.mrb[0].mxu0
        %761 = vmatprep.mubr.bf16.mxu0 0
        %762 = vmatmul.mubr.bf16.gmra.mrb[0].mxu0 %v550
        %v763 = vpop.f32.mrb[0].mxu0
        %v764 = vadd.f32 %v316, %v763
        %v765 = vpop.f32.mrb[0].mxu0
        %v766 = vpop.f32.mrb[0].mxu0
        %v767 = vadd.f32 %v316, %v766
        %v768 = vpop.f32.mrb[0].mxu0
        %769 = vmatprep.mubr.bf16.mxu0 0
        %770 = vmatmul.mubr.bf16.gmra.mrb[0].mxu0 %v553
        %v771 = vpop.f32.mrb[0].mxu0
        %v772 = vadd.f32 %v316, %v771
        %v773 = vpop.f32.mrb[0].mxu0
        %v774 = vpop.f32.mrb[0].mxu0
        %v775 = vadd.f32 %v316, %v774
        %v776 = vpop.f32.mrb[0].mxu0
        %777 = vmatprep.mubr.bf16.mxu0 0
        %778 = vmatmul.mubr.bf16.gmra.mrb[0].mxu0 %v556
        %v779 = vpop.f32.mrb[0].mxu0
        %v780 = vadd.f32 %v316, %v779
        %v781 = vpop.f32.mrb[0].mxu0
        %v782 = vpop.f32.mrb[0].mxu0
        %v783 = vadd.f32 %v316, %v782
        %v784 = vpop.f32.mrb[0].mxu0
        %785 = vmatprep.mubr.bf16.mxu0 0
        %786 = vmatmul.mubr.bf16.gmra.mrb[0].mxu0 %v559
        %v787 = vpop.f32.mrb[0].mxu0
        %v788 = vadd.f32 %v316, %v787
        %v789 = vpop.f32.mrb[0].mxu0
        %v790 = vpop.f32.mrb[0].mxu0
        %v791 = vadd.f32 %v316, %v790
        %v792 = vpop.f32.mrb[0].mxu0
        %793 = vmatprep.mubr.bf16.mxu0 0
        %794 = vmatmul.mubr.bf16.gmra.mrb[0].mxu0 %v562
        %v795 = vpop.f32.mrb[0].mxu0
        %v796 = vadd.f32 %v316, %v795
        %v797 = vpop.f32.mrb[0].mxu0
        %v798 = vpop.f32.mrb[0].mxu0
        %v799 = vadd.f32 %v316, %v798
        %v800 = vpop.f32.mrb[0].mxu0
        %801 = vmatprep.mubr.bf16.mxu0 0
        %802 = vmatmul.mubr.bf16.gmra.mrb[0].mxu0 %v565
        %v803 = vpop.f32.mrb[0].mxu0
        %v804 = vadd.f32 %v316, %v803
        %v805 = vpop.f32.mrb[0].mxu0
        %v806 = vpop.f32.mrb[0].mxu0
        %v807 = vadd.f32 %v316, %v806
        %v808 = vpop.f32.mrb[0].mxu0
        %809 = vmatprep.mubr.bf16.mxu0 0
        %810 = vmatmul.mubr.bf16.gmra.mrb[0].mxu0 %v568
        %v811 = vpop.f32.mrb[0].mxu0
        %v812 = vadd.f32 %v316, %v811
        %v813 = vpop.f32.mrb[0].mxu0
        %v814 = vpop.f32.mrb[0].mxu0
        %v815 = vadd.f32 %v316, %v814
        %v816 = vpop.f32.mrb[0].mxu0
        %817 = vmatprep.mubr.bf16.mxu0 0
        %818 = vmatmul.mubr.bf16.gmra.mrb[0].mxu0 %v571
        %v819 = vpop.f32.mrb[0].mxu0
        %v820 = vadd.f32 %v316, %v819
        %v821 = vpop.f32.mrb[0].mxu0
        %v822 = vpop.f32.mrb[0].mxu0
        %v823 = vadd.f32 %v316, %v822
        %v824 = vpop.f32.mrb[0].mxu0
        %825 = vmatprep.mubr.bf16.mxu0 0
        %826 = vmatmul.mubr.bf16.gmra.mrb[0].mxu0 %v574
        %v827 = vpop.f32.mrb[0].mxu0
        %v828 = vadd.f32 %v316, %v827
        %v829 = vpop.f32.mrb[0].mxu0
        %v830 = vpop.f32.mrb[0].mxu0
        %v831 = vadd.f32 %v316, %v830
        %v832 = vpop.f32.mrb[0].mxu0
        %833 = vmatprep.mubr.bf16.mxu0 0
        %834 = vmatmul.mubr.bf16.gmra.mrb[0].mxu0 %v577
        %v835 = vpop.f32.mrb[0].mxu0
        %v836 = vadd.f32 %v316, %v835
        %v837 = vpop.f32.mrb[0].mxu0
        %v838 = vpop.f32.mrb[0].mxu0
        %v839 = vadd.f32 %v316, %v838
        %v840 = vpop.f32.mrb[0].mxu0
        %841 = vmatprep.mubr.bf16.mxu0 0
        %842 = vmatmul.mubr.bf16.gmra.mrb[0].mxu0 %v580
        %v843 = vpop.f32.mrb[0].mxu0
        %v844 = vadd.f32 %v316, %v843
        %v845 = vpop.f32.mrb[0].mxu0
        %v846 = vpop.f32.mrb[0].mxu0
        %v847 = vadd.f32 %v316, %v846
        %v848 = vpop.f32.mrb[0].mxu0
        %849 = vmatprep.mubr.bf16.mxu0 0
        %850 = vmatmul.mubr.bf16.gmra.mrb[0].mxu0 %v583
        %v851 = vpop.f32.mrb[0].mxu0
        %v852 = vadd.f32 %v316, %v851
        %v853 = vpop.f32.mrb[0].mxu0
        %v854 = vpop.f32.mrb[0].mxu0
        %v855 = vadd.f32 %v316, %v854
        %v856 = vpop.f32.mrb[0].mxu0
        %857 = vmatprep.mubr.bf16.mxu0 0
        %858 = vmatmul.mubr.bf16.gmra.mrb[0].mxu0 %v586
        %v859 = vpop.f32.mrb[0].mxu0
        %v860 = vadd.f32 %v316, %v859
        %v861 = vpop.f32.mrb[0].mxu0
        %v862 = vpop.f32.mrb[0].mxu0
        %v863 = vadd.f32 %v316, %v862
        %v864 = vpop.f32.mrb[0].mxu0
        %865 = vmatprep.mubr.bf16.mxu0 0
        %866 = vmatmul.mubr.bf16.gmra.mrb[0].mxu0 %v589
        %v867 = vpop.f32.mrb[0].mxu0
        %v868 = vadd.f32 %v316, %v867
        %v869 = vpop.f32.mrb[0].mxu0
        %v870 = vpop.f32.mrb[0].mxu0
        %v871 = vadd.f32 %v316, %v870
        %v872 = vpop.f32.mrb[0].mxu0
        %873 = vmatprep.mubr.bf16.mxu0 0
        %874 = vmatmul.mubr.bf16.gmra.mrb[0].mxu0 %v592
        %v875 = vpop.f32.mrb[0].mxu0
        %v876 = vadd.f32 %v316, %v875
        %v877 = vpop.f32.mrb[0].mxu0
        %v878 = vpop.f32.mrb[0].mxu0
        %v879 = vadd.f32 %v316, %v878
        %v880 = vpop.f32.mrb[0].mxu0
        %881 = vmatprep.mubr.bf16.mxu0 0
        %882 = vmatmul.mubr.bf16.gmra.mrb[0].mxu0 %v595
        %v883 = vpop.f32.mrb[0].mxu0
        %v884 = vadd.f32 %v316, %v883
        %v885 = vpop.f32.mrb[0].mxu0
        %v886 = vpop.f32.mrb[0].mxu0
        %v887 = vadd.f32 %v316, %v886
        %v888 = vpop.f32.mrb[0].mxu0
        %889 = vmatprep.mubr.bf16.mxu0 0
        %890 = vmatmul.mubr.bf16.gmra.mrb[0].mxu0 %v598
        %v891 = vpop.f32.mrb[0].mxu0
        %v892 = vadd.f32 %v316, %v891
        %v893 = vpop.f32.mrb[0].mxu0
        %v894 = vpop.f32.mrb[0].mxu0
        %v895 = vadd.f32 %v316, %v894
        %v896 = vpop.f32.mrb[0].mxu0
        %897 = vmatprep.mubr.bf16.mxu0 0
        %898 = vmatmul.mubr.bf16.gmra.mrb[0].mxu0 %v601
        %v899 = vpop.f32.mrb[0].mxu0
        %v900 = vadd.f32 %v316, %v899
        %v901 = vpop.f32.mrb[0].mxu0
        %v902 = vpop.f32.mrb[0].mxu0
        %v903 = vadd.f32 %v316, %v902
        %v904 = vpop.f32.mrb[0].mxu0
        %905 = vmatprep.mubr.bf16.mxu0 0
        %906 = vmatmul.mubr.bf16.gmra.mrb[0].mxu0 %v604
        %v907 = vpop.f32.mrb[0].mxu0
        %v908 = vadd.f32 %v316, %v907
        %v909 = vpop.f32.mrb[0].mxu0
        %v910 = vpop.f32.mrb[0].mxu0
        %v911 = vadd.f32 %v316, %v910
        %v912 = vpop.f32.mrb[0].mxu0
        %913 = vmatprep.mubr.bf16.mxu0 0
        %914 = vmatmul.mubr.bf16.gmra.mrb[0].mxu0 %v607
        %v915 = vpop.f32.mrb[0].mxu0
        %v916 = vadd.f32 %v316, %v915
        %v917 = vpop.f32.mrb[0].mxu0
        %v918 = vpop.f32.mrb[0].mxu0
        %v919 = vadd.f32 %v316, %v918
        %v920 = vpop.f32.mrb[0].mxu0
        %921 = vmatprep.mubr.bf16.mxu0 0
        %922 = vmatmul.mubr.bf16.gmra.mrb[0].mxu0 %v610
        %v923 = vpop.f32.mrb[0].mxu0
        %v924 = vadd.f32 %v316, %v923
        %v925 = vpop.f32.mrb[0].mxu0
        %v926 = vpop.f32.mrb[0].mxu0
        %v927 = vadd.f32 %v316, %v926
        %v928 = vpop.f32.mrb[0].mxu0
        %929 = vmatprep.mubr.bf16.mxu0 0
        %930 = vmatmul.mubr.bf16.gmra.mrb[0].mxu0 %v613
        %v931 = vpop.f32.mrb[0].mxu0
        %v932 = vadd.f32 %v316, %v931
        %v933 = vpop.f32.mrb[0].mxu0
        %v934 = vpop.f32.mrb[0].mxu0
        %v935 = vadd.f32 %v316, %v934
        %v936 = vpop.f32.mrb[0].mxu0
        %937 = vmatprep.mubr.bf16.mxu0 0
        %938 = vmatmul.mubr.bf16.gmra.mrb[0].mxu0 %v616
        %v939 = vpop.f32.mrb[0].mxu0
        %v940 = vadd.f32 %v316, %v939
        %v941 = vpop.f32.mrb[0].mxu0
        %v942 = vpop.f32.mrb[0].mxu0
        %v943 = vadd.f32 %v316, %v942
        %v944 = vpop.f32.mrb[0].mxu0
        %945 = vdwg.mxu0
        %v946 = vmax.f32 %v660, 0.0
        %v947 = vmax.f32 %v663, 0.0
        %v948 = vmax.f32 %v668, 0.0
        %v949 = vmax.f32 %v671, 0.0
        %v950 = vmax.f32 %v676, 0.0
        %v951 = vmax.f32 %v679, 0.0
        %v952 = vmax.f32 %v684, 0.0
        %v953 = vmax.f32 %v687, 0.0
        %v954 = vmax.f32 %v692, 0.0
        %v955 = vmax.f32 %v695, 0.0
        %v956 = vmax.f32 %v700, 0.0
        %v957 = vmax.f32 %v703, 0.0
        %v958 = vmax.f32 %v708, 0.0
        %v959 = vmax.f32 %v711, 0.0
        %v960 = vmax.f32 %v716, 0.0
        %v961 = vmax.f32 %v719, 0.0
        %v962 = vmax.f32 %v724, 0.0
        %v963 = vmax.f32 %v727, 0.0
        %v964 = vmax.f32 %v732, 0.0
        %v965 = vmax.f32 %v735, 0.0
        %v966 = vmax.f32 %v740, 0.0
        %v967 = vmax.f32 %v743, 0.0
        %v968 = vmax.f32 %v748, 0.0
        %v969 = vmax.f32 %v751, 0.0
        %v970 = vmax.f32 %v756, 0.0
        %v971 = vmax.f32 %v759, 0.0
        %v972 = vmax.f32 %v764, 0.0
        %v973 = vmax.f32 %v767, 0.0
        %v974 = vmax.f32 %v772, 0.0
        %v975 = vmax.f32 %v775, 0.0
        %v976 = vmax.f32 %v780, 0.0
        %v977 = vmax.f32 %v783, 0.0
        %v978 = vmax.f32 %v788, 0.0
        %v979 = vmax.f32 %v791, 0.0
        %v980 = vmax.f32 %v796, 0.0
        %v981 = vmax.f32 %v799, 0.0
        %v982 = vmax.f32 %v804, 0.0
        %v983 = vmax.f32 %v807, 0.0
        %v984 = vmax.f32 %v812, 0.0
        %v985 = vmax.f32 %v815, 0.0
        %v986 = vmax.f32 %v820, 0.0
        %v987 = vmax.f32 %v823, 0.0
        %v988 = vmax.f32 %v828, 0.0
        %v989 = vmax.f32 %v831, 0.0
        %v990 = vmax.f32 %v836, 0.0
        %v991 = vmax.f32 %v839, 0.0
        %v992 = vmax.f32 %v844, 0.0
        %v993 = vmax.f32 %v847, 0.0
        %v994 = vmax.f32 %v852, 0.0
        %v995 = vmax.f32 %v855, 0.0
        %v996 = vmax.f32 %v860, 0.0
        %v997 = vmax.f32 %v863, 0.0
        %v998 = vmax.f32 %v868, 0.0
        %v999 = vmax.f32 %v871, 0.0
        %v1000 = vmax.f32 %v876, 0.0
        %v1001 = vmax.f32 %v879, 0.0
        %v1002 = vmax.f32 %v884, 0.0
        %v1003 = vmax.f32 %v887, 0.0
        %v1004 = vmax.f32 %v892, 0.0
        %v1005 = vmax.f32 %v895, 0.0
        %v1006 = vmax.f32 %v900, 0.0
        %v1007 = vmax.f32 %v903, 0.0
        %v1008 = vmax.f32 %v908, 0.0
        %v1009 = vmax.f32 %v911, 0.0
        %v1010 = vmax.f32 %v916, 0.0
        %v1011 = vmax.f32 %v919, 0.0
        %v1012 = vmax.f32 %v924, 0.0
        %v1013 = vmax.f32 %v927, 0.0
        %v1014 = vmax.f32 %v932, 0.0
        %v1015 = vmax.f32 %v935, 0.0
        %v1016 = vmax.f32 %v940, 0.0
        %v1017 = vmax.f32 %v943, 0.0
        %v1018 = vpack.c.bf16 %v947, %v946
        %v1019 = vpack.c.bf16 %v949, %v948
        %v1020 = vpack.c.bf16 %v951, %v950
        %v1021 = vpack.c.bf16 %v953, %v952
        %v1022 = vpack.c.bf16 %v955, %v954
        %v1023 = vpack.c.bf16 %v957, %v956
        %v1024 = vpack.c.bf16 %v959, %v958
        %v1025 = vpack.c.bf16 %v961, %v960
        %v1026 = vpack.c.bf16 %v963, %v962
        %v1027 = vpack.c.bf16 %v965, %v964
        %v1028 = vpack.c.bf16 %v967, %v966
        %v1029 = vpack.c.bf16 %v969, %v968
        %v1030 = vpack.c.bf16 %v971, %v970
        %v1031 = vpack.c.bf16 %v973, %v972
        %v1032 = vpack.c.bf16 %v975, %v974
        %v1033 = vpack.c.bf16 %v977, %v976
        %v1034 = vpack.c.bf16 %v979, %v978
        %v1035 = vpack.c.bf16 %v981, %v980
        %v1036 = vpack.c.bf16 %v983, %v982
        %v1037 = vpack.c.bf16 %v985, %v984
        %v1038 = vpack.c.bf16 %v987, %v986
        %v1039 = vpack.c.bf16 %v989, %v988
        %v1040 = vpack.c.bf16 %v991, %v990
        %v1041 = vpack.c.bf16 %v993, %v992
        %v1042 = vpack.c.bf16 %v995, %v994
        %v1043 = vpack.c.bf16 %v997, %v996
        %v1044 = vpack.c.bf16 %v999, %v998
        %v1045 = vpack.c.bf16 %v1001, %v1000
        %v1046 = vpack.c.bf16 %v1003, %v1002
        %v1047 = vpack.c.bf16 %v1005, %v1004
        %v1048 = vpack.c.bf16 %v1007, %v1006
        %v1049 = vpack.c.bf16 %v1009, %v1008
        %v1050 = vpack.c.bf16 %v1011, %v1010
        %v1051 = vpack.c.bf16 %v1013, %v1012
        %v1052 = vpack.c.bf16 %v1015, %v1014
        %v1053 = vpack.c.bf16 %v1017, %v1016
        %v1090 = vunpack.c.l.b16 %v1018
        %v1091 = vunpack.c.h.b16 %v1018
        %v1092 = vunpack.c.l.b16 %v1019
        %v1093 = vunpack.c.h.b16 %v1019
        %v1094 = vunpack.c.l.b16 %v1020
        %v1095 = vunpack.c.h.b16 %v1020
        %v1096 = vunpack.c.l.b16 %v1021
        %v1097 = vunpack.c.h.b16 %v1021
        %v1098 = vunpack.c.l.b16 %v1022
        %v1099 = vunpack.c.h.b16 %v1022
        %v1100 = vunpack.c.l.b16 %v1023
        %v1101 = vunpack.c.h.b16 %v1023
        %v1102 = vunpack.c.l.b16 %v1024
        %v1103 = vunpack.c.h.b16 %v1024
        %v1104 = vunpack.c.l.b16 %v1025
        %v1105 = vunpack.c.h.b16 %v1025
        %v1106 = vunpack.c.l.b16 %v1026
        %v1107 = vunpack.c.h.b16 %v1026
        %v1108 = vunpack.c.l.b16 %v1027
        %v1109 = vunpack.c.h.b16 %v1027
        %v1110 = vunpack.c.l.b16 %v1028
        %v1111 = vunpack.c.h.b16 %v1028
        %v1112 = vunpack.c.l.b16 %v1029
        %v1113 = vunpack.c.h.b16 %v1029
        %v1114 = vunpack.c.l.b16 %v1030
        %v1115 = vunpack.c.h.b16 %v1030
        %v1116 = vunpack.c.l.b16 %v1031
        %v1117 = vunpack.c.h.b16 %v1031
        %v1118 = vunpack.c.l.b16 %v1032
        %v1119 = vunpack.c.h.b16 %v1032
        %v1120 = vunpack.c.l.b16 %v1033
        %v1121 = vunpack.c.h.b16 %v1033
        %v1122 = vunpack.c.l.b16 %v1034
        %v1123 = vunpack.c.h.b16 %v1034
        %v1124 = vunpack.c.l.b16 %v1035
        %v1125 = vunpack.c.h.b16 %v1035
        %v1126 = vunpack.c.l.b16 %v1036
        %v1127 = vunpack.c.h.b16 %v1036
        %v1128 = vunpack.c.l.b16 %v1037
        %v1129 = vunpack.c.h.b16 %v1037
        %v1130 = vunpack.c.l.b16 %v1038
        %v1131 = vunpack.c.h.b16 %v1038
        %v1132 = vunpack.c.l.b16 %v1039
        %v1133 = vunpack.c.h.b16 %v1039
        %v1134 = vunpack.c.l.b16 %v1040
        %v1135 = vunpack.c.h.b16 %v1040
        %v1136 = vunpack.c.l.b16 %v1041
        %v1137 = vunpack.c.h.b16 %v1041
        %v1138 = vunpack.c.l.b16 %v1042
        %v1139 = vunpack.c.h.b16 %v1042
        %v1140 = vunpack.c.l.b16 %v1043
        %v1141 = vunpack.c.h.b16 %v1043
        %v1142 = vunpack.c.l.b16 %v1044
        %v1143 = vunpack.c.h.b16 %v1044
        %v1144 = vunpack.c.l.b16 %v1045
        %v1145 = vunpack.c.h.b16 %v1045
        %v1146 = vunpack.c.l.b16 %v1046
        %v1147 = vunpack.c.h.b16 %v1046
        %v1148 = vunpack.c.l.b16 %v1047
        %v1149 = vunpack.c.h.b16 %v1047
        %v1150 = vunpack.c.l.b16 %v1048
        %v1151 = vunpack.c.h.b16 %v1048
        %v1152 = vunpack.c.l.b16 %v1049
        %v1153 = vunpack.c.h.b16 %v1049
        %v1154 = vunpack.c.l.b16 %v1050
        %v1155 = vunpack.c.h.b16 %v1050
        %v1156 = vunpack.c.l.b16 %v1051
        %v1157 = vunpack.c.h.b16 %v1051
        %v1158 = vunpack.c.l.b16 %v1052
        %v1159 = vunpack.c.h.b16 %v1052
        %v1160 = vunpack.c.l.b16 %v1053
        %v1161 = vunpack.c.h.b16 %v1053
        %v1162 = vpack.c.b16 %v1090, %v1090
        %v1163 = vpack.c.b16 %v1091, %v1091
        %v1164 = vpack.c.b16 %v1092, %v1092
        %v1165 = vpack.c.b16 %v1093, %v1093
        %v1166 = vpack.c.b16 %v1094, %v1094
        %v1167 = vpack.c.b16 %v1095, %v1095
        %v1168 = vpack.c.b16 %v1096, %v1096
        %v1169 = vpack.c.b16 %v1097, %v1097
        %v1170 = vpack.c.b16 %v1098, %v1098
        %v1171 = vpack.c.b16 %v1099, %v1099
        %v1172 = vpack.c.b16 %v1100, %v1100
        %v1173 = vpack.c.b16 %v1101, %v1101
        %v1174 = vpack.c.b16 %v1102, %v1102
        %v1175 = vpack.c.b16 %v1103, %v1103
        %v1176 = vpack.c.b16 %v1104, %v1104
        %v1177 = vpack.c.b16 %v1105, %v1105
        %v1178 = vpack.c.b16 %v1106, %v1106
        %v1179 = vpack.c.b16 %v1107, %v1107
        %v1180 = vpack.c.b16 %v1108, %v1108
        %v1181 = vpack.c.b16 %v1109, %v1109
        %v1182 = vpack.c.b16 %v1110, %v1110
        %v1183 = vpack.c.b16 %v1111, %v1111
        %v1184 = vpack.c.b16 %v1112, %v1112
        %v1185 = vpack.c.b16 %v1113, %v1113
        %v1186 = vpack.c.b16 %v1114, %v1114
        %v1187 = vpack.c.b16 %v1115, %v1115
        %v1188 = vpack.c.b16 %v1116, %v1116
        %v1189 = vpack.c.b16 %v1117, %v1117
        %v1190 = vpack.c.b16 %v1118, %v1118
        %v1191 = vpack.c.b16 %v1119, %v1119
        %v1192 = vpack.c.b16 %v1120, %v1120
        %v1193 = vpack.c.b16 %v1121, %v1121
        %v1194 = vpack.c.b16 %v1122, %v1122
        %v1195 = vpack.c.b16 %v1123, %v1123
        %v1196 = vpack.c.b16 %v1124, %v1124
        %v1197 = vpack.c.b16 %v1125, %v1125
        %v1198 = vpack.c.b16 %v1126, %v1126
        %v1199 = vpack.c.b16 %v1127, %v1127
        %v1200 = vpack.c.b16 %v1128, %v1128
        %v1201 = vpack.c.b16 %v1129, %v1129
        %v1202 = vpack.c.b16 %v1130, %v1130
        %v1203 = vpack.c.b16 %v1131, %v1131
        %v1204 = vpack.c.b16 %v1132, %v1132
        %v1205 = vpack.c.b16 %v1133, %v1133
        %v1206 = vpack.c.b16 %v1134, %v1134
        %v1207 = vpack.c.b16 %v1135, %v1135
        %v1208 = vpack.c.b16 %v1136, %v1136
        %v1209 = vpack.c.b16 %v1137, %v1137
        %v1210 = vpack.c.b16 %v1138, %v1138
        %v1211 = vpack.c.b16 %v1139, %v1139
        %v1212 = vpack.c.b16 %v1140, %v1140
        %v1213 = vpack.c.b16 %v1141, %v1141
        %v1214 = vpack.c.b16 %v1142, %v1142
        %v1215 = vpack.c.b16 %v1143, %v1143
        %v1216 = vpack.c.b16 %v1144, %v1144
        %v1217 = vpack.c.b16 %v1145, %v1145
        %v1218 = vpack.c.b16 %v1146, %v1146
        %v1219 = vpack.c.b16 %v1147, %v1147
        %v1220 = vpack.c.b16 %v1148, %v1148
        %v1221 = vpack.c.b16 %v1149, %v1149
        %v1222 = vpack.c.b16 %v1150, %v1150
        %v1223 = vpack.c.b16 %v1151, %v1151
        %v1224 = vpack.c.b16 %v1152, %v1152
        %v1225 = vpack.c.b16 %v1153, %v1153
        %v1226 = vpack.c.b16 %v1154, %v1154
        %v1227 = vpack.c.b16 %v1155, %v1155
        %v1228 = vpack.c.b16 %v1156, %v1156
        %v1229 = vpack.c.b16 %v1157, %v1157
        %v1230 = vpack.c.b16 %v1158, %v1158
        %v1231 = vpack.c.b16 %v1159, %v1159
        %v1232 = vpack.c.b16 %v1160, %v1160
        %v1233 = vpack.c.b16 %v1161, %v1161
        %vm1306 = vcmask 273408
        %1307 = vst.msk [vmem:[%s232] sm:$0xf] %vm1306, %v1162
        %1308 = vst.msk [vmem:[%s232 + $0x4] sm:$0xf] %vm1306, %v1163
        %1309 = vst.msk [vmem:[%s232 + $0x8] sm:$0xf] %vm1306, %v1164
        %1310 = vst.msk [vmem:[%s232 + $0xc] sm:$0xf] %vm1306, %v1165
        %1311 = vst.msk [vmem:[%s232 + $0x10] sm:$0xf] %vm1306, %v1166
        %1312 = vst.msk [vmem:[%s232 + $0x14] sm:$0xf] %vm1306, %v1167
        %1313 = vst.msk [vmem:[%s232 + $0x18] sm:$0xf] %vm1306, %v1168
        %1314 = vst.msk [vmem:[%s232 + $0x1c] sm:$0xf] %vm1306, %v1169
        %1315 = vst.msk [vmem:[%s232 + $0x20] sm:$0xf] %vm1306, %v1170
        %1316 = vst.msk [vmem:[%s232 + $0x24] sm:$0xf] %vm1306, %v1171
        %1317 = vst.msk [vmem:[%s232 + $0x28] sm:$0xf] %vm1306, %v1172
        %1318 = vst.msk [vmem:[%s232 + $0x2c] sm:$0xf] %vm1306, %v1173
        %1319 = vst.msk [vmem:[%s232 + $0x30] sm:$0xf] %vm1306, %v1174
        %1320 = vst.msk [vmem:[%s232 + $0x34] sm:$0xf] %vm1306, %v1175
        %1321 = vst.msk [vmem:[%s232 + $0x38] sm:$0xf] %vm1306, %v1176
        %1322 = vst.msk [vmem:[%s232 + $0x3c] sm:$0xf] %vm1306, %v1177
        %1323 = vst.msk [vmem:[%s232 + $0x40] sm:$0xf] %vm1306, %v1178
        %1324 = vst.msk [vmem:[%s232 + $0x44] sm:$0xf] %vm1306, %v1179
        %1325 = vst.msk [vmem:[%s232 + $0x48] sm:$0xf] %vm1306, %v1180
        %1326 = vst.msk [vmem:[%s232 + $0x4c] sm:$0xf] %vm1306, %v1181
        %1327 = vst.msk [vmem:[%s232 + $0x50] sm:$0xf] %vm1306, %v1182
        %1328 = vst.msk [vmem:[%s232 + $0x54] sm:$0xf] %vm1306, %v1183
        %1329 = vst.msk [vmem:[%s232 + $0x58] sm:$0xf] %vm1306, %v1184
        %1330 = vst.msk [vmem:[%s232 + $0x5c] sm:$0xf] %vm1306, %v1185
        %1331 = vst.msk [vmem:[%s232 + $0x60] sm:$0xf] %vm1306, %v1186
        %1332 = vst.msk [vmem:[%s232 + $0x64] sm:$0xf] %vm1306, %v1187
        %1333 = vst.msk [vmem:[%s232 + $0x68] sm:$0xf] %vm1306, %v1188
        %1334 = vst.msk [vmem:[%s232 + $0x6c] sm:$0xf] %vm1306, %v1189
        %1335 = vst.msk [vmem:[%s232 + $0x70] sm:$0xf] %vm1306, %v1190
        %1336 = vst.msk [vmem:[%s232 + $0x74] sm:$0xf] %vm1306, %v1191
        %1337 = vst.msk [vmem:[%s232 + $0x78] sm:$0xf] %vm1306, %v1192
        %1338 = vst.msk [vmem:[%s232 + $0x7c] sm:$0xf] %vm1306, %v1193
        %1339 = vst.msk [vmem:[%s232 + $0x80] sm:$0xf] %vm1306, %v1194
        %1340 = vst.msk [vmem:[%s232 + $0x84] sm:$0xf] %vm1306, %v1195
        %1341 = vst.msk [vmem:[%s232 + $0x88] sm:$0xf] %vm1306, %v1196
        %1342 = vst.msk [vmem:[%s232 + $0x8c] sm:$0xf] %vm1306, %v1197
        %1343 = vst.msk [vmem:[%s232 + $0x90] sm:$0xf] %vm1306, %v1198
        %1344 = vst.msk [vmem:[%s232 + $0x94] sm:$0xf] %vm1306, %v1199
        %1345 = vst.msk [vmem:[%s232 + $0x98] sm:$0xf] %vm1306, %v1200
        %1346 = vst.msk [vmem:[%s232 + $0x9c] sm:$0xf] %vm1306, %v1201
        %1347 = vst.msk [vmem:[%s232 + $0xa0] sm:$0xf] %vm1306, %v1202
        %1348 = vst.msk [vmem:[%s232 + $0xa4] sm:$0xf] %vm1306, %v1203
        %1349 = vst.msk [vmem:[%s232 + $0xa8] sm:$0xf] %vm1306, %v1204
        %1350 = vst.msk [vmem:[%s232 + $0xac] sm:$0xf] %vm1306, %v1205
        %1351 = vst.msk [vmem:[%s232 + $0xb0] sm:$0xf] %vm1306, %v1206
        %1352 = vst.msk [vmem:[%s232 + $0xb4] sm:$0xf] %vm1306, %v1207
        %1353 = vst.msk [vmem:[%s232 + $0xb8] sm:$0xf] %vm1306, %v1208
        %1354 = vst.msk [vmem:[%s232 + $0xbc] sm:$0xf] %vm1306, %v1209
        %1355 = vst.msk [vmem:[%s232 + $0xc0] sm:$0xf] %vm1306, %v1210
        %1356 = vst.msk [vmem:[%s232 + $0xc4] sm:$0xf] %vm1306, %v1211
        %1357 = vst.msk [vmem:[%s232 + $0xc8] sm:$0xf] %vm1306, %v1212
        %1358 = vst.msk [vmem:[%s232 + $0xcc] sm:$0xf] %vm1306, %v1213
        %1359 = vst.msk [vmem:[%s232 + $0xd0] sm:$0xf] %vm1306, %v1214
        %1360 = vst.msk [vmem:[%s232 + $0xd4] sm:$0xf] %vm1306, %v1215
        %1361 = vst.msk [vmem:[%s232 + $0xd8] sm:$0xf] %vm1306, %v1216
        %1362 = vst.msk [vmem:[%s232 + $0xdc] sm:$0xf] %vm1306, %v1217
        %1363 = vst.msk [vmem:[%s232 + $0xe0] sm:$0xf] %vm1306, %v1218
        %1364 = vst.msk [vmem:[%s232 + $0xe4] sm:$0xf] %vm1306, %v1219
        %1365 = vst.msk [vmem:[%s232 + $0xe8] sm:$0xf] %vm1306, %v1220
        %1366 = vst.msk [vmem:[%s232 + $0xec] sm:$0xf] %vm1306, %v1221
        %1367 = vst.msk [vmem:[%s232 + $0xf0] sm:$0xf] %vm1306, %v1222
        %1368 = vst.msk [vmem:[%s232 + $0xf4] sm:$0xf] %vm1306, %v1223
        %1369 = vst.msk [vmem:[%s232 + $0xf8] sm:$0xf] %vm1306, %v1224
        %1370 = vst.msk [vmem:[%s232 + $0xfc] sm:$0xf] %vm1306, %v1225
        %1371 = vst.msk [vmem:[%s232 + $0x100] sm:$0xf] %vm1306, %v1226
        %1372 = vst.msk [vmem:[%s232 + $0x104] sm:$0xf] %vm1306, %v1227
        %1373 = vst.msk [vmem:[%s232 + $0x108] sm:$0xf] %vm1306, %v1228
        %1374 = vst.msk [vmem:[%s232 + $0x10c] sm:$0xf] %vm1306, %v1229
        %1375 = vst.msk [vmem:[%s232 + $0x110] sm:$0xf] %vm1306, %v1230
        %1376 = vst.msk [vmem:[%s232 + $0x114] sm:$0xf] %vm1306, %v1231
        %1377 = vst.msk [vmem:[%s232 + $0x118] sm:$0xf] %vm1306, %v1232
        %1378 = vst.msk [vmem:[%s232 + $0x11c] sm:$0xf] %vm1306, %v1233
        %s1379 = smul.u32 72, %s20
        %p1380 = scmp.lt.s32.totalorder %s1379, 143
        %s1381 = scalar_select %p1380, %s1379, 143
        %s1382 = smul.addr %s1381, 4
        %s1383 = scalar_lea.vmem %s3, %s1382
        // Predicated region
        $region41: #{net_forward.4} parent=31 // pred_check
          %p1384 = pneg %p121
        $region42: #{net_forward.4} parent=31 // pred_check_branch
          %1386 = sbr.rel (%p1384) target = $region44
        $region43: #{net_forward.4} parent=31 // pred_region
          %s1387 = smul.u32 72, %s20
        $region44: #{net_forward.4} parent=31 // pred_fallthru
          _
      $region32: #{net_forward.4} parent=5 // pred_fallthru
        _
      %p1388 = scmp.le.s32.totalorder 2, %s11
      // Predicated region
      $region45: #{net_forward.4} parent=5 // pred_check
        %p1389 = pneg %p1388
      $region46: #{net_forward.4} parent=5 // pred_check_branch
        %1391 = sbr.rel (%p1389) target = $region48
      $region47: #{net_forward.4} parent=5 // pred_region
        %s1392 = ssub.s32 %s11, 2
        // Predicated region
        $region49: #{net_forward.4} parent=47 // pred_check
          %p1393 = pneg %p127
        $region50: #{net_forward.4} parent=47 // pred_check_branch
          %1395 = sbr.rel (%p1393) target = $region52
        $region51: #{net_forward.4} parent=47 // pred_region
          %s1396 = smul.u32 72, %s22
          %p1397 = scmp.lt.s32.totalorder %s1396, 143
          %s1398 = scalar_select %p1397, %s1396, 143
          %s1399 = smul.addr %s1398, 4
          %s1400 = scalar_lea.vmem %s3, %s1399
        $region52: #{net_forward.4} parent=47 // pred_fallthru
          _
      $region48: #{net_forward.4} parent=5 // pred_fallthru
        _
    $region6: #{net_forward.4} parent=1 // loop_footer
      %s15 = sadd.s32 1, %s11
    $region7: #{net_forward.4} parent=1 // loop_footer_branch
      %10 = sbr.rel target = $region3
    $region8: #{net_forward.4} parent=1 // loop_exit
      _
    %1401 = vsyncpa [#allocation3], 1
    %s1402 = scalar_lea.sflag [#allocation3], 1
    %1403 = vsyncpa %s1402, 1
    %1404 = vsyncpa [#allocation5], 1

// kernel: net_forward.5
$region0: #{net_forward.5}
  #allocation0 [shape = 'u32[]', space=smem, size = 0x4, offset = 0x4, fixed_abs, tag = 'smem constant byte address 0x4 - core index']
  #allocation1 [shape = 'u32[144,128]{1,0:T(1,128)}', space=vmem, size = 0x12000, scoped, tag = 'internal scratch']
  %s0 = inlined_call_operand.vmem [shape: bf16[800,850], index: 0, kind: input, shape index: {}]
  %s1 = inlined_call_operand.vmem [shape: bf16[850,64], index: 1, kind: input, shape index: {}]
  %s2 = inlined_call_operand.vmem [shape: f32[1,64], index: 2, kind: input, shape index: {}]
  %s3 = inlined_call_operand.vmem [shape: bf16[800,64], index: 3, kind: output, shape index: {}]
  %s4 = sld [smem:[#allocation0]]
  $region45: #{net_forward.5} parent=0
    _
  %s6 = ssub.s32 1, %s4
  %s7 = scalar_select 0, %s6, %s4
  loop: start=0, step=1, limit=4
  $region2: #{net_forward.5} parent=0 // loop_pre_header
    _
  $region3: #{net_forward.5} parent=0 // loop_header
    %s9 = sphi 0, %s13
    %p10 = scmp.ge.s32.totalorder %s9, 4
    %s16 = sphi 0, %s28
    %s17 = sphi 0, %s24
    %s18 = sphi 0, %s16
    %s19 = sphi 0, %s17
    %s20 = sphi 0, %s18
    %s21 = sphi 0, %s19
    %s33 = sphi 0, %s35
    %s36 = sphi 0, %s33
    %s37 = sphi 0, %s36
    %s53 = sphi 0, %s37
    %s59 = sphi 0, %s61
    %s62 = sphi 0, %s59
    %s63 = sphi 0, %s62
    %s79 = sphi 0, %s63
    %s83 = sphi 0, %s83
    %s85 = sphi 0, %s83
    %s86 = sphi 0, %s85
    %s100 = sphi 0, %s86
    %s106 = sphi 0, %s108
    %s109 = sphi 0, %s106
    %s110 = sphi 0, %s109
    %s126 = sphi 0, %s110
  $region4: #{net_forward.5} parent=0 // loop_header_branch
    %12 = sbr.rel (%p10) target = $region8
  $region5: #{net_forward.5} parent=0 // loop_body
    %s14 = ssub.s32 %s9, 1
    %s15 = ssub.s32 %s9, 2
    %s22 = sadd.s32 1, %s17
    %p23 = scmp.ge.s32.totalorder %s22, 1
    %s24 = scalar_select %p23, 0, %s22
    %s25 = sadd.s32 1, %s16
    %s26 = scalar_select %p23, %s25, %s16
    %p27 = scmp.ge.s32.totalorder %s26, 2
    %s28 = scalar_select %p27, 0, %s26
    %s29 = ssub.s32 %s16, %s28
    %s30 = ssub.s32 %s17, %s24
    %s31 = sor.u32 %s29, %s30
    %p32 = scmp.eq.s32.totalorder %s31, 0
    %s34 = sadd.s32 %s33, 1
    %s35 = scalar_select %p32, %s33, %s34
    %p38 = pneg %p32
    %p39 = scmp.eq.s32.totalorder %s9, 1
    %p40 = por %p38, %p39
    %p41 = scmp.ne.s32.totalorder %s33, %s36
    %p42 = scmp.eq.s32.totalorder %s9, 0
    %p43 = por %p41, %p42
    %p44 = scmp.ne.s32.totalorder %s33, %s36
    %p45 = scmp.eq.s32.totalorder %s14, 1
    %p46 = por %p44, %p45
    %p47 = scmp.ne.s32.totalorder %s36, %s37
    %p48 = scmp.eq.s32.totalorder %s14, 0
    %p49 = por %p47, %p48
    %p50 = scmp.ne.s32.totalorder %s36, %s37
    %p51 = scmp.eq.s32.totalorder %s15, 1
    %p52 = por %p50, %p51
    %p54 = scmp.ne.s32.totalorder %s37, %s53
    %p55 = scmp.eq.s32.totalorder %s15, 0
    %p56 = por %p54, %p55
    %s57 = ssub.s32 %s17, %s24
    %p58 = scmp.eq.s32.totalorder %s57, 0
    %s60 = sadd.s32 %s59, 1
    %s61 = scalar_select %p58, %s59, %s60
    %p64 = pneg %p58
    %p65 = scmp.eq.s32.totalorder %s9, 1
    %p66 = por %p64, %p65
    %p67 = scmp.ne.s32.totalorder %s59, %s62
    %p68 = scmp.eq.s32.totalorder %s9, 0
    %p69 = por %p67, %p68
    %p70 = scmp.ne.s32.totalorder %s59, %s62
    %p71 = scmp.eq.s32.totalorder %s14, 1
    %p72 = por %p70, %p71
    %p73 = scmp.ne.s32.totalorder %s62, %s63
    %p74 = scmp.eq.s32.totalorder %s14, 0
    %p75 = por %p73, %p74
    %p76 = scmp.ne.s32.totalorder %s62, %s63
    %p77 = scmp.eq.s32.totalorder %s15, 1
    %p78 = por %p76, %p77
    %p80 = scmp.ne.s32.totalorder %s63, %s79
    %p81 = scmp.eq.s32.totalorder %s15, 0
    %p82 = por %p80, %p81
    %s84 = sadd.s32 %s83, 1
    %p87 = scmp.eq.s32.totalorder %s9, 1
    %p88 = scmp.ne.s32.totalorder %s83, %s85
    %p89 = scmp.eq.s32.totalorder %s9, 0
    %p90 = por %p88, %p89
    %p91 = scmp.ne.s32.totalorder %s83, %s85
    %p92 = scmp.eq.s32.totalorder %s14, 1
    %p93 = por %p91, %p92
    %p94 = scmp.ne.s32.totalorder %s85, %s86
    %p95 = scmp.eq.s32.totalorder %s14, 0
    %p96 = por %p94, %p95
    %p97 = scmp.ne.s32.totalorder %s85, %s86
    %p98 = scmp.eq.s32.totalorder %s15, 1
    %p99 = por %p97, %p98
    %p101 = scmp.ne.s32.totalorder %s86, %s100
    %p102 = scmp.eq.s32.totalorder %s15, 0
    %p103 = por %p101, %p102
    %s104 = ssub.s32 %s16, %s28
    %p105 = scmp.eq.s32.totalorder %s104, 0
    %s107 = sadd.s32 %s106, 1
    %s108 = scalar_select %p105, %s106, %s107
    %p111 = pneg %p105
    %p112 = scmp.eq.s32.totalorder %s9, 1
    %p113 = por %p111, %p112
    %p114 = scmp.ne.s32.totalorder %s106, %s109
    %p115 = scmp.eq.s32.totalorder %s9, 0
    %p116 = por %p114, %p115
    %p117 = scmp.ne.s32.totalorder %s106, %s109
    %p118 = scmp.eq.s32.totalorder %s14, 1
    %p119 = por %p117, %p118
    %p120 = scmp.ne.s32.totalorder %s109, %s110
    %p121 = scmp.eq.s32.totalorder %s14, 0
    %p122 = por %p120, %p121
    %p123 = scmp.ne.s32.totalorder %s109, %s110
    %p124 = scmp.eq.s32.totalorder %s15, 1
    %p125 = por %p123, %p124
    %p127 = scmp.ne.s32.totalorder %s110, %s126
    %p128 = scmp.eq.s32.totalorder %s15, 0
    %p129 = por %p127, %p128
    %p130 = scmp.le.s32.totalorder 1, %s9
    %p131 = scmp.lt.s32.totalorder %s9, 3
    %p132 = pnand %p130, %p131
    %p133 = pneg %p132
    // Predicated region
    $region9: #{net_forward.5} parent=5 // pred_check
      _
    $region10: #{net_forward.5} parent=5 // pred_check_branch
      %135 = sbr.rel (%p132) target = $region12
    $region11: #{net_forward.5} parent=5 // pred_region
      %s136 = ssub.s32 %s9, 1
      // Predicated region
      $region13: #{net_forward.5} parent=11 // pred_check
        %p137 = pneg %p75
      $region14: #{net_forward.5} parent=11 // pred_check_branch
        %139 = sbr.rel (%p137) target = $region16
      $region15: #{net_forward.5} parent=11 // pred_region
        %s140 = smul.u32 107, %s19
        %p141 = scmp.lt.s32.totalorder %s140, 106
        %s142 = scalar_select %p141, %s140, 106
        %s143 = smul.addr %s142, 4
        %s144 = scalar_lea.vmem %s1, %s143
        %s145 = smul.u32 107, %s19
      $region16: #{net_forward.5} parent=11 // pred_fallthru
        _
      // Predicated region
      $region17: #{net_forward.5} parent=11 // pred_check
        %p146 = pneg %p96
      $region18: #{net_forward.5} parent=11 // pred_check_branch
        %148 = sbr.rel (%p146) target = $region20
      $region19: #{net_forward.5} parent=11 // pred_region
        _
      $region20: #{net_forward.5} parent=11 // pred_fallthru
        _
    $region12: #{net_forward.5} parent=5 // pred_fallthru
      _
    %p149 = scmp.lt.s32.totalorder %s9, 2
    // Predicated region
    $region21: #{net_forward.5} parent=5 // pred_check
      %p150 = pneg %p149
    $region22: #{net_forward.5} parent=5 // pred_check_branch
      %152 = sbr.rel (%p150) target = $region24
    $region23: #{net_forward.5} parent=5 // pred_region
      // Predicated region
      $region25: #{net_forward.5} parent=23 // pred_check
        %p153 = pneg %p43
      $region26: #{net_forward.5} parent=23 // pred_check_branch
        %155 = sbr.rel (%p153) target = $region28
      $region27: #{net_forward.5} parent=23 // pred_region
        %s156 = smul.u32 50, %s16
        %s157 = smul.u32 7, %s17
        %p158 = scmp.lt.s32.totalorder %s156, 99
        %s159 = scalar_select %p158, %s156, 99
        %p160 = scmp.lt.s32.totalorder %s157, 6
        %s161 = scalar_select %p160, %s157, 6
        %s162 = smul.addr %s159, 7
        %s163 = sadd.s32 %s161, %s162
        %s164 = smul.addr %s163, 4
        %s165 = scalar_lea.vmem %s0, %s164
        %s166 = smul.u32 50, %s16
        %s167 = smul.u32 7, %s17
      $region28: #{net_forward.5} parent=23 // pred_fallthru
        _
    $region24: #{net_forward.5} parent=5 // pred_fallthru
      _
    %p168 = scmp.le.s32.totalorder 1, %s9
    %p169 = scmp.lt.s32.totalorder %s9, 3
    %p170 = pnand %p168, %p169
    %p171 = pneg %p170
    // Predicated region
    $region29: #{net_forward.5} parent=5 // pred_check
      _
    $region30: #{net_forward.5} parent=5 // pred_check_branch
      %173 = sbr.rel (%p170) target = $region32
    $region31: #{net_forward.5} parent=5 // pred_region
      %s174 = ssub.s32 %s9, 1
      %s175 = smul.u32 50, %s18
      %s176 = smul.u32 7, %s19
      %p177 = scmp.lt.s32.totalorder %s175, 99
      %s178 = scalar_select %p177, %s175, 99
      %p179 = scmp.lt.s32.totalorder %s176, 6
      %s180 = scalar_select %p179, %s176, 6
      %s181 = smul.addr %s178, 7
      %s182 = sadd.s32 %s180, %s181
      %s183 = smul.addr %s182, 4
      %s184 = scalar_lea.vmem %s0, %s183
      %p185 = pneg %p49
      %p186 = pneg %p46
      %s187 = smul.u32 107, %s19
      %p188 = scmp.lt.s32.totalorder %s187, 106
      %s189 = scalar_select %p188, %s187, 106
      %s190 = smul.addr %s189, 4
      %s191 = scalar_lea.vmem %s1, %s190
      %p192 = pneg %p75
      %p193 = pneg %p72
      %p194 = pneg %p96
      %p195 = pneg %p93
      %p196 = pneg %p122
      %p197 = pneg %p119
      %s198 = smul.u32 50, %s18
      %p199 = scmp.lt.s32.totalorder %s198, 99
      %s200 = scalar_select %p199, %s198, 99
      %s201 = smul.addr %s200, 4
      %s202 = scalar_lea.vmem %s3, %s201
      %s203 = smul.u32 50, %s18
      %s204 = smul.u32 7, %s19
      %p205 = scmp.lt.s32.totalorder %s203, 99
      %s206 = scalar_select %p205, %s203, 99
      %p207 = scmp.lt.s32.totalorder %s204, 6
      %s208 = scalar_select %p207, %s204, 6
      %s209 = smul.addr %s206, 7
      %s210 = sadd.s32 %s208, %s209
      %s211 = smul.addr %s210, 4
      %s212 = scalar_lea.vmem %s0, %s211
      %s213 = smul.u32 50, %s18
      %s214 = smul.u32 7, %s19
      %s215 = smul.u32 107, %s19
      %p216 = scmp.lt.s32.totalorder %s215, 106
      %s217 = scalar_select %p216, %s215, 106
      %s218 = smul.addr %s217, 4
      %s219 = scalar_lea.vmem %s1, %s218
      %s220 = smul.u32 107, %s19
      %s221 = smul.u32 50, %s18
      %p222 = scmp.lt.s32.totalorder %s221, 99
      %s223 = scalar_select %p222, %s221, 99
      %s224 = smul.addr %s223, 4
      %s225 = scalar_lea.vmem %s3, %s224
      %s226 = smul.u32 50, %s18
      %v228 = vld [vmem:[%s212] sm:$0xff]
      %v229 = vld [vmem:[%s212 + $0x8] sm:$0xff]
      %v230 = vld [vmem:[%s212 + $0x10] sm:$0xff]
      %v231 = vld [vmem:[%s212 + $0x18] sm:$0xf]
      %v232 = vld [vmem:[%s212 + $0x1c] sm:$0xff]
      %v233 = vld [vmem:[%s212 + $0x24] sm:$0xff]
      %v234 = vld [vmem:[%s212 + $0x2c] sm:$0xff]
      %v235 = vld [vmem:[%s212 + $0x34] sm:$0xf]
      %v236 = vld [vmem:[%s212 + $0x38] sm:$0xff]
      %v237 = vld [vmem:[%s212 + $0x40] sm:$0xff]
      %v238 = vld [vmem:[%s212 + $0x48] sm:$0xff]
      %v239 = vld [vmem:[%s212 + $0x50] sm:$0xf]
      %v240 = vld [vmem:[%s212 + $0x54] sm:$0xff]
      %v241 = vld [vmem:[%s212 + $0x5c] sm:$0xff]
      %v242 = vld [vmem:[%s212 + $0x64] sm:$0xff]
      %v243 = vld [vmem:[%s212 + $0x6c] sm:$0xf]
      %v244 = vld [vmem:[%s212 + $0x70] sm:$0xff]
      %v245 = vld [vmem:[%s212 + $0x78] sm:$0xff]
      %v246 = vld [vmem:[%s212 + $0x80] sm:$0xff]
      %v247 = vld [vmem:[%s212 + $0x88] sm:$0xf]
      %v248 = vld [vmem:[%s212 + $0x8c] sm:$0xff]
      %v249 = vld [vmem:[%s212 + $0x94] sm:$0xff]
      %v250 = vld [vmem:[%s212 + $0x9c] sm:$0xff]
      %v251 = vld [vmem:[%s212 + $0xa4] sm:$0xf]
      %v252 = vld [vmem:[%s212 + $0xa8] sm:$0xff]
      %v253 = vld [vmem:[%s212 + $0xb0] sm:$0xff]
      %v254 = vld [vmem:[%s212 + $0xb8] sm:$0xff]
      %v255 = vld [vmem:[%s212 + $0xc0] sm:$0xf]
      %v256 = vld [vmem:[%s212 + $0xc4] sm:$0xff]
      %v257 = vld [vmem:[%s212 + $0xcc] sm:$0xff]
      %v258 = vld [vmem:[%s212 + $0xd4] sm:$0xff]
      %v259 = vld [vmem:[%s212 + $0xdc] sm:$0xf]
      %v260 = vld [vmem:[%s212 + $0xe0] sm:$0xff]
      %v261 = vld [vmem:[%s212 + $0xe8] sm:$0xff]
      %v262 = vld [vmem:[%s212 + $0xf0] sm:$0xff]
      %v263 = vld [vmem:[%s212 + $0xf8] sm:$0xf]
      %v264 = vld [vmem:[%s212 + $0xfc] sm:$0xff]
      %v265 = vld [vmem:[%s212 + $0x104] sm:$0xff]
      %v266 = vld [vmem:[%s212 + $0x10c] sm:$0xff]
      %v267 = vld [vmem:[%s212 + $0x114] sm:$0xf]
      %v268 = vld [vmem:[%s212 + $0x118] sm:$0xff]
      %v269 = vld [vmem:[%s212 + $0x120] sm:$0xff]
      %v270 = vld [vmem:[%s212 + $0x128] sm:$0xff]
      %v271 = vld [vmem:[%s212 + $0x130] sm:$0xf]
      %v272 = vld [vmem:[%s212 + $0x134] sm:$0xff]
      %v273 = vld [vmem:[%s212 + $0x13c] sm:$0xff]
      %v274 = vld [vmem:[%s212 + $0x144] sm:$0xff]
      %v275 = vld [vmem:[%s212 + $0x14c] sm:$0xf]
      %v276 = vld [vmem:[%s212 + $0x150] sm:$0xff]
      %v277 = vld [vmem:[%s212 + $0x158] sm:$0xff]
      %v278 = vld [vmem:[%s212 + $0x160] sm:$0xff]
      %v279 = vld [vmem:[%s212 + $0x168] sm:$0xf]
      %v280 = vld [vmem:[%s212 + $0x16c] sm:$0xff]
      %v281 = vld [vmem:[%s212 + $0x174] sm:$0xff]
      %v282 = vld [vmem:[%s212 + $0x17c] sm:$0xff]
      %v283 = vld [vmem:[%s212 + $0x184] sm:$0xf]
      %v284 = vld [vmem:[%s212 + $0x188] sm:$0xff]
      %v285 = vld [vmem:[%s212 + $0x190] sm:$0xff]
      %v286 = vld [vmem:[%s212 + $0x198] sm:$0xff]
      %v287 = vld [vmem:[%s212 + $0x1a0] sm:$0xf]
      %v288 = vld [vmem:[%s212 + $0x1a4] sm:$0xff]
      %v289 = vld [vmem:[%s212 + $0x1ac] sm:$0xff]
      %v290 = vld [vmem:[%s212 + $0x1b4] sm:$0xff]
      %v291 = vld [vmem:[%s212 + $0x1bc] sm:$0xf]
      %v292 = vld [vmem:[%s212 + $0x1c0] sm:$0xff]
      %v293 = vld [vmem:[%s212 + $0x1c8] sm:$0xff]
      %v294 = vld [vmem:[%s212 + $0x1d0] sm:$0xff]
      %v295 = vld [vmem:[%s212 + $0x1d8] sm:$0xf]
      %v296 = vld [vmem:[%s212 + $0x1dc] sm:$0xff]
      %v297 = vld [vmem:[%s212 + $0x1e4] sm:$0xff]
      %v298 = vld [vmem:[%s212 + $0x1ec] sm:$0xff]
      %v299 = vld [vmem:[%s212 + $0x1f4] sm:$0xf]
      %v300 = vld [vmem:[%s212 + $0x1f8] sm:$0xff]
      %v301 = vld [vmem:[%s212 + $0x200] sm:$0xff]
      %v302 = vld [vmem:[%s212 + $0x208] sm:$0xff]
      %v303 = vld [vmem:[%s212 + $0x210] sm:$0xf]
      %v304 = vld [vmem:[%s212 + $0x214] sm:$0xff]
      %v305 = vld [vmem:[%s212 + $0x21c] sm:$0xff]
      %v306 = vld [vmem:[%s212 + $0x224] sm:$0xff]
      %v307 = vld [vmem:[%s212 + $0x22c] sm:$0xf]
      %v308 = vld [vmem:[%s212 + $0x230] sm:$0xff]
      %v309 = vld [vmem:[%s212 + $0x238] sm:$0xff]
      %v310 = vld [vmem:[%s212 + $0x240] sm:$0xff]
      %v311 = vld [vmem:[%s212 + $0x248] sm:$0xf]
      %v312 = vld [vmem:[%s212 + $0x24c] sm:$0xff]
      %v313 = vld [vmem:[%s212 + $0x254] sm:$0xff]
      %v314 = vld [vmem:[%s212 + $0x25c] sm:$0xff]
      %v315 = vld [vmem:[%s212 + $0x264] sm:$0xf]
      %v316 = vld [vmem:[%s212 + $0x268] sm:$0xff]
      %v317 = vld [vmem:[%s212 + $0x270] sm:$0xff]
      %v318 = vld [vmem:[%s212 + $0x278] sm:$0xff]
      %v319 = vld [vmem:[%s212 + $0x280] sm:$0xf]
      %v320 = vld [vmem:[%s212 + $0x284] sm:$0xff]
      %v321 = vld [vmem:[%s212 + $0x28c] sm:$0xff]
      %v322 = vld [vmem:[%s212 + $0x294] sm:$0xff]
      %v323 = vld [vmem:[%s212 + $0x29c] sm:$0xf]
      %v324 = vld [vmem:[%s212 + $0x2a0] sm:$0xff]
      %v325 = vld [vmem:[%s212 + $0x2a8] sm:$0xff]
      %v326 = vld [vmem:[%s212 + $0x2b0] sm:$0xff]
      %v327 = vld [vmem:[%s212 + $0x2b8] sm:$0xf]
      %v328 = vld [vmem:[%s212 + $0x2bc] sm:$0xff]
      %v329 = vld [vmem:[%s212 + $0x2c4] sm:$0xff]
      %v330 = vld [vmem:[%s212 + $0x2cc] sm:$0xff]
      %v331 = vld [vmem:[%s212 + $0x2d4] sm:$0xf]
      %v332 = vld [vmem:[%s212 + $0x2d8] sm:$0xff]
      %v333 = vld [vmem:[%s212 + $0x2e0] sm:$0xff]
      %v334 = vld [vmem:[%s212 + $0x2e8] sm:$0xff]
      %v335 = vld [vmem:[%s212 + $0x2f0] sm:$0xf]
      %v336 = vld [vmem:[%s212 + $0x2f4] sm:$0xff]
      %v337 = vld [vmem:[%s212 + $0x2fc] sm:$0xff]
      %v338 = vld [vmem:[%s212 + $0x304] sm:$0xff]
      %v339 = vld [vmem:[%s212 + $0x30c] sm:$0xf]
      %v340 = vld [vmem:[%s212 + $0x310] sm:$0xff]
      %v341 = vld [vmem:[%s212 + $0x318] sm:$0xff]
      %v342 = vld [vmem:[%s212 + $0x320] sm:$0xff]
      %v343 = vld [vmem:[%s212 + $0x328] sm:$0xf]
      %v344 = vld [vmem:[%s212 + $0x32c] sm:$0xff]
      %v345 = vld [vmem:[%s212 + $0x334] sm:$0xff]
      %v346 = vld [vmem:[%s212 + $0x33c] sm:$0xff]
      %v347 = vld [vmem:[%s212 + $0x344] sm:$0xf]
      %v348 = vld [vmem:[%s212 + $0x348] sm:$0xff]
      %v349 = vld [vmem:[%s212 + $0x350] sm:$0xff]
      %v350 = vld [vmem:[%s212 + $0x358] sm:$0xff]
      %v351 = vld [vmem:[%s212 + $0x360] sm:$0xf]
      %v352 = vld [vmem:[%s212 + $0x364] sm:$0xff]
      %v353 = vld [vmem:[%s212 + $0x36c] sm:$0xff]
      %v354 = vld [vmem:[%s212 + $0x374] sm:$0xff]
      %v355 = vld [vmem:[%s212 + $0x37c] sm:$0xf]
      %v356 = vld [vmem:[%s212 + $0x380] sm:$0xff]
      %v357 = vld [vmem:[%s212 + $0x388] sm:$0xff]
      %v358 = vld [vmem:[%s212 + $0x390] sm:$0xff]
      %v359 = vld [vmem:[%s212 + $0x398] sm:$0xf]
      %v360 = vld [vmem:[%s212 + $0x39c] sm:$0xff]
      %v361 = vld [vmem:[%s212 + $0x3a4] sm:$0xff]
      %v362 = vld [vmem:[%s212 + $0x3ac] sm:$0xff]
      %v363 = vld [vmem:[%s212 + $0x3b4] sm:$0xf]
      %v364 = vld [vmem:[%s212 + $0x3b8] sm:$0xff]
      %v365 = vld [vmem:[%s212 + $0x3c0] sm:$0xff]
      %v366 = vld [vmem:[%s212 + $0x3c8] sm:$0xff]
      %v367 = vld [vmem:[%s212 + $0x3d0] sm:$0xf]
      %v368 = vld [vmem:[%s212 + $0x3d4] sm:$0xff]
      %v369 = vld [vmem:[%s212 + $0x3dc] sm:$0xff]
      %v370 = vld [vmem:[%s212 + $0x3e4] sm:$0xff]
      %v371 = vld [vmem:[%s212 + $0x3ec] sm:$0xf]
      %v372 = vld [vmem:[%s212 + $0x3f0] sm:$0xff]
      %v373 = vld [vmem:[%s212 + $0x3f8] sm:$0xff]
      %v374 = vld [vmem:[%s212 + $0x400] sm:$0xff]
      %v375 = vld [vmem:[%s212 + $0x408] sm:$0xf]
      %v376 = vld [vmem:[%s212 + $0x40c] sm:$0xff]
      %v377 = vld [vmem:[%s212 + $0x414] sm:$0xff]
      %v378 = vld [vmem:[%s212 + $0x41c] sm:$0xff]
      %v379 = vld [vmem:[%s212 + $0x424] sm:$0xf]
      %v380 = vld [vmem:[%s212 + $0x428] sm:$0xff]
      %v381 = vld [vmem:[%s212 + $0x430] sm:$0xff]
      %v382 = vld [vmem:[%s212 + $0x438] sm:$0xff]
      %v383 = vld [vmem:[%s212 + $0x440] sm:$0xf]
      %v384 = vld [vmem:[%s212 + $0x444] sm:$0xff]
      %v385 = vld [vmem:[%s212 + $0x44c] sm:$0xff]
      %v386 = vld [vmem:[%s212 + $0x454] sm:$0xff]
      %v387 = vld [vmem:[%s212 + $0x45c] sm:$0xf]
      %v388 = vld [vmem:[%s212 + $0x460] sm:$0xff]
      %v389 = vld [vmem:[%s212 + $0x468] sm:$0xff]
      %v390 = vld [vmem:[%s212 + $0x470] sm:$0xff]
      %v391 = vld [vmem:[%s212 + $0x478] sm:$0xf]
      %v392 = vld [vmem:[%s212 + $0x47c] sm:$0xff]
      %v393 = vld [vmem:[%s212 + $0x484] sm:$0xff]
      %v394 = vld [vmem:[%s212 + $0x48c] sm:$0xff]
      %v395 = vld [vmem:[%s212 + $0x494] sm:$0xf]
      %v396 = vld [vmem:[%s212 + $0x498] sm:$0xff]
      %v397 = vld [vmem:[%s212 + $0x4a0] sm:$0xff]
      %v398 = vld [vmem:[%s212 + $0x4a8] sm:$0xff]
      %v399 = vld [vmem:[%s212 + $0x4b0] sm:$0xf]
      %v400 = vld [vmem:[%s212 + $0x4b4] sm:$0xff]
      %v401 = vld [vmem:[%s212 + $0x4bc] sm:$0xff]
      %v402 = vld [vmem:[%s212 + $0x4c4] sm:$0xff]
      %v403 = vld [vmem:[%s212 + $0x4cc] sm:$0xf]
      %v404 = vld [vmem:[%s212 + $0x4d0] sm:$0xff]
      %v405 = vld [vmem:[%s212 + $0x4d8] sm:$0xff]
      %v406 = vld [vmem:[%s212 + $0x4e0] sm:$0xff]
      %v407 = vld [vmem:[%s212 + $0x4e8] sm:$0xf]
      %v408 = vld [vmem:[%s212 + $0x4ec] sm:$0xff]
      %v409 = vld [vmem:[%s212 + $0x4f4] sm:$0xff]
      %v410 = vld [vmem:[%s212 + $0x4fc] sm:$0xff]
      %v411 = vld [vmem:[%s212 + $0x504] sm:$0xf]
      %v412 = vld [vmem:[%s212 + $0x508] sm:$0xff]
      %v413 = vld [vmem:[%s212 + $0x510] sm:$0xff]
      %v414 = vld [vmem:[%s212 + $0x518] sm:$0xff]
      %v415 = vld [vmem:[%s212 + $0x520] sm:$0xf]
      %v416 = vld [vmem:[%s212 + $0x524] sm:$0xff]
      %v417 = vld [vmem:[%s212 + $0x52c] sm:$0xff]
      %v418 = vld [vmem:[%s212 + $0x534] sm:$0xff]
      %v419 = vld [vmem:[%s212 + $0x53c] sm:$0xf]
      %v420 = vld [vmem:[%s212 + $0x540] sm:$0xff]
      %v421 = vld [vmem:[%s212 + $0x548] sm:$0xff]
      %v422 = vld [vmem:[%s212 + $0x550] sm:$0xff]
      %v423 = vld [vmem:[%s212 + $0x558] sm:$0xf]
      %v424 = vld [vmem:[%s212 + $0x55c] sm:$0xff]
      %v425 = vld [vmem:[%s212 + $0x564] sm:$0xff]
      %v426 = vld [vmem:[%s212 + $0x56c] sm:$0xff]
      %v427 = vld [vmem:[%s212 + $0x574] sm:$0xf]
      %v428 = vld [vmem:[%s219] sm:$0xf]
      %v429 = vld [vmem:[%s219 + $0x4] sm:$0xf]
      %v430 = vld [vmem:[%s219 + $0x8] sm:$0xf]
      %v431 = vld [vmem:[%s219 + $0xc] sm:$0xf]
      %v432 = vld [vmem:[%s219 + $0x10] sm:$0xf]
      %v433 = vld [vmem:[%s219 + $0x14] sm:$0xf]
      %v434 = vld [vmem:[%s219 + $0x18] sm:$0xf]
      %v435 = vld [vmem:[%s219 + $0x1c] sm:$0xf]
      %v436 = vld [vmem:[%s219 + $0x20] sm:$0xf]
      %v437 = vld [vmem:[%s219 + $0x24] sm:$0xf]
      %v438 = vld [vmem:[%s219 + $0x28] sm:$0xf]
      %v439 = vld [vmem:[%s219 + $0x2c] sm:$0xf]
      %v440 = vld [vmem:[%s219 + $0x30] sm:$0xf]
      %v441 = vld [vmem:[%s219 + $0x34] sm:$0xf]
      %v442 = vld [vmem:[%s219 + $0x38] sm:$0xf]
      %v443 = vld [vmem:[%s219 + $0x3c] sm:$0xf]
      %v444 = vld [vmem:[%s219 + $0x40] sm:$0xf]
      %v445 = vld [vmem:[%s219 + $0x44] sm:$0xf]
      %v446 = vld [vmem:[%s219 + $0x48] sm:$0xf]
      %v447 = vld [vmem:[%s219 + $0x4c] sm:$0xf]
      %v448 = vld [vmem:[%s219 + $0x50] sm:$0xf]
      %v449 = vld [vmem:[%s219 + $0x54] sm:$0xf]
      %v450 = vld [vmem:[%s219 + $0x58] sm:$0xf]
      %v451 = vld [vmem:[%s219 + $0x5c] sm:$0xf]
      %v452 = vld [vmem:[%s219 + $0x60] sm:$0xf]
      %v453 = vld [vmem:[%s219 + $0x64] sm:$0xf]
      %v454 = vld [vmem:[%s219 + $0x68] sm:$0xf]
      %v455 = vld [vmem:[%s219 + $0x6c] sm:$0xf]
      %v456 = vld [vmem:[%s219 + $0x70] sm:$0xf]
      %v457 = vld [vmem:[%s219 + $0x74] sm:$0xf]
      %v458 = vld [vmem:[%s219 + $0x78] sm:$0xf]
      %v459 = vld [vmem:[%s219 + $0x7c] sm:$0xf]
      %v460 = vld [vmem:[%s219 + $0x80] sm:$0xf]
      %v461 = vld [vmem:[%s219 + $0x84] sm:$0xf]
      %v462 = vld [vmem:[%s219 + $0x88] sm:$0xf]
      %v463 = vld [vmem:[%s219 + $0x8c] sm:$0xf]
      %v464 = vld [vmem:[%s219 + $0x90] sm:$0xf]
      %v465 = vld [vmem:[%s219 + $0x94] sm:$0xf]
      %v466 = vld [vmem:[%s219 + $0x98] sm:$0xf]
      %v467 = vld [vmem:[%s219 + $0x9c] sm:$0xf]
      %v468 = vld [vmem:[%s219 + $0xa0] sm:$0xf]
      %v469 = vld [vmem:[%s219 + $0xa4] sm:$0xf]
      %v470 = vld [vmem:[%s219 + $0xa8] sm:$0xf]
      %v471 = vld [vmem:[%s219 + $0xac] sm:$0xf]
      %v472 = vld [vmem:[%s219 + $0xb0] sm:$0xf]
      %v473 = vld [vmem:[%s219 + $0xb4] sm:$0xf]
      %v474 = vld [vmem:[%s219 + $0xb8] sm:$0xf]
      %v475 = vld [vmem:[%s219 + $0xbc] sm:$0xf]
      %v476 = vld [vmem:[%s219 + $0xc0] sm:$0xf]
      %v477 = vld [vmem:[%s219 + $0xc4] sm:$0xf]
      %v478 = vld [vmem:[%s219 + $0xc8] sm:$0xf]
      %v479 = vld [vmem:[%s219 + $0xcc] sm:$0xf]
      %v480 = vld [vmem:[%s219 + $0xd0] sm:$0xf]
      %v481 = vld [vmem:[%s219 + $0xd4] sm:$0xf]
      %v482 = vld [vmem:[%s219 + $0xd8] sm:$0xf]
      %v483 = vld [vmem:[%s219 + $0xdc] sm:$0xf]
      %v484 = vld [vmem:[%s219 + $0xe0] sm:$0xf]
      %v485 = vld [vmem:[%s219 + $0xe4] sm:$0xf]
      %v486 = vld [vmem:[%s219 + $0xe8] sm:$0xf]
      %v487 = vld [vmem:[%s219 + $0xec] sm:$0xf]
      %v488 = vld [vmem:[%s219 + $0xf0] sm:$0xf]
      %v489 = vld [vmem:[%s219 + $0xf4] sm:$0xf]
      %v490 = vld [vmem:[%s219 + $0xf8] sm:$0xf]
      %v491 = vld [vmem:[%s219 + $0xfc] sm:$0xf]
      %v492 = vld [vmem:[%s219 + $0x100] sm:$0xf]
      %v493 = vld [vmem:[%s219 + $0x104] sm:$0xf]
      %v494 = vld [vmem:[%s219 + $0x108] sm:$0xf]
      %v495 = vld [vmem:[%s219 + $0x10c] sm:$0xf]
      %v496 = vld [vmem:[%s219 + $0x110] sm:$0xf]
      %v497 = vld [vmem:[%s219 + $0x114] sm:$0xf]
      %v498 = vld [vmem:[%s219 + $0x118] sm:$0xf]
      %v499 = vld [vmem:[%s219 + $0x11c] sm:$0xf]
      %v500 = vld [vmem:[%s219 + $0x120] sm:$0xf]
      %v501 = vld [vmem:[%s219 + $0x124] sm:$0xf]
      %v502 = vld [vmem:[%s219 + $0x128] sm:$0xf]
      %v503 = vld [vmem:[%s219 + $0x12c] sm:$0xf]
      %v504 = vld [vmem:[%s219 + $0x130] sm:$0xf]
      %v505 = vld [vmem:[%s219 + $0x134] sm:$0xf]
      %v506 = vld [vmem:[%s219 + $0x138] sm:$0xf]
      %v507 = vld [vmem:[%s219 + $0x13c] sm:$0xf]
      %v508 = vld [vmem:[%s219 + $0x140] sm:$0xf]
      %v509 = vld [vmem:[%s219 + $0x144] sm:$0xf]
      %v510 = vld [vmem:[%s219 + $0x148] sm:$0xf]
      %v511 = vld [vmem:[%s219 + $0x14c] sm:$0xf]
      %v512 = vld [vmem:[%s219 + $0x150] sm:$0xf]
      %v513 = vld [vmem:[%s219 + $0x154] sm:$0xf]
      %v514 = vld [vmem:[%s219 + $0x158] sm:$0xf]
      %v515 = vld [vmem:[%s219 + $0x15c] sm:$0xf]
      %v516 = vld [vmem:[%s219 + $0x160] sm:$0xf]
      %v517 = vld [vmem:[%s219 + $0x164] sm:$0xf]
      %v518 = vld [vmem:[%s219 + $0x168] sm:$0xf]
      %v519 = vld [vmem:[%s219 + $0x16c] sm:$0xf]
      %v520 = vld [vmem:[%s219 + $0x170] sm:$0xf]
      %v521 = vld [vmem:[%s219 + $0x174] sm:$0xf]
      %v522 = vld [vmem:[%s219 + $0x178] sm:$0xf]
      %v523 = vld [vmem:[%s219 + $0x17c] sm:$0xf]
      %v524 = vld [vmem:[%s219 + $0x180] sm:$0xf]
      %v525 = vld [vmem:[%s219 + $0x184] sm:$0xf]
      %v526 = vld [vmem:[%s219 + $0x188] sm:$0xf]
      %v527 = vld [vmem:[%s219 + $0x18c] sm:$0xf]
      %v528 = vld [vmem:[%s219 + $0x190] sm:$0xf]
      %v529 = vld [vmem:[%s219 + $0x194] sm:$0xf]
      %v530 = vld [vmem:[%s219 + $0x198] sm:$0xf]
      %v531 = vld [vmem:[%s219 + $0x19c] sm:$0xf]
      %v532 = vld [vmem:[%s219 + $0x1a0] sm:$0xf]
      %v533 = vld [vmem:[%s219 + $0x1a4] sm:$0xf]
      %v534 = vld [vmem:[%s219 + $0x1a8] sm:$0x1]
      %v535 = vld [vmem:[%s2] sm:$0x1]
      %v537 = vlaneseq
      %v538 = vshrl.u32 %v537, 7
      %v539 = vsub.s32 0, %v538
      %v540 = vrot.slane %v535, %v539
      %v742 = vunpack.c.l.b16 %v228
      %v743 = vunpack.c.h.b16 %v228
      %v744 = vunpack.c.l.b16 %v229
      %v745 = vunpack.c.h.b16 %v229
      %v746 = vunpack.c.l.b16 %v230
      %v747 = vunpack.c.h.b16 %v230
      %v748 = vunpack.c.l.b16 %v231
      %v749 = vunpack.c.l.b16 %v232
      %v750 = vunpack.c.h.b16 %v232
      %v751 = vunpack.c.l.b16 %v233
      %v752 = vunpack.c.h.b16 %v233
      %v753 = vunpack.c.l.b16 %v234
      %v754 = vunpack.c.h.b16 %v234
      %v755 = vunpack.c.l.b16 %v235
      %v756 = vunpack.c.l.b16 %v236
      %v757 = vunpack.c.h.b16 %v236
      %v758 = vunpack.c.l.b16 %v237
      %v759 = vunpack.c.h.b16 %v237
      %v760 = vunpack.c.l.b16 %v238
      %v761 = vunpack.c.h.b16 %v238
      %v762 = vunpack.c.l.b16 %v239
      %v763 = vunpack.c.l.b16 %v240
      %v764 = vunpack.c.h.b16 %v240
      %v765 = vunpack.c.l.b16 %v241
      %v766 = vunpack.c.h.b16 %v241
      %v767 = vunpack.c.l.b16 %v242
      %v768 = vunpack.c.h.b16 %v242
      %v769 = vunpack.c.l.b16 %v243
      %v770 = vunpack.c.l.b16 %v244
      %v771 = vunpack.c.h.b16 %v244
      %v772 = vunpack.c.l.b16 %v245
      %v773 = vunpack.c.h.b16 %v245
      %v774 = vunpack.c.l.b16 %v246
      %v775 = vunpack.c.h.b16 %v246
      %v776 = vunpack.c.l.b16 %v247
      %v777 = vunpack.c.l.b16 %v248
      %v778 = vunpack.c.h.b16 %v248
      %v779 = vunpack.c.l.b16 %v249
      %v780 = vunpack.c.h.b16 %v249
      %v781 = vunpack.c.l.b16 %v250
      %v782 = vunpack.c.h.b16 %v250
      %v783 = vunpack.c.l.b16 %v251
      %v784 = vunpack.c.l.b16 %v252
      %v785 = vunpack.c.h.b16 %v252
      %v786 = vunpack.c.l.b16 %v253
      %v787 = vunpack.c.h.b16 %v253
      %v788 = vunpack.c.l.b16 %v254
      %v789 = vunpack.c.h.b16 %v254
      %v790 = vunpack.c.l.b16 %v255
      %v791 = vunpack.c.l.b16 %v256
      %v792 = vunpack.c.h.b16 %v256
      %v793 = vunpack.c.l.b16 %v257
      %v794 = vunpack.c.h.b16 %v257
      %v795 = vunpack.c.l.b16 %v258
      %v796 = vunpack.c.h.b16 %v258
      %v797 = vunpack.c.l.b16 %v259
      %v798 = vunpack.c.l.b16 %v260
      %v799 = vunpack.c.h.b16 %v260
      %v800 = vunpack.c.l.b16 %v261
      %v801 = vunpack.c.h.b16 %v261
      %v802 = vunpack.c.l.b16 %v262
      %v803 = vunpack.c.h.b16 %v262
      %v804 = vunpack.c.l.b16 %v263
      %v805 = vunpack.c.l.b16 %v264
      %v806 = vunpack.c.h.b16 %v264
      %v807 = vunpack.c.l.b16 %v265
      %v808 = vunpack.c.h.b16 %v265
      %v809 = vunpack.c.l.b16 %v266
      %v810 = vunpack.c.h.b16 %v266
      %v811 = vunpack.c.l.b16 %v267
      %v812 = vunpack.c.l.b16 %v268
      %v813 = vunpack.c.h.b16 %v268
      %v814 = vunpack.c.l.b16 %v269
      %v815 = vunpack.c.h.b16 %v269
      %v816 = vunpack.c.l.b16 %v270
      %v817 = vunpack.c.h.b16 %v270
      %v818 = vunpack.c.l.b16 %v271
      %v819 = vunpack.c.l.b16 %v272
      %v820 = vunpack.c.h.b16 %v272
      %v821 = vunpack.c.l.b16 %v273
      %v822 = vunpack.c.h.b16 %v273
      %v823 = vunpack.c.l.b16 %v274
      %v824 = vunpack.c.h.b16 %v274
      %v825 = vunpack.c.l.b16 %v275
      %v826 = vunpack.c.l.b16 %v276
      %v827 = vunpack.c.h.b16 %v276
      %v828 = vunpack.c.l.b16 %v277
      %v829 = vunpack.c.h.b16 %v277
      %v830 = vunpack.c.l.b16 %v278
      %v831 = vunpack.c.h.b16 %v278
      %v832 = vunpack.c.l.b16 %v279
      %v833 = vunpack.c.l.b16 %v280
      %v834 = vunpack.c.h.b16 %v280
      %v835 = vunpack.c.l.b16 %v281
      %v836 = vunpack.c.h.b16 %v281
      %v837 = vunpack.c.l.b16 %v282
      %v838 = vunpack.c.h.b16 %v282
      %v839 = vunpack.c.l.b16 %v283
      %v840 = vunpack.c.l.b16 %v284
      %v841 = vunpack.c.h.b16 %v284
      %v842 = vunpack.c.l.b16 %v285
      %v843 = vunpack.c.h.b16 %v285
      %v844 = vunpack.c.l.b16 %v286
      %v845 = vunpack.c.h.b16 %v286
      %v846 = vunpack.c.l.b16 %v287
      %v847 = vunpack.c.l.b16 %v288
      %v848 = vunpack.c.h.b16 %v288
      %v849 = vunpack.c.l.b16 %v289
      %v850 = vunpack.c.h.b16 %v289
      %v851 = vunpack.c.l.b16 %v290
      %v852 = vunpack.c.h.b16 %v290
      %v853 = vunpack.c.l.b16 %v291
      %v854 = vunpack.c.l.b16 %v292
      %v855 = vunpack.c.h.b16 %v292
      %v856 = vunpack.c.l.b16 %v293
      %v857 = vunpack.c.h.b16 %v293
      %v858 = vunpack.c.l.b16 %v294
      %v859 = vunpack.c.h.b16 %v294
      %v860 = vunpack.c.l.b16 %v295
      %v861 = vunpack.c.l.b16 %v296
      %v862 = vunpack.c.h.b16 %v296
      %v863 = vunpack.c.l.b16 %v297
      %v864 = vunpack.c.h.b16 %v297
      %v865 = vunpack.c.l.b16 %v298
      %v866 = vunpack.c.h.b16 %v298
      %v867 = vunpack.c.l.b16 %v299
      %v868 = vunpack.c.l.b16 %v300
      %v869 = vunpack.c.h.b16 %v300
      %v870 = vunpack.c.l.b16 %v301
      %v871 = vunpack.c.h.b16 %v301
      %v872 = vunpack.c.l.b16 %v302
      %v873 = vunpack.c.h.b16 %v302
      %v874 = vunpack.c.l.b16 %v303
      %v875 = vunpack.c.l.b16 %v304
      %v876 = vunpack.c.h.b16 %v304
      %v877 = vunpack.c.l.b16 %v305
      %v878 = vunpack.c.h.b16 %v305
      %v879 = vunpack.c.l.b16 %v306
      %v880 = vunpack.c.h.b16 %v306
      %v881 = vunpack.c.l.b16 %v307
      %v882 = vunpack.c.l.b16 %v308
      %v883 = vunpack.c.h.b16 %v308
      %v884 = vunpack.c.l.b16 %v309
      %v885 = vunpack.c.h.b16 %v309
      %v886 = vunpack.c.l.b16 %v310
      %v887 = vunpack.c.h.b16 %v310
      %v888 = vunpack.c.l.b16 %v311
      %v889 = vunpack.c.l.b16 %v312
      %v890 = vunpack.c.h.b16 %v312
      %v891 = vunpack.c.l.b16 %v313
      %v892 = vunpack.c.h.b16 %v313
      %v893 = vunpack.c.l.b16 %v314
      %v894 = vunpack.c.h.b16 %v314
      %v895 = vunpack.c.l.b16 %v315
      %v896 = vunpack.c.l.b16 %v316
      %v897 = vunpack.c.h.b16 %v316
      %v898 = vunpack.c.l.b16 %v317
      %v899 = vunpack.c.h.b16 %v317
      %v900 = vunpack.c.l.b16 %v318
      %v901 = vunpack.c.h.b16 %v318
      %v902 = vunpack.c.l.b16 %v319
      %v903 = vunpack.c.l.b16 %v320
      %v904 = vunpack.c.h.b16 %v320
      %v905 = vunpack.c.l.b16 %v321
      %v906 = vunpack.c.h.b16 %v321
      %v907 = vunpack.c.l.b16 %v322
      %v908 = vunpack.c.h.b16 %v322
      %v909 = vunpack.c.l.b16 %v323
      %v910 = vunpack.c.l.b16 %v324
      %v911 = vunpack.c.h.b16 %v324
      %v912 = vunpack.c.l.b16 %v325
      %v913 = vunpack.c.h.b16 %v325
      %v914 = vunpack.c.l.b16 %v326
      %v915 = vunpack.c.h.b16 %v326
      %v916 = vunpack.c.l.b16 %v327
      %v917 = vunpack.c.l.b16 %v328
      %v918 = vunpack.c.h.b16 %v328
      %v919 = vunpack.c.l.b16 %v329
      %v920 = vunpack.c.h.b16 %v329
      %v921 = vunpack.c.l.b16 %v330
      %v922 = vunpack.c.h.b16 %v330
      %v923 = vunpack.c.l.b16 %v331
      %v924 = vunpack.c.l.b16 %v332
      %v925 = vunpack.c.h.b16 %v332
      %v926 = vunpack.c.l.b16 %v333
      %v927 = vunpack.c.h.b16 %v333
      %v928 = vunpack.c.l.b16 %v334
      %v929 = vunpack.c.h.b16 %v334
      %v930 = vunpack.c.l.b16 %v335
      %v931 = vunpack.c.l.b16 %v336
      %v932 = vunpack.c.h.b16 %v336
      %v933 = vunpack.c.l.b16 %v337
      %v934 = vunpack.c.h.b16 %v337
      %v935 = vunpack.c.l.b16 %v338
      %v936 = vunpack.c.h.b16 %v338
      %v937 = vunpack.c.l.b16 %v339
      %v938 = vunpack.c.l.b16 %v340
      %v939 = vunpack.c.h.b16 %v340
      %v940 = vunpack.c.l.b16 %v341
      %v941 = vunpack.c.h.b16 %v341
      %v942 = vunpack.c.l.b16 %v342
      %v943 = vunpack.c.h.b16 %v342
      %v944 = vunpack.c.l.b16 %v343
      %v945 = vunpack.c.l.b16 %v344
      %v946 = vunpack.c.h.b16 %v344
      %v947 = vunpack.c.l.b16 %v345
      %v948 = vunpack.c.h.b16 %v345
      %v949 = vunpack.c.l.b16 %v346
      %v950 = vunpack.c.h.b16 %v346
      %v951 = vunpack.c.l.b16 %v347
      %v952 = vunpack.c.l.b16 %v348
      %v953 = vunpack.c.h.b16 %v348
      %v954 = vunpack.c.l.b16 %v349
      %v955 = vunpack.c.h.b16 %v349
      %v956 = vunpack.c.l.b16 %v350
      %v957 = vunpack.c.h.b16 %v350
      %v958 = vunpack.c.l.b16 %v351
      %v959 = vunpack.c.l.b16 %v352
      %v960 = vunpack.c.h.b16 %v352
      %v961 = vunpack.c.l.b16 %v353
      %v962 = vunpack.c.h.b16 %v353
      %v963 = vunpack.c.l.b16 %v354
      %v964 = vunpack.c.h.b16 %v354
      %v965 = vunpack.c.l.b16 %v355
      %v966 = vunpack.c.l.b16 %v356
      %v967 = vunpack.c.h.b16 %v356
      %v968 = vunpack.c.l.b16 %v357
      %v969 = vunpack.c.h.b16 %v357
      %v970 = vunpack.c.l.b16 %v358
      %v971 = vunpack.c.h.b16 %v358
      %v972 = vunpack.c.l.b16 %v359
      %v973 = vunpack.c.l.b16 %v360
      %v974 = vunpack.c.h.b16 %v360
      %v975 = vunpack.c.l.b16 %v361
      %v976 = vunpack.c.h.b16 %v361
      %v977 = vunpack.c.l.b16 %v362
      %v978 = vunpack.c.h.b16 %v362
      %v979 = vunpack.c.l.b16 %v363
      %v980 = vunpack.c.l.b16 %v364
      %v981 = vunpack.c.h.b16 %v364
      %v982 = vunpack.c.l.b16 %v365
      %v983 = vunpack.c.h.b16 %v365
      %v984 = vunpack.c.l.b16 %v366
      %v985 = vunpack.c.h.b16 %v366
      %v986 = vunpack.c.l.b16 %v367
      %v987 = vunpack.c.l.b16 %v368
      %v988 = vunpack.c.h.b16 %v368
      %v989 = vunpack.c.l.b16 %v369
      %v990 = vunpack.c.h.b16 %v369
      %v991 = vunpack.c.l.b16 %v370
      %v992 = vunpack.c.h.b16 %v370
      %v993 = vunpack.c.l.b16 %v371
      %v994 = vunpack.c.l.b16 %v372
      %v995 = vunpack.c.h.b16 %v372
      %v996 = vunpack.c.l.b16 %v373
      %v997 = vunpack.c.h.b16 %v373
      %v998 = vunpack.c.l.b16 %v374
      %v999 = vunpack.c.h.b16 %v374
      %v1000 = vunpack.c.l.b16 %v375
      %v1001 = vunpack.c.l.b16 %v376
      %v1002 = vunpack.c.h.b16 %v376
      %v1003 = vunpack.c.l.b16 %v377
      %v1004 = vunpack.c.h.b16 %v377
      %v1005 = vunpack.c.l.b16 %v378
      %v1006 = vunpack.c.h.b16 %v378
      %v1007 = vunpack.c.l.b16 %v379
      %v1008 = vunpack.c.l.b16 %v380
      %v1009 = vunpack.c.h.b16 %v380
      %v1010 = vunpack.c.l.b16 %v381
      %v1011 = vunpack.c.h.b16 %v381
      %v1012 = vunpack.c.l.b16 %v382
      %v1013 = vunpack.c.h.b16 %v382
      %v1014 = vunpack.c.l.b16 %v383
      %v1015 = vunpack.c.l.b16 %v384
      %v1016 = vunpack.c.h.b16 %v384
      %v1017 = vunpack.c.l.b16 %v385
      %v1018 = vunpack.c.h.b16 %v385
      %v1019 = vunpack.c.l.b16 %v386
      %v1020 = vunpack.c.h.b16 %v386
      %v1021 = vunpack.c.l.b16 %v387
      %v1022 = vunpack.c.l.b16 %v388
      %v1023 = vunpack.c.h.b16 %v388
      %v1024 = vunpack.c.l.b16 %v389
      %v1025 = vunpack.c.h.b16 %v389
      %v1026 = vunpack.c.l.b16 %v390
      %v1027 = vunpack.c.h.b16 %v390
      %v1028 = vunpack.c.l.b16 %v391
      %v1029 = vunpack.c.l.b16 %v392
      %v1030 = vunpack.c.h.b16 %v392
      %v1031 = vunpack.c.l.b16 %v393
      %v1032 = vunpack.c.h.b16 %v393
      %v1033 = vunpack.c.l.b16 %v394
      %v1034 = vunpack.c.h.b16 %v394
      %v1035 = vunpack.c.l.b16 %v395
      %v1036 = vunpack.c.l.b16 %v396
      %v1037 = vunpack.c.h.b16 %v396
      %v1038 = vunpack.c.l.b16 %v397
      %v1039 = vunpack.c.h.b16 %v397
      %v1040 = vunpack.c.l.b16 %v398
      %v1041 = vunpack.c.h.b16 %v398
      %v1042 = vunpack.c.l.b16 %v399
      %v1043 = vunpack.c.l.b16 %v400
      %v1044 = vunpack.c.h.b16 %v400
      %v1045 = vunpack.c.l.b16 %v401
      %v1046 = vunpack.c.h.b16 %v401
      %v1047 = vunpack.c.l.b16 %v402
      %v1048 = vunpack.c.h.b16 %v402
      %v1049 = vunpack.c.l.b16 %v403
      %v1050 = vunpack.c.l.b16 %v404
      %v1051 = vunpack.c.h.b16 %v404
      %v1052 = vunpack.c.l.b16 %v405
      %v1053 = vunpack.c.h.b16 %v405
      %v1054 = vunpack.c.l.b16 %v406
      %v1055 = vunpack.c.h.b16 %v406
      %v1056 = vunpack.c.l.b16 %v407
      %v1057 = vunpack.c.l.b16 %v408
      %v1058 = vunpack.c.h.b16 %v408
      %v1059 = vunpack.c.l.b16 %v409
      %v1060 = vunpack.c.h.b16 %v409
      %v1061 = vunpack.c.l.b16 %v410
      %v1062 = vunpack.c.h.b16 %v410
      %v1063 = vunpack.c.l.b16 %v411
      %v1064 = vunpack.c.l.b16 %v412
      %v1065 = vunpack.c.h.b16 %v412
      %v1066 = vunpack.c.l.b16 %v413
      %v1067 = vunpack.c.h.b16 %v413
      %v1068 = vunpack.c.l.b16 %v414
      %v1069 = vunpack.c.h.b16 %v414
      %v1070 = vunpack.c.l.b16 %v415
      %v1071 = vunpack.c.l.b16 %v416
      %v1072 = vunpack.c.h.b16 %v416
      %v1073 = vunpack.c.l.b16 %v417
      %v1074 = vunpack.c.h.b16 %v417
      %v1075 = vunpack.c.l.b16 %v418
      %v1076 = vunpack.c.h.b16 %v418
      %v1077 = vunpack.c.l.b16 %v419
      %v1078 = vunpack.c.l.b16 %v420
      %v1079 = vunpack.c.h.b16 %v420
      %v1080 = vunpack.c.l.b16 %v421
      %v1081 = vunpack.c.h.b16 %v421
      %v1082 = vunpack.c.l.b16 %v422
      %v1083 = vunpack.c.h.b16 %v422
      %v1084 = vunpack.c.l.b16 %v423
      %v1085 = vunpack.c.l.b16 %v424
      %v1086 = vunpack.c.h.b16 %v424
      %v1087 = vunpack.c.l.b16 %v425
      %v1088 = vunpack.c.h.b16 %v425
      %v1089 = vunpack.c.l.b16 %v426
      %v1090 = vunpack.c.h.b16 %v426
      %v1091 = vunpack.c.l.b16 %v427
      %v1092 = vpack.c.b16 %v749, %v742
      %v1093 = vpack.c.b16 %v750, %v743
      %v1094 = vpack.c.b16 %v751, %v744
      %v1095 = vpack.c.b16 %v752, %v745
      %v1096 = vpack.c.b16 %v753, %v746
      %v1097 = vpack.c.b16 %v754, %v747
      %v1098 = vpack.c.b16 %v755, %v748
      %v1099 = vpack.c.b16 %v763, %v756
      %v1100 = vpack.c.b16 %v764, %v757
      %v1101 = vpack.c.b16 %v765, %v758
      %v1102 = vpack.c.b16 %v766, %v759
      %v1103 = vpack.c.b16 %v767, %v760
      %v1104 = vpack.c.b16 %v768, %v761
      %v1105 = vpack.c.b16 %v769, %v762
      %v1106 = vpack.c.b16 %v777, %v770
      %v1107 = vpack.c.b16 %v778, %v771
      %v1108 = vpack.c.b16 %v779, %v772
      %v1109 = vpack.c.b16 %v780, %v773
      %v1110 = vpack.c.b16 %v781, %v774
      %v1111 = vpack.c.b16 %v782, %v775
      %v1112 = vpack.c.b16 %v783, %v776
      %v1113 = vpack.c.b16 %v791, %v784
      %v1114 = vpack.c.b16 %v792, %v785
      %v1115 = vpack.c.b16 %v793, %v786
      %v1116 = vpack.c.b16 %v794, %v787
      %v1117 = vpack.c.b16 %v795, %v788
      %v1118 = vpack.c.b16 %v796, %v789
      %v1119 = vpack.c.b16 %v797, %v790
      %v1120 = vpack.c.b16 %v805, %v798
      %v1121 = vpack.c.b16 %v806, %v799
      %v1122 = vpack.c.b16 %v807, %v800
      %v1123 = vpack.c.b16 %v808, %v801
      %v1124 = vpack.c.b16 %v809, %v802
      %v1125 = vpack.c.b16 %v810, %v803
      %v1126 = vpack.c.b16 %v811, %v804
      %v1127 = vpack.c.b16 %v819, %v812
      %v1128 = vpack.c.b16 %v820, %v813
      %v1129 = vpack.c.b16 %v821, %v814
      %v1130 = vpack.c.b16 %v822, %v815
      %v1131 = vpack.c.b16 %v823, %v816
      %v1132 = vpack.c.b16 %v824, %v817
      %v1133 = vpack.c.b16 %v825, %v818
      %v1134 = vpack.c.b16 %v833, %v826
      %v1135 = vpack.c.b16 %v834, %v827
      %v1136 = vpack.c.b16 %v835, %v828
      %v1137 = vpack.c.b16 %v836, %v829
      %v1138 = vpack.c.b16 %v837, %v830
      %v1139 = vpack.c.b16 %v838, %v831
      %v1140 = vpack.c.b16 %v839, %v832
      %v1141 = vpack.c.b16 %v847, %v840
      %v1142 = vpack.c.b16 %v848, %v841
      %v1143 = vpack.c.b16 %v849, %v842
      %v1144 = vpack.c.b16 %v850, %v843
      %v1145 = vpack.c.b16 %v851, %v844
      %v1146 = vpack.c.b16 %v852, %v845
      %v1147 = vpack.c.b16 %v853, %v846
      %v1148 = vpack.c.b16 %v861, %v854
      %v1149 = vpack.c.b16 %v862, %v855
      %v1150 = vpack.c.b16 %v863, %v856
      %v1151 = vpack.c.b16 %v864, %v857
      %v1152 = vpack.c.b16 %v865, %v858
      %v1153 = vpack.c.b16 %v866, %v859
      %v1154 = vpack.c.b16 %v867, %v860
      %v1155 = vpack.c.b16 %v875, %v868
      %v1156 = vpack.c.b16 %v876, %v869
      %v1157 = vpack.c.b16 %v877, %v870
      %v1158 = vpack.c.b16 %v878, %v871
      %v1159 = vpack.c.b16 %v879, %v872
      %v1160 = vpack.c.b16 %v880, %v873
      %v1161 = vpack.c.b16 %v881, %v874
      %v1162 = vpack.c.b16 %v889, %v882
      %v1163 = vpack.c.b16 %v890, %v883
      %v1164 = vpack.c.b16 %v891, %v884
      %v1165 = vpack.c.b16 %v892, %v885
      %v1166 = vpack.c.b16 %v893, %v886
      %v1167 = vpack.c.b16 %v894, %v887
      %v1168 = vpack.c.b16 %v895, %v888
      %v1169 = vpack.c.b16 %v903, %v896
      %v1170 = vpack.c.b16 %v904, %v897
      %v1171 = vpack.c.b16 %v905, %v898
      %v1172 = vpack.c.b16 %v906, %v899
      %v1173 = vpack.c.b16 %v907, %v900
      %v1174 = vpack.c.b16 %v908, %v901
      %v1175 = vpack.c.b16 %v909, %v902
      %v1176 = vpack.c.b16 %v917, %v910
      %v1177 = vpack.c.b16 %v918, %v911
      %v1178 = vpack.c.b16 %v919, %v912
      %v1179 = vpack.c.b16 %v920, %v913
      %v1180 = vpack.c.b16 %v921, %v914
      %v1181 = vpack.c.b16 %v922, %v915
      %v1182 = vpack.c.b16 %v923, %v916
      %v1183 = vpack.c.b16 %v931, %v924
      %v1184 = vpack.c.b16 %v932, %v925
      %v1185 = vpack.c.b16 %v933, %v926
      %v1186 = vpack.c.b16 %v934, %v927
      %v1187 = vpack.c.b16 %v935, %v928
      %v1188 = vpack.c.b16 %v936, %v929
      %v1189 = vpack.c.b16 %v937, %v930
      %v1190 = vpack.c.b16 %v945, %v938
      %v1191 = vpack.c.b16 %v946, %v939
      %v1192 = vpack.c.b16 %v947, %v940
      %v1193 = vpack.c.b16 %v948, %v941
      %v1194 = vpack.c.b16 %v949, %v942
      %v1195 = vpack.c.b16 %v950, %v943
      %v1196 = vpack.c.b16 %v951, %v944
      %v1197 = vpack.c.b16 %v959, %v952
      %v1198 = vpack.c.b16 %v960, %v953
      %v1199 = vpack.c.b16 %v961, %v954
      %v1200 = vpack.c.b16 %v962, %v955
      %v1201 = vpack.c.b16 %v963, %v956
      %v1202 = vpack.c.b16 %v964, %v957
      %v1203 = vpack.c.b16 %v965, %v958
      %v1204 = vpack.c.b16 %v973, %v966
      %v1205 = vpack.c.b16 %v974, %v967
      %v1206 = vpack.c.b16 %v975, %v968
      %v1207 = vpack.c.b16 %v976, %v969
      %v1208 = vpack.c.b16 %v977, %v970
      %v1209 = vpack.c.b16 %v978, %v971
      %v1210 = vpack.c.b16 %v979, %v972
      %v1211 = vpack.c.b16 %v987, %v980
      %v1212 = vpack.c.b16 %v988, %v981
      %v1213 = vpack.c.b16 %v989, %v982
      %v1214 = vpack.c.b16 %v990, %v983
      %v1215 = vpack.c.b16 %v991, %v984
      %v1216 = vpack.c.b16 %v992, %v985
      %v1217 = vpack.c.b16 %v993, %v986
      %v1218 = vpack.c.b16 %v1001, %v994
      %v1219 = vpack.c.b16 %v1002, %v995
      %v1220 = vpack.c.b16 %v1003, %v996
      %v1221 = vpack.c.b16 %v1004, %v997
      %v1222 = vpack.c.b16 %v1005, %v998
      %v1223 = vpack.c.b16 %v1006, %v999
      %v1224 = vpack.c.b16 %v1007, %v1000
      %v1225 = vpack.c.b16 %v1015, %v1008
      %v1226 = vpack.c.b16 %v1016, %v1009
      %v1227 = vpack.c.b16 %v1017, %v1010
      %v1228 = vpack.c.b16 %v1018, %v1011
      %v1229 = vpack.c.b16 %v1019, %v1012
      %v1230 = vpack.c.b16 %v1020, %v1013
      %v1231 = vpack.c.b16 %v1021, %v1014
      %v1232 = vpack.c.b16 %v1029, %v1022
      %v1233 = vpack.c.b16 %v1030, %v1023
      %v1234 = vpack.c.b16 %v1031, %v1024
      %v1235 = vpack.c.b16 %v1032, %v1025
      %v1236 = vpack.c.b16 %v1033, %v1026
      %v1237 = vpack.c.b16 %v1034, %v1027
      %v1238 = vpack.c.b16 %v1035, %v1028
      %v1239 = vpack.c.b16 %v1043, %v1036
      %v1240 = vpack.c.b16 %v1044, %v1037
      %v1241 = vpack.c.b16 %v1045, %v1038
      %v1242 = vpack.c.b16 %v1046, %v1039
      %v1243 = vpack.c.b16 %v1047, %v1040
      %v1244 = vpack.c.b16 %v1048, %v1041
      %v1245 = vpack.c.b16 %v1049, %v1042
      %v1246 = vpack.c.b16 %v1057, %v1050
      %v1247 = vpack.c.b16 %v1058, %v1051
      %v1248 = vpack.c.b16 %v1059, %v1052
      %v1249 = vpack.c.b16 %v1060, %v1053
      %v1250 = vpack.c.b16 %v1061, %v1054
      %v1251 = vpack.c.b16 %v1062, %v1055
      %v1252 = vpack.c.b16 %v1063, %v1056
      %v1253 = vpack.c.b16 %v1071, %v1064
      %v1254 = vpack.c.b16 %v1072, %v1065
      %v1255 = vpack.c.b16 %v1073, %v1066
      %v1256 = vpack.c.b16 %v1074, %v1067
      %v1257 = vpack.c.b16 %v1075, %v1068
      %v1258 = vpack.c.b16 %v1076, %v1069
      %v1259 = vpack.c.b16 %v1077, %v1070
      %v1260 = vpack.c.b16 %v1085, %v1078
      %v1261 = vpack.c.b16 %v1086, %v1079
      %v1262 = vpack.c.b16 %v1087, %v1080
      %v1263 = vpack.c.b16 %v1088, %v1081
      %v1264 = vpack.c.b16 %v1089, %v1082
      %v1265 = vpack.c.b16 %v1090, %v1083
      %v1266 = vpack.c.b16 %v1091, %v1084
      %v1524 = vunpack.c.l.b16 %v428
      %v1525 = vunpack.c.l.b16 %v429
      %v1526 = vunpack.c.l.b16 %v430
      %v1527 = vunpack.c.l.b16 %v431
      %v1528 = vunpack.c.l.b16 %v432
      %v1529 = vunpack.c.l.b16 %v433
      %v1530 = vunpack.c.l.b16 %v434
      %v1531 = vunpack.c.l.b16 %v435
      %v1532 = vunpack.c.l.b16 %v436
      %v1533 = vunpack.c.l.b16 %v437
      %v1534 = vunpack.c.l.b16 %v438
      %v1535 = vunpack.c.l.b16 %v439
      %v1536 = vunpack.c.l.b16 %v440
      %v1537 = vunpack.c.l.b16 %v441
      %v1538 = vunpack.c.l.b16 %v442
      %v1539 = vunpack.c.l.b16 %v443
      %v1540 = vunpack.c.l.b16 %v444
      %v1541 = vunpack.c.l.b16 %v445
      %v1542 = vunpack.c.l.b16 %v446
      %v1543 = vunpack.c.l.b16 %v447
      %v1544 = vunpack.c.l.b16 %v448
      %v1545 = vunpack.c.l.b16 %v449
      %v1546 = vunpack.c.l.b16 %v450
      %v1547 = vunpack.c.l.b16 %v451
      %v1548 = vunpack.c.l.b16 %v452
      %v1549 = vunpack.c.l.b16 %v453
      %v1550 = vunpack.c.l.b16 %v454
      %v1551 = vunpack.c.l.b16 %v455
      %v1552 = vunpack.c.l.b16 %v456
      %v1553 = vunpack.c.l.b16 %v457
      %v1554 = vunpack.c.l.b16 %v458
      %v1555 = vunpack.c.l.b16 %v459
      %v1556 = vunpack.c.l.b16 %v460
      %v1557 = vunpack.c.l.b16 %v461
      %v1558 = vunpack.c.l.b16 %v462
      %v1559 = vunpack.c.l.b16 %v463
      %v1560 = vunpack.c.l.b16 %v464
      %v1561 = vunpack.c.l.b16 %v465
      %v1562 = vunpack.c.l.b16 %v466
      %v1563 = vunpack.c.l.b16 %v467
      %v1564 = vunpack.c.l.b16 %v468
      %v1565 = vunpack.c.l.b16 %v469
      %v1566 = vunpack.c.l.b16 %v470
      %v1567 = vunpack.c.l.b16 %v471
      %v1568 = vunpack.c.l.b16 %v472
      %v1569 = vunpack.c.l.b16 %v473
      %v1570 = vunpack.c.l.b16 %v474
      %v1571 = vunpack.c.l.b16 %v475
      %v1572 = vunpack.c.l.b16 %v476
      %v1573 = vunpack.c.l.b16 %v477
      %v1574 = vunpack.c.l.b16 %v478
      %v1575 = vunpack.c.l.b16 %v479
      %v1576 = vunpack.c.l.b16 %v480
      %v1577 = vunpack.c.l.b16 %v481
      %v1578 = vunpack.c.l.b16 %v482
      %v1579 = vunpack.c.l.b16 %v483
      %v1580 = vunpack.c.l.b16 %v484
      %v1581 = vunpack.c.l.b16 %v485
      %v1582 = vunpack.c.l.b16 %v486
      %v1583 = vunpack.c.l.b16 %v487
      %v1584 = vunpack.c.l.b16 %v488
      %v1585 = vunpack.c.l.b16 %v489
      %v1586 = vunpack.c.l.b16 %v490
      %v1587 = vunpack.c.l.b16 %v491
      %v1588 = vunpack.c.l.b16 %v492
      %v1589 = vunpack.c.l.b16 %v493
      %v1590 = vunpack.c.l.b16 %v494
      %v1591 = vunpack.c.l.b16 %v495
      %v1592 = vunpack.c.l.b16 %v496
      %v1593 = vunpack.c.l.b16 %v497
      %v1594 = vunpack.c.l.b16 %v498
      %v1595 = vunpack.c.l.b16 %v499
      %v1596 = vunpack.c.l.b16 %v500
      %v1597 = vunpack.c.l.b16 %v501
      %v1598 = vunpack.c.l.b16 %v502
      %v1599 = vunpack.c.l.b16 %v503
      %v1600 = vunpack.c.l.b16 %v504
      %v1601 = vunpack.c.l.b16 %v505
      %v1602 = vunpack.c.l.b16 %v506
      %v1603 = vunpack.c.l.b16 %v507
      %v1604 = vunpack.c.l.b16 %v508
      %v1605 = vunpack.c.l.b16 %v509
      %v1606 = vunpack.c.l.b16 %v510
      %v1607 = vunpack.c.l.b16 %v511
      %v1608 = vunpack.c.l.b16 %v512
      %v1609 = vunpack.c.l.b16 %v513
      %v1610 = vunpack.c.l.b16 %v514
      %v1611 = vunpack.c.l.b16 %v515
      %v1612 = vunpack.c.l.b16 %v516
      %v1613 = vunpack.c.l.b16 %v517
      %v1614 = vunpack.c.l.b16 %v518
      %v1615 = vunpack.c.l.b16 %v519
      %v1616 = vunpack.c.l.b16 %v520
      %v1617 = vunpack.c.l.b16 %v521
      %v1618 = vunpack.c.l.b16 %v522
      %v1619 = vunpack.c.l.b16 %v523
      %v1620 = vunpack.c.l.b16 %v524
      %v1621 = vunpack.c.l.b16 %v525
      %v1622 = vunpack.c.l.b16 %v526
      %v1623 = vunpack.c.l.b16 %v527
      %v1624 = vunpack.c.l.b16 %v528
      %v1625 = vunpack.c.l.b16 %v529
      %v1626 = vunpack.c.l.b16 %v530
      %v1627 = vunpack.c.l.b16 %v531
      %v1628 = vunpack.c.l.b16 %v532
      %v1629 = vunpack.c.l.b16 %v533
      %v1630 = vunpack.c.l.b16 %v534
      %v1631 = vpack.c.b16 %v1525, %v1524
      %v1632 = vpack.c.b16 %v1527, %v1526
      %v1633 = vpack.c.b16 %v1529, %v1528
      %v1634 = vpack.c.b16 %v1531, %v1530
      %v1635 = vpack.c.b16 %v1533, %v1532
      %v1636 = vpack.c.b16 %v1535, %v1534
      %v1637 = vpack.c.b16 %v1537, %v1536
      %v1638 = vpack.c.b16 %v1539, %v1538
      %v1639 = vpack.c.b16 %v1541, %v1540
      %v1640 = vpack.c.b16 %v1543, %v1542
      %v1641 = vpack.c.b16 %v1545, %v1544
      %v1642 = vpack.c.b16 %v1547, %v1546
      %v1643 = vpack.c.b16 %v1549, %v1548
      %v1644 = vpack.c.b16 %v1551, %v1550
      %v1645 = vpack.c.b16 %v1553, %v1552
      %v1646 = vpack.c.b16 %v1555, %v1554
      %v1647 = vpack.c.b16 %v1557, %v1556
      %v1648 = vpack.c.b16 %v1559, %v1558
      %v1649 = vpack.c.b16 %v1561, %v1560
      %v1650 = vpack.c.b16 %v1563, %v1562
      %v1651 = vpack.c.b16 %v1565, %v1564
      %v1652 = vpack.c.b16 %v1567, %v1566
      %v1653 = vpack.c.b16 %v1569, %v1568
      %v1654 = vpack.c.b16 %v1571, %v1570
      %v1655 = vpack.c.b16 %v1573, %v1572
      %v1656 = vpack.c.b16 %v1575, %v1574
      %v1657 = vpack.c.b16 %v1577, %v1576
      %v1658 = vpack.c.b16 %v1579, %v1578
      %v1659 = vpack.c.b16 %v1581, %v1580
      %v1660 = vpack.c.b16 %v1583, %v1582
      %v1661 = vpack.c.b16 %v1585, %v1584
      %v1662 = vpack.c.b16 %v1587, %v1586
      %v1663 = vpack.c.b16 %v1589, %v1588
      %v1664 = vpack.c.b16 %v1591, %v1590
      %v1665 = vpack.c.b16 %v1593, %v1592
      %v1666 = vpack.c.b16 %v1595, %v1594
      %v1667 = vpack.c.b16 %v1597, %v1596
      %v1668 = vpack.c.b16 %v1599, %v1598
      %v1669 = vpack.c.b16 %v1601, %v1600
      %v1670 = vpack.c.b16 %v1603, %v1602
      %v1671 = vpack.c.b16 %v1605, %v1604
      %v1672 = vpack.c.b16 %v1607, %v1606
      %v1673 = vpack.c.b16 %v1609, %v1608
      %v1674 = vpack.c.b16 %v1611, %v1610
      %v1675 = vpack.c.b16 %v1613, %v1612
      %v1676 = vpack.c.b16 %v1615, %v1614
      %v1677 = vpack.c.b16 %v1617, %v1616
      %v1678 = vpack.c.b16 %v1619, %v1618
      %v1679 = vpack.c.b16 %v1621, %v1620
      %v1680 = vpack.c.b16 %v1623, %v1622
      %v1681 = vpack.c.b16 %v1625, %v1624
      %v1682 = vpack.c.b16 %v1627, %v1626
      %v1683 = vpack.c.b16 %v1629, %v1628
      %v1684 = vpack.c.b16 %v1630, %v1630
      %vm1738 = vcmask 670720
      %v1740 = vsel %vm1738, %v1098, 0
      %v1743 = vsel %vm1738, %v1105, 0
      %v1746 = vsel %vm1738, %v1112, 0
      %v1749 = vsel %vm1738, %v1119, 0
      %v1752 = vsel %vm1738, %v1126, 0
      %v1755 = vsel %vm1738, %v1133, 0
      %v1758 = vsel %vm1738, %v1140, 0
      %v1761 = vsel %vm1738, %v1147, 0
      %v1764 = vsel %vm1738, %v1154, 0
      %v1767 = vsel %vm1738, %v1161, 0
      %v1770 = vsel %vm1738, %v1168, 0
      %v1773 = vsel %vm1738, %v1175, 0
      %v1776 = vsel %vm1738, %v1182, 0
      %v1779 = vsel %vm1738, %v1189, 0
      %v1782 = vsel %vm1738, %v1196, 0
      %v1785 = vsel %vm1738, %v1203, 0
      %v1788 = vsel %vm1738, %v1210, 0
      %v1791 = vsel %vm1738, %v1217, 0
      %v1794 = vsel %vm1738, %v1224, 0
      %v1797 = vsel %vm1738, %v1231, 0
      %v1800 = vsel %vm1738, %v1238, 0
      %v1803 = vsel %vm1738, %v1245, 0
      %v1806 = vsel %vm1738, %v1252, 0
      %v1809 = vsel %vm1738, %v1259, 0
      %v1812 = vsel %vm1738, %v1266, 0
      %vm1814 = vcmask 1040384
      %v1816 = vsel %vm1814, %v1684, 0
      %1818 = vmatprep.subr.bf16.mxu0 0
      %1819 = vmatpush1.bf16.msra.mxu0 %v1631
      %1820 = vmatprep.subr.bf16.mxu0 0
      %1821 = vmatpush1.bf16.msra.mxu0 %v1632
      %1822 = vmatprep.subr.bf16.mxu0 0
      %1823 = vmatpush1.bf16.msra.mxu0 %v1633
      %1824 = vmatprep.subr.bf16.mxu0 0
      %1825 = vmatpush1.bf16.msra.mxu0 %v1634
      %1826 = vmatprep.subr.bf16.mxu0 0
      %1827 = vmatpush1.bf16.msra.mxu0 %v1635
      %1828 = vmatprep.subr.bf16.mxu0 0
      %1829 = vmatpush1.bf16.msra.mxu0 %v1636
      %1830 = vmatprep.subr.bf16.mxu0 0
      %1831 = vmatpush1.bf16.msra.mxu0 %v1637
      %1832 = vmatprep.subr.bf16.mxu0 0
      %1833 = vmatpush1.bf16.msra.mxu0 %v1638
      %1834 = vmatprep.subr.bf16.mxu0 0
      %1835 = vmatpush1.bf16.msra.mxu0 %v1639
      %1836 = vmatprep.subr.bf16.mxu0 0
      %1837 = vmatpush1.bf16.msra.mxu0 %v1640
      %1838 = vmatprep.subr.bf16.mxu0 0
      %1839 = vmatpush1.bf16.msra.mxu0 %v1641
      %1840 = vmatprep.subr.bf16.mxu0 0
      %1841 = vmatpush1.bf16.msra.mxu0 %v1642
      %1842 = vmatprep.subr.bf16.mxu0 0
      %1843 = vmatpush1.bf16.msra.mxu0 %v1643
      %1844 = vmatprep.subr.bf16.mxu0 0
      %1845 = vmatpush1.bf16.msra.mxu0 %v1644
      %1846 = vmatprep.subr.bf16.mxu0 0
      %1847 = vmatpush1.bf16.msra.mxu0 %v1645
      %1848 = vmatprep.subr.bf16.mxu0 0
      %1849 = vmatpush1.bf16.msra.mxu0 %v1646
      %1850 = vmatprep.mubr.bf16.mxu0 %v1093
      %1851 = vmatmul.mubr.bf16.gmra.mrb[0].mxu0 %v1092
      %v1852 = vpop.f32.mrb[0].mxu0
      %v1853 = vadd.f32 %v540, %v1852
      %v1854 = vpop.f32.mrb[0].mxu0
      %v1855 = vpop.f32.mrb[0].mxu0
      %v1856 = vadd.f32 %v540, %v1855
      %v1857 = vpop.f32.mrb[0].mxu0
      %1858 = vmatprep.mubr.bf16.mxu0 %v1100
      %1859 = vmatmul.mubr.bf16.gmra.mrb[0].mxu0 %v1099
      %v1860 = vpop.f32.mrb[0].mxu0
      %v1861 = vadd.f32 %v540, %v1860
      %v1862 = vpop.f32.mrb[0].mxu0
      %v1863 = vpop.f32.mrb[0].mxu0
      %v1864 = vadd.f32 %v540, %v1863
      %v1865 = vpop.f32.mrb[0].mxu0
      %1866 = vmatprep.mubr.bf16.mxu0 %v1107
      %1867 = vmatmul.mubr.bf16.gmra.mrb[0].mxu0 %v1106
      %v1868 = vpop.f32.mrb[0].mxu0
      %v1869 = vadd.f32 %v540, %v1868
      %v1870 = vpop.f32.mrb[0].mxu0
      %v1871 = vpop.f32.mrb[0].mxu0
      %v1872 = vadd.f32 %v540, %v1871
      %v1873 = vpop.f32.mrb[0].mxu0
      %1874 = vmatprep.mubr.bf16.mxu0 %v1114
      %1875 = vmatmul.mubr.bf16.gmra.mrb[0].mxu0 %v1113
      %v1876 = vpop.f32.mrb[0].mxu0
      %v1877 = vadd.f32 %v540, %v1876
      %v1878 = vpop.f32.mrb[0].mxu0
      %v1879 = vpop.f32.mrb[0].mxu0
      %v1880 = vadd.f32 %v540, %v1879
      %v1881 = vpop.f32.mrb[0].mxu0
      %1882 = vmatprep.mubr.bf16.mxu0 %v1121
      %1883 = vmatmul.mubr.bf16.gmra.mrb[0].mxu0 %v1120
      %v1884 = vpop.f32.mrb[0].mxu0
      %v1885 = vadd.f32 %v540, %v1884
      %v1886 = vpop.f32.mrb[0].mxu0
      %v1887 = vpop.f32.mrb[0].mxu0
      %v1888 = vadd.f32 %v540, %v1887
      %v1889 = vpop.f32.mrb[0].mxu0
      %1890 = vmatprep.mubr.bf16.mxu0 %v1128
      %1891 = vmatmul.mubr.bf16.gmra.mrb[0].mxu0 %v1127
      %v1892 = vpop.f32.mrb[0].mxu0
      %v1893 = vadd.f32 %v540, %v1892
      %v1894 = vpop.f32.mrb[0].mxu0
      %v1895 = vpop.f32.mrb[0].mxu0
      %v1896 = vadd.f32 %v540, %v1895
      %v1897 = vpop.f32.mrb[0].mxu0
      %1898 = vmatprep.mubr.bf16.mxu0 %v1135
      %1899 = vmatmul.mubr.bf16.gmra.mrb[0].mxu0 %v1134
      %v1900 = vpop.f32.mrb[0].mxu0
      %v1901 = vadd.f32 %v540, %v1900
      %v1902 = vpop.f32.mrb[0].mxu0
      %v1903 = vpop.f32.mrb[0].mxu0
      %v1904 = vadd.f32 %v540, %v1903
      %v1905 = vpop.f32.mrb[0].mxu0
      %1906 = vmatprep.mubr.bf16.mxu0 %v1142
      %1907 = vmatmul.mubr.bf16.gmra.mrb[0].mxu0 %v1141
      %v1908 = vpop.f32.mrb[0].mxu0
      %v1909 = vadd.f32 %v540, %v1908
      %v1910 = vpop.f32.mrb[0].mxu0
      %v1911 = vpop.f32.mrb[0].mxu0
      %v1912 = vadd.f32 %v540, %v1911
      %v1913 = vpop.f32.mrb[0].mxu0
      %1914 = vmatprep.mubr.bf16.mxu0 %v1149
      %1915 = vmatmul.mubr.bf16.gmra.mrb[0].mxu0 %v1148
      %v1916 = vpop.f32.mrb[0].mxu0
      %v1917 = vadd.f32 %v540, %v1916
      %v1918 = vpop.f32.mrb[0].mxu0
      %v1919 = vpop.f32.mrb[0].mxu0
      %v1920 = vadd.f32 %v540, %v1919
      %v1921 = vpop.f32.mrb[0].mxu0
      %1922 = vmatprep.mubr.bf16.mxu0 %v1156
      %1923 = vmatmul.mubr.bf16.gmra.mrb[0].mxu0 %v1155
      %v1924 = vpop.f32.mrb[0].mxu0
      %v1925 = vadd.f32 %v540, %v1924
      %v1926 = vpop.f32.mrb[0].mxu0
      %v1927 = vpop.f32.mrb[0].mxu0
      %v1928 = vadd.f32 %v540, %v1927
      %v1929 = vpop.f32.mrb[0].mxu0
      %1930 = vmatprep.mubr.bf16.mxu0 %v1163
      %1931 = vmatmul.mubr.bf16.gmra.mrb[0].mxu0 %v1162
      %v1932 = vpop.f32.mrb[0].mxu0
      %v1933 = vadd.f32 %v540, %v1932
      %v1934 = vpop.f32.mrb[0].mxu0
      %v1935 = vpop.f32.mrb[0].mxu0
      %v1936 = vadd.f32 %v540, %v1935
      %v1937 = vpop.f32.mrb[0].mxu0
      %1938 = vmatprep.mubr.bf16.mxu0 %v1170
      %1939 = vmatmul.mubr.bf16.gmra.mrb[0].mxu0 %v1169
      %v1940 = vpop.f32.mrb[0].mxu0
      %v1941 = vadd.f32 %v540, %v1940
      %v1942 = vpop.f32.mrb[0].mxu0
      %v1943 = vpop.f32.mrb[0].mxu0
      %v1944 = vadd.f32 %v540, %v1943
      %v1945 = vpop.f32.mrb[0].mxu0
      %1946 = vmatprep.mubr.bf16.mxu0 %v1177
      %1947 = vmatmul.mubr.bf16.gmra.mrb[0].mxu0 %v1176
      %v1948 = vpop.f32.mrb[0].mxu0
      %v1949 = vadd.f32 %v540, %v1948
      %v1950 = vpop.f32.mrb[0].mxu0
      %v1951 = vpop.f32.mrb[0].mxu0
      %v1952 = vadd.f32 %v540, %v1951
      %v1953 = vpop.f32.mrb[0].mxu0
      %1954 = vmatprep.mubr.bf16.mxu0 %v1184
      %1955 = vmatmul.mubr.bf16.gmra.mrb[0].mxu0 %v1183
      %v1956 = vpop.f32.mrb[0].mxu0
      %v1957 = vadd.f32 %v540, %v1956
      %v1958 = vpop.f32.mrb[0].mxu0
      %v1959 = vpop.f32.mrb[0].mxu0
      %v1960 = vadd.f32 %v540, %v1959
      %v1961 = vpop.f32.mrb[0].mxu0
      %1962 = vmatprep.mubr.bf16.mxu0 %v1191
      %1963 = vmatmul.mubr.bf16.gmra.mrb[0].mxu0 %v1190
      %v1964 = vpop.f32.mrb[0].mxu0
      %v1965 = vadd.f32 %v540, %v1964
      %v1966 = vpop.f32.mrb[0].mxu0
      %v1967 = vpop.f32.mrb[0].mxu0
      %v1968 = vadd.f32 %v540, %v1967
      %v1969 = vpop.f32.mrb[0].mxu0
      %1970 = vmatprep.mubr.bf16.mxu0 %v1198
      %1971 = vmatmul.mubr.bf16.gmra.mrb[0].mxu0 %v1197
      %v1972 = vpop.f32.mrb[0].mxu0
      %v1973 = vadd.f32 %v540, %v1972
      %v1974 = vpop.f32.mrb[0].mxu0
      %v1975 = vpop.f32.mrb[0].mxu0
      %v1976 = vadd.f32 %v540, %v1975
      %v1977 = vpop.f32.mrb[0].mxu0
      %1978 = vmatprep.mubr.bf16.mxu0 %v1205
      %1979 = vmatmul.mubr.bf16.gmra.mrb[0].mxu0 %v1204
      %v1980 = vpop.f32.mrb[0].mxu0
      %v1981 = vadd.f32 %v540, %v1980
      %v1982 = vpop.f32.mrb[0].mxu0
      %v1983 = vpop.f32.mrb[0].mxu0
      %v1984 = vadd.f32 %v540, %v1983
      %v1985 = vpop.f32.mrb[0].mxu0
      %1986 = vmatprep.mubr.bf16.mxu0 %v1212
      %1987 = vmatmul.mubr.bf16.gmra.mrb[0].mxu0 %v1211
      %v1988 = vpop.f32.mrb[0].mxu0
      %v1989 = vadd.f32 %v540, %v1988
      %v1990 = vpop.f32.mrb[0].mxu0
      %v1991 = vpop.f32.mrb[0].mxu0
      %v1992 = vadd.f32 %v540, %v1991
      %v1993 = vpop.f32.mrb[0].mxu0
      %1994 = vmatprep.mubr.bf16.mxu0 %v1219
      %1995 = vmatmul.mubr.bf16.gmra.mrb[0].mxu0 %v1218
      %v1996 = vpop.f32.mrb[0].mxu0
      %v1997 = vadd.f32 %v540, %v1996
      %v1998 = vpop.f32.mrb[0].mxu0
      %v1999 = vpop.f32.mrb[0].mxu0
      %v2000 = vadd.f32 %v540, %v1999
      %v2001 = vpop.f32.mrb[0].mxu0
      %2002 = vmatprep.mubr.bf16.mxu0 %v1226
      %2003 = vmatmul.mubr.bf16.gmra.mrb[0].mxu0 %v1225
      %v2004 = vpop.f32.mrb[0].mxu0
      %v2005 = vadd.f32 %v540, %v2004
      %v2006 = vpop.f32.mrb[0].mxu0
      %v2007 = vpop.f32.mrb[0].mxu0
      %v2008 = vadd.f32 %v540, %v2007
      %v2009 = vpop.f32.mrb[0].mxu0
      %2010 = vmatprep.mubr.bf16.mxu0 %v1233
      %2011 = vmatmul.mubr.bf16.gmra.mrb[0].mxu0 %v1232
      %v2012 = vpop.f32.mrb[0].mxu0
      %v2013 = vadd.f32 %v540, %v2012
      %v2014 = vpop.f32.mrb[0].mxu0
      %v2015 = vpop.f32.mrb[0].mxu0
      %v2016 = vadd.f32 %v540, %v2015
      %v2017 = vpop.f32.mrb[0].mxu0
      %2018 = vmatprep.mubr.bf16.mxu0 %v1240
      %2019 = vmatmul.mubr.bf16.gmra.mrb[0].mxu0 %v1239
      %v2020 = vpop.f32.mrb[0].mxu0
      %v2021 = vadd.f32 %v540, %v2020
      %v2022 = vpop.f32.mrb[0].mxu0
      %v2023 = vpop.f32.mrb[0].mxu0
      %v2024 = vadd.f32 %v540, %v2023
      %v2025 = vpop.f32.mrb[0].mxu0
      %2026 = vmatprep.mubr.bf16.mxu0 %v1247
      %2027 = vmatmul.mubr.bf16.gmra.mrb[0].mxu0 %v1246
      %v2028 = vpop.f32.mrb[0].mxu0
      %v2029 = vadd.f32 %v540, %v2028
      %v2030 = vpop.f32.mrb[0].mxu0
      %v2031 = vpop.f32.mrb[0].mxu0
      %v2032 = vadd.f32 %v540, %v2031
      %v2033 = vpop.f32.mrb[0].mxu0
      %2034 = vmatprep.mubr.bf16.mxu0 %v1254
      %2035 = vmatmul.mubr.bf16.gmra.mrb[0].mxu0 %v1253
      %v2036 = vpop.f32.mrb[0].mxu0
      %v2037 = vadd.f32 %v540, %v2036
      %v2038 = vpop.f32.mrb[0].mxu0
      %v2039 = vpop.f32.mrb[0].mxu0
      %v2040 = vadd.f32 %v540, %v2039
      %v2041 = vpop.f32.mrb[0].mxu0
      %2042 = vmatprep.mubr.bf16.mxu0 %v1261
      %2043 = vmatmul.mubr.bf16.gmra.mrb[0].mxu0 %v1260
      %v2044 = vpop.f32.mrb[0].mxu0
      %v2045 = vadd.f32 %v540, %v2044
      %v2046 = vpop.f32.mrb[0].mxu0
      %v2047 = vpop.f32.mrb[0].mxu0
      %v2048 = vadd.f32 %v540, %v2047
      %v2049 = vpop.f32.mrb[0].mxu0
      %2050 = vdwg.mxu0
      %2051 = vmatprep.subr.bf16.mxu0 0
      %2052 = vmatpush1.bf16.msra.mxu0 %v1647
      %2053 = vmatprep.subr.bf16.mxu0 0
      %2054 = vmatpush1.bf16.msra.mxu0 %v1648
      %2055 = vmatprep.subr.bf16.mxu0 0
      %2056 = vmatpush1.bf16.msra.mxu0 %v1649
      %2057 = vmatprep.subr.bf16.mxu0 0
      %2058 = vmatpush1.bf16.msra.mxu0 %v1650
      %2059 = vmatprep.subr.bf16.mxu0 0
      %2060 = vmatpush1.bf16.msra.mxu0 %v1651
      %2061 = vmatprep.subr.bf16.mxu0 0
      %2062 = vmatpush1.bf16.msra.mxu0 %v1652
      %2063 = vmatprep.subr.bf16.mxu0 0
      %2064 = vmatpush1.bf16.msra.mxu0 %v1653
      %2065 = vmatprep.subr.bf16.mxu0 0
      %2066 = vmatpush1.bf16.msra.mxu0 %v1654
      %2067 = vmatprep.subr.bf16.mxu0 0
      %2068 = vmatpush1.bf16.msra.mxu0 %v1655
      %2069 = vmatprep.subr.bf16.mxu0 0
      %2070 = vmatpush1.bf16.msra.mxu0 %v1656
      %2071 = vmatprep.subr.bf16.mxu0 0
      %2072 = vmatpush1.bf16.msra.mxu0 %v1657
      %2073 = vmatprep.subr.bf16.mxu0 0
      %2074 = vmatpush1.bf16.msra.mxu0 %v1658
      %2075 = vmatprep.subr.bf16.mxu0 0
      %2076 = vmatpush1.bf16.msra.mxu0 %v1659
      %2077 = vmatprep.subr.bf16.mxu0 0
      %2078 = vmatpush1.bf16.msra.mxu0 %v1660
      %2079 = vmatprep.subr.bf16.mxu0 0
      %2080 = vmatpush1.bf16.msra.mxu0 %v1661
      %2081 = vmatprep.subr.bf16.mxu0 0
      %2082 = vmatpush1.bf16.msra.mxu0 %v1662
      %2083 = vmatprep.mubr.bf16.mxu0 %v1095
      %2084 = vmatmul.mubr.bf16.gmra.mrb[0].mxu0 %v1094
      %v2085 = vpop.f32.mrb[0].mxu0
      %v2086 = vadd.f32 %v1853, %v2085
      %v2087 = vpop.f32.mrb[0].mxu0
      %v2088 = vpop.f32.mrb[0].mxu0
      %v2089 = vadd.f32 %v1856, %v2088
      %v2090 = vpop.f32.mrb[0].mxu0
      %2091 = vmatprep.mubr.bf16.mxu0 %v1102
      %2092 = vmatmul.mubr.bf16.gmra.mrb[0].mxu0 %v1101
      %v2093 = vpop.f32.mrb[0].mxu0
      %v2094 = vadd.f32 %v1861, %v2093
      %v2095 = vpop.f32.mrb[0].mxu0
      %v2096 = vpop.f32.mrb[0].mxu0
      %v2097 = vadd.f32 %v1864, %v2096
      %v2098 = vpop.f32.mrb[0].mxu0
      %2099 = vmatprep.mubr.bf16.mxu0 %v1109
      %2100 = vmatmul.mubr.bf16.gmra.mrb[0].mxu0 %v1108
      %v2101 = vpop.f32.mrb[0].mxu0
      %v2102 = vadd.f32 %v1869, %v2101
      %v2103 = vpop.f32.mrb[0].mxu0
      %v2104 = vpop.f32.mrb[0].mxu0
      %v2105 = vadd.f32 %v1872, %v2104
      %v2106 = vpop.f32.mrb[0].mxu0
      %2107 = vmatprep.mubr.bf16.mxu0 %v1116
      %2108 = vmatmul.mubr.bf16.gmra.mrb[0].mxu0 %v1115
      %v2109 = vpop.f32.mrb[0].mxu0
      %v2110 = vadd.f32 %v1877, %v2109
      %v2111 = vpop.f32.mrb[0].mxu0
      %v2112 = vpop.f32.mrb[0].mxu0
      %v2113 = vadd.f32 %v1880, %v2112
      %v2114 = vpop.f32.mrb[0].mxu0
      %2115 = vmatprep.mubr.bf16.mxu0 %v1123
      %2116 = vmatmul.mubr.bf16.gmra.mrb[0].mxu0 %v1122
      %v2117 = vpop.f32.mrb[0].mxu0
      %v2118 = vadd.f32 %v1885, %v2117
      %v2119 = vpop.f32.mrb[0].mxu0
      %v2120 = vpop.f32.mrb[0].mxu0
      %v2121 = vadd.f32 %v1888, %v2120
      %v2122 = vpop.f32.mrb[0].mxu0
      %2123 = vmatprep.mubr.bf16.mxu0 %v1130
      %2124 = vmatmul.mubr.bf16.gmra.mrb[0].mxu0 %v1129
      %v2125 = vpop.f32.mrb[0].mxu0
      %v2126 = vadd.f32 %v1893, %v2125
      %v2127 = vpop.f32.mrb[0].mxu0
      %v2128 = vpop.f32.mrb[0].mxu0
      %v2129 = vadd.f32 %v1896, %v2128
      %v2130 = vpop.f32.mrb[0].mxu0
      %2131 = vmatprep.mubr.bf16.mxu0 %v1137
      %2132 = vmatmul.mubr.bf16.gmra.mrb[0].mxu0 %v1136
      %v2133 = vpop.f32.mrb[0].mxu0
      %v2134 = vadd.f32 %v1901, %v2133
      %v2135 = vpop.f32.mrb[0].mxu0
      %v2136 = vpop.f32.mrb[0].mxu0
      %v2137 = vadd.f32 %v1904, %v2136
      %v2138 = vpop.f32.mrb[0].mxu0
      %2139 = vmatprep.mubr.bf16.mxu0 %v1144
      %2140 = vmatmul.mubr.bf16.gmra.mrb[0].mxu0 %v1143
      %v2141 = vpop.f32.mrb[0].mxu0
      %v2142 = vadd.f32 %v1909, %v2141
      %v2143 = vpop.f32.mrb[0].mxu0
      %v2144 = vpop.f32.mrb[0].mxu0
      %v2145 = vadd.f32 %v1912, %v2144
      %v2146 = vpop.f32.mrb[0].mxu0
      %2147 = vmatprep.mubr.bf16.mxu0 %v1151
      %2148 = vmatmul.mubr.bf16.gmra.mrb[0].mxu0 %v1150
      %v2149 = vpop.f32.mrb[0].mxu0
      %v2150 = vadd.f32 %v1917, %v2149
      %v2151 = vpop.f32.mrb[0].mxu0
      %v2152 = vpop.f32.mrb[0].mxu0
      %v2153 = vadd.f32 %v1920, %v2152
      %v2154 = vpop.f32.mrb[0].mxu0
      %2155 = vmatprep.mubr.bf16.mxu0 %v1158
      %2156 = vmatmul.mubr.bf16.gmra.mrb[0].mxu0 %v1157
      %v2157 = vpop.f32.mrb[0].mxu0
      %v2158 = vadd.f32 %v1925, %v2157
      %v2159 = vpop.f32.mrb[0].mxu0
      %v2160 = vpop.f32.mrb[0].mxu0
      %v2161 = vadd.f32 %v1928, %v2160
      %v2162 = vpop.f32.mrb[0].mxu0
      %2163 = vmatprep.mubr.bf16.mxu0 %v1165
      %2164 = vmatmul.mubr.bf16.gmra.mrb[0].mxu0 %v1164
      %v2165 = vpop.f32.mrb[0].mxu0
      %v2166 = vadd.f32 %v1933, %v2165
      %v2167 = vpop.f32.mrb[0].mxu0
      %v2168 = vpop.f32.mrb[0].mxu0
      %v2169 = vadd.f32 %v1936, %v2168
      %v2170 = vpop.f32.mrb[0].mxu0
      %2171 = vmatprep.mubr.bf16.mxu0 %v1172
      %2172 = vmatmul.mubr.bf16.gmra.mrb[0].mxu0 %v1171
      %v2173 = vpop.f32.mrb[0].mxu0
      %v2174 = vadd.f32 %v1941, %v2173
      %v2175 = vpop.f32.mrb[0].mxu0
      %v2176 = vpop.f32.mrb[0].mxu0
      %v2177 = vadd.f32 %v1944, %v2176
      %v2178 = vpop.f32.mrb[0].mxu0
      %2179 = vmatprep.mubr.bf16.mxu0 %v1179
      %2180 = vmatmul.mubr.bf16.gmra.mrb[0].mxu0 %v1178
      %v2181 = vpop.f32.mrb[0].mxu0
      %v2182 = vadd.f32 %v1949, %v2181
      %v2183 = vpop.f32.mrb[0].mxu0
      %v2184 = vpop.f32.mrb[0].mxu0
      %v2185 = vadd.f32 %v1952, %v2184
      %v2186 = vpop.f32.mrb[0].mxu0
      %2187 = vmatprep.mubr.bf16.mxu0 %v1186
      %2188 = vmatmul.mubr.bf16.gmra.mrb[0].mxu0 %v1185
      %v2189 = vpop.f32.mrb[0].mxu0
      %v2190 = vadd.f32 %v1957, %v2189
      %v2191 = vpop.f32.mrb[0].mxu0
      %v2192 = vpop.f32.mrb[0].mxu0
      %v2193 = vadd.f32 %v1960, %v2192
      %v2194 = vpop.f32.mrb[0].mxu0
      %2195 = vmatprep.mubr.bf16.mxu0 %v1193
      %2196 = vmatmul.mubr.bf16.gmra.mrb[0].mxu0 %v1192
      %v2197 = vpop.f32.mrb[0].mxu0
      %v2198 = vadd.f32 %v1965, %v2197
      %v2199 = vpop.f32.mrb[0].mxu0
      %v2200 = vpop.f32.mrb[0].mxu0
      %v2201 = vadd.f32 %v1968, %v2200
      %v2202 = vpop.f32.mrb[0].mxu0
      %2203 = vmatprep.mubr.bf16.mxu0 %v1200
      %2204 = vmatmul.mubr.bf16.gmra.mrb[0].mxu0 %v1199
      %v2205 = vpop.f32.mrb[0].mxu0
      %v2206 = vadd.f32 %v1973, %v2205
      %v2207 = vpop.f32.mrb[0].mxu0
      %v2208 = vpop.f32.mrb[0].mxu0
      %v2209 = vadd.f32 %v1976, %v2208
      %v2210 = vpop.f32.mrb[0].mxu0
      %2211 = vmatprep.mubr.bf16.mxu0 %v1207
      %2212 = vmatmul.mubr.bf16.gmra.mrb[0].mxu0 %v1206
      %v2213 = vpop.f32.mrb[0].mxu0
      %v2214 = vadd.f32 %v1981, %v2213
      %v2215 = vpop.f32.mrb[0].mxu0
      %v2216 = vpop.f32.mrb[0].mxu0
      %v2217 = vadd.f32 %v1984, %v2216
      %v2218 = vpop.f32.mrb[0].mxu0
      %2219 = vmatprep.mubr.bf16.mxu0 %v1214
      %2220 = vmatmul.mubr.bf16.gmra.mrb[0].mxu0 %v1213
      %v2221 = vpop.f32.mrb[0].mxu0
      %v2222 = vadd.f32 %v1989, %v2221
      %v2223 = vpop.f32.mrb[0].mxu0
      %v2224 = vpop.f32.mrb[0].mxu0
      %v2225 = vadd.f32 %v1992, %v2224
      %v2226 = vpop.f32.mrb[0].mxu0
      %2227 = vmatprep.mubr.bf16.mxu0 %v1221
      %2228 = vmatmul.mubr.bf16.gmra.mrb[0].mxu0 %v1220
      %v2229 = vpop.f32.mrb[0].mxu0
      %v2230 = vadd.f32 %v1997, %v2229
      %v2231 = vpop.f32.mrb[0].mxu0
      %v2232 = vpop.f32.mrb[0].mxu0
      %v2233 = vadd.f32 %v2000, %v2232
      %v2234 = vpop.f32.mrb[0].mxu0
      %2235 = vmatprep.mubr.bf16.mxu0 %v1228
      %2236 = vmatmul.mubr.bf16.gmra.mrb[0].mxu0 %v1227
      %v2237 = vpop.f32.mrb[0].mxu0
      %v2238 = vadd.f32 %v2005, %v2237
      %v2239 = vpop.f32.mrb[0].mxu0
      %v2240 = vpop.f32.mrb[0].mxu0
      %v2241 = vadd.f32 %v2008, %v2240
      %v2242 = vpop.f32.mrb[0].mxu0
      %2243 = vmatprep.mubr.bf16.mxu0 %v1235
      %2244 = vmatmul.mubr.bf16.gmra.mrb[0].mxu0 %v1234
      %v2245 = vpop.f32.mrb[0].mxu0
      %v2246 = vadd.f32 %v2013, %v2245
      %v2247 = vpop.f32.mrb[0].mxu0
      %v2248 = vpop.f32.mrb[0].mxu0
      %v2249 = vadd.f32 %v2016, %v2248
      %v2250 = vpop.f32.mrb[0].mxu0
      %2251 = vmatprep.mubr.bf16.mxu0 %v1242
      %2252 = vmatmul.mubr.bf16.gmra.mrb[0].mxu0 %v1241
      %v2253 = vpop.f32.mrb[0].mxu0
      %v2254 = vadd.f32 %v2021, %v2253
      %v2255 = vpop.f32.mrb[0].mxu0
      %v2256 = vpop.f32.mrb[0].mxu0
      %v2257 = vadd.f32 %v2024, %v2256
      %v2258 = vpop.f32.mrb[0].mxu0
      %2259 = vmatprep.mubr.bf16.mxu0 %v1249
      %2260 = vmatmul.mubr.bf16.gmra.mrb[0].mxu0 %v1248
      %v2261 = vpop.f32.mrb[0].mxu0
      %v2262 = vadd.f32 %v2029, %v2261
      %v2263 = vpop.f32.mrb[0].mxu0
      %v2264 = vpop.f32.mrb[0].mxu0
      %v2265 = vadd.f32 %v2032, %v2264
      %v2266 = vpop.f32.mrb[0].mxu0
      %2267 = vmatprep.mubr.bf16.mxu0 %v1256
      %2268 = vmatmul.mubr.bf16.gmra.mrb[0].mxu0 %v1255
      %v2269 = vpop.f32.mrb[0].mxu0
      %v2270 = vadd.f32 %v2037, %v2269
      %v2271 = vpop.f32.mrb[0].mxu0
      %v2272 = vpop.f32.mrb[0].mxu0
      %v2273 = vadd.f32 %v2040, %v2272
      %v2274 = vpop.f32.mrb[0].mxu0
      %2275 = vmatprep.mubr.bf16.mxu0 %v1263
      %2276 = vmatmul.mubr.bf16.gmra.mrb[0].mxu0 %v1262
      %v2277 = vpop.f32.mrb[0].mxu0
      %v2278 = vadd.f32 %v2045, %v2277
      %v2279 = vpop.f32.mrb[0].mxu0
      %v2280 = vpop.f32.mrb[0].mxu0
      %v2281 = vadd.f32 %v2048, %v2280
      %v2282 = vpop.f32.mrb[0].mxu0
      %2283 = vdwg.mxu0
      %2284 = vmatprep.subr.bf16.mxu0 0
      %2285 = vmatpush1.bf16.msra.mxu0 %v1663
      %2286 = vmatprep.subr.bf16.mxu0 0
      %2287 = vmatpush1.bf16.msra.mxu0 %v1664
      %2288 = vmatprep.subr.bf16.mxu0 0
      %2289 = vmatpush1.bf16.msra.mxu0 %v1665
      %2290 = vmatprep.subr.bf16.mxu0 0
      %2291 = vmatpush1.bf16.msra.mxu0 %v1666
      %2292 = vmatprep.subr.bf16.mxu0 0
      %2293 = vmatpush1.bf16.msra.mxu0 %v1667
      %2294 = vmatprep.subr.bf16.mxu0 0
      %2295 = vmatpush1.bf16.msra.mxu0 %v1668
      %2296 = vmatprep.subr.bf16.mxu0 0
      %2297 = vmatpush1.bf16.msra.mxu0 %v1669
      %2298 = vmatprep.subr.bf16.mxu0 0
      %2299 = vmatpush1.bf16.msra.mxu0 %v1670
      %2300 = vmatprep.subr.bf16.mxu0 0
      %2301 = vmatpush1.bf16.msra.mxu0 %v1671
      %2302 = vmatprep.subr.bf16.mxu0 0
      %2303 = vmatpush1.bf16.msra.mxu0 %v1672
      %2304 = vmatprep.subr.bf16.mxu0 0
      %2305 = vmatpush1.bf16.msra.mxu0 %v1673
      %2306 = vmatprep.subr.bf16.mxu0 0
      %2307 = vmatpush1.bf16.msra.mxu0 %v1674
      %2308 = vmatprep.subr.bf16.mxu0 0
      %2309 = vmatpush1.bf16.msra.mxu0 %v1675
      %2310 = vmatprep.subr.bf16.mxu0 0
      %2311 = vmatpush1.bf16.msra.mxu0 %v1676
      %2312 = vmatprep.subr.bf16.mxu0 0
      %2313 = vmatpush1.bf16.msra.mxu0 %v1677
      %2314 = vmatprep.subr.bf16.mxu0 0
      %2315 = vmatpush1.bf16.msra.mxu0 %v1678
      %2316 = vmatprep.mubr.bf16.mxu0 %v1097
      %2317 = vmatmul.mubr.bf16.gmra.mrb[0].mxu0 %v1096
      %v2318 = vpop.f32.mrb[0].mxu0
      %v2319 = vadd.f32 %v2086, %v2318
      %v2320 = vpop.f32.mrb[0].mxu0
      %v2321 = vpop.f32.mrb[0].mxu0
      %v2322 = vadd.f32 %v2089, %v2321
      %v2323 = vpop.f32.mrb[0].mxu0
      %2324 = vmatprep.mubr.bf16.mxu0 %v1104
      %2325 = vmatmul.mubr.bf16.gmra.mrb[0].mxu0 %v1103
      %v2326 = vpop.f32.mrb[0].mxu0
      %v2327 = vadd.f32 %v2094, %v2326
      %v2328 = vpop.f32.mrb[0].mxu0
      %v2329 = vpop.f32.mrb[0].mxu0
      %v2330 = vadd.f32 %v2097, %v2329
      %v2331 = vpop.f32.mrb[0].mxu0
      %2332 = vmatprep.mubr.bf16.mxu0 %v1111
      %2333 = vmatmul.mubr.bf16.gmra.mrb[0].mxu0 %v1110
      %v2334 = vpop.f32.mrb[0].mxu0
      %v2335 = vadd.f32 %v2102, %v2334
      %v2336 = vpop.f32.mrb[0].mxu0
      %v2337 = vpop.f32.mrb[0].mxu0
      %v2338 = vadd.f32 %v2105, %v2337
      %v2339 = vpop.f32.mrb[0].mxu0
      %2340 = vmatprep.mubr.bf16.mxu0 %v1118
      %2341 = vmatmul.mubr.bf16.gmra.mrb[0].mxu0 %v1117
      %v2342 = vpop.f32.mrb[0].mxu0
      %v2343 = vadd.f32 %v2110, %v2342
      %v2344 = vpop.f32.mrb[0].mxu0
      %v2345 = vpop.f32.mrb[0].mxu0
      %v2346 = vadd.f32 %v2113, %v2345
      %v2347 = vpop.f32.mrb[0].mxu0
      %2348 = vmatprep.mubr.bf16.mxu0 %v1125
      %2349 = vmatmul.mubr.bf16.gmra.mrb[0].mxu0 %v1124
      %v2350 = vpop.f32.mrb[0].mxu0
      %v2351 = vadd.f32 %v2118, %v2350
      %v2352 = vpop.f32.mrb[0].mxu0
      %v2353 = vpop.f32.mrb[0].mxu0
      %v2354 = vadd.f32 %v2121, %v2353
      %v2355 = vpop.f32.mrb[0].mxu0
      %2356 = vmatprep.mubr.bf16.mxu0 %v1132
      %2357 = vmatmul.mubr.bf16.gmra.mrb[0].mxu0 %v1131
      %v2358 = vpop.f32.mrb[0].mxu0
      %v2359 = vadd.f32 %v2126, %v2358
      %v2360 = vpop.f32.mrb[0].mxu0
      %v2361 = vpop.f32.mrb[0].mxu0
      %v2362 = vadd.f32 %v2129, %v2361
      %v2363 = vpop.f32.mrb[0].mxu0
      %2364 = vmatprep.mubr.bf16.mxu0 %v1139
      %2365 = vmatmul.mubr.bf16.gmra.mrb[0].mxu0 %v1138
      %v2366 = vpop.f32.mrb[0].mxu0
      %v2367 = vadd.f32 %v2134, %v2366
      %v2368 = vpop.f32.mrb[0].mxu0
      %v2369 = vpop.f32.mrb[0].mxu0
      %v2370 = vadd.f32 %v2137, %v2369
      %v2371 = vpop.f32.mrb[0].mxu0
      %2372 = vmatprep.mubr.bf16.mxu0 %v1146
      %2373 = vmatmul.mubr.bf16.gmra.mrb[0].mxu0 %v1145
      %v2374 = vpop.f32.mrb[0].mxu0
      %v2375 = vadd.f32 %v2142, %v2374
      %v2376 = vpop.f32.mrb[0].mxu0
      %v2377 = vpop.f32.mrb[0].mxu0
      %v2378 = vadd.f32 %v2145, %v2377
      %v2379 = vpop.f32.mrb[0].mxu0
      %2380 = vmatprep.mubr.bf16.mxu0 %v1153
      %2381 = vmatmul.mubr.bf16.gmra.mrb[0].mxu0 %v1152
      %v2382 = vpop.f32.mrb[0].mxu0
      %v2383 = vadd.f32 %v2150, %v2382
      %v2384 = vpop.f32.mrb[0].mxu0
      %v2385 = vpop.f32.mrb[0].mxu0
      %v2386 = vadd.f32 %v2153, %v2385
      %v2387 = vpop.f32.mrb[0].mxu0
      %2388 = vmatprep.mubr.bf16.mxu0 %v1160
      %2389 = vmatmul.mubr.bf16.gmra.mrb[0].mxu0 %v1159
      %v2390 = vpop.f32.mrb[0].mxu0
      %v2391 = vadd.f32 %v2158, %v2390
      %v2392 = vpop.f32.mrb[0].mxu0
      %v2393 = vpop.f32.mrb[0].mxu0
      %v2394 = vadd.f32 %v2161, %v2393
      %v2395 = vpop.f32.mrb[0].mxu0
      %2396 = vmatprep.mubr.bf16.mxu0 %v1167
      %2397 = vmatmul.mubr.bf16.gmra.mrb[0].mxu0 %v1166
      %v2398 = vpop.f32.mrb[0].mxu0
      %v2399 = vadd.f32 %v2166, %v2398
      %v2400 = vpop.f32.mrb[0].mxu0
      %v2401 = vpop.f32.mrb[0].mxu0
      %v2402 = vadd.f32 %v2169, %v2401
      %v2403 = vpop.f32.mrb[0].mxu0
      %2404 = vmatprep.mubr.bf16.mxu0 %v1174
      %2405 = vmatmul.mubr.bf16.gmra.mrb[0].mxu0 %v1173
      %v2406 = vpop.f32.mrb[0].mxu0
      %v2407 = vadd.f32 %v2174, %v2406
      %v2408 = vpop.f32.mrb[0].mxu0
      %v2409 = vpop.f32.mrb[0].mxu0
      %v2410 = vadd.f32 %v2177, %v2409
      %v2411 = vpop.f32.mrb[0].mxu0
      %2412 = vmatprep.mubr.bf16.mxu0 %v1181
      %2413 = vmatmul.mubr.bf16.gmra.mrb[0].mxu0 %v1180
      %v2414 = vpop.f32.mrb[0].mxu0
      %v2415 = vadd.f32 %v2182, %v2414
      %v2416 = vpop.f32.mrb[0].mxu0
      %v2417 = vpop.f32.mrb[0].mxu0
      %v2418 = vadd.f32 %v2185, %v2417
      %v2419 = vpop.f32.mrb[0].mxu0
      %2420 = vmatprep.mubr.bf16.mxu0 %v1188
      %2421 = vmatmul.mubr.bf16.gmra.mrb[0].mxu0 %v1187
      %v2422 = vpop.f32.mrb[0].mxu0
      %v2423 = vadd.f32 %v2190, %v2422
      %v2424 = vpop.f32.mrb[0].mxu0
      %v2425 = vpop.f32.mrb[0].mxu0
      %v2426 = vadd.f32 %v2193, %v2425
      %v2427 = vpop.f32.mrb[0].mxu0
      %2428 = vmatprep.mubr.bf16.mxu0 %v1195
      %2429 = vmatmul.mubr.bf16.gmra.mrb[0].mxu0 %v1194
      %v2430 = vpop.f32.mrb[0].mxu0
      %v2431 = vadd.f32 %v2198, %v2430
      %v2432 = vpop.f32.mrb[0].mxu0
      %v2433 = vpop.f32.mrb[0].mxu0
      %v2434 = vadd.f32 %v2201, %v2433
      %v2435 = vpop.f32.mrb[0].mxu0
      %2436 = vmatprep.mubr.bf16.mxu0 %v1202
      %2437 = vmatmul.mubr.bf16.gmra.mrb[0].mxu0 %v1201
      %v2438 = vpop.f32.mrb[0].mxu0
      %v2439 = vadd.f32 %v2206, %v2438
      %v2440 = vpop.f32.mrb[0].mxu0
      %v2441 = vpop.f32.mrb[0].mxu0
      %v2442 = vadd.f32 %v2209, %v2441
      %v2443 = vpop.f32.mrb[0].mxu0
      %2444 = vmatprep.mubr.bf16.mxu0 %v1209
      %2445 = vmatmul.mubr.bf16.gmra.mrb[0].mxu0 %v1208
      %v2446 = vpop.f32.mrb[0].mxu0
      %v2447 = vadd.f32 %v2214, %v2446
      %v2448 = vpop.f32.mrb[0].mxu0
      %v2449 = vpop.f32.mrb[0].mxu0
      %v2450 = vadd.f32 %v2217, %v2449
      %v2451 = vpop.f32.mrb[0].mxu0
      %2452 = vmatprep.mubr.bf16.mxu0 %v1216
      %2453 = vmatmul.mubr.bf16.gmra.mrb[0].mxu0 %v1215
      %v2454 = vpop.f32.mrb[0].mxu0
      %v2455 = vadd.f32 %v2222, %v2454
      %v2456 = vpop.f32.mrb[0].mxu0
      %v2457 = vpop.f32.mrb[0].mxu0
      %v2458 = vadd.f32 %v2225, %v2457
      %v2459 = vpop.f32.mrb[0].mxu0
      %2460 = vmatprep.mubr.bf16.mxu0 %v1223
      %2461 = vmatmul.mubr.bf16.gmra.mrb[0].mxu0 %v1222
      %v2462 = vpop.f32.mrb[0].mxu0
      %v2463 = vadd.f32 %v2230, %v2462
      %v2464 = vpop.f32.mrb[0].mxu0
      %v2465 = vpop.f32.mrb[0].mxu0
      %v2466 = vadd.f32 %v2233, %v2465
      %v2467 = vpop.f32.mrb[0].mxu0
      %2468 = vmatprep.mubr.bf16.mxu0 %v1230
      %2469 = vmatmul.mubr.bf16.gmra.mrb[0].mxu0 %v1229
      %v2470 = vpop.f32.mrb[0].mxu0
      %v2471 = vadd.f32 %v2238, %v2470
      %v2472 = vpop.f32.mrb[0].mxu0
      %v2473 = vpop.f32.mrb[0].mxu0
      %v2474 = vadd.f32 %v2241, %v2473
      %v2475 = vpop.f32.mrb[0].mxu0
      %2476 = vmatprep.mubr.bf16.mxu0 %v1237
      %2477 = vmatmul.mubr.bf16.gmra.mrb[0].mxu0 %v1236
      %v2478 = vpop.f32.mrb[0].mxu0
      %v2479 = vadd.f32 %v2246, %v2478
      %v2480 = vpop.f32.mrb[0].mxu0
      %v2481 = vpop.f32.mrb[0].mxu0
      %v2482 = vadd.f32 %v2249, %v2481
      %v2483 = vpop.f32.mrb[0].mxu0
      %2484 = vmatprep.mubr.bf16.mxu0 %v1244
      %2485 = vmatmul.mubr.bf16.gmra.mrb[0].mxu0 %v1243
      %v2486 = vpop.f32.mrb[0].mxu0
      %v2487 = vadd.f32 %v2254, %v2486
      %v2488 = vpop.f32.mrb[0].mxu0
      %v2489 = vpop.f32.mrb[0].mxu0
      %v2490 = vadd.f32 %v2257, %v2489
      %v2491 = vpop.f32.mrb[0].mxu0
      %2492 = vmatprep.mubr.bf16.mxu0 %v1251
      %2493 = vmatmul.mubr.bf16.gmra.mrb[0].mxu0 %v1250
      %v2494 = vpop.f32.mrb[0].mxu0
      %v2495 = vadd.f32 %v2262, %v2494
      %v2496 = vpop.f32.mrb[0].mxu0
      %v2497 = vpop.f32.mrb[0].mxu0
      %v2498 = vadd.f32 %v2265, %v2497
      %v2499 = vpop.f32.mrb[0].mxu0
      %2500 = vmatprep.mubr.bf16.mxu0 %v1258
      %2501 = vmatmul.mubr.bf16.gmra.mrb[0].mxu0 %v1257
      %v2502 = vpop.f32.mrb[0].mxu0
      %v2503 = vadd.f32 %v2270, %v2502
      %v2504 = vpop.f32.mrb[0].mxu0
      %v2505 = vpop.f32.mrb[0].mxu0
      %v2506 = vadd.f32 %v2273, %v2505
      %v2507 = vpop.f32.mrb[0].mxu0
      %2508 = vmatprep.mubr.bf16.mxu0 %v1265
      %2509 = vmatmul.mubr.bf16.gmra.mrb[0].mxu0 %v1264
      %v2510 = vpop.f32.mrb[0].mxu0
      %v2511 = vadd.f32 %v2278, %v2510
      %v2512 = vpop.f32.mrb[0].mxu0
      %v2513 = vpop.f32.mrb[0].mxu0
      %v2514 = vadd.f32 %v2281, %v2513
      %v2515 = vpop.f32.mrb[0].mxu0
      %2516 = vdwg.mxu0
      %2517 = vmatprep.subr.bf16.mxu0 0
      %2518 = vmatpush1.bf16.msra.mxu0 %v1679
      %2519 = vmatprep.subr.bf16.mxu0 0
      %2520 = vmatpush1.bf16.msra.mxu0 %v1680
      %2521 = vmatprep.subr.bf16.mxu0 0
      %2522 = vmatpush1.bf16.msra.mxu0 %v1681
      %2523 = vmatprep.subr.bf16.mxu0 0
      %2524 = vmatpush1.bf16.msra.mxu0 %v1682
      %2525 = vmatprep.subr.bf16.mxu0 0
      %2526 = vmatpush1.bf16.msra.mxu0 %v1683
      %2527 = vmatprep.subr.bf16.mxu0 0
      %2528 = vmatpush1.bf16.msra.mxu0 %v1816
      %2529 = vmatprep.subr.bf16.mxu0 0
      %2530 = vmatpush1.bf16.msra.mxu0 0
      %2531 = vmatprep.subr.bf16.mxu0 0
      %2532 = vmatpush1.bf16.msra.mxu0 0
      %2533 = vmatprep.subr.bf16.mxu0 0
      %2534 = vmatpush1.bf16.msra.mxu0 0
      %2535 = vmatprep.subr.bf16.mxu0 0
      %2536 = vmatpush1.bf16.msra.mxu0 0
      %2537 = vmatprep.subr.bf16.mxu0 0
      %2538 = vmatpush1.bf16.msra.mxu0 0
      %2539 = vmatprep.subr.bf16.mxu0 0
      %2540 = vmatpush1.bf16.msra.mxu0 0
      %2541 = vmatprep.subr.bf16.mxu0 0
      %2542 = vmatpush1.bf16.msra.mxu0 0
      %2543 = vmatprep.subr.bf16.mxu0 0
      %2544 = vmatpush1.bf16.msra.mxu0 0
      %2545 = vmatprep.subr.bf16.mxu0 0
      %2546 = vmatpush1.bf16.msra.mxu0 0
      %2547 = vmatprep.subr.bf16.mxu0 0
      %2548 = vmatpush1.bf16.msra.mxu0 0
      %2549 = vmatprep.mubr.bf16.mxu0 0
      %2550 = vmatmul.mubr.bf16.gmra.mrb[0].mxu0 %v1740
      %v2551 = vpop.f32.mrb[0].mxu0
      %v2552 = vadd.f32 %v2319, %v2551
      %v2553 = vpop.f32.mrb[0].mxu0
      %v2554 = vpop.f32.mrb[0].mxu0
      %v2555 = vadd.f32 %v2322, %v2554
      %v2556 = vpop.f32.mrb[0].mxu0
      %2557 = vmatprep.mubr.bf16.mxu0 0
      %2558 = vmatmul.mubr.bf16.gmra.mrb[0].mxu0 %v1743
      %v2559 = vpop.f32.mrb[0].mxu0
      %v2560 = vadd.f32 %v2327, %v2559
      %v2561 = vpop.f32.mrb[0].mxu0
      %v2562 = vpop.f32.mrb[0].mxu0
      %v2563 = vadd.f32 %v2330, %v2562
      %v2564 = vpop.f32.mrb[0].mxu0
      %2565 = vmatprep.mubr.bf16.mxu0 0
      %2566 = vmatmul.mubr.bf16.gmra.mrb[0].mxu0 %v1746
      %v2567 = vpop.f32.mrb[0].mxu0
      %v2568 = vadd.f32 %v2335, %v2567
      %v2569 = vpop.f32.mrb[0].mxu0
      %v2570 = vpop.f32.mrb[0].mxu0
      %v2571 = vadd.f32 %v2338, %v2570
      %v2572 = vpop.f32.mrb[0].mxu0
      %2573 = vmatprep.mubr.bf16.mxu0 0
      %2574 = vmatmul.mubr.bf16.gmra.mrb[0].mxu0 %v1749
      %v2575 = vpop.f32.mrb[0].mxu0
      %v2576 = vadd.f32 %v2343, %v2575
      %v2577 = vpop.f32.mrb[0].mxu0
      %v2578 = vpop.f32.mrb[0].mxu0
      %v2579 = vadd.f32 %v2346, %v2578
      %v2580 = vpop.f32.mrb[0].mxu0
      %2581 = vmatprep.mubr.bf16.mxu0 0
      %2582 = vmatmul.mubr.bf16.gmra.mrb[0].mxu0 %v1752
      %v2583 = vpop.f32.mrb[0].mxu0
      %v2584 = vadd.f32 %v2351, %v2583
      %v2585 = vpop.f32.mrb[0].mxu0
      %v2586 = vpop.f32.mrb[0].mxu0
      %v2587 = vadd.f32 %v2354, %v2586
      %v2588 = vpop.f32.mrb[0].mxu0
      %2589 = vmatprep.mubr.bf16.mxu0 0
      %2590 = vmatmul.mubr.bf16.gmra.mrb[0].mxu0 %v1755
      %v2591 = vpop.f32.mrb[0].mxu0
      %v2592 = vadd.f32 %v2359, %v2591
      %v2593 = vpop.f32.mrb[0].mxu0
      %v2594 = vpop.f32.mrb[0].mxu0
      %v2595 = vadd.f32 %v2362, %v2594
      %v2596 = vpop.f32.mrb[0].mxu0
      %2597 = vmatprep.mubr.bf16.mxu0 0
      %2598 = vmatmul.mubr.bf16.gmra.mrb[0].mxu0 %v1758
      %v2599 = vpop.f32.mrb[0].mxu0
      %v2600 = vadd.f32 %v2367, %v2599
      %v2601 = vpop.f32.mrb[0].mxu0
      %v2602 = vpop.f32.mrb[0].mxu0
      %v2603 = vadd.f32 %v2370, %v2602
      %v2604 = vpop.f32.mrb[0].mxu0
      %2605 = vmatprep.mubr.bf16.mxu0 0
      %2606 = vmatmul.mubr.bf16.gmra.mrb[0].mxu0 %v1761
      %v2607 = vpop.f32.mrb[0].mxu0
      %v2608 = vadd.f32 %v2375, %v2607
      %v2609 = vpop.f32.mrb[0].mxu0
      %v2610 = vpop.f32.mrb[0].mxu0
      %v2611 = vadd.f32 %v2378, %v2610
      %v2612 = vpop.f32.mrb[0].mxu0
      %2613 = vmatprep.mubr.bf16.mxu0 0
      %2614 = vmatmul.mubr.bf16.gmra.mrb[0].mxu0 %v1764
      %v2615 = vpop.f32.mrb[0].mxu0
      %v2616 = vadd.f32 %v2383, %v2615
      %v2617 = vpop.f32.mrb[0].mxu0
      %v2618 = vpop.f32.mrb[0].mxu0
      %v2619 = vadd.f32 %v2386, %v2618
      %v2620 = vpop.f32.mrb[0].mxu0
      %2621 = vmatprep.mubr.bf16.mxu0 0
      %2622 = vmatmul.mubr.bf16.gmra.mrb[0].mxu0 %v1767
      %v2623 = vpop.f32.mrb[0].mxu0
      %v2624 = vadd.f32 %v2391, %v2623
      %v2625 = vpop.f32.mrb[0].mxu0
      %v2626 = vpop.f32.mrb[0].mxu0
      %v2627 = vadd.f32 %v2394, %v2626
      %v2628 = vpop.f32.mrb[0].mxu0
      %2629 = vmatprep.mubr.bf16.mxu0 0
      %2630 = vmatmul.mubr.bf16.gmra.mrb[0].mxu0 %v1770
      %v2631 = vpop.f32.mrb[0].mxu0
      %v2632 = vadd.f32 %v2399, %v2631
      %v2633 = vpop.f32.mrb[0].mxu0
      %v2634 = vpop.f32.mrb[0].mxu0
      %v2635 = vadd.f32 %v2402, %v2634
      %v2636 = vpop.f32.mrb[0].mxu0
      %2637 = vmatprep.mubr.bf16.mxu0 0
      %2638 = vmatmul.mubr.bf16.gmra.mrb[0].mxu0 %v1773
      %v2639 = vpop.f32.mrb[0].mxu0
      %v2640 = vadd.f32 %v2407, %v2639
      %v2641 = vpop.f32.mrb[0].mxu0
      %v2642 = vpop.f32.mrb[0].mxu0
      %v2643 = vadd.f32 %v2410, %v2642
      %v2644 = vpop.f32.mrb[0].mxu0
      %2645 = vmatprep.mubr.bf16.mxu0 0
      %2646 = vmatmul.mubr.bf16.gmra.mrb[0].mxu0 %v1776
      %v2647 = vpop.f32.mrb[0].mxu0
      %v2648 = vadd.f32 %v2415, %v2647
      %v2649 = vpop.f32.mrb[0].mxu0
      %v2650 = vpop.f32.mrb[0].mxu0
      %v2651 = vadd.f32 %v2418, %v2650
      %v2652 = vpop.f32.mrb[0].mxu0
      %2653 = vmatprep.mubr.bf16.mxu0 0
      %2654 = vmatmul.mubr.bf16.gmra.mrb[0].mxu0 %v1779
      %v2655 = vpop.f32.mrb[0].mxu0
      %v2656 = vadd.f32 %v2423, %v2655
      %v2657 = vpop.f32.mrb[0].mxu0
      %v2658 = vpop.f32.mrb[0].mxu0
      %v2659 = vadd.f32 %v2426, %v2658
      %v2660 = vpop.f32.mrb[0].mxu0
      %2661 = vmatprep.mubr.bf16.mxu0 0
      %2662 = vmatmul.mubr.bf16.gmra.mrb[0].mxu0 %v1782
      %v2663 = vpop.f32.mrb[0].mxu0
      %v2664 = vadd.f32 %v2431, %v2663
      %v2665 = vpop.f32.mrb[0].mxu0
      %v2666 = vpop.f32.mrb[0].mxu0
      %v2667 = vadd.f32 %v2434, %v2666
      %v2668 = vpop.f32.mrb[0].mxu0
      %2669 = vmatprep.mubr.bf16.mxu0 0
      %2670 = vmatmul.mubr.bf16.gmra.mrb[0].mxu0 %v1785
      %v2671 = vpop.f32.mrb[0].mxu0
      %v2672 = vadd.f32 %v2439, %v2671
      %v2673 = vpop.f32.mrb[0].mxu0
      %v2674 = vpop.f32.mrb[0].mxu0
      %v2675 = vadd.f32 %v2442, %v2674
      %v2676 = vpop.f32.mrb[0].mxu0
      %2677 = vmatprep.mubr.bf16.mxu0 0
      %2678 = vmatmul.mubr.bf16.gmra.mrb[0].mxu0 %v1788
      %v2679 = vpop.f32.mrb[0].mxu0
      %v2680 = vadd.f32 %v2447, %v2679
      %v2681 = vpop.f32.mrb[0].mxu0
      %v2682 = vpop.f32.mrb[0].mxu0
      %v2683 = vadd.f32 %v2450, %v2682
      %v2684 = vpop.f32.mrb[0].mxu0
      %2685 = vmatprep.mubr.bf16.mxu0 0
      %2686 = vmatmul.mubr.bf16.gmra.mrb[0].mxu0 %v1791
      %v2687 = vpop.f32.mrb[0].mxu0
      %v2688 = vadd.f32 %v2455, %v2687
      %v2689 = vpop.f32.mrb[0].mxu0
      %v2690 = vpop.f32.mrb[0].mxu0
      %v2691 = vadd.f32 %v2458, %v2690
      %v2692 = vpop.f32.mrb[0].mxu0
      %2693 = vmatprep.mubr.bf16.mxu0 0
      %2694 = vmatmul.mubr.bf16.gmra.mrb[0].mxu0 %v1794
      %v2695 = vpop.f32.mrb[0].mxu0
      %v2696 = vadd.f32 %v2463, %v2695
      %v2697 = vpop.f32.mrb[0].mxu0
      %v2698 = vpop.f32.mrb[0].mxu0
      %v2699 = vadd.f32 %v2466, %v2698
      %v2700 = vpop.f32.mrb[0].mxu0
      %2701 = vmatprep.mubr.bf16.mxu0 0
      %2702 = vmatmul.mubr.bf16.gmra.mrb[0].mxu0 %v1797
      %v2703 = vpop.f32.mrb[0].mxu0
      %v2704 = vadd.f32 %v2471, %v2703
      %v2705 = vpop.f32.mrb[0].mxu0
      %v2706 = vpop.f32.mrb[0].mxu0
      %v2707 = vadd.f32 %v2474, %v2706
      %v2708 = vpop.f32.mrb[0].mxu0
      %2709 = vmatprep.mubr.bf16.mxu0 0
      %2710 = vmatmul.mubr.bf16.gmra.mrb[0].mxu0 %v1800
      %v2711 = vpop.f32.mrb[0].mxu0
      %v2712 = vadd.f32 %v2479, %v2711
      %v2713 = vpop.f32.mrb[0].mxu0
      %v2714 = vpop.f32.mrb[0].mxu0
      %v2715 = vadd.f32 %v2482, %v2714
      %v2716 = vpop.f32.mrb[0].mxu0
      %2717 = vmatprep.mubr.bf16.mxu0 0
      %2718 = vmatmul.mubr.bf16.gmra.mrb[0].mxu0 %v1803
      %v2719 = vpop.f32.mrb[0].mxu0
      %v2720 = vadd.f32 %v2487, %v2719
      %v2721 = vpop.f32.mrb[0].mxu0
      %v2722 = vpop.f32.mrb[0].mxu0
      %v2723 = vadd.f32 %v2490, %v2722
      %v2724 = vpop.f32.mrb[0].mxu0
      %2725 = vmatprep.mubr.bf16.mxu0 0
      %2726 = vmatmul.mubr.bf16.gmra.mrb[0].mxu0 %v1806
      %v2727 = vpop.f32.mrb[0].mxu0
      %v2728 = vadd.f32 %v2495, %v2727
      %v2729 = vpop.f32.mrb[0].mxu0
      %v2730 = vpop.f32.mrb[0].mxu0
      %v2731 = vadd.f32 %v2498, %v2730
      %v2732 = vpop.f32.mrb[0].mxu0
      %2733 = vmatprep.mubr.bf16.mxu0 0
      %2734 = vmatmul.mubr.bf16.gmra.mrb[0].mxu0 %v1809
      %v2735 = vpop.f32.mrb[0].mxu0
      %v2736 = vadd.f32 %v2503, %v2735
      %v2737 = vpop.f32.mrb[0].mxu0
      %v2738 = vpop.f32.mrb[0].mxu0
      %v2739 = vadd.f32 %v2506, %v2738
      %v2740 = vpop.f32.mrb[0].mxu0
      %2741 = vmatprep.mubr.bf16.mxu0 0
      %2742 = vmatmul.mubr.bf16.gmra.mrb[0].mxu0 %v1812
      %v2743 = vpop.f32.mrb[0].mxu0
      %v2744 = vadd.f32 %v2511, %v2743
      %v2745 = vpop.f32.mrb[0].mxu0
      %v2746 = vpop.f32.mrb[0].mxu0
      %v2747 = vadd.f32 %v2514, %v2746
      %v2748 = vpop.f32.mrb[0].mxu0
      %2749 = vdwg.mxu0
      %v2750 = vmax.f32 %v2552, 0.0
      %v2751 = vmax.f32 %v2555, 0.0
      %v2752 = vmax.f32 %v2560, 0.0
      %v2753 = vmax.f32 %v2563, 0.0
      %v2754 = vmax.f32 %v2568, 0.0
      %v2755 = vmax.f32 %v2571, 0.0
      %v2756 = vmax.f32 %v2576, 0.0
      %v2757 = vmax.f32 %v2579, 0.0
      %v2758 = vmax.f32 %v2584, 0.0
      %v2759 = vmax.f32 %v2587, 0.0
      %v2760 = vmax.f32 %v2592, 0.0
      %v2761 = vmax.f32 %v2595, 0.0
      %v2762 = vmax.f32 %v2600, 0.0
      %v2763 = vmax.f32 %v2603, 0.0
      %v2764 = vmax.f32 %v2608, 0.0
      %v2765 = vmax.f32 %v2611, 0.0
      %v2766 = vmax.f32 %v2616, 0.0
      %v2767 = vmax.f32 %v2619, 0.0
      %v2768 = vmax.f32 %v2624, 0.0
      %v2769 = vmax.f32 %v2627, 0.0
      %v2770 = vmax.f32 %v2632, 0.0
      %v2771 = vmax.f32 %v2635, 0.0
      %v2772 = vmax.f32 %v2640, 0.0
      %v2773 = vmax.f32 %v2643, 0.0
      %v2774 = vmax.f32 %v2648, 0.0
      %v2775 = vmax.f32 %v2651, 0.0
      %v2776 = vmax.f32 %v2656, 0.0
      %v2777 = vmax.f32 %v2659, 0.0
      %v2778 = vmax.f32 %v2664, 0.0
      %v2779 = vmax.f32 %v2667, 0.0
      %v2780 = vmax.f32 %v2672, 0.0
      %v2781 = vmax.f32 %v2675, 0.0
      %v2782 = vmax.f32 %v2680, 0.0
      %v2783 = vmax.f32 %v2683, 0.0
      %v2784 = vmax.f32 %v2688, 0.0
      %v2785 = vmax.f32 %v2691, 0.0
      %v2786 = vmax.f32 %v2696, 0.0
      %v2787 = vmax.f32 %v2699, 0.0
      %v2788 = vmax.f32 %v2704, 0.0
      %v2789 = vmax.f32 %v2707, 0.0
      %v2790 = vmax.f32 %v2712, 0.0
      %v2791 = vmax.f32 %v2715, 0.0
      %v2792 = vmax.f32 %v2720, 0.0
      %v2793 = vmax.f32 %v2723, 0.0
      %v2794 = vmax.f32 %v2728, 0.0
      %v2795 = vmax.f32 %v2731, 0.0
      %v2796 = vmax.f32 %v2736, 0.0
      %v2797 = vmax.f32 %v2739, 0.0
      %v2798 = vmax.f32 %v2744, 0.0
      %v2799 = vmax.f32 %v2747, 0.0
      %v2800 = vpack.c.bf16 %v2751, %v2750
      %v2801 = vpack.c.bf16 %v2753, %v2752
      %v2802 = vpack.c.bf16 %v2755, %v2754
      %v2803 = vpack.c.bf16 %v2757, %v2756
      %v2804 = vpack.c.bf16 %v2759, %v2758
      %v2805 = vpack.c.bf16 %v2761, %v2760
      %v2806 = vpack.c.bf16 %v2763, %v2762
      %v2807 = vpack.c.bf16 %v2765, %v2764
      %v2808 = vpack.c.bf16 %v2767, %v2766
      %v2809 = vpack.c.bf16 %v2769, %v2768
      %v2810 = vpack.c.bf16 %v2771, %v2770
      %v2811 = vpack.c.bf16 %v2773, %v2772
      %v2812 = vpack.c.bf16 %v2775, %v2774
      %v2813 = vpack.c.bf16 %v2777, %v2776
      %v2814 = vpack.c.bf16 %v2779, %v2778
      %v2815 = vpack.c.bf16 %v2781, %v2780
      %v2816 = vpack.c.bf16 %v2783, %v2782
      %v2817 = vpack.c.bf16 %v2785, %v2784
      %v2818 = vpack.c.bf16 %v2787, %v2786
      %v2819 = vpack.c.bf16 %v2789, %v2788
      %v2820 = vpack.c.bf16 %v2791, %v2790
      %v2821 = vpack.c.bf16 %v2793, %v2792
      %v2822 = vpack.c.bf16 %v2795, %v2794
      %v2823 = vpack.c.bf16 %v2797, %v2796
      %v2824 = vpack.c.bf16 %v2799, %v2798
      %v2850 = vunpack.c.l.b16 %v2800
      %v2851 = vunpack.c.h.b16 %v2800
      %v2852 = vunpack.c.l.b16 %v2801
      %v2853 = vunpack.c.h.b16 %v2801
      %v2854 = vunpack.c.l.b16 %v2802
      %v2855 = vunpack.c.h.b16 %v2802
      %v2856 = vunpack.c.l.b16 %v2803
      %v2857 = vunpack.c.h.b16 %v2803
      %v2858 = vunpack.c.l.b16 %v2804
      %v2859 = vunpack.c.h.b16 %v2804
      %v2860 = vunpack.c.l.b16 %v2805
      %v2861 = vunpack.c.h.b16 %v2805
      %v2862 = vunpack.c.l.b16 %v2806
      %v2863 = vunpack.c.h.b16 %v2806
      %v2864 = vunpack.c.l.b16 %v2807
      %v2865 = vunpack.c.h.b16 %v2807
      %v2866 = vunpack.c.l.b16 %v2808
      %v2867 = vunpack.c.h.b16 %v2808
      %v2868 = vunpack.c.l.b16 %v2809
      %v2869 = vunpack.c.h.b16 %v2809
      %v2870 = vunpack.c.l.b16 %v2810
      %v2871 = vunpack.c.h.b16 %v2810
      %v2872 = vunpack.c.l.b16 %v2811
      %v2873 = vunpack.c.h.b16 %v2811
      %v2874 = vunpack.c.l.b16 %v2812
      %v2875 = vunpack.c.h.b16 %v2812
      %v2876 = vunpack.c.l.b16 %v2813
      %v2877 = vunpack.c.h.b16 %v2813
      %v2878 = vunpack.c.l.b16 %v2814
      %v2879 = vunpack.c.h.b16 %v2814
      %v2880 = vunpack.c.l.b16 %v2815
      %v2881 = vunpack.c.h.b16 %v2815
      %v2882 = vunpack.c.l.b16 %v2816
      %v2883 = vunpack.c.h.b16 %v2816
      %v2884 = vunpack.c.l.b16 %v2817
      %v2885 = vunpack.c.h.b16 %v2817
      %v2886 = vunpack.c.l.b16 %v2818
      %v2887 = vunpack.c.h.b16 %v2818
      %v2888 = vunpack.c.l.b16 %v2819
      %v2889 = vunpack.c.h.b16 %v2819
      %v2890 = vunpack.c.l.b16 %v2820
      %v2891 = vunpack.c.h.b16 %v2820
      %v2892 = vunpack.c.l.b16 %v2821
      %v2893 = vunpack.c.h.b16 %v2821
      %v2894 = vunpack.c.l.b16 %v2822
      %v2895 = vunpack.c.h.b16 %v2822
      %v2896 = vunpack.c.l.b16 %v2823
      %v2897 = vunpack.c.h.b16 %v2823
      %v2898 = vunpack.c.l.b16 %v2824
      %v2899 = vunpack.c.h.b16 %v2824
      %v2900 = vpack.c.b16 %v2850, %v2850
      %v2901 = vpack.c.b16 %v2851, %v2851
      %v2902 = vpack.c.b16 %v2852, %v2852
      %v2903 = vpack.c.b16 %v2853, %v2853
      %v2904 = vpack.c.b16 %v2854, %v2854
      %v2905 = vpack.c.b16 %v2855, %v2855
      %v2906 = vpack.c.b16 %v2856, %v2856
      %v2907 = vpack.c.b16 %v2857, %v2857
      %v2908 = vpack.c.b16 %v2858, %v2858
      %v2909 = vpack.c.b16 %v2859, %v2859
      %v2910 = vpack.c.b16 %v2860, %v2860
      %v2911 = vpack.c.b16 %v2861, %v2861
      %v2912 = vpack.c.b16 %v2862, %v2862
      %v2913 = vpack.c.b16 %v2863, %v2863
      %v2914 = vpack.c.b16 %v2864, %v2864
      %v2915 = vpack.c.b16 %v2865, %v2865
      %v2916 = vpack.c.b16 %v2866, %v2866
      %v2917 = vpack.c.b16 %v2867, %v2867
      %v2918 = vpack.c.b16 %v2868, %v2868
      %v2919 = vpack.c.b16 %v2869, %v2869
      %v2920 = vpack.c.b16 %v2870, %v2870
      %v2921 = vpack.c.b16 %v2871, %v2871
      %v2922 = vpack.c.b16 %v2872, %v2872
      %v2923 = vpack.c.b16 %v2873, %v2873
      %v2924 = vpack.c.b16 %v2874, %v2874
      %v2925 = vpack.c.b16 %v2875, %v2875
      %v2926 = vpack.c.b16 %v2876, %v2876
      %v2927 = vpack.c.b16 %v2877, %v2877
      %v2928 = vpack.c.b16 %v2878, %v2878
      %v2929 = vpack.c.b16 %v2879, %v2879
      %v2930 = vpack.c.b16 %v2880, %v2880
      %v2931 = vpack.c.b16 %v2881, %v2881
      %v2932 = vpack.c.b16 %v2882, %v2882
      %v2933 = vpack.c.b16 %v2883, %v2883
      %v2934 = vpack.c.b16 %v2884, %v2884
      %v2935 = vpack.c.b16 %v2885, %v2885
      %v2936 = vpack.c.b16 %v2886, %v2886
      %v2937 = vpack.c.b16 %v2887, %v2887
      %v2938 = vpack.c.b16 %v2888, %v2888
      %v2939 = vpack.c.b16 %v2889, %v2889
      %v2940 = vpack.c.b16 %v2890, %v2890
      %v2941 = vpack.c.b16 %v2891, %v2891
      %v2942 = vpack.c.b16 %v2892, %v2892
      %v2943 = vpack.c.b16 %v2893, %v2893
      %v2944 = vpack.c.b16 %v2894, %v2894
      %v2945 = vpack.c.b16 %v2895, %v2895
      %v2946 = vpack.c.b16 %v2896, %v2896
      %v2947 = vpack.c.b16 %v2897, %v2897
      %v2948 = vpack.c.b16 %v2898, %v2898
      %v2949 = vpack.c.b16 %v2899, %v2899
      %vm3000 = vcmask 519168
      %3001 = vst.msk [vmem:[%s225] sm:$0xf] %vm3000, %v2900
      %3002 = vst.msk [vmem:[%s225 + $0x4] sm:$0xf] %vm3000, %v2901
      %3003 = vst.msk [vmem:[%s225 + $0x8] sm:$0xf] %vm3000, %v2902
      %3004 = vst.msk [vmem:[%s225 + $0xc] sm:$0xf] %vm3000, %v2903
      %3005 = vst.msk [vmem:[%s225 + $0x10] sm:$0xf] %vm3000, %v2904
      %3006 = vst.msk [vmem:[%s225 + $0x14] sm:$0xf] %vm3000, %v2905
      %3007 = vst.msk [vmem:[%s225 + $0x18] sm:$0xf] %vm3000, %v2906
      %3008 = vst.msk [vmem:[%s225 + $0x1c] sm:$0xf] %vm3000, %v2907
      %3009 = vst.msk [vmem:[%s225 + $0x20] sm:$0xf] %vm3000, %v2908
      %3010 = vst.msk [vmem:[%s225 + $0x24] sm:$0xf] %vm3000, %v2909
      %3011 = vst.msk [vmem:[%s225 + $0x28] sm:$0xf] %vm3000, %v2910
      %3012 = vst.msk [vmem:[%s225 + $0x2c] sm:$0xf] %vm3000, %v2911
      %3013 = vst.msk [vmem:[%s225 + $0x30] sm:$0xf] %vm3000, %v2912
      %3014 = vst.msk [vmem:[%s225 + $0x34] sm:$0xf] %vm3000, %v2913
      %3015 = vst.msk [vmem:[%s225 + $0x38] sm:$0xf] %vm3000, %v2914
      %3016 = vst.msk [vmem:[%s225 + $0x3c] sm:$0xf] %vm3000, %v2915
      %3017 = vst.msk [vmem:[%s225 + $0x40] sm:$0xf] %vm3000, %v2916
      %3018 = vst.msk [vmem:[%s225 + $0x44] sm:$0xf] %vm3000, %v2917
      %3019 = vst.msk [vmem:[%s225 + $0x48] sm:$0xf] %vm3000, %v2918
      %3020 = vst.msk [vmem:[%s225 + $0x4c] sm:$0xf] %vm3000, %v2919
      %3021 = vst.msk [vmem:[%s225 + $0x50] sm:$0xf] %vm3000, %v2920
      %3022 = vst.msk [vmem:[%s225 + $0x54] sm:$0xf] %vm3000, %v2921
      %3023 = vst.msk [vmem:[%s225 + $0x58] sm:$0xf] %vm3000, %v2922
      %3024 = vst.msk [vmem:[%s225 + $0x5c] sm:$0xf] %vm3000, %v2923
      %3025 = vst.msk [vmem:[%s225 + $0x60] sm:$0xf] %vm3000, %v2924
      %3026 = vst.msk [vmem:[%s225 + $0x64] sm:$0xf] %vm3000, %v2925
      %3027 = vst.msk [vmem:[%s225 + $0x68] sm:$0xf] %vm3000, %v2926
      %3028 = vst.msk [vmem:[%s225 + $0x6c] sm:$0xf] %vm3000, %v2927
      %3029 = vst.msk [vmem:[%s225 + $0x70] sm:$0xf] %vm3000, %v2928
      %3030 = vst.msk [vmem:[%s225 + $0x74] sm:$0xf] %vm3000, %v2929
      %3031 = vst.msk [vmem:[%s225 + $0x78] sm:$0xf] %vm3000, %v2930
      %3032 = vst.msk [vmem:[%s225 + $0x7c] sm:$0xf] %vm3000, %v2931
      %3033 = vst.msk [vmem:[%s225 + $0x80] sm:$0xf] %vm3000, %v2932
      %3034 = vst.msk [vmem:[%s225 + $0x84] sm:$0xf] %vm3000, %v2933
      %3035 = vst.msk [vmem:[%s225 + $0x88] sm:$0xf] %vm3000, %v2934
      %3036 = vst.msk [vmem:[%s225 + $0x8c] sm:$0xf] %vm3000, %v2935
      %3037 = vst.msk [vmem:[%s225 + $0x90] sm:$0xf] %vm3000, %v2936
      %3038 = vst.msk [vmem:[%s225 + $0x94] sm:$0xf] %vm3000, %v2937
      %3039 = vst.msk [vmem:[%s225 + $0x98] sm:$0xf] %vm3000, %v2938
      %3040 = vst.msk [vmem:[%s225 + $0x9c] sm:$0xf] %vm3000, %v2939
      %3041 = vst.msk [vmem:[%s225 + $0xa0] sm:$0xf] %vm3000, %v2940
      %3042 = vst.msk [vmem:[%s225 + $0xa4] sm:$0xf] %vm3000, %v2941
      %3043 = vst.msk [vmem:[%s225 + $0xa8] sm:$0xf] %vm3000, %v2942
      %3044 = vst.msk [vmem:[%s225 + $0xac] sm:$0xf] %vm3000, %v2943
      %3045 = vst.msk [vmem:[%s225 + $0xb0] sm:$0xf] %vm3000, %v2944
      %3046 = vst.msk [vmem:[%s225 + $0xb4] sm:$0xf] %vm3000, %v2945
      %3047 = vst.msk [vmem:[%s225 + $0xb8] sm:$0xf] %vm3000, %v2946
      %3048 = vst.msk [vmem:[%s225 + $0xbc] sm:$0xf] %vm3000, %v2947
      %3049 = vst.msk [vmem:[%s225 + $0xc0] sm:$0xf] %vm3000, %v2948
      %3050 = vst.msk [vmem:[%s225 + $0xc4] sm:$0xf] %vm3000, %v2949
      %s3051 = smul.u32 50, %s18
      %p3052 = scmp.lt.s32.totalorder %s3051, 99
      %s3053 = scalar_select %p3052, %s3051, 99
      %s3054 = smul.addr %s3053, 4
      %s3055 = scalar_lea.vmem %s3, %s3054
      // Predicated region
      $region33: #{net_forward.5} parent=31 // pred_check
        %p3056 = pneg %p119
      $region34: #{net_forward.5} parent=31 // pred_check_branch
        %3058 = sbr.rel (%p3056) target = $region36
      $region35: #{net_forward.5} parent=31 // pred_region
        %s3059 = smul.u32 50, %s18
      $region36: #{net_forward.5} parent=31 // pred_fallthru
        _
    $region32: #{net_forward.5} parent=5 // pred_fallthru
      _
    %p3060 = scmp.le.s32.totalorder 2, %s9
    // Predicated region
    $region37: #{net_forward.5} parent=5 // pred_check
      %p3061 = pneg %p3060
    $region38: #{net_forward.5} parent=5 // pred_check_branch
      %3063 = sbr.rel (%p3061) target = $region40
    $region39: #{net_forward.5} parent=5 // pred_region
      %s3064 = ssub.s32 %s9, 2
      // Predicated region
      $region41: #{net_forward.5} parent=39 // pred_check
        %p3065 = pneg %p125
      $region42: #{net_forward.5} parent=39 // pred_check_branch
        %3067 = sbr.rel (%p3065) target = $region44
      $region43: #{net_forward.5} parent=39 // pred_region
        %s3068 = smul.u32 50, %s20
        %p3069 = scmp.lt.s32.totalorder %s3068, 99
        %s3070 = scalar_select %p3069, %s3068, 99
        %s3071 = smul.addr %s3070, 4
        %s3072 = scalar_lea.vmem %s3, %s3071
      $region44: #{net_forward.5} parent=39 // pred_fallthru
        _
    $region40: #{net_forward.5} parent=5 // pred_fallthru
      _
  $region6: #{net_forward.5} parent=0 // loop_footer
    %s13 = sadd.s32 1, %s9
  $region7: #{net_forward.5} parent=0 // loop_footer_branch
    %8 = sbr.rel target = $region3
  $region8: #{net_forward.5} parent=0 // loop_exit
    _

// kernel: net_forward.7
$region0: #{net_forward.7}
  #allocation0 [shape = 'u32[]', space=smem, size = 0x4, offset = 0x4, fixed_abs, tag = 'smem constant byte address 0x4 - core index']
  #allocation1 [shape = 'u32[144,128]{1,0:T(1,128)}', space=vmem, size = 0x12000, scoped, tag = 'internal scratch']
  %s0 = inlined_call_operand.vmem [shape: f32[2,512], index: 0, kind: input, shape index: {}]
  %s1 = inlined_call_operand.vmem [shape: f32[512,10], index: 1, kind: input, shape index: {}]
  %s2 = inlined_call_operand.vmem [shape: f32[1,10], index: 2, kind: input, shape index: {}]
  %s3 = inlined_call_operand.hbm [shape: f32[2,10], index: 3, kind: output, shape index: {}]
  %s4 = sld [smem:[#allocation0]]
  $region22: #{net_forward.7} parent=0
    _
  %s6 = ssub.s32 1, %s4
  %s7 = scalar_select 0, %s6, %s4
  $region1: #{net_forward.7} parent=0
    #allocation2 [shape = 'u8[1024]{0}', space=vmem, size = 0x400, scoped, tag = 'output window, operand 0, single buffered']
    #allocation3 [shape = 's32[1]{0}', space=sflag, size = 0x4, scoped, tag = 'scoped memory for net_forward.7']
    %8 = vsyncpa [#allocation3], 0
    // Predicated region
    $region2: #{net_forward.7} parent=1 // pred_check
      _
    $region3: #{net_forward.7} parent=1 // pred_check_branch
      %10 = sbr.rel (0) target = $region5
    $region4: #{net_forward.7} parent=1 // pred_region
      _
    $region5: #{net_forward.7} parent=1 // pred_fallthru
      _
    // Predicated region
    $region6: #{net_forward.7} parent=1 // pred_check
      _
    $region7: #{net_forward.7} parent=1 // pred_check_branch
      %12 = sbr.rel (0) target = $region9
    $region8: #{net_forward.7} parent=1 // pred_region
      _
    $region9: #{net_forward.7} parent=1 // pred_fallthru
      _
    // Predicated region
    $region10: #{net_forward.7} parent=1 // pred_check
      _
    $region11: #{net_forward.7} parent=1 // pred_check_branch
      %14 = sbr.rel (0) target = $region13
    $region12: #{net_forward.7} parent=1 // pred_region
      _
    $region13: #{net_forward.7} parent=1 // pred_fallthru
      _
    %v15 = vld [vmem:[%s0] sm:$0xff]
    %v16 = vld [vmem:[%s1] sm:$0xff]
    %v17 = vld [vmem:[%s1 + $0x8] sm:$0xff]
    %v18 = vld [vmem:[%s1 + $0x10] sm:$0xff]
    %v19 = vld [vmem:[%s1 + $0x18] sm:$0xff]
    %v20 = vld [vmem:[%s1 + $0x20] sm:$0xff]
    %v21 = vld [vmem:[%s1 + $0x28] sm:$0xff]
    %v22 = vld [vmem:[%s1 + $0x30] sm:$0xff]
    %v23 = vld [vmem:[%s1 + $0x38] sm:$0xff]
    %v24 = vld [vmem:[%s1 + $0x40] sm:$0xff]
    %v25 = vld [vmem:[%s1 + $0x48] sm:$0xff]
    %v26 = vld [vmem:[%s1 + $0x50] sm:$0xff]
    %v27 = vld [vmem:[%s1 + $0x58] sm:$0xff]
    %v28 = vld [vmem:[%s1 + $0x60] sm:$0xff]
    %v29 = vld [vmem:[%s1 + $0x68] sm:$0xff]
    %v30 = vld [vmem:[%s1 + $0x70] sm:$0xff]
    %v31 = vld [vmem:[%s1 + $0x78] sm:$0xff]
    %v32 = vld [vmem:[%s1 + $0x80] sm:$0xff]
    %v33 = vld [vmem:[%s1 + $0x88] sm:$0xff]
    %v34 = vld [vmem:[%s1 + $0x90] sm:$0xff]
    %v35 = vld [vmem:[%s1 + $0x98] sm:$0xff]
    %v36 = vld [vmem:[%s1 + $0xa0] sm:$0xff]
    %v37 = vld [vmem:[%s1 + $0xa8] sm:$0xff]
    %v38 = vld [vmem:[%s1 + $0xb0] sm:$0xff]
    %v39 = vld [vmem:[%s1 + $0xb8] sm:$0xff]
    %v40 = vld [vmem:[%s1 + $0xc0] sm:$0xff]
    %v41 = vld [vmem:[%s1 + $0xc8] sm:$0xff]
    %v42 = vld [vmem:[%s1 + $0xd0] sm:$0xff]
    %v43 = vld [vmem:[%s1 + $0xd8] sm:$0xff]
    %v44 = vld [vmem:[%s1 + $0xe0] sm:$0xff]
    %v45 = vld [vmem:[%s1 + $0xe8] sm:$0xff]
    %v46 = vld [vmem:[%s1 + $0xf0] sm:$0xff]
    %v47 = vld [vmem:[%s1 + $0xf8] sm:$0xff]
    %v48 = vld [vmem:[%s1 + $0x100] sm:$0xff]
    %v49 = vld [vmem:[%s1 + $0x108] sm:$0xff]
    %v50 = vld [vmem:[%s1 + $0x110] sm:$0xff]
    %v51 = vld [vmem:[%s1 + $0x118] sm:$0xff]
    %v52 = vld [vmem:[%s1 + $0x120] sm:$0xff]
    %v53 = vld [vmem:[%s1 + $0x128] sm:$0xff]
    %v54 = vld [vmem:[%s1 + $0x130] sm:$0xff]
    %v55 = vld [vmem:[%s1 + $0x138] sm:$0xff]
    %v56 = vld [vmem:[%s1 + $0x140] sm:$0xff]
    %v57 = vld [vmem:[%s1 + $0x148] sm:$0xff]
    %v58 = vld [vmem:[%s1 + $0x150] sm:$0xff]
    %v59 = vld [vmem:[%s1 + $0x158] sm:$0xff]
    %v60 = vld [vmem:[%s1 + $0x160] sm:$0xff]
    %v61 = vld [vmem:[%s1 + $0x168] sm:$0xff]
    %v62 = vld [vmem:[%s1 + $0x170] sm:$0xff]
    %v63 = vld [vmem:[%s1 + $0x178] sm:$0xff]
    %v64 = vld [vmem:[%s1 + $0x180] sm:$0xff]
    %v65 = vld [vmem:[%s1 + $0x188] sm:$0xff]
    %v66 = vld [vmem:[%s1 + $0x190] sm:$0xff]
    %v67 = vld [vmem:[%s1 + $0x198] sm:$0xff]
    %v68 = vld [vmem:[%s1 + $0x1a0] sm:$0xff]
    %v69 = vld [vmem:[%s1 + $0x1a8] sm:$0xff]
    %v70 = vld [vmem:[%s1 + $0x1b0] sm:$0xff]
    %v71 = vld [vmem:[%s1 + $0x1b8] sm:$0xff]
    %v72 = vld [vmem:[%s1 + $0x1c0] sm:$0xff]
    %v73 = vld [vmem:[%s1 + $0x1c8] sm:$0xff]
    %v74 = vld [vmem:[%s1 + $0x1d0] sm:$0xff]
    %v75 = vld [vmem:[%s1 + $0x1d8] sm:$0xff]
    %v76 = vld [vmem:[%s1 + $0x1e0] sm:$0xff]
    %v77 = vld [vmem:[%s1 + $0x1e8] sm:$0xff]
    %v78 = vld [vmem:[%s1 + $0x1f0] sm:$0xff]
    %v79 = vld [vmem:[%s1 + $0x1f8] sm:$0xff]
    %v80 = vld [vmem:[%s2] sm:$0x1]
    %v82 = vlaneseq
    %v83 = vshrl.u32 %v82, 7
    %v84 = vsub.s32 0, %v83
    %v85 = vrot.slane %v80, %v84
    %v88 = vcombine.high %v15, %v15
    %v90 = vunpack.c.l.s4 1983009808
    %v91 = vunpack.c.0.s8 %v90
    %v92 = vlaneseq
    %v93 = vshrl.u32 %v92, 7
    %v94 = vsub.s32 %v91, %v93
    %v95 = vrot.slane %v15, %v94
    %v97 = vunpack.c.l.s4 1983009808
    %v98 = vunpack.c.0.s8 %v97
    %v99 = vlaneseq
    %v100 = vshrl.u32 %v99, 7
    %v101 = vsub.s32 %v98, %v100
    %v102 = vrot.slane %v88, %v101
    %v103 = vcombine.high %v95, %v95
    %v104 = vcombine.high %v102, %v102
    %109 = vmatprep.subr.mxu0 0.0
    %110 = vmatpush1.msra.mxu0 %v16
    %111 = vmatprep.subr.mxu0 0.0
    %112 = vmatpush1.msra.mxu0 %v17
    %113 = vmatprep.subr.mxu0 0.0
    %114 = vmatpush1.msra.mxu0 %v18
    %115 = vmatprep.subr.mxu0 0.0
    %116 = vmatpush1.msra.mxu0 %v19
    %117 = vmatprep.subr.mxu0 0.0
    %118 = vmatpush1.msra.mxu0 %v20
    %119 = vmatprep.subr.mxu0 0.0
    %120 = vmatpush1.msra.mxu0 %v21
    %121 = vmatprep.subr.mxu0 0.0
    %122 = vmatpush1.msra.mxu0 %v22
    %123 = vmatprep.subr.mxu0 0.0
    %124 = vmatpush1.msra.mxu0 %v23
    %125 = vmatprep.subr.mxu0 0.0
    %126 = vmatpush1.msra.mxu0 %v24
    %127 = vmatprep.subr.mxu0 0.0
    %128 = vmatpush1.msra.mxu0 %v25
    %129 = vmatprep.subr.mxu0 0.0
    %130 = vmatpush1.msra.mxu0 %v26
    %131 = vmatprep.subr.mxu0 0.0
    %132 = vmatpush1.msra.mxu0 %v27
    %133 = vmatprep.subr.mxu0 0.0
    %134 = vmatpush1.msra.mxu0 %v28
    %135 = vmatprep.subr.mxu0 0.0
    %136 = vmatpush1.msra.mxu0 %v29
    %137 = vmatprep.subr.mxu0 0.0
    %138 = vmatpush1.msra.mxu0 %v30
    %139 = vmatprep.subr.mxu0 0.0
    %140 = vmatpush1.msra.mxu0 %v31
    %141 = vmatprep.subr.mxu0 0.0
    %142 = vmatpush1.msra.mxu0 %v32
    %143 = vmatprep.subr.mxu0 0.0
    %144 = vmatpush1.msra.mxu0 %v33
    %145 = vmatprep.subr.mxu0 0.0
    %146 = vmatpush1.msra.mxu0 %v34
    %147 = vmatprep.subr.mxu0 0.0
    %148 = vmatpush1.msra.mxu0 %v35
    %149 = vmatprep.subr.mxu0 0.0
    %150 = vmatpush1.msra.mxu0 %v36
    %151 = vmatprep.subr.mxu0 0.0
    %152 = vmatpush1.msra.mxu0 %v37
    %153 = vmatprep.subr.mxu0 0.0
    %154 = vmatpush1.msra.mxu0 %v38
    %155 = vmatprep.subr.mxu0 0.0
    %156 = vmatpush1.msra.mxu0 %v39
    %157 = vmatprep.subr.mxu0 0.0
    %158 = vmatpush1.msra.mxu0 %v40
    %159 = vmatprep.subr.mxu0 0.0
    %160 = vmatpush1.msra.mxu0 %v41
    %161 = vmatprep.subr.mxu0 0.0
    %162 = vmatpush1.msra.mxu0 %v42
    %163 = vmatprep.subr.mxu0 0.0
    %164 = vmatpush1.msra.mxu0 %v43
    %165 = vmatprep.subr.mxu0 0.0
    %166 = vmatpush1.msra.mxu0 %v44
    %167 = vmatprep.subr.mxu0 0.0
    %168 = vmatpush1.msra.mxu0 %v45
    %169 = vmatprep.subr.mxu0 0.0
    %170 = vmatpush1.msra.mxu0 %v46
    %171 = vmatprep.subr.mxu0 0.0
    %172 = vmatpush1.msra.mxu0 %v47
    %173 = vmatprep.mubr.f32.mxu0 %v103
    %174 = vmatmul.mubr.f32.gmra.mrb[0].mxu0 %v95
    %v175 = vpop.f32.mrb[0].mxu0
    %v176 = vadd.f32 %v85, %v175
    %v177 = vpop.f32.mrb[0].mxu0
    %178 = vdwg.mxu0
    %179 = vmatprep.subr.mxu0 0.0
    %180 = vmatpush1.msra.mxu0 %v48
    %181 = vmatprep.subr.mxu0 0.0
    %182 = vmatpush1.msra.mxu0 %v49
    %183 = vmatprep.subr.mxu0 0.0
    %184 = vmatpush1.msra.mxu0 %v50
    %185 = vmatprep.subr.mxu0 0.0
    %186 = vmatpush1.msra.mxu0 %v51
    %187 = vmatprep.subr.mxu0 0.0
    %188 = vmatpush1.msra.mxu0 %v52
    %189 = vmatprep.subr.mxu0 0.0
    %190 = vmatpush1.msra.mxu0 %v53
    %191 = vmatprep.subr.mxu0 0.0
    %192 = vmatpush1.msra.mxu0 %v54
    %193 = vmatprep.subr.mxu0 0.0
    %194 = vmatpush1.msra.mxu0 %v55
    %195 = vmatprep.subr.mxu0 0.0
    %196 = vmatpush1.msra.mxu0 %v56
    %197 = vmatprep.subr.mxu0 0.0
    %198 = vmatpush1.msra.mxu0 %v57
    %199 = vmatprep.subr.mxu0 0.0
    %200 = vmatpush1.msra.mxu0 %v58
    %201 = vmatprep.subr.mxu0 0.0
    %202 = vmatpush1.msra.mxu0 %v59
    %203 = vmatprep.subr.mxu0 0.0
    %204 = vmatpush1.msra.mxu0 %v60
    %205 = vmatprep.subr.mxu0 0.0
    %206 = vmatpush1.msra.mxu0 %v61
    %207 = vmatprep.subr.mxu0 0.0
    %208 = vmatpush1.msra.mxu0 %v62
    %209 = vmatprep.subr.mxu0 0.0
    %210 = vmatpush1.msra.mxu0 %v63
    %211 = vmatprep.subr.mxu0 0.0
    %212 = vmatpush1.msra.mxu0 %v64
    %213 = vmatprep.subr.mxu0 0.0
    %214 = vmatpush1.msra.mxu0 %v65
    %215 = vmatprep.subr.mxu0 0.0
    %216 = vmatpush1.msra.mxu0 %v66
    %217 = vmatprep.subr.mxu0 0.0
    %218 = vmatpush1.msra.mxu0 %v67
    %219 = vmatprep.subr.mxu0 0.0
    %220 = vmatpush1.msra.mxu0 %v68
    %221 = vmatprep.subr.mxu0 0.0
    %222 = vmatpush1.msra.mxu0 %v69
    %223 = vmatprep.subr.mxu0 0.0
    %224 = vmatpush1.msra.mxu0 %v70
    %225 = vmatprep.subr.mxu0 0.0
    %226 = vmatpush1.msra.mxu0 %v71
    %227 = vmatprep.subr.mxu0 0.0
    %228 = vmatpush1.msra.mxu0 %v72
    %229 = vmatprep.subr.mxu0 0.0
    %230 = vmatpush1.msra.mxu0 %v73
    %231 = vmatprep.subr.mxu0 0.0
    %232 = vmatpush1.msra.mxu0 %v74
    %233 = vmatprep.subr.mxu0 0.0
    %234 = vmatpush1.msra.mxu0 %v75
    %235 = vmatprep.subr.mxu0 0.0
    %236 = vmatpush1.msra.mxu0 %v76
    %237 = vmatprep.subr.mxu0 0.0
    %238 = vmatpush1.msra.mxu0 %v77
    %239 = vmatprep.subr.mxu0 0.0
    %240 = vmatpush1.msra.mxu0 %v78
    %241 = vmatprep.subr.mxu0 0.0
    %242 = vmatpush1.msra.mxu0 %v79
    %243 = vmatprep.mubr.f32.mxu0 %v104
    %244 = vmatmul.mubr.f32.gmra.mrb[0].mxu0 %v102
    %v245 = vpop.f32.mrb[0].mxu0
    %v246 = vadd.f32 %v176, %v245
    %v247 = vpop.f32.mrb[0].mxu0
    %248 = vdwg.mxu0
    %vm249 = vcmask 74752
    %v250 = vsel %vm249, %v246, -inf
    %251 = vmax.xlane.f32.xlu0 %v250
    %v252 = vpop.xlane.xlu0 %251
    %v253 = vsub.f32 %v246, %v252
    %v254 = vmul.f32 %v253, 1.442695
    %v255 = vpow.pop %v254
    %v256 = vsel %vm249, %v255, 0.0
    %257 = vadd.xlane.f32.xlu0 %v256
    %v258 = vpop.xlane.xlu0 %257
    %v259 = vlog2.pop %v258
    %v260 = vmul.f32 %v259, 0.6931472
    %v261 = vsub.f32 %v253, %v260
    %262 = vst.msk [vmem:[#allocation2] sm:$0x3] %vm249, %v261
    // Predicated region
    $region14: #{net_forward.7} parent=1 // pred_check
      _
    $region15: #{net_forward.7} parent=1 // pred_check_branch
      %264 = sbr.rel (0) target = $region17
    $region16: #{net_forward.7} parent=1 // pred_region
      %s266 = ssub.s32 32, 32
      %267 = vsyncadd [#allocation3], %s266
      %s269 = sshll.u32 [#allocation2], 4
      %s270 = int_to_ptr.vmem [resolvable:$true] %s269
      %272 = dma.vmem_to_hbm [thread:$0]  %s270, 32, %s3, [#allocation3]
    $region17: #{net_forward.7} parent=1 // pred_fallthru
      _
    // Predicated region
    $region18: #{net_forward.7} parent=1 // pred_check
      _
    $region19: #{net_forward.7} parent=1 // pred_check_branch
      %274 = sbr.rel (0) target = $region21
    $region20: #{net_forward.7} parent=1 // pred_region
      %275 = dma.done [#allocation3], 32
    $region21: #{net_forward.7} parent=1 // pred_fallthru
      _
    %276 = vsyncpa [#allocation3], 1

// kernel: net_forward.6
$region0: #{net_forward.6}
  #allocation0 [shape = 'u32[]', space=smem, size = 0x4, offset = 0x4, fixed_abs, tag = 'smem constant byte address 0x4 - core index']
  #allocation1 [shape = 'u32[144,128]{1,0:T(1,128)}', space=vmem, size = 0x12000, scoped, tag = 'internal scratch']
  #allocation2 [shape = 'f32[2,512]{1,0:T(2,128)}', space=vmem, size = 0x1000, scoped, tag = 'scratch operand']
  %s0 = inlined_call_operand.vmem [shape: bf16[2,25600], index: 0, kind: input, shape index: {}]
  %s1 = inlined_call_operand.vmem [shape: bf16[25600,512], index: 1, kind: input, shape index: {}]
  %s2 = inlined_call_operand.vmem [shape: f32[1,512], index: 2, kind: input, shape index: {}]
  %s3 = inlined_call_operand.vmem [shape: f32[2,512], index: 3, kind: output, shape index: {}]
  %s4 = sld [smem:[#allocation0]]
  $region53: #{net_forward.6} parent=0
    _
  %s6 = ssub.s32 1, %s4
  %s7 = scalar_select 0, %s6, %s4
  loop: start=0, step=1, limit=10
  $region2: #{net_forward.6} parent=0 // loop_pre_header
    _
  $region3: #{net_forward.6} parent=0 // loop_header
    %s9 = sphi 0, %s13
    %p10 = scmp.ge.s32.totalorder %s9, 10
    %s16 = sphi 0, %s28
    %s17 = sphi 0, %s24
    %s18 = sphi 0, %s16
    %s19 = sphi 0, %s17
    %s20 = sphi 0, %s18
    %s21 = sphi 0, %s19
    %s33 = sphi 0, %s35
    %s36 = sphi 0, %s33
    %s37 = sphi 0, %s36
    %s53 = sphi 0, %s37
    %s59 = sphi 0, %s61
    %s62 = sphi 0, %s59
    %s63 = sphi 0, %s62
    %s79 = sphi 0, %s63
    %s83 = sphi 0, %s83
    %s85 = sphi 0, %s83
    %s86 = sphi 0, %s85
    %s100 = sphi 0, %s86
    %s106 = sphi 0, %s108
    %s109 = sphi 0, %s106
    %s110 = sphi 0, %s109
    %s126 = sphi 0, %s110
  $region4: #{net_forward.6} parent=0 // loop_header_branch
    %12 = sbr.rel (%p10) target = $region8
  $region5: #{net_forward.6} parent=0 // loop_body
    %s14 = ssub.s32 %s9, 1
    %s15 = ssub.s32 %s9, 2
    %s22 = sadd.s32 1, %s17
    %p23 = scmp.ge.s32.totalorder %s22, 8
    %s24 = scalar_select %p23, 0, %s22
    %s25 = sadd.s32 1, %s16
    %s26 = scalar_select %p23, %s25, %s16
    %p27 = scmp.ge.s32.totalorder %s26, 1
    %s28 = scalar_select %p27, 0, %s26
    %s29 = ssub.s32 %s16, %s28
    %s30 = ssub.s32 %s17, %s24
    %s31 = sor.u32 %s29, %s30
    %p32 = scmp.eq.s32.totalorder %s31, 0
    %s34 = sadd.s32 %s33, 1
    %s35 = scalar_select %p32, %s33, %s34
    %p38 = pneg %p32
    %p39 = scmp.eq.s32.totalorder %s9, 7
    %p40 = por %p38, %p39
    %p41 = scmp.ne.s32.totalorder %s33, %s36
    %p42 = scmp.eq.s32.totalorder %s9, 0
    %p43 = por %p41, %p42
    %p44 = scmp.ne.s32.totalorder %s33, %s36
    %p45 = scmp.eq.s32.totalorder %s14, 7
    %p46 = por %p44, %p45
    %p47 = scmp.ne.s32.totalorder %s36, %s37
    %p48 = scmp.eq.s32.totalorder %s14, 0
    %p49 = por %p47, %p48
    %p50 = scmp.ne.s32.totalorder %s36, %s37
    %p51 = scmp.eq.s32.totalorder %s15, 7
    %p52 = por %p50, %p51
    %p54 = scmp.ne.s32.totalorder %s37, %s53
    %p55 = scmp.eq.s32.totalorder %s15, 0
    %p56 = por %p54, %p55
    %s57 = ssub.s32 %s17, %s24
    %p58 = scmp.eq.s32.totalorder %s57, 0
    %s60 = sadd.s32 %s59, 1
    %s61 = scalar_select %p58, %s59, %s60
    %p64 = pneg %p58
    %p65 = scmp.eq.s32.totalorder %s9, 7
    %p66 = por %p64, %p65
    %p67 = scmp.ne.s32.totalorder %s59, %s62
    %p68 = scmp.eq.s32.totalorder %s9, 0
    %p69 = por %p67, %p68
    %p70 = scmp.ne.s32.totalorder %s59, %s62
    %p71 = scmp.eq.s32.totalorder %s14, 7
    %p72 = por %p70, %p71
    %p73 = scmp.ne.s32.totalorder %s62, %s63
    %p74 = scmp.eq.s32.totalorder %s14, 0
    %p75 = por %p73, %p74
    %p76 = scmp.ne.s32.totalorder %s62, %s63
    %p77 = scmp.eq.s32.totalorder %s15, 7
    %p78 = por %p76, %p77
    %p80 = scmp.ne.s32.totalorder %s63, %s79
    %p81 = scmp.eq.s32.totalorder %s15, 0
    %p82 = por %p80, %p81
    %s84 = sadd.s32 %s83, 1
    %p87 = scmp.eq.s32.totalorder %s9, 7
    %p88 = scmp.ne.s32.totalorder %s83, %s85
    %p89 = scmp.eq.s32.totalorder %s9, 0
    %p90 = por %p88, %p89
    %p91 = scmp.ne.s32.totalorder %s83, %s85
    %p92 = scmp.eq.s32.totalorder %s14, 7
    %p93 = por %p91, %p92
    %p94 = scmp.ne.s32.totalorder %s85, %s86
    %p95 = scmp.eq.s32.totalorder %s14, 0
    %p96 = por %p94, %p95
    %p97 = scmp.ne.s32.totalorder %s85, %s86
    %p98 = scmp.eq.s32.totalorder %s15, 7
    %p99 = por %p97, %p98
    %p101 = scmp.ne.s32.totalorder %s86, %s100
    %p102 = scmp.eq.s32.totalorder %s15, 0
    %p103 = por %p101, %p102
    %s104 = ssub.s32 %s16, %s28
    %p105 = scmp.eq.s32.totalorder %s104, 0
    %s107 = sadd.s32 %s106, 1
    %s108 = scalar_select %p105, %s106, %s107
    %p111 = pneg %p105
    %p112 = scmp.eq.s32.totalorder %s9, 7
    %p113 = por %p111, %p112
    %p114 = scmp.ne.s32.totalorder %s106, %s109
    %p115 = scmp.eq.s32.totalorder %s9, 0
    %p116 = por %p114, %p115
    %p117 = scmp.ne.s32.totalorder %s106, %s109
    %p118 = scmp.eq.s32.totalorder %s14, 7
    %p119 = por %p117, %p118
    %p120 = scmp.ne.s32.totalorder %s109, %s110
    %p121 = scmp.eq.s32.totalorder %s14, 0
    %p122 = por %p120, %p121
    %p123 = scmp.ne.s32.totalorder %s109, %s110
    %p124 = scmp.eq.s32.totalorder %s15, 7
    %p125 = por %p123, %p124
    %p127 = scmp.ne.s32.totalorder %s110, %s126
    %p128 = scmp.eq.s32.totalorder %s15, 0
    %p129 = por %p127, %p128
    %p130 = scmp.le.s32.totalorder 1, %s9
    %p131 = scmp.lt.s32.totalorder %s9, 9
    %p132 = pnand %p130, %p131
    %p133 = pneg %p132
    // Predicated region
    $region9: #{net_forward.6} parent=5 // pred_check
      _
    $region10: #{net_forward.6} parent=5 // pred_check_branch
      %135 = sbr.rel (%p132) target = $region12
    $region11: #{net_forward.6} parent=5 // pred_region
      %s136 = ssub.s32 %s9, 1
      // Predicated region
      $region13: #{net_forward.6} parent=11 // pred_check
        %p137 = pneg %p96
      $region14: #{net_forward.6} parent=11 // pred_check_branch
        %139 = sbr.rel (%p137) target = $region16
      $region15: #{net_forward.6} parent=11 // pred_region
        _
      $region16: #{net_forward.6} parent=11 // pred_fallthru
        _
    $region12: #{net_forward.6} parent=5 // pred_fallthru
      _
    %p140 = scmp.lt.s32.totalorder %s9, 8
    // Predicated region
    $region17: #{net_forward.6} parent=5 // pred_check
      %p141 = pneg %p140
    $region18: #{net_forward.6} parent=5 // pred_check_branch
      %143 = sbr.rel (%p141) target = $region20
    $region19: #{net_forward.6} parent=5 // pred_region
      // Predicated region
      $region21: #{net_forward.6} parent=19 // pred_check
        %p144 = pneg %p43
      $region22: #{net_forward.6} parent=19 // pred_check_branch
        %146 = sbr.rel (%p144) target = $region24
      $region23: #{net_forward.6} parent=19 // pred_region
        %s147 = smul.u32 25, %s17
        %p148 = scmp.lt.s32.totalorder %s16, 0
        %s149 = scalar_select %p148, %s16, 0
        %p150 = scmp.lt.s32.totalorder %s147, 199
        %s151 = scalar_select %p150, %s147, 199
        %s152 = smul.addr %s149, 200
        %s153 = sadd.s32 %s151, %s152
        %s154 = scalar_lea.vmem %s0, %s153
        %s155 = smul.u32 25, %s17
      $region24: #{net_forward.6} parent=19 // pred_fallthru
        _
      // Predicated region
      $region25: #{net_forward.6} parent=19 // pred_check
        %p156 = pneg %p69
      $region26: #{net_forward.6} parent=19 // pred_check_branch
        %158 = sbr.rel (%p156) target = $region28
      $region27: #{net_forward.6} parent=19 // pred_region
        %s159 = smul.u32 400, %s17
        %p160 = scmp.lt.s32.totalorder %s159, 3199
        %s161 = scalar_select %p160, %s159, 3199
        %s162 = smul.addr %s161, 4
        %s163 = smul.addr %s162, 4
        %s164 = scalar_lea.vmem %s1, %s163
        %s165 = smul.u32 400, %s17
      $region28: #{net_forward.6} parent=19 // pred_fallthru
        _
    $region20: #{net_forward.6} parent=5 // pred_fallthru
      _
    %p166 = scmp.le.s32.totalorder 1, %s9
    %p167 = scmp.lt.s32.totalorder %s9, 9
    %p168 = pnand %p166, %p167
    %p169 = pneg %p168
    // Predicated region
    $region29: #{net_forward.6} parent=5 // pred_check
      _
    $region30: #{net_forward.6} parent=5 // pred_check_branch
      %171 = sbr.rel (%p168) target = $region32
    $region31: #{net_forward.6} parent=5 // pred_region
      %s172 = ssub.s32 %s9, 1
      %s173 = smul.u32 25, %s19
      %p174 = scmp.lt.s32.totalorder %s18, 0
      %s175 = scalar_select %p174, %s18, 0
      %p176 = scmp.lt.s32.totalorder %s173, 199
      %s177 = scalar_select %p176, %s173, 199
      %s178 = smul.addr %s175, 200
      %s179 = sadd.s32 %s177, %s178
      %s180 = scalar_lea.vmem %s0, %s179
      %p181 = pneg %p49
      %p182 = pneg %p46
      %s183 = smul.u32 400, %s19
      %p184 = scmp.lt.s32.totalorder %s183, 3199
      %s185 = scalar_select %p184, %s183, 3199
      %s186 = smul.addr %s185, 4
      %s187 = smul.addr %s186, 4
      %s188 = scalar_lea.vmem %s1, %s187
      %p189 = pneg %p75
      %p190 = pneg %p72
      %p191 = pneg %p96
      %p192 = pneg %p93
      %p193 = pneg %p122
      %p194 = pneg %p119
      %p195 = scmp.lt.s32.totalorder %s18, 0
      %s196 = scalar_select %p195, %s18, 0
      %s197 = smul.addr %s196, 4
      %s198 = smul.addr %s197, 2
      %s199 = scalar_lea.vmem %s3, %s198
      %s200 = smul.u32 25, %s19
      %p201 = scmp.lt.s32.totalorder %s18, 0
      %s202 = scalar_select %p201, %s18, 0
      %p203 = scmp.lt.s32.totalorder %s200, 199
      %s204 = scalar_select %p203, %s200, 199
      %s205 = smul.addr %s202, 200
      %s206 = sadd.s32 %s204, %s205
      %s207 = scalar_lea.vmem %s0, %s206
      %s208 = smul.u32 25, %s19
      %s209 = smul.u32 400, %s19
      %p210 = scmp.lt.s32.totalorder %s209, 3199
      %s211 = scalar_select %p210, %s209, 3199
      %s212 = smul.addr %s211, 4
      %s213 = smul.addr %s212, 4
      %s214 = scalar_lea.vmem %s1, %s213
      %s215 = smul.u32 400, %s19
      %p216 = scmp.lt.s32.totalorder %s18, 0
      %s217 = scalar_select %p216, %s18, 0
      %s218 = smul.addr %s217, 4
      %s219 = smul.addr %s218, 2
      %s220 = scalar_lea.vmem %s3, %s219
      %p222 = scmp.eq.s32.totalorder %s19, 0
      // Predicated region
      $region33: #{net_forward.6} parent=31 // pred_check
        %p223 = pneg %p222
      $region34: #{net_forward.6} parent=31 // pred_check_branch
        %225 = sbr.rel (%p223) target = $region36
      $region35: #{net_forward.6} parent=31 // pred_region
        %226 = vst [vmem:[#allocation2] sm:$0xff] 0.0
      $region36: #{net_forward.6} parent=31 // pred_fallthru
        _
      %v227 = vld [vmem:[%s207] sm:$0xff]
      %v228 = vld [vmem:[%s207 + $0x8] sm:$0xff]
      %v229 = vld [vmem:[%s207 + $0x10] sm:$0xff]
      %v230 = vld [vmem:[%s207 + $0x18] sm:$0x1]
      %v231 = vld [vmem:[#allocation2] sm:$0xff]
      %v232 = vld [vmem:[%s214] sm:$0xff]
      %v233 = vld [vmem:[%s214 + $0x8] sm:$0xff]
      %v234 = vld [vmem:[%s214 + $0x10] sm:$0xff]
      %v235 = vld [vmem:[%s214 + $0x18] sm:$0xff]
      %v236 = vld [vmem:[%s214 + $0x20] sm:$0xff]
      %v237 = vld [vmem:[%s214 + $0x28] sm:$0xff]
      %v238 = vld [vmem:[%s214 + $0x30] sm:$0xff]
      %v239 = vld [vmem:[%s214 + $0x38] sm:$0xff]
      %v240 = vld [vmem:[%s214 + $0x40] sm:$0xff]
      %v241 = vld [vmem:[%s214 + $0x48] sm:$0xff]
      %v242 = vld [vmem:[%s214 + $0x50] sm:$0xff]
      %v243 = vld [vmem:[%s214 + $0x58] sm:$0xff]
      %v244 = vld [vmem:[%s214 + $0x60] sm:$0xff]
      %v245 = vld [vmem:[%s214 + $0x68] sm:$0xff]
      %v246 = vld [vmem:[%s214 + $0x70] sm:$0xff]
      %v247 = vld [vmem:[%s214 + $0x78] sm:$0xff]
      %v248 = vld [vmem:[%s214 + $0x80] sm:$0xff]
      %v249 = vld [vmem:[%s214 + $0x88] sm:$0xff]
      %v250 = vld [vmem:[%s214 + $0x90] sm:$0xff]
      %v251 = vld [vmem:[%s214 + $0x98] sm:$0xff]
      %v252 = vld [vmem:[%s214 + $0xa0] sm:$0xff]
      %v253 = vld [vmem:[%s214 + $0xa8] sm:$0xff]
      %v254 = vld [vmem:[%s214 + $0xb0] sm:$0xff]
      %v255 = vld [vmem:[%s214 + $0xb8] sm:$0xff]
      %v256 = vld [vmem:[%s214 + $0xc0] sm:$0xff]
      %v257 = vld [vmem:[%s214 + $0xc8] sm:$0xff]
      %v258 = vld [vmem:[%s214 + $0xd0] sm:$0xff]
      %v259 = vld [vmem:[%s214 + $0xd8] sm:$0xff]
      %v260 = vld [vmem:[%s214 + $0xe0] sm:$0xff]
      %v261 = vld [vmem:[%s214 + $0xe8] sm:$0xff]
      %v262 = vld [vmem:[%s214 + $0xf0] sm:$0xff]
      %v263 = vld [vmem:[%s214 + $0xf8] sm:$0xff]
      %v264 = vld [vmem:[%s214 + $0x100] sm:$0xff]
      %v265 = vld [vmem:[%s214 + $0x108] sm:$0xff]
      %v266 = vld [vmem:[%s214 + $0x110] sm:$0xff]
      %v267 = vld [vmem:[%s214 + $0x118] sm:$0xff]
      %v268 = vld [vmem:[%s214 + $0x120] sm:$0xff]
      %v269 = vld [vmem:[%s214 + $0x128] sm:$0xff]
      %v270 = vld [vmem:[%s214 + $0x130] sm:$0xff]
      %v271 = vld [vmem:[%s214 + $0x138] sm:$0xff]
      %v272 = vld [vmem:[%s214 + $0x140] sm:$0xff]
      %v273 = vld [vmem:[%s214 + $0x148] sm:$0xff]
      %v274 = vld [vmem:[%s214 + $0x150] sm:$0xff]
      %v275 = vld [vmem:[%s214 + $0x158] sm:$0xff]
      %v276 = vld [vmem:[%s214 + $0x160] sm:$0xff]
      %v277 = vld [vmem:[%s214 + $0x168] sm:$0xff]
      %v278 = vld [vmem:[%s214 + $0x170] sm:$0xff]
      %v279 = vld [vmem:[%s214 + $0x178] sm:$0xff]
      %v280 = vld [vmem:[%s214 + $0x180] sm:$0xff]
      %v281 = vld [vmem:[%s214 + $0x188] sm:$0xff]
      %v282 = vld [vmem:[%s214 + $0x190] sm:$0xff]
      %v283 = vld [vmem:[%s214 + $0x198] sm:$0xff]
      %v284 = vld [vmem:[%s214 + $0x1a0] sm:$0xff]
      %v285 = vld [vmem:[%s214 + $0x1a8] sm:$0xff]
      %v286 = vld [vmem:[%s214 + $0x1b0] sm:$0xff]
      %v287 = vld [vmem:[%s214 + $0x1b8] sm:$0xff]
      %v288 = vld [vmem:[%s214 + $0x1c0] sm:$0xff]
      %v289 = vld [vmem:[%s214 + $0x1c8] sm:$0xff]
      %v290 = vld [vmem:[%s214 + $0x1d0] sm:$0xff]
      %v291 = vld [vmem:[%s214 + $0x1d8] sm:$0xff]
      %v292 = vld [vmem:[%s214 + $0x1e0] sm:$0xff]
      %v293 = vld [vmem:[%s214 + $0x1e8] sm:$0xff]
      %v294 = vld [vmem:[%s214 + $0x1f0] sm:$0xff]
      %v295 = vld [vmem:[%s214 + $0x1f8] sm:$0xff]
      %v296 = vld [vmem:[%s214 + $0x200] sm:$0xff]
      %v297 = vld [vmem:[%s214 + $0x208] sm:$0xff]
      %v298 = vld [vmem:[%s214 + $0x210] sm:$0xff]
      %v299 = vld [vmem:[%s214 + $0x218] sm:$0xff]
      %v300 = vld [vmem:[%s214 + $0x220] sm:$0xff]
      %v301 = vld [vmem:[%s214 + $0x228] sm:$0xff]
      %v302 = vld [vmem:[%s214 + $0x230] sm:$0xff]
      %v303 = vld [vmem:[%s214 + $0x238] sm:$0xff]
      %v304 = vld [vmem:[%s214 + $0x240] sm:$0xff]
      %v305 = vld [vmem:[%s214 + $0x248] sm:$0xff]
      %v306 = vld [vmem:[%s214 + $0x250] sm:$0xff]
      %v307 = vld [vmem:[%s214 + $0x258] sm:$0xff]
      %v308 = vld [vmem:[%s214 + $0x260] sm:$0xff]
      %v309 = vld [vmem:[%s214 + $0x268] sm:$0xff]
      %v310 = vld [vmem:[%s214 + $0x270] sm:$0xff]
      %v311 = vld [vmem:[%s214 + $0x278] sm:$0xff]
      %v312 = vld [vmem:[%s214 + $0x280] sm:$0xff]
      %v313 = vld [vmem:[%s214 + $0x288] sm:$0xff]
      %v314 = vld [vmem:[%s214 + $0x290] sm:$0xff]
      %v315 = vld [vmem:[%s214 + $0x298] sm:$0xff]
      %v316 = vld [vmem:[%s214 + $0x2a0] sm:$0xff]
      %v317 = vld [vmem:[%s214 + $0x2a8] sm:$0xff]
      %v318 = vld [vmem:[%s214 + $0x2b0] sm:$0xff]
      %v319 = vld [vmem:[%s214 + $0x2b8] sm:$0xff]
      %v320 = vld [vmem:[%s214 + $0x2c0] sm:$0xff]
      %v321 = vld [vmem:[%s214 + $0x2c8] sm:$0xff]
      %v322 = vld [vmem:[%s214 + $0x2d0] sm:$0xff]
      %v323 = vld [vmem:[%s214 + $0x2d8] sm:$0xff]
      %v324 = vld [vmem:[%s214 + $0x2e0] sm:$0xff]
      %v325 = vld [vmem:[%s214 + $0x2e8] sm:$0xff]
      %v326 = vld [vmem:[%s214 + $0x2f0] sm:$0xff]
      %v327 = vld [vmem:[%s214 + $0x2f8] sm:$0xff]
      %v328 = vld [vmem:[%s214 + $0x300] sm:$0xff]
      %v329 = vld [vmem:[%s214 + $0x308] sm:$0xff]
      %v330 = vld [vmem:[%s214 + $0x310] sm:$0xff]
      %v331 = vld [vmem:[%s214 + $0x318] sm:$0xff]
      %v332 = vld [vmem:[%s214 + $0x320] sm:$0xff]
      %v333 = vld [vmem:[%s214 + $0x328] sm:$0xff]
      %v334 = vld [vmem:[%s214 + $0x330] sm:$0xff]
      %v335 = vld [vmem:[%s214 + $0x338] sm:$0xff]
      %v336 = vld [vmem:[%s214 + $0x340] sm:$0xff]
      %v337 = vld [vmem:[%s214 + $0x348] sm:$0xff]
      %v338 = vld [vmem:[%s214 + $0x350] sm:$0xff]
      %v339 = vld [vmem:[%s214 + $0x358] sm:$0xff]
      %v340 = vld [vmem:[%s214 + $0x360] sm:$0xff]
      %v341 = vld [vmem:[%s214 + $0x368] sm:$0xff]
      %v342 = vld [vmem:[%s214 + $0x370] sm:$0xff]
      %v343 = vld [vmem:[%s214 + $0x378] sm:$0xff]
      %v344 = vld [vmem:[%s214 + $0x380] sm:$0xff]
      %v345 = vld [vmem:[%s214 + $0x388] sm:$0xff]
      %v346 = vld [vmem:[%s214 + $0x390] sm:$0xff]
      %v347 = vld [vmem:[%s214 + $0x398] sm:$0xff]
      %v348 = vld [vmem:[%s214 + $0x3a0] sm:$0xff]
      %v349 = vld [vmem:[%s214 + $0x3a8] sm:$0xff]
      %v350 = vld [vmem:[%s214 + $0x3b0] sm:$0xff]
      %v351 = vld [vmem:[%s214 + $0x3b8] sm:$0xff]
      %v352 = vld [vmem:[%s214 + $0x3c0] sm:$0xff]
      %v353 = vld [vmem:[%s214 + $0x3c8] sm:$0xff]
      %v354 = vld [vmem:[%s214 + $0x3d0] sm:$0xff]
      %v355 = vld [vmem:[%s214 + $0x3d8] sm:$0xff]
      %v356 = vld [vmem:[%s214 + $0x3e0] sm:$0xff]
      %v357 = vld [vmem:[%s214 + $0x3e8] sm:$0xff]
      %v358 = vld [vmem:[%s214 + $0x3f0] sm:$0xff]
      %v359 = vld [vmem:[%s214 + $0x3f8] sm:$0xff]
      %v360 = vld [vmem:[%s214 + $0x400] sm:$0xff]
      %v361 = vld [vmem:[%s214 + $0x408] sm:$0xff]
      %v362 = vld [vmem:[%s214 + $0x410] sm:$0xff]
      %v363 = vld [vmem:[%s214 + $0x418] sm:$0xff]
      %v364 = vld [vmem:[%s214 + $0x420] sm:$0xff]
      %v365 = vld [vmem:[%s214 + $0x428] sm:$0xff]
      %v366 = vld [vmem:[%s214 + $0x430] sm:$0xff]
      %v367 = vld [vmem:[%s214 + $0x438] sm:$0xff]
      %v368 = vld [vmem:[%s214 + $0x440] sm:$0xff]
      %v369 = vld [vmem:[%s214 + $0x448] sm:$0xff]
      %v370 = vld [vmem:[%s214 + $0x450] sm:$0xff]
      %v371 = vld [vmem:[%s214 + $0x458] sm:$0xff]
      %v372 = vld [vmem:[%s214 + $0x460] sm:$0xff]
      %v373 = vld [vmem:[%s214 + $0x468] sm:$0xff]
      %v374 = vld [vmem:[%s214 + $0x470] sm:$0xff]
      %v375 = vld [vmem:[%s214 + $0x478] sm:$0xff]
      %v376 = vld [vmem:[%s214 + $0x480] sm:$0xff]
      %v377 = vld [vmem:[%s214 + $0x488] sm:$0xff]
      %v378 = vld [vmem:[%s214 + $0x490] sm:$0xff]
      %v379 = vld [vmem:[%s214 + $0x498] sm:$0xff]
      %v380 = vld [vmem:[%s214 + $0x4a0] sm:$0xff]
      %v381 = vld [vmem:[%s214 + $0x4a8] sm:$0xff]
      %v382 = vld [vmem:[%s214 + $0x4b0] sm:$0xff]
      %v383 = vld [vmem:[%s214 + $0x4b8] sm:$0xff]
      %v384 = vld [vmem:[%s214 + $0x4c0] sm:$0xff]
      %v385 = vld [vmem:[%s214 + $0x4c8] sm:$0xff]
      %v386 = vld [vmem:[%s214 + $0x4d0] sm:$0xff]
      %v387 = vld [vmem:[%s214 + $0x4d8] sm:$0xff]
      %v388 = vld [vmem:[%s214 + $0x4e0] sm:$0xff]
      %v389 = vld [vmem:[%s214 + $0x4e8] sm:$0xff]
      %v390 = vld [vmem:[%s214 + $0x4f0] sm:$0xff]
      %v391 = vld [vmem:[%s214 + $0x4f8] sm:$0xff]
      %v392 = vld [vmem:[%s214 + $0x500] sm:$0xff]
      %v393 = vld [vmem:[%s214 + $0x508] sm:$0xff]
      %v394 = vld [vmem:[%s214 + $0x510] sm:$0xff]
      %v395 = vld [vmem:[%s214 + $0x518] sm:$0xff]
      %v396 = vld [vmem:[%s214 + $0x520] sm:$0xff]
      %v397 = vld [vmem:[%s214 + $0x528] sm:$0xff]
      %v398 = vld [vmem:[%s214 + $0x530] sm:$0xff]
      %v399 = vld [vmem:[%s214 + $0x538] sm:$0xff]
      %v400 = vld [vmem:[%s214 + $0x540] sm:$0xff]
      %v401 = vld [vmem:[%s214 + $0x548] sm:$0xff]
      %v402 = vld [vmem:[%s214 + $0x550] sm:$0xff]
      %v403 = vld [vmem:[%s214 + $0x558] sm:$0xff]
      %v404 = vld [vmem:[%s214 + $0x560] sm:$0xff]
      %v405 = vld [vmem:[%s214 + $0x568] sm:$0xff]
      %v406 = vld [vmem:[%s214 + $0x570] sm:$0xff]
      %v407 = vld [vmem:[%s214 + $0x578] sm:$0xff]
      %v408 = vld [vmem:[%s214 + $0x580] sm:$0xff]
      %v409 = vld [vmem:[%s214 + $0x588] sm:$0xff]
      %v410 = vld [vmem:[%s214 + $0x590] sm:$0xff]
      %v411 = vld [vmem:[%s214 + $0x598] sm:$0xff]
      %v412 = vld [vmem:[%s214 + $0x5a0] sm:$0xff]
      %v413 = vld [vmem:[%s214 + $0x5a8] sm:$0xff]
      %v414 = vld [vmem:[%s214 + $0x5b0] sm:$0xff]
      %v415 = vld [vmem:[%s214 + $0x5b8] sm:$0xff]
      %v416 = vld [vmem:[%s214 + $0x5c0] sm:$0xff]
      %v417 = vld [vmem:[%s214 + $0x5c8] sm:$0xff]
      %v418 = vld [vmem:[%s214 + $0x5d0] sm:$0xff]
      %v419 = vld [vmem:[%s214 + $0x5d8] sm:$0xff]
      %v420 = vld [vmem:[%s214 + $0x5e0] sm:$0xff]
      %v421 = vld [vmem:[%s214 + $0x5e8] sm:$0xff]
      %v422 = vld [vmem:[%s214 + $0x5f0] sm:$0xff]
      %v423 = vld [vmem:[%s214 + $0x5f8] sm:$0xff]
      %v424 = vld [vmem:[%s214 + $0x600] sm:$0xff]
      %v425 = vld [vmem:[%s214 + $0x608] sm:$0xff]
      %v426 = vld [vmem:[%s214 + $0x610] sm:$0xff]
      %v427 = vld [vmem:[%s214 + $0x618] sm:$0xff]
      %v428 = vld [vmem:[%s214 + $0x620] sm:$0xff]
      %v429 = vld [vmem:[%s214 + $0x628] sm:$0xff]
      %v430 = vld [vmem:[%s214 + $0x630] sm:$0xff]
      %v431 = vld [vmem:[%s214 + $0x638] sm:$0xff]
      %v432 = vld [vmem:[%s214 + $0x640] sm:$0xff]
      %v433 = vld [vmem:[%s214 + $0x648] sm:$0xff]
      %v434 = vld [vmem:[%s214 + $0x650] sm:$0xff]
      %v435 = vld [vmem:[%s214 + $0x658] sm:$0xff]
      %v436 = vld [vmem:[%s214 + $0x660] sm:$0xff]
      %v437 = vld [vmem:[%s214 + $0x668] sm:$0xff]
      %v438 = vld [vmem:[%s214 + $0x670] sm:$0xff]
      %v439 = vld [vmem:[%s214 + $0x678] sm:$0xff]
      %v440 = vld [vmem:[%s214 + $0x680] sm:$0xff]
      %v441 = vld [vmem:[%s214 + $0x688] sm:$0xff]
      %v442 = vld [vmem:[%s214 + $0x690] sm:$0xff]
      %v443 = vld [vmem:[%s214 + $0x698] sm:$0xff]
      %v444 = vld [vmem:[%s214 + $0x6a0] sm:$0xff]
      %v445 = vld [vmem:[%s214 + $0x6a8] sm:$0xff]
      %v446 = vld [vmem:[%s214 + $0x6b0] sm:$0xff]
      %v447 = vld [vmem:[%s214 + $0x6b8] sm:$0xff]
      %v448 = vld [vmem:[%s214 + $0x6c0] sm:$0xff]
      %v449 = vld [vmem:[%s214 + $0x6c8] sm:$0xff]
      %v450 = vld [vmem:[%s214 + $0x6d0] sm:$0xff]
      %v451 = vld [vmem:[%s214 + $0x6d8] sm:$0xff]
      %v452 = vld [vmem:[%s214 + $0x6e0] sm:$0xff]
      %v453 = vld [vmem:[%s214 + $0x6e8] sm:$0xff]
      %v454 = vld [vmem:[%s214 + $0x6f0] sm:$0xff]
      %v455 = vld [vmem:[%s214 + $0x6f8] sm:$0xff]
      %v456 = vld [vmem:[%s214 + $0x700] sm:$0xff]
      %v457 = vld [vmem:[%s214 + $0x708] sm:$0xff]
      %v458 = vld [vmem:[%s214 + $0x710] sm:$0xff]
      %v459 = vld [vmem:[%s214 + $0x718] sm:$0xff]
      %v460 = vld [vmem:[%s214 + $0x720] sm:$0xff]
      %v461 = vld [vmem:[%s214 + $0x728] sm:$0xff]
      %v462 = vld [vmem:[%s214 + $0x730] sm:$0xff]
      %v463 = vld [vmem:[%s214 + $0x738] sm:$0xff]
      %v464 = vld [vmem:[%s214 + $0x740] sm:$0xff]
      %v465 = vld [vmem:[%s214 + $0x748] sm:$0xff]
      %v466 = vld [vmem:[%s214 + $0x750] sm:$0xff]
      %v467 = vld [vmem:[%s214 + $0x758] sm:$0xff]
      %v468 = vld [vmem:[%s214 + $0x760] sm:$0xff]
      %v469 = vld [vmem:[%s214 + $0x768] sm:$0xff]
      %v470 = vld [vmem:[%s214 + $0x770] sm:$0xff]
      %v471 = vld [vmem:[%s214 + $0x778] sm:$0xff]
      %v472 = vld [vmem:[%s214 + $0x780] sm:$0xff]
      %v473 = vld [vmem:[%s214 + $0x788] sm:$0xff]
      %v474 = vld [vmem:[%s214 + $0x790] sm:$0xff]
      %v475 = vld [vmem:[%s214 + $0x798] sm:$0xff]
      %v476 = vld [vmem:[%s214 + $0x7a0] sm:$0xff]
      %v477 = vld [vmem:[%s214 + $0x7a8] sm:$0xff]
      %v478 = vld [vmem:[%s214 + $0x7b0] sm:$0xff]
      %v479 = vld [vmem:[%s214 + $0x7b8] sm:$0xff]
      %v480 = vld [vmem:[%s214 + $0x7c0] sm:$0xff]
      %v481 = vld [vmem:[%s214 + $0x7c8] sm:$0xff]
      %v482 = vld [vmem:[%s214 + $0x7d0] sm:$0xff]
      %v483 = vld [vmem:[%s214 + $0x7d8] sm:$0xff]
      %v484 = vld [vmem:[%s214 + $0x7e0] sm:$0xff]
      %v485 = vld [vmem:[%s214 + $0x7e8] sm:$0xff]
      %v486 = vld [vmem:[%s214 + $0x7f0] sm:$0xff]
      %v487 = vld [vmem:[%s214 + $0x7f8] sm:$0xff]
      %v488 = vld [vmem:[%s214 + $0x800] sm:$0xff]
      %v489 = vld [vmem:[%s214 + $0x808] sm:$0xff]
      %v490 = vld [vmem:[%s214 + $0x810] sm:$0xff]
      %v491 = vld [vmem:[%s214 + $0x818] sm:$0xff]
      %v492 = vld [vmem:[%s214 + $0x820] sm:$0xff]
      %v493 = vld [vmem:[%s214 + $0x828] sm:$0xff]
      %v494 = vld [vmem:[%s214 + $0x830] sm:$0xff]
      %v495 = vld [vmem:[%s214 + $0x838] sm:$0xff]
      %v496 = vld [vmem:[%s214 + $0x840] sm:$0xff]
      %v497 = vld [vmem:[%s214 + $0x848] sm:$0xff]
      %v498 = vld [vmem:[%s214 + $0x850] sm:$0xff]
      %v499 = vld [vmem:[%s214 + $0x858] sm:$0xff]
      %v500 = vld [vmem:[%s214 + $0x860] sm:$0xff]
      %v501 = vld [vmem:[%s214 + $0x868] sm:$0xff]
      %v502 = vld [vmem:[%s214 + $0x870] sm:$0xff]
      %v503 = vld [vmem:[%s214 + $0x878] sm:$0xff]
      %v504 = vld [vmem:[%s214 + $0x880] sm:$0xff]
      %v505 = vld [vmem:[%s214 + $0x888] sm:$0xff]
      %v506 = vld [vmem:[%s214 + $0x890] sm:$0xff]
      %v507 = vld [vmem:[%s214 + $0x898] sm:$0xff]
      %v508 = vld [vmem:[%s214 + $0x8a0] sm:$0xff]
      %v509 = vld [vmem:[%s214 + $0x8a8] sm:$0xff]
      %v510 = vld [vmem:[%s214 + $0x8b0] sm:$0xff]
      %v511 = vld [vmem:[%s214 + $0x8b8] sm:$0xff]
      %v512 = vld [vmem:[%s214 + $0x8c0] sm:$0xff]
      %v513 = vld [vmem:[%s214 + $0x8c8] sm:$0xff]
      %v514 = vld [vmem:[%s214 + $0x8d0] sm:$0xff]
      %v515 = vld [vmem:[%s214 + $0x8d8] sm:$0xff]
      %v516 = vld [vmem:[%s214 + $0x8e0] sm:$0xff]
      %v517 = vld [vmem:[%s214 + $0x8e8] sm:$0xff]
      %v518 = vld [vmem:[%s214 + $0x8f0] sm:$0xff]
      %v519 = vld [vmem:[%s214 + $0x8f8] sm:$0xff]
      %v520 = vld [vmem:[%s214 + $0x900] sm:$0xff]
      %v521 = vld [vmem:[%s214 + $0x908] sm:$0xff]
      %v522 = vld [vmem:[%s214 + $0x910] sm:$0xff]
      %v523 = vld [vmem:[%s214 + $0x918] sm:$0xff]
      %v524 = vld [vmem:[%s214 + $0x920] sm:$0xff]
      %v525 = vld [vmem:[%s214 + $0x928] sm:$0xff]
      %v526 = vld [vmem:[%s214 + $0x930] sm:$0xff]
      %v527 = vld [vmem:[%s214 + $0x938] sm:$0xff]
      %v528 = vld [vmem:[%s214 + $0x940] sm:$0xff]
      %v529 = vld [vmem:[%s214 + $0x948] sm:$0xff]
      %v530 = vld [vmem:[%s214 + $0x950] sm:$0xff]
      %v531 = vld [vmem:[%s214 + $0x958] sm:$0xff]
      %v532 = vld [vmem:[%s214 + $0x960] sm:$0xff]
      %v533 = vld [vmem:[%s214 + $0x968] sm:$0xff]
      %v534 = vld [vmem:[%s214 + $0x970] sm:$0xff]
      %v535 = vld [vmem:[%s214 + $0x978] sm:$0xff]
      %v536 = vld [vmem:[%s214 + $0x980] sm:$0xff]
      %v537 = vld [vmem:[%s214 + $0x988] sm:$0xff]
      %v538 = vld [vmem:[%s214 + $0x990] sm:$0xff]
      %v539 = vld [vmem:[%s214 + $0x998] sm:$0xff]
      %v540 = vld [vmem:[%s214 + $0x9a0] sm:$0xff]
      %v541 = vld [vmem:[%s214 + $0x9a8] sm:$0xff]
      %v542 = vld [vmem:[%s214 + $0x9b0] sm:$0xff]
      %v543 = vld [vmem:[%s214 + $0x9b8] sm:$0xff]
      %v544 = vld [vmem:[%s214 + $0x9c0] sm:$0xff]
      %v545 = vld [vmem:[%s214 + $0x9c8] sm:$0xff]
      %v546 = vld [vmem:[%s214 + $0x9d0] sm:$0xff]
      %v547 = vld [vmem:[%s214 + $0x9d8] sm:$0xff]
      %v548 = vld [vmem:[%s214 + $0x9e0] sm:$0xff]
      %v549 = vld [vmem:[%s214 + $0x9e8] sm:$0xff]
      %v550 = vld [vmem:[%s214 + $0x9f0] sm:$0xff]
      %v551 = vld [vmem:[%s214 + $0x9f8] sm:$0xff]
      %v552 = vld [vmem:[%s214 + $0xa00] sm:$0xff]
      %v553 = vld [vmem:[%s214 + $0xa08] sm:$0xff]
      %v554 = vld [vmem:[%s214 + $0xa10] sm:$0xff]
      %v555 = vld [vmem:[%s214 + $0xa18] sm:$0xff]
      %v556 = vld [vmem:[%s214 + $0xa20] sm:$0xff]
      %v557 = vld [vmem:[%s214 + $0xa28] sm:$0xff]
      %v558 = vld [vmem:[%s214 + $0xa30] sm:$0xff]
      %v559 = vld [vmem:[%s214 + $0xa38] sm:$0xff]
      %v560 = vld [vmem:[%s214 + $0xa40] sm:$0xff]
      %v561 = vld [vmem:[%s214 + $0xa48] sm:$0xff]
      %v562 = vld [vmem:[%s214 + $0xa50] sm:$0xff]
      %v563 = vld [vmem:[%s214 + $0xa58] sm:$0xff]
      %v564 = vld [vmem:[%s214 + $0xa60] sm:$0xff]
      %v565 = vld [vmem:[%s214 + $0xa68] sm:$0xff]
      %v566 = vld [vmem:[%s214 + $0xa70] sm:$0xff]
      %v567 = vld [vmem:[%s214 + $0xa78] sm:$0xff]
      %v568 = vld [vmem:[%s214 + $0xa80] sm:$0xff]
      %v569 = vld [vmem:[%s214 + $0xa88] sm:$0xff]
      %v570 = vld [vmem:[%s214 + $0xa90] sm:$0xff]
      %v571 = vld [vmem:[%s214 + $0xa98] sm:$0xff]
      %v572 = vld [vmem:[%s214 + $0xaa0] sm:$0xff]
      %v573 = vld [vmem:[%s214 + $0xaa8] sm:$0xff]
      %v574 = vld [vmem:[%s214 + $0xab0] sm:$0xff]
      %v575 = vld [vmem:[%s214 + $0xab8] sm:$0xff]
      %v576 = vld [vmem:[%s214 + $0xac0] sm:$0xff]
      %v577 = vld [vmem:[%s214 + $0xac8] sm:$0xff]
      %v578 = vld [vmem:[%s214 + $0xad0] sm:$0xff]
      %v579 = vld [vmem:[%s214 + $0xad8] sm:$0xff]
      %v580 = vld [vmem:[%s214 + $0xae0] sm:$0xff]
      %v581 = vld [vmem:[%s214 + $0xae8] sm:$0xff]
      %v582 = vld [vmem:[%s214 + $0xaf0] sm:$0xff]
      %v583 = vld [vmem:[%s214 + $0xaf8] sm:$0xff]
      %v584 = vld [vmem:[%s214 + $0xb00] sm:$0xff]
      %v585 = vld [vmem:[%s214 + $0xb08] sm:$0xff]
      %v586 = vld [vmem:[%s214 + $0xb10] sm:$0xff]
      %v587 = vld [vmem:[%s214 + $0xb18] sm:$0xff]
      %v588 = vld [vmem:[%s214 + $0xb20] sm:$0xff]
      %v589 = vld [vmem:[%s214 + $0xb28] sm:$0xff]
      %v590 = vld [vmem:[%s214 + $0xb30] sm:$0xff]
      %v591 = vld [vmem:[%s214 + $0xb38] sm:$0xff]
      %v592 = vld [vmem:[%s214 + $0xb40] sm:$0xff]
      %v593 = vld [vmem:[%s214 + $0xb48] sm:$0xff]
      %v594 = vld [vmem:[%s214 + $0xb50] sm:$0xff]
      %v595 = vld [vmem:[%s214 + $0xb58] sm:$0xff]
      %v596 = vld [vmem:[%s214 + $0xb60] sm:$0xff]
      %v597 = vld [vmem:[%s214 + $0xb68] sm:$0xff]
      %v598 = vld [vmem:[%s214 + $0xb70] sm:$0xff]
      %v599 = vld [vmem:[%s214 + $0xb78] sm:$0xff]
      %v600 = vld [vmem:[%s214 + $0xb80] sm:$0xff]
      %v601 = vld [vmem:[%s214 + $0xb88] sm:$0xff]
      %v602 = vld [vmem:[%s214 + $0xb90] sm:$0xff]
      %v603 = vld [vmem:[%s214 + $0xb98] sm:$0xff]
      %v604 = vld [vmem:[%s214 + $0xba0] sm:$0xff]
      %v605 = vld [vmem:[%s214 + $0xba8] sm:$0xff]
      %v606 = vld [vmem:[%s214 + $0xbb0] sm:$0xff]
      %v607 = vld [vmem:[%s214 + $0xbb8] sm:$0xff]
      %v608 = vld [vmem:[%s214 + $0xbc0] sm:$0xff]
      %v609 = vld [vmem:[%s214 + $0xbc8] sm:$0xff]
      %v610 = vld [vmem:[%s214 + $0xbd0] sm:$0xff]
      %v611 = vld [vmem:[%s214 + $0xbd8] sm:$0xff]
      %v612 = vld [vmem:[%s214 + $0xbe0] sm:$0xff]
      %v613 = vld [vmem:[%s214 + $0xbe8] sm:$0xff]
      %v614 = vld [vmem:[%s214 + $0xbf0] sm:$0xff]
      %v615 = vld [vmem:[%s214 + $0xbf8] sm:$0xff]
      %v616 = vld [vmem:[%s214 + $0xc00] sm:$0xff]
      %v617 = vld [vmem:[%s214 + $0xc08] sm:$0xff]
      %v618 = vld [vmem:[%s214 + $0xc10] sm:$0xff]
      %v619 = vld [vmem:[%s214 + $0xc18] sm:$0xff]
      %v620 = vld [vmem:[%s214 + $0xc20] sm:$0xff]
      %v621 = vld [vmem:[%s214 + $0xc28] sm:$0xff]
      %v622 = vld [vmem:[%s214 + $0xc30] sm:$0xff]
      %v623 = vld [vmem:[%s214 + $0xc38] sm:$0xff]
      %v624 = vld [vmem:[%s214 + $0xc40] sm:$0xff]
      %v625 = vld [vmem:[%s214 + $0xc48] sm:$0xff]
      %v626 = vld [vmem:[%s214 + $0xc50] sm:$0xff]
      %v627 = vld [vmem:[%s214 + $0xc58] sm:$0xff]
      %v628 = vld [vmem:[%s214 + $0xc60] sm:$0xff]
      %v629 = vld [vmem:[%s214 + $0xc68] sm:$0xff]
      %v630 = vld [vmem:[%s214 + $0xc70] sm:$0xff]
      %v631 = vld [vmem:[%s214 + $0xc78] sm:$0xff]
      %v632 = vld [vmem:[%s214 + $0xc80] sm:$0xff]
      %v633 = vld [vmem:[%s214 + $0xc88] sm:$0xff]
      %v634 = vld [vmem:[%s214 + $0xc90] sm:$0xff]
      %v635 = vld [vmem:[%s214 + $0xc98] sm:$0xff]
      %v636 = vld [vmem:[%s214 + $0xca0] sm:$0xff]
      %v637 = vld [vmem:[%s214 + $0xca8] sm:$0xff]
      %v638 = vld [vmem:[%s214 + $0xcb0] sm:$0xff]
      %v639 = vld [vmem:[%s214 + $0xcb8] sm:$0xff]
      %v640 = vld [vmem:[%s214 + $0xcc0] sm:$0xff]
      %v641 = vld [vmem:[%s214 + $0xcc8] sm:$0xff]
      %v642 = vld [vmem:[%s214 + $0xcd0] sm:$0xff]
      %v643 = vld [vmem:[%s214 + $0xcd8] sm:$0xff]
      %v644 = vld [vmem:[%s214 + $0xce0] sm:$0xff]
      %v645 = vld [vmem:[%s214 + $0xce8] sm:$0xff]
      %v646 = vld [vmem:[%s214 + $0xcf0] sm:$0xff]
      %v647 = vld [vmem:[%s214 + $0xcf8] sm:$0xff]
      %v648 = vld [vmem:[%s214 + $0xd00] sm:$0xff]
      %v649 = vld [vmem:[%s214 + $0xd08] sm:$0xff]
      %v650 = vld [vmem:[%s214 + $0xd10] sm:$0xff]
      %v651 = vld [vmem:[%s214 + $0xd18] sm:$0xff]
      %v652 = vld [vmem:[%s214 + $0xd20] sm:$0xff]
      %v653 = vld [vmem:[%s214 + $0xd28] sm:$0xff]
      %v654 = vld [vmem:[%s214 + $0xd30] sm:$0xff]
      %v655 = vld [vmem:[%s214 + $0xd38] sm:$0xff]
      %v656 = vld [vmem:[%s214 + $0xd40] sm:$0xff]
      %v657 = vld [vmem:[%s214 + $0xd48] sm:$0xff]
      %v658 = vld [vmem:[%s214 + $0xd50] sm:$0xff]
      %v659 = vld [vmem:[%s214 + $0xd58] sm:$0xff]
      %v660 = vld [vmem:[%s214 + $0xd60] sm:$0xff]
      %v661 = vld [vmem:[%s214 + $0xd68] sm:$0xff]
      %v662 = vld [vmem:[%s214 + $0xd70] sm:$0xff]
      %v663 = vld [vmem:[%s214 + $0xd78] sm:$0xff]
      %v664 = vld [vmem:[%s214 + $0xd80] sm:$0xff]
      %v665 = vld [vmem:[%s214 + $0xd88] sm:$0xff]
      %v666 = vld [vmem:[%s214 + $0xd90] sm:$0xff]
      %v667 = vld [vmem:[%s214 + $0xd98] sm:$0xff]
      %v668 = vld [vmem:[%s214 + $0xda0] sm:$0xff]
      %v669 = vld [vmem:[%s214 + $0xda8] sm:$0xff]
      %v670 = vld [vmem:[%s214 + $0xdb0] sm:$0xff]
      %v671 = vld [vmem:[%s214 + $0xdb8] sm:$0xff]
      %v672 = vld [vmem:[%s214 + $0xdc0] sm:$0xff]
      %v673 = vld [vmem:[%s214 + $0xdc8] sm:$0xff]
      %v674 = vld [vmem:[%s214 + $0xdd0] sm:$0xff]
      %v675 = vld [vmem:[%s214 + $0xdd8] sm:$0xff]
      %v676 = vld [vmem:[%s214 + $0xde0] sm:$0xff]
      %v677 = vld [vmem:[%s214 + $0xde8] sm:$0xff]
      %v678 = vld [vmem:[%s214 + $0xdf0] sm:$0xff]
      %v679 = vld [vmem:[%s214 + $0xdf8] sm:$0xff]
      %v680 = vld [vmem:[%s214 + $0xe00] sm:$0xff]
      %v681 = vld [vmem:[%s214 + $0xe08] sm:$0xff]
      %v682 = vld [vmem:[%s214 + $0xe10] sm:$0xff]
      %v683 = vld [vmem:[%s214 + $0xe18] sm:$0xff]
      %v684 = vld [vmem:[%s214 + $0xe20] sm:$0xff]
      %v685 = vld [vmem:[%s214 + $0xe28] sm:$0xff]
      %v686 = vld [vmem:[%s214 + $0xe30] sm:$0xff]
      %v687 = vld [vmem:[%s214 + $0xe38] sm:$0xff]
      %v688 = vld [vmem:[%s214 + $0xe40] sm:$0xff]
      %v689 = vld [vmem:[%s214 + $0xe48] sm:$0xff]
      %v690 = vld [vmem:[%s214 + $0xe50] sm:$0xff]
      %v691 = vld [vmem:[%s214 + $0xe58] sm:$0xff]
      %v692 = vld [vmem:[%s214 + $0xe60] sm:$0xff]
      %v693 = vld [vmem:[%s214 + $0xe68] sm:$0xff]
      %v694 = vld [vmem:[%s214 + $0xe70] sm:$0xff]
      %v695 = vld [vmem:[%s214 + $0xe78] sm:$0xff]
      %v696 = vld [vmem:[%s214 + $0xe80] sm:$0xff]
      %v697 = vld [vmem:[%s214 + $0xe88] sm:$0xff]
      %v698 = vld [vmem:[%s214 + $0xe90] sm:$0xff]
      %v699 = vld [vmem:[%s214 + $0xe98] sm:$0xff]
      %v700 = vld [vmem:[%s214 + $0xea0] sm:$0xff]
      %v701 = vld [vmem:[%s214 + $0xea8] sm:$0xff]
      %v702 = vld [vmem:[%s214 + $0xeb0] sm:$0xff]
      %v703 = vld [vmem:[%s214 + $0xeb8] sm:$0xff]
      %v704 = vld [vmem:[%s214 + $0xec0] sm:$0xff]
      %v705 = vld [vmem:[%s214 + $0xec8] sm:$0xff]
      %v706 = vld [vmem:[%s214 + $0xed0] sm:$0xff]
      %v707 = vld [vmem:[%s214 + $0xed8] sm:$0xff]
      %v708 = vld [vmem:[%s214 + $0xee0] sm:$0xff]
      %v709 = vld [vmem:[%s214 + $0xee8] sm:$0xff]
      %v710 = vld [vmem:[%s214 + $0xef0] sm:$0xff]
      %v711 = vld [vmem:[%s214 + $0xef8] sm:$0xff]
      %v712 = vld [vmem:[%s214 + $0xf00] sm:$0xff]
      %v713 = vld [vmem:[%s214 + $0xf08] sm:$0xff]
      %v714 = vld [vmem:[%s214 + $0xf10] sm:$0xff]
      %v715 = vld [vmem:[%s214 + $0xf18] sm:$0xff]
      %v716 = vld [vmem:[%s214 + $0xf20] sm:$0xff]
      %v717 = vld [vmem:[%s214 + $0xf28] sm:$0xff]
      %v718 = vld [vmem:[%s214 + $0xf30] sm:$0xff]
      %v719 = vld [vmem:[%s214 + $0xf38] sm:$0xff]
      %v720 = vld [vmem:[%s214 + $0xf40] sm:$0xff]
      %v721 = vld [vmem:[%s214 + $0xf48] sm:$0xff]
      %v722 = vld [vmem:[%s214 + $0xf50] sm:$0xff]
      %v723 = vld [vmem:[%s214 + $0xf58] sm:$0xff]
      %v724 = vld [vmem:[%s214 + $0xf60] sm:$0xff]
      %v725 = vld [vmem:[%s214 + $0xf68] sm:$0xff]
      %v726 = vld [vmem:[%s214 + $0xf70] sm:$0xff]
      %v727 = vld [vmem:[%s214 + $0xf78] sm:$0xff]
      %v728 = vld [vmem:[%s214 + $0xf80] sm:$0xff]
      %v729 = vld [vmem:[%s214 + $0xf88] sm:$0xff]
      %v730 = vld [vmem:[%s214 + $0xf90] sm:$0xff]
      %v731 = vld [vmem:[%s214 + $0xf98] sm:$0xff]
      %v732 = vld [vmem:[%s214 + $0xfa0] sm:$0xff]
      %v733 = vld [vmem:[%s214 + $0xfa8] sm:$0xff]
      %v734 = vld [vmem:[%s214 + $0xfb0] sm:$0xff]
      %v735 = vld [vmem:[%s214 + $0xfb8] sm:$0xff]
      %v736 = vld [vmem:[%s214 + $0xfc0] sm:$0xff]
      %v737 = vld [vmem:[%s214 + $0xfc8] sm:$0xff]
      %v738 = vld [vmem:[%s214 + $0xfd0] sm:$0xff]
      %v739 = vld [vmem:[%s214 + $0xfd8] sm:$0xff]
      %v740 = vld [vmem:[%s214 + $0xfe0] sm:$0xff]
      %v741 = vld [vmem:[%s214 + $0xfe8] sm:$0xff]
      %v742 = vld [vmem:[%s214 + $0xff0] sm:$0xff]
      %v743 = vld [vmem:[%s214 + $0xff8] sm:$0xff]
      %v744 = vld [vmem:[%s214 + $0x1000] sm:$0xff]
      %v745 = vld [vmem:[%s214 + $0x1008] sm:$0xff]
      %v746 = vld [vmem:[%s214 + $0x1010] sm:$0xff]
      %v747 = vld [vmem:[%s214 + $0x1018] sm:$0xff]
      %v748 = vld [vmem:[%s214 + $0x1020] sm:$0xff]
      %v749 = vld [vmem:[%s214 + $0x1028] sm:$0xff]
      %v750 = vld [vmem:[%s214 + $0x1030] sm:$0xff]
      %v751 = vld [vmem:[%s214 + $0x1038] sm:$0xff]
      %v752 = vld [vmem:[%s214 + $0x1040] sm:$0xff]
      %v753 = vld [vmem:[%s214 + $0x1048] sm:$0xff]
      %v754 = vld [vmem:[%s214 + $0x1050] sm:$0xff]
      %v755 = vld [vmem:[%s214 + $0x1058] sm:$0xff]
      %v756 = vld [vmem:[%s214 + $0x1060] sm:$0xff]
      %v757 = vld [vmem:[%s214 + $0x1068] sm:$0xff]
      %v758 = vld [vmem:[%s214 + $0x1070] sm:$0xff]
      %v759 = vld [vmem:[%s214 + $0x1078] sm:$0xff]
      %v760 = vld [vmem:[%s214 + $0x1080] sm:$0xff]
      %v761 = vld [vmem:[%s214 + $0x1088] sm:$0xff]
      %v762 = vld [vmem:[%s214 + $0x1090] sm:$0xff]
      %v763 = vld [vmem:[%s214 + $0x1098] sm:$0xff]
      %v764 = vld [vmem:[%s214 + $0x10a0] sm:$0xff]
      %v765 = vld [vmem:[%s214 + $0x10a8] sm:$0xff]
      %v766 = vld [vmem:[%s214 + $0x10b0] sm:$0xff]
      %v767 = vld [vmem:[%s214 + $0x10b8] sm:$0xff]
      %v768 = vld [vmem:[%s214 + $0x10c0] sm:$0xff]
      %v769 = vld [vmem:[%s214 + $0x10c8] sm:$0xff]
      %v770 = vld [vmem:[%s214 + $0x10d0] sm:$0xff]
      %v771 = vld [vmem:[%s214 + $0x10d8] sm:$0xff]
      %v772 = vld [vmem:[%s214 + $0x10e0] sm:$0xff]
      %v773 = vld [vmem:[%s214 + $0x10e8] sm:$0xff]
      %v774 = vld [vmem:[%s214 + $0x10f0] sm:$0xff]
      %v775 = vld [vmem:[%s214 + $0x10f8] sm:$0xff]
      %v776 = vld [vmem:[%s214 + $0x1100] sm:$0xff]
      %v777 = vld [vmem:[%s214 + $0x1108] sm:$0xff]
      %v778 = vld [vmem:[%s214 + $0x1110] sm:$0xff]
      %v779 = vld [vmem:[%s214 + $0x1118] sm:$0xff]
      %v780 = vld [vmem:[%s214 + $0x1120] sm:$0xff]
      %v781 = vld [vmem:[%s214 + $0x1128] sm:$0xff]
      %v782 = vld [vmem:[%s214 + $0x1130] sm:$0xff]
      %v783 = vld [vmem:[%s214 + $0x1138] sm:$0xff]
      %v784 = vld [vmem:[%s214 + $0x1140] sm:$0xff]
      %v785 = vld [vmem:[%s214 + $0x1148] sm:$0xff]
      %v786 = vld [vmem:[%s214 + $0x1150] sm:$0xff]
      %v787 = vld [vmem:[%s214 + $0x1158] sm:$0xff]
      %v788 = vld [vmem:[%s214 + $0x1160] sm:$0xff]
      %v789 = vld [vmem:[%s214 + $0x1168] sm:$0xff]
      %v790 = vld [vmem:[%s214 + $0x1170] sm:$0xff]
      %v791 = vld [vmem:[%s214 + $0x1178] sm:$0xff]
      %v792 = vld [vmem:[%s214 + $0x1180] sm:$0xff]
      %v793 = vld [vmem:[%s214 + $0x1188] sm:$0xff]
      %v794 = vld [vmem:[%s214 + $0x1190] sm:$0xff]
      %v795 = vld [vmem:[%s214 + $0x1198] sm:$0xff]
      %v796 = vld [vmem:[%s214 + $0x11a0] sm:$0xff]
      %v797 = vld [vmem:[%s214 + $0x11a8] sm:$0xff]
      %v798 = vld [vmem:[%s214 + $0x11b0] sm:$0xff]
      %v799 = vld [vmem:[%s214 + $0x11b8] sm:$0xff]
      %v800 = vld [vmem:[%s214 + $0x11c0] sm:$0xff]
      %v801 = vld [vmem:[%s214 + $0x11c8] sm:$0xff]
      %v802 = vld [vmem:[%s214 + $0x11d0] sm:$0xff]
      %v803 = vld [vmem:[%s214 + $0x11d8] sm:$0xff]
      %v804 = vld [vmem:[%s214 + $0x11e0] sm:$0xff]
      %v805 = vld [vmem:[%s214 + $0x11e8] sm:$0xff]
      %v806 = vld [vmem:[%s214 + $0x11f0] sm:$0xff]
      %v807 = vld [vmem:[%s214 + $0x11f8] sm:$0xff]
      %v808 = vld [vmem:[%s214 + $0x1200] sm:$0xff]
      %v809 = vld [vmem:[%s214 + $0x1208] sm:$0xff]
      %v810 = vld [vmem:[%s214 + $0x1210] sm:$0xff]
      %v811 = vld [vmem:[%s214 + $0x1218] sm:$0xff]
      %v812 = vld [vmem:[%s214 + $0x1220] sm:$0xff]
      %v813 = vld [vmem:[%s214 + $0x1228] sm:$0xff]
      %v814 = vld [vmem:[%s214 + $0x1230] sm:$0xff]
      %v815 = vld [vmem:[%s214 + $0x1238] sm:$0xff]
      %v816 = vld [vmem:[%s214 + $0x1240] sm:$0xff]
      %v817 = vld [vmem:[%s214 + $0x1248] sm:$0xff]
      %v818 = vld [vmem:[%s214 + $0x1250] sm:$0xff]
      %v819 = vld [vmem:[%s214 + $0x1258] sm:$0xff]
      %v820 = vld [vmem:[%s214 + $0x1260] sm:$0xff]
      %v821 = vld [vmem:[%s214 + $0x1268] sm:$0xff]
      %v822 = vld [vmem:[%s214 + $0x1270] sm:$0xff]
      %v823 = vld [vmem:[%s214 + $0x1278] sm:$0xff]
      %v824 = vld [vmem:[%s214 + $0x1280] sm:$0xff]
      %v825 = vld [vmem:[%s214 + $0x1288] sm:$0xff]
      %v826 = vld [vmem:[%s214 + $0x1290] sm:$0xff]
      %v827 = vld [vmem:[%s214 + $0x1298] sm:$0xff]
      %v828 = vld [vmem:[%s214 + $0x12a0] sm:$0xff]
      %v829 = vld [vmem:[%s214 + $0x12a8] sm:$0xff]
      %v830 = vld [vmem:[%s214 + $0x12b0] sm:$0xff]
      %v831 = vld [vmem:[%s214 + $0x12b8] sm:$0xff]
      %v832 = vld [vmem:[%s214 + $0x12c0] sm:$0xff]
      %v833 = vld [vmem:[%s214 + $0x12c8] sm:$0xff]
      %v834 = vld [vmem:[%s214 + $0x12d0] sm:$0xff]
      %v835 = vld [vmem:[%s214 + $0x12d8] sm:$0xff]
      %v836 = vld [vmem:[%s214 + $0x12e0] sm:$0xff]
      %v837 = vld [vmem:[%s214 + $0x12e8] sm:$0xff]
      %v838 = vld [vmem:[%s214 + $0x12f0] sm:$0xff]
      %v839 = vld [vmem:[%s214 + $0x12f8] sm:$0xff]
      %v840 = vld [vmem:[%s214 + $0x1300] sm:$0xff]
      %v841 = vld [vmem:[%s214 + $0x1308] sm:$0xff]
      %v842 = vld [vmem:[%s214 + $0x1310] sm:$0xff]
      %v843 = vld [vmem:[%s214 + $0x1318] sm:$0xff]
      %v844 = vld [vmem:[%s214 + $0x1320] sm:$0xff]
      %v845 = vld [vmem:[%s214 + $0x1328] sm:$0xff]
      %v846 = vld [vmem:[%s214 + $0x1330] sm:$0xff]
      %v847 = vld [vmem:[%s214 + $0x1338] sm:$0xff]
      %v848 = vld [vmem:[%s214 + $0x1340] sm:$0xff]
      %v849 = vld [vmem:[%s214 + $0x1348] sm:$0xff]
      %v850 = vld [vmem:[%s214 + $0x1350] sm:$0xff]
      %v851 = vld [vmem:[%s214 + $0x1358] sm:$0xff]
      %v852 = vld [vmem:[%s214 + $0x1360] sm:$0xff]
      %v853 = vld [vmem:[%s214 + $0x1368] sm:$0xff]
      %v854 = vld [vmem:[%s214 + $0x1370] sm:$0xff]
      %v855 = vld [vmem:[%s214 + $0x1378] sm:$0xff]
      %v856 = vld [vmem:[%s214 + $0x1380] sm:$0xff]
      %v857 = vld [vmem:[%s214 + $0x1388] sm:$0xff]
      %v858 = vld [vmem:[%s214 + $0x1390] sm:$0xff]
      %v859 = vld [vmem:[%s214 + $0x1398] sm:$0xff]
      %v860 = vld [vmem:[%s214 + $0x13a0] sm:$0xff]
      %v861 = vld [vmem:[%s214 + $0x13a8] sm:$0xff]
      %v862 = vld [vmem:[%s214 + $0x13b0] sm:$0xff]
      %v863 = vld [vmem:[%s214 + $0x13b8] sm:$0xff]
      %v864 = vld [vmem:[%s214 + $0x13c0] sm:$0xff]
      %v865 = vld [vmem:[%s214 + $0x13c8] sm:$0xff]
      %v866 = vld [vmem:[%s214 + $0x13d0] sm:$0xff]
      %v867 = vld [vmem:[%s214 + $0x13d8] sm:$0xff]
      %v868 = vld [vmem:[%s214 + $0x13e0] sm:$0xff]
      %v869 = vld [vmem:[%s214 + $0x13e8] sm:$0xff]
      %v870 = vld [vmem:[%s214 + $0x13f0] sm:$0xff]
      %v871 = vld [vmem:[%s214 + $0x13f8] sm:$0xff]
      %v872 = vld [vmem:[%s214 + $0x1400] sm:$0xff]
      %v873 = vld [vmem:[%s214 + $0x1408] sm:$0xff]
      %v874 = vld [vmem:[%s214 + $0x1410] sm:$0xff]
      %v875 = vld [vmem:[%s214 + $0x1418] sm:$0xff]
      %v876 = vld [vmem:[%s214 + $0x1420] sm:$0xff]
      %v877 = vld [vmem:[%s214 + $0x1428] sm:$0xff]
      %v878 = vld [vmem:[%s214 + $0x1430] sm:$0xff]
      %v879 = vld [vmem:[%s214 + $0x1438] sm:$0xff]
      %v880 = vld [vmem:[%s214 + $0x1440] sm:$0xff]
      %v881 = vld [vmem:[%s214 + $0x1448] sm:$0xff]
      %v882 = vld [vmem:[%s214 + $0x1450] sm:$0xff]
      %v883 = vld [vmem:[%s214 + $0x1458] sm:$0xff]
      %v884 = vld [vmem:[%s214 + $0x1460] sm:$0xff]
      %v885 = vld [vmem:[%s214 + $0x1468] sm:$0xff]
      %v886 = vld [vmem:[%s214 + $0x1470] sm:$0xff]
      %v887 = vld [vmem:[%s214 + $0x1478] sm:$0xff]
      %v888 = vld [vmem:[%s214 + $0x1480] sm:$0xff]
      %v889 = vld [vmem:[%s214 + $0x1488] sm:$0xff]
      %v890 = vld [vmem:[%s214 + $0x1490] sm:$0xff]
      %v891 = vld [vmem:[%s214 + $0x1498] sm:$0xff]
      %v892 = vld [vmem:[%s214 + $0x14a0] sm:$0xff]
      %v893 = vld [vmem:[%s214 + $0x14a8] sm:$0xff]
      %v894 = vld [vmem:[%s214 + $0x14b0] sm:$0xff]
      %v895 = vld [vmem:[%s214 + $0x14b8] sm:$0xff]
      %v896 = vld [vmem:[%s214 + $0x14c0] sm:$0xff]
      %v897 = vld [vmem:[%s214 + $0x14c8] sm:$0xff]
      %v898 = vld [vmem:[%s214 + $0x14d0] sm:$0xff]
      %v899 = vld [vmem:[%s214 + $0x14d8] sm:$0xff]
      %v900 = vld [vmem:[%s214 + $0x14e0] sm:$0xff]
      %v901 = vld [vmem:[%s214 + $0x14e8] sm:$0xff]
      %v902 = vld [vmem:[%s214 + $0x14f0] sm:$0xff]
      %v903 = vld [vmem:[%s214 + $0x14f8] sm:$0xff]
      %v904 = vld [vmem:[%s214 + $0x1500] sm:$0xff]
      %v905 = vld [vmem:[%s214 + $0x1508] sm:$0xff]
      %v906 = vld [vmem:[%s214 + $0x1510] sm:$0xff]
      %v907 = vld [vmem:[%s214 + $0x1518] sm:$0xff]
      %v908 = vld [vmem:[%s214 + $0x1520] sm:$0xff]
      %v909 = vld [vmem:[%s214 + $0x1528] sm:$0xff]
      %v910 = vld [vmem:[%s214 + $0x1530] sm:$0xff]
      %v911 = vld [vmem:[%s214 + $0x1538] sm:$0xff]
      %v912 = vld [vmem:[%s214 + $0x1540] sm:$0xff]
      %v913 = vld [vmem:[%s214 + $0x1548] sm:$0xff]
      %v914 = vld [vmem:[%s214 + $0x1550] sm:$0xff]
      %v915 = vld [vmem:[%s214 + $0x1558] sm:$0xff]
      %v916 = vld [vmem:[%s214 + $0x1560] sm:$0xff]
      %v917 = vld [vmem:[%s214 + $0x1568] sm:$0xff]
      %v918 = vld [vmem:[%s214 + $0x1570] sm:$0xff]
      %v919 = vld [vmem:[%s214 + $0x1578] sm:$0xff]
      %v920 = vld [vmem:[%s214 + $0x1580] sm:$0xff]
      %v921 = vld [vmem:[%s214 + $0x1588] sm:$0xff]
      %v922 = vld [vmem:[%s214 + $0x1590] sm:$0xff]
      %v923 = vld [vmem:[%s214 + $0x1598] sm:$0xff]
      %v924 = vld [vmem:[%s214 + $0x15a0] sm:$0xff]
      %v925 = vld [vmem:[%s214 + $0x15a8] sm:$0xff]
      %v926 = vld [vmem:[%s214 + $0x15b0] sm:$0xff]
      %v927 = vld [vmem:[%s214 + $0x15b8] sm:$0xff]
      %v928 = vld [vmem:[%s214 + $0x15c0] sm:$0xff]
      %v929 = vld [vmem:[%s214 + $0x15c8] sm:$0xff]
      %v930 = vld [vmem:[%s214 + $0x15d0] sm:$0xff]
      %v931 = vld [vmem:[%s214 + $0x15d8] sm:$0xff]
      %v932 = vld [vmem:[%s214 + $0x15e0] sm:$0xff]
      %v933 = vld [vmem:[%s214 + $0x15e8] sm:$0xff]
      %v934 = vld [vmem:[%s214 + $0x15f0] sm:$0xff]
      %v935 = vld [vmem:[%s214 + $0x15f8] sm:$0xff]
      %v936 = vld [vmem:[%s214 + $0x1600] sm:$0xff]
      %v937 = vld [vmem:[%s214 + $0x1608] sm:$0xff]
      %v938 = vld [vmem:[%s214 + $0x1610] sm:$0xff]
      %v939 = vld [vmem:[%s214 + $0x1618] sm:$0xff]
      %v940 = vld [vmem:[%s214 + $0x1620] sm:$0xff]
      %v941 = vld [vmem:[%s214 + $0x1628] sm:$0xff]
      %v942 = vld [vmem:[%s214 + $0x1630] sm:$0xff]
      %v943 = vld [vmem:[%s214 + $0x1638] sm:$0xff]
      %v944 = vld [vmem:[%s214 + $0x1640] sm:$0xff]
      %v945 = vld [vmem:[%s214 + $0x1648] sm:$0xff]
      %v946 = vld [vmem:[%s214 + $0x1650] sm:$0xff]
      %v947 = vld [vmem:[%s214 + $0x1658] sm:$0xff]
      %v948 = vld [vmem:[%s214 + $0x1660] sm:$0xff]
      %v949 = vld [vmem:[%s214 + $0x1668] sm:$0xff]
      %v950 = vld [vmem:[%s214 + $0x1670] sm:$0xff]
      %v951 = vld [vmem:[%s214 + $0x1678] sm:$0xff]
      %v952 = vld [vmem:[%s214 + $0x1680] sm:$0xff]
      %v953 = vld [vmem:[%s214 + $0x1688] sm:$0xff]
      %v954 = vld [vmem:[%s214 + $0x1690] sm:$0xff]
      %v955 = vld [vmem:[%s214 + $0x1698] sm:$0xff]
      %v956 = vld [vmem:[%s214 + $0x16a0] sm:$0xff]
      %v957 = vld [vmem:[%s214 + $0x16a8] sm:$0xff]
      %v958 = vld [vmem:[%s214 + $0x16b0] sm:$0xff]
      %v959 = vld [vmem:[%s214 + $0x16b8] sm:$0xff]
      %v960 = vld [vmem:[%s214 + $0x16c0] sm:$0xff]
      %v961 = vld [vmem:[%s214 + $0x16c8] sm:$0xff]
      %v962 = vld [vmem:[%s214 + $0x16d0] sm:$0xff]
      %v963 = vld [vmem:[%s214 + $0x16d8] sm:$0xff]
      %v964 = vld [vmem:[%s214 + $0x16e0] sm:$0xff]
      %v965 = vld [vmem:[%s214 + $0x16e8] sm:$0xff]
      %v966 = vld [vmem:[%s214 + $0x16f0] sm:$0xff]
      %v967 = vld [vmem:[%s214 + $0x16f8] sm:$0xff]
      %v968 = vld [vmem:[%s214 + $0x1700] sm:$0xff]
      %v969 = vld [vmem:[%s214 + $0x1708] sm:$0xff]
      %v970 = vld [vmem:[%s214 + $0x1710] sm:$0xff]
      %v971 = vld [vmem:[%s214 + $0x1718] sm:$0xff]
      %v972 = vld [vmem:[%s214 + $0x1720] sm:$0xff]
      %v973 = vld [vmem:[%s214 + $0x1728] sm:$0xff]
      %v974 = vld [vmem:[%s214 + $0x1730] sm:$0xff]
      %v975 = vld [vmem:[%s214 + $0x1738] sm:$0xff]
      %v976 = vld [vmem:[%s214 + $0x1740] sm:$0xff]
      %v977 = vld [vmem:[%s214 + $0x1748] sm:$0xff]
      %v978 = vld [vmem:[%s214 + $0x1750] sm:$0xff]
      %v979 = vld [vmem:[%s214 + $0x1758] sm:$0xff]
      %v980 = vld [vmem:[%s214 + $0x1760] sm:$0xff]
      %v981 = vld [vmem:[%s214 + $0x1768] sm:$0xff]
      %v982 = vld [vmem:[%s214 + $0x1770] sm:$0xff]
      %v983 = vld [vmem:[%s214 + $0x1778] sm:$0xff]
      %v984 = vld [vmem:[%s214 + $0x1780] sm:$0xff]
      %v985 = vld [vmem:[%s214 + $0x1788] sm:$0xff]
      %v986 = vld [vmem:[%s214 + $0x1790] sm:$0xff]
      %v987 = vld [vmem:[%s214 + $0x1798] sm:$0xff]
      %v988 = vld [vmem:[%s214 + $0x17a0] sm:$0xff]
      %v989 = vld [vmem:[%s214 + $0x17a8] sm:$0xff]
      %v990 = vld [vmem:[%s214 + $0x17b0] sm:$0xff]
      %v991 = vld [vmem:[%s214 + $0x17b8] sm:$0xff]
      %v992 = vld [vmem:[%s214 + $0x17c0] sm:$0xff]
      %v993 = vld [vmem:[%s214 + $0x17c8] sm:$0xff]
      %v994 = vld [vmem:[%s214 + $0x17d0] sm:$0xff]
      %v995 = vld [vmem:[%s214 + $0x17d8] sm:$0xff]
      %v996 = vld [vmem:[%s214 + $0x17e0] sm:$0xff]
      %v997 = vld [vmem:[%s214 + $0x17e8] sm:$0xff]
      %v998 = vld [vmem:[%s214 + $0x17f0] sm:$0xff]
      %v999 = vld [vmem:[%s214 + $0x17f8] sm:$0xff]
      %v1000 = vld [vmem:[%s214 + $0x1800] sm:$0xff]
      %v1001 = vld [vmem:[%s214 + $0x1808] sm:$0xff]
      %v1002 = vld [vmem:[%s214 + $0x1810] sm:$0xff]
      %v1003 = vld [vmem:[%s214 + $0x1818] sm:$0xff]
      %v1004 = vld [vmem:[%s214 + $0x1820] sm:$0xff]
      %v1005 = vld [vmem:[%s214 + $0x1828] sm:$0xff]
      %v1006 = vld [vmem:[%s214 + $0x1830] sm:$0xff]
      %v1007 = vld [vmem:[%s214 + $0x1838] sm:$0xff]
      %v1008 = vld [vmem:[%s214 + $0x1840] sm:$0xff]
      %v1009 = vld [vmem:[%s214 + $0x1848] sm:$0xff]
      %v1010 = vld [vmem:[%s214 + $0x1850] sm:$0xff]
      %v1011 = vld [vmem:[%s214 + $0x1858] sm:$0xff]
      %v1012 = vld [vmem:[%s214 + $0x1860] sm:$0xff]
      %v1013 = vld [vmem:[%s214 + $0x1868] sm:$0xff]
      %v1014 = vld [vmem:[%s214 + $0x1870] sm:$0xff]
      %v1015 = vld [vmem:[%s214 + $0x1878] sm:$0xff]
      %v1016 = vld [vmem:[%s214 + $0x1880] sm:$0xff]
      %v1017 = vld [vmem:[%s214 + $0x1888] sm:$0xff]
      %v1018 = vld [vmem:[%s214 + $0x1890] sm:$0xff]
      %v1019 = vld [vmem:[%s214 + $0x1898] sm:$0xff]
      %v1020 = vld [vmem:[%s214 + $0x18a0] sm:$0xff]
      %v1021 = vld [vmem:[%s214 + $0x18a8] sm:$0xff]
      %v1022 = vld [vmem:[%s214 + $0x18b0] sm:$0xff]
      %v1023 = vld [vmem:[%s214 + $0x18b8] sm:$0xff]
      %v1024 = vld [vmem:[%s214 + $0x18c0] sm:$0xff]
      %v1025 = vld [vmem:[%s214 + $0x18c8] sm:$0xff]
      %v1026 = vld [vmem:[%s214 + $0x18d0] sm:$0xff]
      %v1027 = vld [vmem:[%s214 + $0x18d8] sm:$0xff]
      %v1028 = vld [vmem:[%s214 + $0x18e0] sm:$0xff]
      %v1029 = vld [vmem:[%s214 + $0x18e8] sm:$0xff]
      %v1030 = vld [vmem:[%s214 + $0x18f0] sm:$0xff]
      %v1031 = vld [vmem:[%s214 + $0x18f8] sm:$0xff]
      %v1036 = vcombine.high %v227, %v227
      %v1038 = vunpack.c.l.s4 1966171168
      %v1039 = vunpack.c.0.s8 %v1038
      %v1040 = vlaneseq
      %v1041 = vshrl.u32 %v1040, 7
      %v1042 = vsub.s32 %v1039, %v1041
      %v1043 = vrot.slane %v227, %v1042
      %v1045 = vunpack.c.l.s4 1966171168
      %v1046 = vunpack.c.0.s8 %v1045
      %v1047 = vlaneseq
      %v1048 = vshrl.u32 %v1047, 7
      %v1049 = vsub.s32 %v1046, %v1048
      %v1050 = vrot.slane %v1036, %v1049
      %v1051 = vcombine.high %v1043, %v1043
      %v1052 = vcombine.high %v1050, %v1050
      %v1054 = vunpack.c.l.s4 1966171168
      %v1055 = vunpack.c.0.s8 %v1054
      %v1056 = vlaneseq
      %v1057 = vshrl.u32 %v1056, 7
      %v1058 = vsub.s32 %v1055, %v1057
      %v1059 = vrot.slane %v1043, %v1058
      %v1061 = vunpack.c.l.s4 1966171168
      %v1062 = vunpack.c.0.s8 %v1061
      %v1063 = vlaneseq
      %v1064 = vshrl.u32 %v1063, 7
      %v1065 = vsub.s32 %v1062, %v1064
      %v1066 = vrot.slane %v1050, %v1065
      %v1068 = vunpack.c.l.s4 1966171168
      %v1069 = vunpack.c.0.s8 %v1068
      %v1070 = vlaneseq
      %v1071 = vshrl.u32 %v1070, 7
      %v1072 = vsub.s32 %v1069, %v1071
      %v1073 = vrot.slane %v1051, %v1072
      %v1075 = vunpack.c.l.s4 1966171168
      %v1076 = vunpack.c.0.s8 %v1075
      %v1077 = vlaneseq
      %v1078 = vshrl.u32 %v1077, 7
      %v1079 = vsub.s32 %v1076, %v1078
      %v1080 = vrot.slane %v1052, %v1079
      %v1081 = vcombine.high %v1059, %v1059
      %v1082 = vcombine.high %v1066, %v1066
      %v1083 = vcombine.high %v1073, %v1073
      %v1084 = vcombine.high %v1080, %v1080
      %v1085 = vcombine.high %v228, %v228
      %v1087 = vunpack.c.l.s4 1966171168
      %v1088 = vunpack.c.0.s8 %v1087
      %v1089 = vlaneseq
      %v1090 = vshrl.u32 %v1089, 7
      %v1091 = vsub.s32 %v1088, %v1090
      %v1092 = vrot.slane %v228, %v1091
      %v1094 = vunpack.c.l.s4 1966171168
      %v1095 = vunpack.c.0.s8 %v1094
      %v1096 = vlaneseq
      %v1097 = vshrl.u32 %v1096, 7
      %v1098 = vsub.s32 %v1095, %v1097
      %v1099 = vrot.slane %v1085, %v1098
      %v1100 = vcombine.high %v1092, %v1092
      %v1101 = vcombine.high %v1099, %v1099
      %v1103 = vunpack.c.l.s4 1966171168
      %v1104 = vunpack.c.0.s8 %v1103
      %v1105 = vlaneseq
      %v1106 = vshrl.u32 %v1105, 7
      %v1107 = vsub.s32 %v1104, %v1106
      %v1108 = vrot.slane %v1092, %v1107
      %v1110 = vunpack.c.l.s4 1966171168
      %v1111 = vunpack.c.0.s8 %v1110
      %v1112 = vlaneseq
      %v1113 = vshrl.u32 %v1112, 7
      %v1114 = vsub.s32 %v1111, %v1113
      %v1115 = vrot.slane %v1099, %v1114
      %v1117 = vunpack.c.l.s4 1966171168
      %v1118 = vunpack.c.0.s8 %v1117
      %v1119 = vlaneseq
      %v1120 = vshrl.u32 %v1119, 7
      %v1121 = vsub.s32 %v1118, %v1120
      %v1122 = vrot.slane %v1100, %v1121
      %v1124 = vunpack.c.l.s4 1966171168
      %v1125 = vunpack.c.0.s8 %v1124
      %v1126 = vlaneseq
      %v1127 = vshrl.u32 %v1126, 7
      %v1128 = vsub.s32 %v1125, %v1127
      %v1129 = vrot.slane %v1101, %v1128
      %v1130 = vcombine.high %v1108, %v1108
      %v1131 = vcombine.high %v1115, %v1115
      %v1132 = vcombine.high %v1122, %v1122
      %v1133 = vcombine.high %v1129, %v1129
      %v1134 = vcombine.high %v229, %v229
      %v1136 = vunpack.c.l.s4 1966171168
      %v1137 = vunpack.c.0.s8 %v1136
      %v1138 = vlaneseq
      %v1139 = vshrl.u32 %v1138, 7
      %v1140 = vsub.s32 %v1137, %v1139
      %v1141 = vrot.slane %v229, %v1140
      %v1143 = vunpack.c.l.s4 1966171168
      %v1144 = vunpack.c.0.s8 %v1143
      %v1145 = vlaneseq
      %v1146 = vshrl.u32 %v1145, 7
      %v1147 = vsub.s32 %v1144, %v1146
      %v1148 = vrot.slane %v1134, %v1147
      %v1149 = vcombine.high %v1141, %v1141
      %v1150 = vcombine.high %v1148, %v1148
      %v1152 = vunpack.c.l.s4 1966171168
      %v1153 = vunpack.c.0.s8 %v1152
      %v1154 = vlaneseq
      %v1155 = vshrl.u32 %v1154, 7
      %v1156 = vsub.s32 %v1153, %v1155
      %v1157 = vrot.slane %v1141, %v1156
      %v1159 = vunpack.c.l.s4 1966171168
      %v1160 = vunpack.c.0.s8 %v1159
      %v1161 = vlaneseq
      %v1162 = vshrl.u32 %v1161, 7
      %v1163 = vsub.s32 %v1160, %v1162
      %v1164 = vrot.slane %v1148, %v1163
      %v1166 = vunpack.c.l.s4 1966171168
      %v1167 = vunpack.c.0.s8 %v1166
      %v1168 = vlaneseq
      %v1169 = vshrl.u32 %v1168, 7
      %v1170 = vsub.s32 %v1167, %v1169
      %v1171 = vrot.slane %v1149, %v1170
      %v1173 = vunpack.c.l.s4 1966171168
      %v1174 = vunpack.c.0.s8 %v1173
      %v1175 = vlaneseq
      %v1176 = vshrl.u32 %v1175, 7
      %v1177 = vsub.s32 %v1174, %v1176
      %v1178 = vrot.slane %v1150, %v1177
      %v1179 = vcombine.high %v1157, %v1157
      %v1180 = vcombine.high %v1164, %v1164
      %v1181 = vcombine.high %v1171, %v1171
      %v1182 = vcombine.high %v1178, %v1178
      %v1184 = vunpack.c.l.s4 1966171168
      %v1185 = vunpack.c.0.s8 %v1184
      %v1186 = vlaneseq
      %v1187 = vshrl.u32 %v1186, 7
      %v1188 = vsub.s32 %v1185, %v1187
      %v1189 = vrot.slane %v230, %v1188
      %v1191 = vunpack.c.l.s4 1966171168
      %v1192 = vunpack.c.0.s8 %v1191
      %v1193 = vlaneseq
      %v1194 = vshrl.u32 %v1193, 7
      %v1195 = vsub.s32 %v1192, %v1194
      %v1196 = vrot.slane %v1189, %v1195
      %v2022 = vunpack.c.l.b16 %v232
      %v2023 = vunpack.c.h.b16 %v232
      %v2024 = vunpack.c.l.b16 %v233
      %v2025 = vunpack.c.h.b16 %v233
      %v2026 = vunpack.c.l.b16 %v234
      %v2027 = vunpack.c.h.b16 %v234
      %v2028 = vunpack.c.l.b16 %v235
      %v2029 = vunpack.c.h.b16 %v235
      %v2030 = vunpack.c.l.b16 %v236
      %v2031 = vunpack.c.h.b16 %v236
      %v2032 = vunpack.c.l.b16 %v237
      %v2033 = vunpack.c.h.b16 %v237
      %v2034 = vunpack.c.l.b16 %v238
      %v2035 = vunpack.c.h.b16 %v238
      %v2036 = vunpack.c.l.b16 %v239
      %v2037 = vunpack.c.h.b16 %v239
      %v2038 = vunpack.c.l.b16 %v240
      %v2039 = vunpack.c.h.b16 %v240
      %v2040 = vunpack.c.l.b16 %v241
      %v2041 = vunpack.c.h.b16 %v241
      %v2042 = vunpack.c.l.b16 %v242
      %v2043 = vunpack.c.h.b16 %v242
      %v2044 = vunpack.c.l.b16 %v243
      %v2045 = vunpack.c.h.b16 %v243
      %v2046 = vunpack.c.l.b16 %v244
      %v2047 = vunpack.c.h.b16 %v244
      %v2048 = vunpack.c.l.b16 %v245
      %v2049 = vunpack.c.h.b16 %v245
      %v2050 = vunpack.c.l.b16 %v246
      %v2051 = vunpack.c.h.b16 %v246
      %v2052 = vunpack.c.l.b16 %v247
      %v2053 = vunpack.c.h.b16 %v247
      %v2054 = vunpack.c.l.b16 %v248
      %v2055 = vunpack.c.h.b16 %v248
      %v2056 = vunpack.c.l.b16 %v249
      %v2057 = vunpack.c.h.b16 %v249
      %v2058 = vunpack.c.l.b16 %v250
      %v2059 = vunpack.c.h.b16 %v250
      %v2060 = vunpack.c.l.b16 %v251
      %v2061 = vunpack.c.h.b16 %v251
      %v2062 = vunpack.c.l.b16 %v252
      %v2063 = vunpack.c.h.b16 %v252
      %v2064 = vunpack.c.l.b16 %v253
      %v2065 = vunpack.c.h.b16 %v253
      %v2066 = vunpack.c.l.b16 %v254
      %v2067 = vunpack.c.h.b16 %v254
      %v2068 = vunpack.c.l.b16 %v255
      %v2069 = vunpack.c.h.b16 %v255
      %v2070 = vunpack.c.l.b16 %v256
      %v2071 = vunpack.c.h.b16 %v256
      %v2072 = vunpack.c.l.b16 %v257
      %v2073 = vunpack.c.h.b16 %v257
      %v2074 = vunpack.c.l.b16 %v258
      %v2075 = vunpack.c.h.b16 %v258
      %v2076 = vunpack.c.l.b16 %v259
      %v2077 = vunpack.c.h.b16 %v259
      %v2078 = vunpack.c.l.b16 %v260
      %v2079 = vunpack.c.h.b16 %v260
      %v2080 = vunpack.c.l.b16 %v261
      %v2081 = vunpack.c.h.b16 %v261
      %v2082 = vunpack.c.l.b16 %v262
      %v2083 = vunpack.c.h.b16 %v262
      %v2084 = vunpack.c.l.b16 %v263
      %v2085 = vunpack.c.h.b16 %v263
      %v2086 = vunpack.c.l.b16 %v264
      %v2087 = vunpack.c.h.b16 %v264
      %v2088 = vunpack.c.l.b16 %v265
      %v2089 = vunpack.c.h.b16 %v265
      %v2090 = vunpack.c.l.b16 %v266
      %v2091 = vunpack.c.h.b16 %v266
      %v2092 = vunpack.c.l.b16 %v267
      %v2093 = vunpack.c.h.b16 %v267
      %v2094 = vunpack.c.l.b16 %v268
      %v2095 = vunpack.c.h.b16 %v268
      %v2096 = vunpack.c.l.b16 %v269
      %v2097 = vunpack.c.h.b16 %v269
      %v2098 = vunpack.c.l.b16 %v270
      %v2099 = vunpack.c.h.b16 %v270
      %v2100 = vunpack.c.l.b16 %v271
      %v2101 = vunpack.c.h.b16 %v271
      %v2102 = vunpack.c.l.b16 %v272
      %v2103 = vunpack.c.h.b16 %v272
      %v2104 = vunpack.c.l.b16 %v273
      %v2105 = vunpack.c.h.b16 %v273
      %v2106 = vunpack.c.l.b16 %v274
      %v2107 = vunpack.c.h.b16 %v274
      %v2108 = vunpack.c.l.b16 %v275
      %v2109 = vunpack.c.h.b16 %v275
      %v2110 = vunpack.c.l.b16 %v276
      %v2111 = vunpack.c.h.b16 %v276
      %v2112 = vunpack.c.l.b16 %v277
      %v2113 = vunpack.c.h.b16 %v277
      %v2114 = vunpack.c.l.b16 %v278
      %v2115 = vunpack.c.h.b16 %v278
      %v2116 = vunpack.c.l.b16 %v279
      %v2117 = vunpack.c.h.b16 %v279
      %v2118 = vunpack.c.l.b16 %v280
      %v2119 = vunpack.c.h.b16 %v280
      %v2120 = vunpack.c.l.b16 %v281
      %v2121 = vunpack.c.h.b16 %v281
      %v2122 = vunpack.c.l.b16 %v282
      %v2123 = vunpack.c.h.b16 %v282
      %v2124 = vunpack.c.l.b16 %v283
      %v2125 = vunpack.c.h.b16 %v283
      %v2126 = vunpack.c.l.b16 %v284
      %v2127 = vunpack.c.h.b16 %v284
      %v2128 = vunpack.c.l.b16 %v285
      %v2129 = vunpack.c.h.b16 %v285
      %v2130 = vunpack.c.l.b16 %v286
      %v2131 = vunpack.c.h.b16 %v286
      %v2132 = vunpack.c.l.b16 %v287
      %v2133 = vunpack.c.h.b16 %v287
      %v2134 = vunpack.c.l.b16 %v288
      %v2135 = vunpack.c.h.b16 %v288
      %v2136 = vunpack.c.l.b16 %v289
      %v2137 = vunpack.c.h.b16 %v289
      %v2138 = vunpack.c.l.b16 %v290
      %v2139 = vunpack.c.h.b16 %v290
      %v2140 = vunpack.c.l.b16 %v291
      %v2141 = vunpack.c.h.b16 %v291
      %v2142 = vunpack.c.l.b16 %v292
      %v2143 = vunpack.c.h.b16 %v292
      %v2144 = vunpack.c.l.b16 %v293
      %v2145 = vunpack.c.h.b16 %v293
      %v2146 = vunpack.c.l.b16 %v294
      %v2147 = vunpack.c.h.b16 %v294
      %v2148 = vunpack.c.l.b16 %v295
      %v2149 = vunpack.c.h.b16 %v295
      %v2150 = vunpack.c.l.b16 %v296
      %v2151 = vunpack.c.h.b16 %v296
      %v2152 = vunpack.c.l.b16 %v297
      %v2153 = vunpack.c.h.b16 %v297
      %v2154 = vunpack.c.l.b16 %v298
      %v2155 = vunpack.c.h.b16 %v298
      %v2156 = vunpack.c.l.b16 %v299
      %v2157 = vunpack.c.h.b16 %v299
      %v2158 = vunpack.c.l.b16 %v300
      %v2159 = vunpack.c.h.b16 %v300
      %v2160 = vunpack.c.l.b16 %v301
      %v2161 = vunpack.c.h.b16 %v301
      %v2162 = vunpack.c.l.b16 %v302
      %v2163 = vunpack.c.h.b16 %v302
      %v2164 = vunpack.c.l.b16 %v303
      %v2165 = vunpack.c.h.b16 %v303
      %v2166 = vunpack.c.l.b16 %v304
      %v2167 = vunpack.c.h.b16 %v304
      %v2168 = vunpack.c.l.b16 %v305
      %v2169 = vunpack.c.h.b16 %v305
      %v2170 = vunpack.c.l.b16 %v306
      %v2171 = vunpack.c.h.b16 %v306
      %v2172 = vunpack.c.l.b16 %v307
      %v2173 = vunpack.c.h.b16 %v307
      %v2174 = vunpack.c.l.b16 %v308
      %v2175 = vunpack.c.h.b16 %v308
      %v2176 = vunpack.c.l.b16 %v309
      %v2177 = vunpack.c.h.b16 %v309
      %v2178 = vunpack.c.l.b16 %v310
      %v2179 = vunpack.c.h.b16 %v310
      %v2180 = vunpack.c.l.b16 %v311
      %v2181 = vunpack.c.h.b16 %v311
      %v2182 = vunpack.c.l.b16 %v312
      %v2183 = vunpack.c.h.b16 %v312
      %v2184 = vunpack.c.l.b16 %v313
      %v2185 = vunpack.c.h.b16 %v313
      %v2186 = vunpack.c.l.b16 %v314
      %v2187 = vunpack.c.h.b16 %v314
      %v2188 = vunpack.c.l.b16 %v315
      %v2189 = vunpack.c.h.b16 %v315
      %v2190 = vunpack.c.l.b16 %v316
      %v2191 = vunpack.c.h.b16 %v316
      %v2192 = vunpack.c.l.b16 %v317
      %v2193 = vunpack.c.h.b16 %v317
      %v2194 = vunpack.c.l.b16 %v318
      %v2195 = vunpack.c.h.b16 %v318
      %v2196 = vunpack.c.l.b16 %v319
      %v2197 = vunpack.c.h.b16 %v319
      %v2198 = vunpack.c.l.b16 %v320
      %v2199 = vunpack.c.h.b16 %v320
      %v2200 = vunpack.c.l.b16 %v321
      %v2201 = vunpack.c.h.b16 %v321
      %v2202 = vunpack.c.l.b16 %v322
      %v2203 = vunpack.c.h.b16 %v322
      %v2204 = vunpack.c.l.b16 %v323
      %v2205 = vunpack.c.h.b16 %v323
      %v2206 = vunpack.c.l.b16 %v324
      %v2207 = vunpack.c.h.b16 %v324
      %v2208 = vunpack.c.l.b16 %v325
      %v2209 = vunpack.c.h.b16 %v325
      %v2210 = vunpack.c.l.b16 %v326
      %v2211 = vunpack.c.h.b16 %v326
      %v2212 = vunpack.c.l.b16 %v327
      %v2213 = vunpack.c.h.b16 %v327
      %v2214 = vunpack.c.l.b16 %v328
      %v2215 = vunpack.c.h.b16 %v328
      %v2216 = vunpack.c.l.b16 %v329
      %v2217 = vunpack.c.h.b16 %v329
      %v2218 = vunpack.c.l.b16 %v330
      %v2219 = vunpack.c.h.b16 %v330
      %v2220 = vunpack.c.l.b16 %v331
      %v2221 = vunpack.c.h.b16 %v331
      %v2222 = vunpack.c.l.b16 %v332
      %v2223 = vunpack.c.h.b16 %v332
      %v2224 = vunpack.c.l.b16 %v333
      %v2225 = vunpack.c.h.b16 %v333
      %v2226 = vunpack.c.l.b16 %v334
      %v2227 = vunpack.c.h.b16 %v334
      %v2228 = vunpack.c.l.b16 %v335
      %v2229 = vunpack.c.h.b16 %v335
      %v2230 = vunpack.c.l.b16 %v336
      %v2231 = vunpack.c.h.b16 %v336
      %v2232 = vunpack.c.l.b16 %v337
      %v2233 = vunpack.c.h.b16 %v337
      %v2234 = vunpack.c.l.b16 %v338
      %v2235 = vunpack.c.h.b16 %v338
      %v2236 = vunpack.c.l.b16 %v339
      %v2237 = vunpack.c.h.b16 %v339
      %v2238 = vunpack.c.l.b16 %v340
      %v2239 = vunpack.c.h.b16 %v340
      %v2240 = vunpack.c.l.b16 %v341
      %v2241 = vunpack.c.h.b16 %v341
      %v2242 = vunpack.c.l.b16 %v342
      %v2243 = vunpack.c.h.b16 %v342
      %v2244 = vunpack.c.l.b16 %v343
      %v2245 = vunpack.c.h.b16 %v343
      %v2246 = vunpack.c.l.b16 %v344
      %v2247 = vunpack.c.h.b16 %v344
      %v2248 = vunpack.c.l.b16 %v345
      %v2249 = vunpack.c.h.b16 %v345
      %v2250 = vunpack.c.l.b16 %v346
      %v2251 = vunpack.c.h.b16 %v346
      %v2252 = vunpack.c.l.b16 %v347
      %v2253 = vunpack.c.h.b16 %v347
      %v2254 = vunpack.c.l.b16 %v348
      %v2255 = vunpack.c.h.b16 %v348
      %v2256 = vunpack.c.l.b16 %v349
      %v2257 = vunpack.c.h.b16 %v349
      %v2258 = vunpack.c.l.b16 %v350
      %v2259 = vunpack.c.h.b16 %v350
      %v2260 = vunpack.c.l.b16 %v351
      %v2261 = vunpack.c.h.b16 %v351
      %v2262 = vunpack.c.l.b16 %v352
      %v2263 = vunpack.c.h.b16 %v352
      %v2264 = vunpack.c.l.b16 %v353
      %v2265 = vunpack.c.h.b16 %v353
      %v2266 = vunpack.c.l.b16 %v354
      %v2267 = vunpack.c.h.b16 %v354
      %v2268 = vunpack.c.l.b16 %v355
      %v2269 = vunpack.c.h.b16 %v355
      %v2270 = vunpack.c.l.b16 %v356
      %v2271 = vunpack.c.h.b16 %v356
      %v2272 = vunpack.c.l.b16 %v357
      %v2273 = vunpack.c.h.b16 %v357
      %v2274 = vunpack.c.l.b16 %v358
      %v2275 = vunpack.c.h.b16 %v358
      %v2276 = vunpack.c.l.b16 %v359
      %v2277 = vunpack.c.h.b16 %v359
      %v2278 = vunpack.c.l.b16 %v360
      %v2279 = vunpack.c.h.b16 %v360
      %v2280 = vunpack.c.l.b16 %v361
      %v2281 = vunpack.c.h.b16 %v361
      %v2282 = vunpack.c.l.b16 %v362
      %v2283 = vunpack.c.h.b16 %v362
      %v2284 = vunpack.c.l.b16 %v363
      %v2285 = vunpack.c.h.b16 %v363
      %v2286 = vunpack.c.l.b16 %v364
      %v2287 = vunpack.c.h.b16 %v364
      %v2288 = vunpack.c.l.b16 %v365
      %v2289 = vunpack.c.h.b16 %v365
      %v2290 = vunpack.c.l.b16 %v366
      %v2291 = vunpack.c.h.b16 %v366
      %v2292 = vunpack.c.l.b16 %v367
      %v2293 = vunpack.c.h.b16 %v367
      %v2294 = vunpack.c.l.b16 %v368
      %v2295 = vunpack.c.h.b16 %v368
      %v2296 = vunpack.c.l.b16 %v369
      %v2297 = vunpack.c.h.b16 %v369
      %v2298 = vunpack.c.l.b16 %v370
      %v2299 = vunpack.c.h.b16 %v370
      %v2300 = vunpack.c.l.b16 %v371
      %v2301 = vunpack.c.h.b16 %v371
      %v2302 = vunpack.c.l.b16 %v372
      %v2303 = vunpack.c.h.b16 %v372
      %v2304 = vunpack.c.l.b16 %v373
      %v2305 = vunpack.c.h.b16 %v373
      %v2306 = vunpack.c.l.b16 %v374
      %v2307 = vunpack.c.h.b16 %v374
      %v2308 = vunpack.c.l.b16 %v375
      %v2309 = vunpack.c.h.b16 %v375
      %v2310 = vunpack.c.l.b16 %v376
      %v2311 = vunpack.c.h.b16 %v376
      %v2312 = vunpack.c.l.b16 %v377
      %v2313 = vunpack.c.h.b16 %v377
      %v2314 = vunpack.c.l.b16 %v378
      %v2315 = vunpack.c.h.b16 %v378
      %v2316 = vunpack.c.l.b16 %v379
      %v2317 = vunpack.c.h.b16 %v379
      %v2318 = vunpack.c.l.b16 %v380
      %v2319 = vunpack.c.h.b16 %v380
      %v2320 = vunpack.c.l.b16 %v381
      %v2321 = vunpack.c.h.b16 %v381
      %v2322 = vunpack.c.l.b16 %v382
      %v2323 = vunpack.c.h.b16 %v382
      %v2324 = vunpack.c.l.b16 %v383
      %v2325 = vunpack.c.h.b16 %v383
      %v2326 = vunpack.c.l.b16 %v384
      %v2327 = vunpack.c.h.b16 %v384
      %v2328 = vunpack.c.l.b16 %v385
      %v2329 = vunpack.c.h.b16 %v385
      %v2330 = vunpack.c.l.b16 %v386
      %v2331 = vunpack.c.h.b16 %v386
      %v2332 = vunpack.c.l.b16 %v387
      %v2333 = vunpack.c.h.b16 %v387
      %v2334 = vunpack.c.l.b16 %v388
      %v2335 = vunpack.c.h.b16 %v388
      %v2336 = vunpack.c.l.b16 %v389
      %v2337 = vunpack.c.h.b16 %v389
      %v2338 = vunpack.c.l.b16 %v390
      %v2339 = vunpack.c.h.b16 %v390
      %v2340 = vunpack.c.l.b16 %v391
      %v2341 = vunpack.c.h.b16 %v391
      %v2342 = vunpack.c.l.b16 %v392
      %v2343 = vunpack.c.h.b16 %v392
      %v2344 = vunpack.c.l.b16 %v393
      %v2345 = vunpack.c.h.b16 %v393
      %v2346 = vunpack.c.l.b16 %v394
      %v2347 = vunpack.c.h.b16 %v394
      %v2348 = vunpack.c.l.b16 %v395
      %v2349 = vunpack.c.h.b16 %v395
      %v2350 = vunpack.c.l.b16 %v396
      %v2351 = vunpack.c.h.b16 %v396
      %v2352 = vunpack.c.l.b16 %v397
      %v2353 = vunpack.c.h.b16 %v397
      %v2354 = vunpack.c.l.b16 %v398
      %v2355 = vunpack.c.h.b16 %v398
      %v2356 = vunpack.c.l.b16 %v399
      %v2357 = vunpack.c.h.b16 %v399
      %v2358 = vunpack.c.l.b16 %v400
      %v2359 = vunpack.c.h.b16 %v400
      %v2360 = vunpack.c.l.b16 %v401
      %v2361 = vunpack.c.h.b16 %v401
      %v2362 = vunpack.c.l.b16 %v402
      %v2363 = vunpack.c.h.b16 %v402
      %v2364 = vunpack.c.l.b16 %v403
      %v2365 = vunpack.c.h.b16 %v403
      %v2366 = vunpack.c.l.b16 %v404
      %v2367 = vunpack.c.h.b16 %v404
      %v2368 = vunpack.c.l.b16 %v405
      %v2369 = vunpack.c.h.b16 %v405
      %v2370 = vunpack.c.l.b16 %v406
      %v2371 = vunpack.c.h.b16 %v406
      %v2372 = vunpack.c.l.b16 %v407
      %v2373 = vunpack.c.h.b16 %v407
      %v2374 = vunpack.c.l.b16 %v408
      %v2375 = vunpack.c.h.b16 %v408
      %v2376 = vunpack.c.l.b16 %v409
      %v2377 = vunpack.c.h.b16 %v409
      %v2378 = vunpack.c.l.b16 %v410
      %v2379 = vunpack.c.h.b16 %v410
      %v2380 = vunpack.c.l.b16 %v411
      %v2381 = vunpack.c.h.b16 %v411
      %v2382 = vunpack.c.l.b16 %v412
      %v2383 = vunpack.c.h.b16 %v412
      %v2384 = vunpack.c.l.b16 %v413
      %v2385 = vunpack.c.h.b16 %v413
      %v2386 = vunpack.c.l.b16 %v414
      %v2387 = vunpack.c.h.b16 %v414
      %v2388 = vunpack.c.l.b16 %v415
      %v2389 = vunpack.c.h.b16 %v415
      %v2390 = vunpack.c.l.b16 %v416
      %v2391 = vunpack.c.h.b16 %v416
      %v2392 = vunpack.c.l.b16 %v417
      %v2393 = vunpack.c.h.b16 %v417
      %v2394 = vunpack.c.l.b16 %v418
      %v2395 = vunpack.c.h.b16 %v418
      %v2396 = vunpack.c.l.b16 %v419
      %v2397 = vunpack.c.h.b16 %v419
      %v2398 = vunpack.c.l.b16 %v420
      %v2399 = vunpack.c.h.b16 %v420
      %v2400 = vunpack.c.l.b16 %v421
      %v2401 = vunpack.c.h.b16 %v421
      %v2402 = vunpack.c.l.b16 %v422
      %v2403 = vunpack.c.h.b16 %v422
      %v2404 = vunpack.c.l.b16 %v423
      %v2405 = vunpack.c.h.b16 %v423
      %v2406 = vunpack.c.l.b16 %v424
      %v2407 = vunpack.c.h.b16 %v424
      %v2408 = vunpack.c.l.b16 %v425
      %v2409 = vunpack.c.h.b16 %v425
      %v2410 = vunpack.c.l.b16 %v426
      %v2411 = vunpack.c.h.b16 %v426
      %v2412 = vunpack.c.l.b16 %v427
      %v2413 = vunpack.c.h.b16 %v427
      %v2414 = vunpack.c.l.b16 %v428
      %v2415 = vunpack.c.h.b16 %v428
      %v2416 = vunpack.c.l.b16 %v429
      %v2417 = vunpack.c.h.b16 %v429
      %v2418 = vunpack.c.l.b16 %v430
      %v2419 = vunpack.c.h.b16 %v430
      %v2420 = vunpack.c.l.b16 %v431
      %v2421 = vunpack.c.h.b16 %v431
      %v2422 = vunpack.c.l.b16 %v432
      %v2423 = vunpack.c.h.b16 %v432
      %v2424 = vunpack.c.l.b16 %v433
      %v2425 = vunpack.c.h.b16 %v433
      %v2426 = vunpack.c.l.b16 %v434
      %v2427 = vunpack.c.h.b16 %v434
      %v2428 = vunpack.c.l.b16 %v435
      %v2429 = vunpack.c.h.b16 %v435
      %v2430 = vunpack.c.l.b16 %v436
      %v2431 = vunpack.c.h.b16 %v436
      %v2432 = vunpack.c.l.b16 %v437
      %v2433 = vunpack.c.h.b16 %v437
      %v2434 = vunpack.c.l.b16 %v438
      %v2435 = vunpack.c.h.b16 %v438
      %v2436 = vunpack.c.l.b16 %v439
      %v2437 = vunpack.c.h.b16 %v439
      %v2438 = vunpack.c.l.b16 %v440
      %v2439 = vunpack.c.h.b16 %v440
      %v2440 = vunpack.c.l.b16 %v441
      %v2441 = vunpack.c.h.b16 %v441
      %v2442 = vunpack.c.l.b16 %v442
      %v2443 = vunpack.c.h.b16 %v442
      %v2444 = vunpack.c.l.b16 %v443
      %v2445 = vunpack.c.h.b16 %v443
      %v2446 = vunpack.c.l.b16 %v444
      %v2447 = vunpack.c.h.b16 %v444
      %v2448 = vunpack.c.l.b16 %v445
      %v2449 = vunpack.c.h.b16 %v445
      %v2450 = vunpack.c.l.b16 %v446
      %v2451 = vunpack.c.h.b16 %v446
      %v2452 = vunpack.c.l.b16 %v447
      %v2453 = vunpack.c.h.b16 %v447
      %v2454 = vunpack.c.l.b16 %v448
      %v2455 = vunpack.c.h.b16 %v448
      %v2456 = vunpack.c.l.b16 %v449
      %v2457 = vunpack.c.h.b16 %v449
      %v2458 = vunpack.c.l.b16 %v450
      %v2459 = vunpack.c.h.b16 %v450
      %v2460 = vunpack.c.l.b16 %v451
      %v2461 = vunpack.c.h.b16 %v451
      %v2462 = vunpack.c.l.b16 %v452
      %v2463 = vunpack.c.h.b16 %v452
      %v2464 = vunpack.c.l.b16 %v453
      %v2465 = vunpack.c.h.b16 %v453
      %v2466 = vunpack.c.l.b16 %v454
      %v2467 = vunpack.c.h.b16 %v454
      %v2468 = vunpack.c.l.b16 %v455
      %v2469 = vunpack.c.h.b16 %v455
      %v2470 = vunpack.c.l.b16 %v456
      %v2471 = vunpack.c.h.b16 %v456
      %v2472 = vunpack.c.l.b16 %v457
      %v2473 = vunpack.c.h.b16 %v457
      %v2474 = vunpack.c.l.b16 %v458
      %v2475 = vunpack.c.h.b16 %v458
      %v2476 = vunpack.c.l.b16 %v459
      %v2477 = vunpack.c.h.b16 %v459
      %v2478 = vunpack.c.l.b16 %v460
      %v2479 = vunpack.c.h.b16 %v460
      %v2480 = vunpack.c.l.b16 %v461
      %v2481 = vunpack.c.h.b16 %v461
      %v2482 = vunpack.c.l.b16 %v462
      %v2483 = vunpack.c.h.b16 %v462
      %v2484 = vunpack.c.l.b16 %v463
      %v2485 = vunpack.c.h.b16 %v463
      %v2486 = vunpack.c.l.b16 %v464
      %v2487 = vunpack.c.h.b16 %v464
      %v2488 = vunpack.c.l.b16 %v465
      %v2489 = vunpack.c.h.b16 %v465
      %v2490 = vunpack.c.l.b16 %v466
      %v2491 = vunpack.c.h.b16 %v466
      %v2492 = vunpack.c.l.b16 %v467
      %v2493 = vunpack.c.h.b16 %v467
      %v2494 = vunpack.c.l.b16 %v468
      %v2495 = vunpack.c.h.b16 %v468
      %v2496 = vunpack.c.l.b16 %v469
      %v2497 = vunpack.c.h.b16 %v469
      %v2498 = vunpack.c.l.b16 %v470
      %v2499 = vunpack.c.h.b16 %v470
      %v2500 = vunpack.c.l.b16 %v471
      %v2501 = vunpack.c.h.b16 %v471
      %v2502 = vunpack.c.l.b16 %v472
      %v2503 = vunpack.c.h.b16 %v472
      %v2504 = vunpack.c.l.b16 %v473
      %v2505 = vunpack.c.h.b16 %v473
      %v2506 = vunpack.c.l.b16 %v474
      %v2507 = vunpack.c.h.b16 %v474
      %v2508 = vunpack.c.l.b16 %v475
      %v2509 = vunpack.c.h.b16 %v475
      %v2510 = vunpack.c.l.b16 %v476
      %v2511 = vunpack.c.h.b16 %v476
      %v2512 = vunpack.c.l.b16 %v477
      %v2513 = vunpack.c.h.b16 %v477
      %v2514 = vunpack.c.l.b16 %v478
      %v2515 = vunpack.c.h.b16 %v478
      %v2516 = vunpack.c.l.b16 %v479
      %v2517 = vunpack.c.h.b16 %v479
      %v2518 = vunpack.c.l.b16 %v480
      %v2519 = vunpack.c.h.b16 %v480
      %v2520 = vunpack.c.l.b16 %v481
      %v2521 = vunpack.c.h.b16 %v481
      %v2522 = vunpack.c.l.b16 %v482
      %v2523 = vunpack.c.h.b16 %v482
      %v2524 = vunpack.c.l.b16 %v483
      %v2525 = vunpack.c.h.b16 %v483
      %v2526 = vunpack.c.l.b16 %v484
      %v2527 = vunpack.c.h.b16 %v484
      %v2528 = vunpack.c.l.b16 %v485
      %v2529 = vunpack.c.h.b16 %v485
      %v2530 = vunpack.c.l.b16 %v486
      %v2531 = vunpack.c.h.b16 %v486
      %v2532 = vunpack.c.l.b16 %v487
      %v2533 = vunpack.c.h.b16 %v487
      %v2534 = vunpack.c.l.b16 %v488
      %v2535 = vunpack.c.h.b16 %v488
      %v2536 = vunpack.c.l.b16 %v489
      %v2537 = vunpack.c.h.b16 %v489
      %v2538 = vunpack.c.l.b16 %v490
      %v2539 = vunpack.c.h.b16 %v490
      %v2540 = vunpack.c.l.b16 %v491
      %v2541 = vunpack.c.h.b16 %v491
      %v2542 = vunpack.c.l.b16 %v492
      %v2543 = vunpack.c.h.b16 %v492
      %v2544 = vunpack.c.l.b16 %v493
      %v2545 = vunpack.c.h.b16 %v493
      %v2546 = vunpack.c.l.b16 %v494
      %v2547 = vunpack.c.h.b16 %v494
      %v2548 = vunpack.c.l.b16 %v495
      %v2549 = vunpack.c.h.b16 %v495
      %v2550 = vunpack.c.l.b16 %v496
      %v2551 = vunpack.c.h.b16 %v496
      %v2552 = vunpack.c.l.b16 %v497
      %v2553 = vunpack.c.h.b16 %v497
      %v2554 = vunpack.c.l.b16 %v498
      %v2555 = vunpack.c.h.b16 %v498
      %v2556 = vunpack.c.l.b16 %v499
      %v2557 = vunpack.c.h.b16 %v499
      %v2558 = vunpack.c.l.b16 %v500
      %v2559 = vunpack.c.h.b16 %v500
      %v2560 = vunpack.c.l.b16 %v501
      %v2561 = vunpack.c.h.b16 %v501
      %v2562 = vunpack.c.l.b16 %v502
      %v2563 = vunpack.c.h.b16 %v502
      %v2564 = vunpack.c.l.b16 %v503
      %v2565 = vunpack.c.h.b16 %v503
      %v2566 = vunpack.c.l.b16 %v504
      %v2567 = vunpack.c.h.b16 %v504
      %v2568 = vunpack.c.l.b16 %v505
      %v2569 = vunpack.c.h.b16 %v505
      %v2570 = vunpack.c.l.b16 %v506
      %v2571 = vunpack.c.h.b16 %v506
      %v2572 = vunpack.c.l.b16 %v507
      %v2573 = vunpack.c.h.b16 %v507
      %v2574 = vunpack.c.l.b16 %v508
      %v2575 = vunpack.c.h.b16 %v508
      %v2576 = vunpack.c.l.b16 %v509
      %v2577 = vunpack.c.h.b16 %v509
      %v2578 = vunpack.c.l.b16 %v510
      %v2579 = vunpack.c.h.b16 %v510
      %v2580 = vunpack.c.l.b16 %v511
      %v2581 = vunpack.c.h.b16 %v511
      %v2582 = vunpack.c.l.b16 %v512
      %v2583 = vunpack.c.h.b16 %v512
      %v2584 = vunpack.c.l.b16 %v513
      %v2585 = vunpack.c.h.b16 %v513
      %v2586 = vunpack.c.l.b16 %v514
      %v2587 = vunpack.c.h.b16 %v514
      %v2588 = vunpack.c.l.b16 %v515
      %v2589 = vunpack.c.h.b16 %v515
      %v2590 = vunpack.c.l.b16 %v516
      %v2591 = vunpack.c.h.b16 %v516
      %v2592 = vunpack.c.l.b16 %v517
      %v2593 = vunpack.c.h.b16 %v517
      %v2594 = vunpack.c.l.b16 %v518
      %v2595 = vunpack.c.h.b16 %v518
      %v2596 = vunpack.c.l.b16 %v519
      %v2597 = vunpack.c.h.b16 %v519
      %v2598 = vunpack.c.l.b16 %v520
      %v2599 = vunpack.c.h.b16 %v520
      %v2600 = vunpack.c.l.b16 %v521
      %v2601 = vunpack.c.h.b16 %v521
      %v2602 = vunpack.c.l.b16 %v522
      %v2603 = vunpack.c.h.b16 %v522
      %v2604 = vunpack.c.l.b16 %v523
      %v2605 = vunpack.c.h.b16 %v523
      %v2606 = vunpack.c.l.b16 %v524
      %v2607 = vunpack.c.h.b16 %v524
      %v2608 = vunpack.c.l.b16 %v525
      %v2609 = vunpack.c.h.b16 %v525
      %v2610 = vunpack.c.l.b16 %v526
      %v2611 = vunpack.c.h.b16 %v526
      %v2612 = vunpack.c.l.b16 %v527
      %v2613 = vunpack.c.h.b16 %v527
      %v2614 = vunpack.c.l.b16 %v528
      %v2615 = vunpack.c.h.b16 %v528
      %v2616 = vunpack.c.l.b16 %v529
      %v2617 = vunpack.c.h.b16 %v529
      %v2618 = vunpack.c.l.b16 %v530
      %v2619 = vunpack.c.h.b16 %v530
      %v2620 = vunpack.c.l.b16 %v531
      %v2621 = vunpack.c.h.b16 %v531
      %v2622 = vunpack.c.l.b16 %v532
      %v2623 = vunpack.c.h.b16 %v532
      %v2624 = vunpack.c.l.b16 %v533
      %v2625 = vunpack.c.h.b16 %v533
      %v2626 = vunpack.c.l.b16 %v534
      %v2627 = vunpack.c.h.b16 %v534
      %v2628 = vunpack.c.l.b16 %v535
      %v2629 = vunpack.c.h.b16 %v535
      %v2630 = vunpack.c.l.b16 %v536
      %v2631 = vunpack.c.h.b16 %v536
      %v2632 = vunpack.c.l.b16 %v537
      %v2633 = vunpack.c.h.b16 %v537
      %v2634 = vunpack.c.l.b16 %v538
      %v2635 = vunpack.c.h.b16 %v538
      %v2636 = vunpack.c.l.b16 %v539
      %v2637 = vunpack.c.h.b16 %v539
      %v2638 = vunpack.c.l.b16 %v540
      %v2639 = vunpack.c.h.b16 %v540
      %v2640 = vunpack.c.l.b16 %v541
      %v2641 = vunpack.c.h.b16 %v541
      %v2642 = vunpack.c.l.b16 %v542
      %v2643 = vunpack.c.h.b16 %v542
      %v2644 = vunpack.c.l.b16 %v543
      %v2645 = vunpack.c.h.b16 %v543
      %v2646 = vunpack.c.l.b16 %v544
      %v2647 = vunpack.c.h.b16 %v544
      %v2648 = vunpack.c.l.b16 %v545
      %v2649 = vunpack.c.h.b16 %v545
      %v2650 = vunpack.c.l.b16 %v546
      %v2651 = vunpack.c.h.b16 %v546
      %v2652 = vunpack.c.l.b16 %v547
      %v2653 = vunpack.c.h.b16 %v547
      %v2654 = vunpack.c.l.b16 %v548
      %v2655 = vunpack.c.h.b16 %v548
      %v2656 = vunpack.c.l.b16 %v549
      %v2657 = vunpack.c.h.b16 %v549
      %v2658 = vunpack.c.l.b16 %v550
      %v2659 = vunpack.c.h.b16 %v550
      %v2660 = vunpack.c.l.b16 %v551
      %v2661 = vunpack.c.h.b16 %v551
      %v2662 = vunpack.c.l.b16 %v552
      %v2663 = vunpack.c.h.b16 %v552
      %v2664 = vunpack.c.l.b16 %v553
      %v2665 = vunpack.c.h.b16 %v553
      %v2666 = vunpack.c.l.b16 %v554
      %v2667 = vunpack.c.h.b16 %v554
      %v2668 = vunpack.c.l.b16 %v555
      %v2669 = vunpack.c.h.b16 %v555
      %v2670 = vunpack.c.l.b16 %v556
      %v2671 = vunpack.c.h.b16 %v556
      %v2672 = vunpack.c.l.b16 %v557
      %v2673 = vunpack.c.h.b16 %v557
      %v2674 = vunpack.c.l.b16 %v558
      %v2675 = vunpack.c.h.b16 %v558
      %v2676 = vunpack.c.l.b16 %v559
      %v2677 = vunpack.c.h.b16 %v559
      %v2678 = vunpack.c.l.b16 %v560
      %v2679 = vunpack.c.h.b16 %v560
      %v2680 = vunpack.c.l.b16 %v561
      %v2681 = vunpack.c.h.b16 %v561
      %v2682 = vunpack.c.l.b16 %v562
      %v2683 = vunpack.c.h.b16 %v562
      %v2684 = vunpack.c.l.b16 %v563
      %v2685 = vunpack.c.h.b16 %v563
      %v2686 = vunpack.c.l.b16 %v564
      %v2687 = vunpack.c.h.b16 %v564
      %v2688 = vunpack.c.l.b16 %v565
      %v2689 = vunpack.c.h.b16 %v565
      %v2690 = vunpack.c.l.b16 %v566
      %v2691 = vunpack.c.h.b16 %v566
      %v2692 = vunpack.c.l.b16 %v567
      %v2693 = vunpack.c.h.b16 %v567
      %v2694 = vunpack.c.l.b16 %v568
      %v2695 = vunpack.c.h.b16 %v568
      %v2696 = vunpack.c.l.b16 %v569
      %v2697 = vunpack.c.h.b16 %v569
      %v2698 = vunpack.c.l.b16 %v570
      %v2699 = vunpack.c.h.b16 %v570
      %v2700 = vunpack.c.l.b16 %v571
      %v2701 = vunpack.c.h.b16 %v571
      %v2702 = vunpack.c.l.b16 %v572
      %v2703 = vunpack.c.h.b16 %v572
      %v2704 = vunpack.c.l.b16 %v573
      %v2705 = vunpack.c.h.b16 %v573
      %v2706 = vunpack.c.l.b16 %v574
      %v2707 = vunpack.c.h.b16 %v574
      %v2708 = vunpack.c.l.b16 %v575
      %v2709 = vunpack.c.h.b16 %v575
      %v2710 = vunpack.c.l.b16 %v576
      %v2711 = vunpack.c.h.b16 %v576
      %v2712 = vunpack.c.l.b16 %v577
      %v2713 = vunpack.c.h.b16 %v577
      %v2714 = vunpack.c.l.b16 %v578
      %v2715 = vunpack.c.h.b16 %v578
      %v2716 = vunpack.c.l.b16 %v579
      %v2717 = vunpack.c.h.b16 %v579
      %v2718 = vunpack.c.l.b16 %v580
      %v2719 = vunpack.c.h.b16 %v580
      %v2720 = vunpack.c.l.b16 %v581
      %v2721 = vunpack.c.h.b16 %v581
      %v2722 = vunpack.c.l.b16 %v582
      %v2723 = vunpack.c.h.b16 %v582
      %v2724 = vunpack.c.l.b16 %v583
      %v2725 = vunpack.c.h.b16 %v583
      %v2726 = vunpack.c.l.b16 %v584
      %v2727 = vunpack.c.h.b16 %v584
      %v2728 = vunpack.c.l.b16 %v585
      %v2729 = vunpack.c.h.b16 %v585
      %v2730 = vunpack.c.l.b16 %v586
      %v2731 = vunpack.c.h.b16 %v586
      %v2732 = vunpack.c.l.b16 %v587
      %v2733 = vunpack.c.h.b16 %v587
      %v2734 = vunpack.c.l.b16 %v588
      %v2735 = vunpack.c.h.b16 %v588
      %v2736 = vunpack.c.l.b16 %v589
      %v2737 = vunpack.c.h.b16 %v589
      %v2738 = vunpack.c.l.b16 %v590
      %v2739 = vunpack.c.h.b16 %v590
      %v2740 = vunpack.c.l.b16 %v591
      %v2741 = vunpack.c.h.b16 %v591
      %v2742 = vunpack.c.l.b16 %v592
      %v2743 = vunpack.c.h.b16 %v592
      %v2744 = vunpack.c.l.b16 %v593
      %v2745 = vunpack.c.h.b16 %v593
      %v2746 = vunpack.c.l.b16 %v594
      %v2747 = vunpack.c.h.b16 %v594
      %v2748 = vunpack.c.l.b16 %v595
      %v2749 = vunpack.c.h.b16 %v595
      %v2750 = vunpack.c.l.b16 %v596
      %v2751 = vunpack.c.h.b16 %v596
      %v2752 = vunpack.c.l.b16 %v597
      %v2753 = vunpack.c.h.b16 %v597
      %v2754 = vunpack.c.l.b16 %v598
      %v2755 = vunpack.c.h.b16 %v598
      %v2756 = vunpack.c.l.b16 %v599
      %v2757 = vunpack.c.h.b16 %v599
      %v2758 = vunpack.c.l.b16 %v600
      %v2759 = vunpack.c.h.b16 %v600
      %v2760 = vunpack.c.l.b16 %v601
      %v2761 = vunpack.c.h.b16 %v601
      %v2762 = vunpack.c.l.b16 %v602
      %v2763 = vunpack.c.h.b16 %v602
      %v2764 = vunpack.c.l.b16 %v603
      %v2765 = vunpack.c.h.b16 %v603
      %v2766 = vunpack.c.l.b16 %v604
      %v2767 = vunpack.c.h.b16 %v604
      %v2768 = vunpack.c.l.b16 %v605
      %v2769 = vunpack.c.h.b16 %v605
      %v2770 = vunpack.c.l.b16 %v606
      %v2771 = vunpack.c.h.b16 %v606
      %v2772 = vunpack.c.l.b16 %v607
      %v2773 = vunpack.c.h.b16 %v607
      %v2774 = vunpack.c.l.b16 %v608
      %v2775 = vunpack.c.h.b16 %v608
      %v2776 = vunpack.c.l.b16 %v609
      %v2777 = vunpack.c.h.b16 %v609
      %v2778 = vunpack.c.l.b16 %v610
      %v2779 = vunpack.c.h.b16 %v610
      %v2780 = vunpack.c.l.b16 %v611
      %v2781 = vunpack.c.h.b16 %v611
      %v2782 = vunpack.c.l.b16 %v612
      %v2783 = vunpack.c.h.b16 %v612
      %v2784 = vunpack.c.l.b16 %v613
      %v2785 = vunpack.c.h.b16 %v613
      %v2786 = vunpack.c.l.b16 %v614
      %v2787 = vunpack.c.h.b16 %v614
      %v2788 = vunpack.c.l.b16 %v615
      %v2789 = vunpack.c.h.b16 %v615
      %v2790 = vunpack.c.l.b16 %v616
      %v2791 = vunpack.c.h.b16 %v616
      %v2792 = vunpack.c.l.b16 %v617
      %v2793 = vunpack.c.h.b16 %v617
      %v2794 = vunpack.c.l.b16 %v618
      %v2795 = vunpack.c.h.b16 %v618
      %v2796 = vunpack.c.l.b16 %v619
      %v2797 = vunpack.c.h.b16 %v619
      %v2798 = vunpack.c.l.b16 %v620
      %v2799 = vunpack.c.h.b16 %v620
      %v2800 = vunpack.c.l.b16 %v621
      %v2801 = vunpack.c.h.b16 %v621
      %v2802 = vunpack.c.l.b16 %v622
      %v2803 = vunpack.c.h.b16 %v622
      %v2804 = vunpack.c.l.b16 %v623
      %v2805 = vunpack.c.h.b16 %v623
      %v2806 = vunpack.c.l.b16 %v624
      %v2807 = vunpack.c.h.b16 %v624
      %v2808 = vunpack.c.l.b16 %v625
      %v2809 = vunpack.c.h.b16 %v625
      %v2810 = vunpack.c.l.b16 %v626
      %v2811 = vunpack.c.h.b16 %v626
      %v2812 = vunpack.c.l.b16 %v627
      %v2813 = vunpack.c.h.b16 %v627
      %v2814 = vunpack.c.l.b16 %v628
      %v2815 = vunpack.c.h.b16 %v628
      %v2816 = vunpack.c.l.b16 %v629
      %v2817 = vunpack.c.h.b16 %v629
      %v2818 = vunpack.c.l.b16 %v630
      %v2819 = vunpack.c.h.b16 %v630
      %v2820 = vunpack.c.l.b16 %v631
      %v2821 = vunpack.c.h.b16 %v631
      %v2822 = vunpack.c.l.b16 %v632
      %v2823 = vunpack.c.h.b16 %v632
      %v2824 = vunpack.c.l.b16 %v633
      %v2825 = vunpack.c.h.b16 %v633
      %v2826 = vunpack.c.l.b16 %v634
      %v2827 = vunpack.c.h.b16 %v634
      %v2828 = vunpack.c.l.b16 %v635
      %v2829 = vunpack.c.h.b16 %v635
      %v2830 = vunpack.c.l.b16 %v636
      %v2831 = vunpack.c.h.b16 %v636
      %v2832 = vunpack.c.l.b16 %v637
      %v2833 = vunpack.c.h.b16 %v637
      %v2834 = vunpack.c.l.b16 %v638
      %v2835 = vunpack.c.h.b16 %v638
      %v2836 = vunpack.c.l.b16 %v639
      %v2837 = vunpack.c.h.b16 %v639
      %v2838 = vunpack.c.l.b16 %v640
      %v2839 = vunpack.c.h.b16 %v640
      %v2840 = vunpack.c.l.b16 %v641
      %v2841 = vunpack.c.h.b16 %v641
      %v2842 = vunpack.c.l.b16 %v642
      %v2843 = vunpack.c.h.b16 %v642
      %v2844 = vunpack.c.l.b16 %v643
      %v2845 = vunpack.c.h.b16 %v643
      %v2846 = vunpack.c.l.b16 %v644
      %v2847 = vunpack.c.h.b16 %v644
      %v2848 = vunpack.c.l.b16 %v645
      %v2849 = vunpack.c.h.b16 %v645
      %v2850 = vunpack.c.l.b16 %v646
      %v2851 = vunpack.c.h.b16 %v646
      %v2852 = vunpack.c.l.b16 %v647
      %v2853 = vunpack.c.h.b16 %v647
      %v2854 = vunpack.c.l.b16 %v648
      %v2855 = vunpack.c.h.b16 %v648
      %v2856 = vunpack.c.l.b16 %v649
      %v2857 = vunpack.c.h.b16 %v649
      %v2858 = vunpack.c.l.b16 %v650
      %v2859 = vunpack.c.h.b16 %v650
      %v2860 = vunpack.c.l.b16 %v651
      %v2861 = vunpack.c.h.b16 %v651
      %v2862 = vunpack.c.l.b16 %v652
      %v2863 = vunpack.c.h.b16 %v652
      %v2864 = vunpack.c.l.b16 %v653
      %v2865 = vunpack.c.h.b16 %v653
      %v2866 = vunpack.c.l.b16 %v654
      %v2867 = vunpack.c.h.b16 %v654
      %v2868 = vunpack.c.l.b16 %v655
      %v2869 = vunpack.c.h.b16 %v655
      %v2870 = vunpack.c.l.b16 %v656
      %v2871 = vunpack.c.h.b16 %v656
      %v2872 = vunpack.c.l.b16 %v657
      %v2873 = vunpack.c.h.b16 %v657
      %v2874 = vunpack.c.l.b16 %v658
      %v2875 = vunpack.c.h.b16 %v658
      %v2876 = vunpack.c.l.b16 %v659
      %v2877 = vunpack.c.h.b16 %v659
      %v2878 = vunpack.c.l.b16 %v660
      %v2879 = vunpack.c.h.b16 %v660
      %v2880 = vunpack.c.l.b16 %v661
      %v2881 = vunpack.c.h.b16 %v661
      %v2882 = vunpack.c.l.b16 %v662
      %v2883 = vunpack.c.h.b16 %v662
      %v2884 = vunpack.c.l.b16 %v663
      %v2885 = vunpack.c.h.b16 %v663
      %v2886 = vunpack.c.l.b16 %v664
      %v2887 = vunpack.c.h.b16 %v664
      %v2888 = vunpack.c.l.b16 %v665
      %v2889 = vunpack.c.h.b16 %v665
      %v2890 = vunpack.c.l.b16 %v666
      %v2891 = vunpack.c.h.b16 %v666
      %v2892 = vunpack.c.l.b16 %v667
      %v2893 = vunpack.c.h.b16 %v667
      %v2894 = vunpack.c.l.b16 %v668
      %v2895 = vunpack.c.h.b16 %v668
      %v2896 = vunpack.c.l.b16 %v669
      %v2897 = vunpack.c.h.b16 %v669
      %v2898 = vunpack.c.l.b16 %v670
      %v2899 = vunpack.c.h.b16 %v670
      %v2900 = vunpack.c.l.b16 %v671
      %v2901 = vunpack.c.h.b16 %v671
      %v2902 = vunpack.c.l.b16 %v672
      %v2903 = vunpack.c.h.b16 %v672
      %v2904 = vunpack.c.l.b16 %v673
      %v2905 = vunpack.c.h.b16 %v673
      %v2906 = vunpack.c.l.b16 %v674
      %v2907 = vunpack.c.h.b16 %v674
      %v2908 = vunpack.c.l.b16 %v675
      %v2909 = vunpack.c.h.b16 %v675
      %v2910 = vunpack.c.l.b16 %v676
      %v2911 = vunpack.c.h.b16 %v676
      %v2912 = vunpack.c.l.b16 %v677
      %v2913 = vunpack.c.h.b16 %v677
      %v2914 = vunpack.c.l.b16 %v678
      %v2915 = vunpack.c.h.b16 %v678
      %v2916 = vunpack.c.l.b16 %v679
      %v2917 = vunpack.c.h.b16 %v679
      %v2918 = vunpack.c.l.b16 %v680
      %v2919 = vunpack.c.h.b16 %v680
      %v2920 = vunpack.c.l.b16 %v681
      %v2921 = vunpack.c.h.b16 %v681
      %v2922 = vunpack.c.l.b16 %v682
      %v2923 = vunpack.c.h.b16 %v682
      %v2924 = vunpack.c.l.b16 %v683
      %v2925 = vunpack.c.h.b16 %v683
      %v2926 = vunpack.c.l.b16 %v684
      %v2927 = vunpack.c.h.b16 %v684
      %v2928 = vunpack.c.l.b16 %v685
      %v2929 = vunpack.c.h.b16 %v685
      %v2930 = vunpack.c.l.b16 %v686
      %v2931 = vunpack.c.h.b16 %v686
      %v2932 = vunpack.c.l.b16 %v687
      %v2933 = vunpack.c.h.b16 %v687
      %v2934 = vunpack.c.l.b16 %v688
      %v2935 = vunpack.c.h.b16 %v688
      %v2936 = vunpack.c.l.b16 %v689
      %v2937 = vunpack.c.h.b16 %v689
      %v2938 = vunpack.c.l.b16 %v690
      %v2939 = vunpack.c.h.b16 %v690
      %v2940 = vunpack.c.l.b16 %v691
      %v2941 = vunpack.c.h.b16 %v691
      %v2942 = vunpack.c.l.b16 %v692
      %v2943 = vunpack.c.h.b16 %v692
      %v2944 = vunpack.c.l.b16 %v693
      %v2945 = vunpack.c.h.b16 %v693
      %v2946 = vunpack.c.l.b16 %v694
      %v2947 = vunpack.c.h.b16 %v694
      %v2948 = vunpack.c.l.b16 %v695
      %v2949 = vunpack.c.h.b16 %v695
      %v2950 = vunpack.c.l.b16 %v696
      %v2951 = vunpack.c.h.b16 %v696
      %v2952 = vunpack.c.l.b16 %v697
      %v2953 = vunpack.c.h.b16 %v697
      %v2954 = vunpack.c.l.b16 %v698
      %v2955 = vunpack.c.h.b16 %v698
      %v2956 = vunpack.c.l.b16 %v699
      %v2957 = vunpack.c.h.b16 %v699
      %v2958 = vunpack.c.l.b16 %v700
      %v2959 = vunpack.c.h.b16 %v700
      %v2960 = vunpack.c.l.b16 %v701
      %v2961 = vunpack.c.h.b16 %v701
      %v2962 = vunpack.c.l.b16 %v702
      %v2963 = vunpack.c.h.b16 %v702
      %v2964 = vunpack.c.l.b16 %v703
      %v2965 = vunpack.c.h.b16 %v703
      %v2966 = vunpack.c.l.b16 %v704
      %v2967 = vunpack.c.h.b16 %v704
      %v2968 = vunpack.c.l.b16 %v705
      %v2969 = vunpack.c.h.b16 %v705
      %v2970 = vunpack.c.l.b16 %v706
      %v2971 = vunpack.c.h.b16 %v706
      %v2972 = vunpack.c.l.b16 %v707
      %v2973 = vunpack.c.h.b16 %v707
      %v2974 = vunpack.c.l.b16 %v708
      %v2975 = vunpack.c.h.b16 %v708
      %v2976 = vunpack.c.l.b16 %v709
      %v2977 = vunpack.c.h.b16 %v709
      %v2978 = vunpack.c.l.b16 %v710
      %v2979 = vunpack.c.h.b16 %v710
      %v2980 = vunpack.c.l.b16 %v711
      %v2981 = vunpack.c.h.b16 %v711
      %v2982 = vunpack.c.l.b16 %v712
      %v2983 = vunpack.c.h.b16 %v712
      %v2984 = vunpack.c.l.b16 %v713
      %v2985 = vunpack.c.h.b16 %v713
      %v2986 = vunpack.c.l.b16 %v714
      %v2987 = vunpack.c.h.b16 %v714
      %v2988 = vunpack.c.l.b16 %v715
      %v2989 = vunpack.c.h.b16 %v715
      %v2990 = vunpack.c.l.b16 %v716
      %v2991 = vunpack.c.h.b16 %v716
      %v2992 = vunpack.c.l.b16 %v717
      %v2993 = vunpack.c.h.b16 %v717
      %v2994 = vunpack.c.l.b16 %v718
      %v2995 = vunpack.c.h.b16 %v718
      %v2996 = vunpack.c.l.b16 %v719
      %v2997 = vunpack.c.h.b16 %v719
      %v2998 = vunpack.c.l.b16 %v720
      %v2999 = vunpack.c.h.b16 %v720
      %v3000 = vunpack.c.l.b16 %v721
      %v3001 = vunpack.c.h.b16 %v721
      %v3002 = vunpack.c.l.b16 %v722
      %v3003 = vunpack.c.h.b16 %v722
      %v3004 = vunpack.c.l.b16 %v723
      %v3005 = vunpack.c.h.b16 %v723
      %v3006 = vunpack.c.l.b16 %v724
      %v3007 = vunpack.c.h.b16 %v724
      %v3008 = vunpack.c.l.b16 %v725
      %v3009 = vunpack.c.h.b16 %v725
      %v3010 = vunpack.c.l.b16 %v726
      %v3011 = vunpack.c.h.b16 %v726
      %v3012 = vunpack.c.l.b16 %v727
      %v3013 = vunpack.c.h.b16 %v727
      %v3014 = vunpack.c.l.b16 %v728
      %v3015 = vunpack.c.h.b16 %v728
      %v3016 = vunpack.c.l.b16 %v729
      %v3017 = vunpack.c.h.b16 %v729
      %v3018 = vunpack.c.l.b16 %v730
      %v3019 = vunpack.c.h.b16 %v730
      %v3020 = vunpack.c.l.b16 %v731
      %v3021 = vunpack.c.h.b16 %v731
      %v3022 = vunpack.c.l.b16 %v732
      %v3023 = vunpack.c.h.b16 %v732
      %v3024 = vunpack.c.l.b16 %v733
      %v3025 = vunpack.c.h.b16 %v733
      %v3026 = vunpack.c.l.b16 %v734
      %v3027 = vunpack.c.h.b16 %v734
      %v3028 = vunpack.c.l.b16 %v735
      %v3029 = vunpack.c.h.b16 %v735
      %v3030 = vunpack.c.l.b16 %v736
      %v3031 = vunpack.c.h.b16 %v736
      %v3032 = vunpack.c.l.b16 %v737
      %v3033 = vunpack.c.h.b16 %v737
      %v3034 = vunpack.c.l.b16 %v738
      %v3035 = vunpack.c.h.b16 %v738
      %v3036 = vunpack.c.l.b16 %v739
      %v3037 = vunpack.c.h.b16 %v739
      %v3038 = vunpack.c.l.b16 %v740
      %v3039 = vunpack.c.h.b16 %v740
      %v3040 = vunpack.c.l.b16 %v741
      %v3041 = vunpack.c.h.b16 %v741
      %v3042 = vunpack.c.l.b16 %v742
      %v3043 = vunpack.c.h.b16 %v742
      %v3044 = vunpack.c.l.b16 %v743
      %v3045 = vunpack.c.h.b16 %v743
      %v3046 = vunpack.c.l.b16 %v744
      %v3047 = vunpack.c.h.b16 %v744
      %v3048 = vunpack.c.l.b16 %v745
      %v3049 = vunpack.c.h.b16 %v745
      %v3050 = vunpack.c.l.b16 %v746
      %v3051 = vunpack.c.h.b16 %v746
      %v3052 = vunpack.c.l.b16 %v747
      %v3053 = vunpack.c.h.b16 %v747
      %v3054 = vunpack.c.l.b16 %v748
      %v3055 = vunpack.c.h.b16 %v748
      %v3056 = vunpack.c.l.b16 %v749
      %v3057 = vunpack.c.h.b16 %v749
      %v3058 = vunpack.c.l.b16 %v750
      %v3059 = vunpack.c.h.b16 %v750
      %v3060 = vunpack.c.l.b16 %v751
      %v3061 = vunpack.c.h.b16 %v751
      %v3062 = vunpack.c.l.b16 %v752
      %v3063 = vunpack.c.h.b16 %v752
      %v3064 = vunpack.c.l.b16 %v753
      %v3065 = vunpack.c.h.b16 %v753
      %v3066 = vunpack.c.l.b16 %v754
      %v3067 = vunpack.c.h.b16 %v754
      %v3068 = vunpack.c.l.b16 %v755
      %v3069 = vunpack.c.h.b16 %v755
      %v3070 = vunpack.c.l.b16 %v756
      %v3071 = vunpack.c.h.b16 %v756
      %v3072 = vunpack.c.l.b16 %v757
      %v3073 = vunpack.c.h.b16 %v757
      %v3074 = vunpack.c.l.b16 %v758
      %v3075 = vunpack.c.h.b16 %v758
      %v3076 = vunpack.c.l.b16 %v759
      %v3077 = vunpack.c.h.b16 %v759
      %v3078 = vunpack.c.l.b16 %v760
      %v3079 = vunpack.c.h.b16 %v760
      %v3080 = vunpack.c.l.b16 %v761
      %v3081 = vunpack.c.h.b16 %v761
      %v3082 = vunpack.c.l.b16 %v762
      %v3083 = vunpack.c.h.b16 %v762
      %v3084 = vunpack.c.l.b16 %v763
      %v3085 = vunpack.c.h.b16 %v763
      %v3086 = vunpack.c.l.b16 %v764
      %v3087 = vunpack.c.h.b16 %v764
      %v3088 = vunpack.c.l.b16 %v765
      %v3089 = vunpack.c.h.b16 %v765
      %v3090 = vunpack.c.l.b16 %v766
      %v3091 = vunpack.c.h.b16 %v766
      %v3092 = vunpack.c.l.b16 %v767
      %v3093 = vunpack.c.h.b16 %v767
      %v3094 = vunpack.c.l.b16 %v768
      %v3095 = vunpack.c.h.b16 %v768
      %v3096 = vunpack.c.l.b16 %v769
      %v3097 = vunpack.c.h.b16 %v769
      %v3098 = vunpack.c.l.b16 %v770
      %v3099 = vunpack.c.h.b16 %v770
      %v3100 = vunpack.c.l.b16 %v771
      %v3101 = vunpack.c.h.b16 %v771
      %v3102 = vunpack.c.l.b16 %v772
      %v3103 = vunpack.c.h.b16 %v772
      %v3104 = vunpack.c.l.b16 %v773
      %v3105 = vunpack.c.h.b16 %v773
      %v3106 = vunpack.c.l.b16 %v774
      %v3107 = vunpack.c.h.b16 %v774
      %v3108 = vunpack.c.l.b16 %v775
      %v3109 = vunpack.c.h.b16 %v775
      %v3110 = vunpack.c.l.b16 %v776
      %v3111 = vunpack.c.h.b16 %v776
      %v3112 = vunpack.c.l.b16 %v777
      %v3113 = vunpack.c.h.b16 %v777
      %v3114 = vunpack.c.l.b16 %v778
      %v3115 = vunpack.c.h.b16 %v778
      %v3116 = vunpack.c.l.b16 %v779
      %v3117 = vunpack.c.h.b16 %v779
      %v3118 = vunpack.c.l.b16 %v780
      %v3119 = vunpack.c.h.b16 %v780
      %v3120 = vunpack.c.l.b16 %v781
      %v3121 = vunpack.c.h.b16 %v781
      %v3122 = vunpack.c.l.b16 %v782
      %v3123 = vunpack.c.h.b16 %v782
      %v3124 = vunpack.c.l.b16 %v783
      %v3125 = vunpack.c.h.b16 %v783
      %v3126 = vunpack.c.l.b16 %v784
      %v3127 = vunpack.c.h.b16 %v784
      %v3128 = vunpack.c.l.b16 %v785
      %v3129 = vunpack.c.h.b16 %v785
      %v3130 = vunpack.c.l.b16 %v786
      %v3131 = vunpack.c.h.b16 %v786
      %v3132 = vunpack.c.l.b16 %v787
      %v3133 = vunpack.c.h.b16 %v787
      %v3134 = vunpack.c.l.b16 %v788
      %v3135 = vunpack.c.h.b16 %v788
      %v3136 = vunpack.c.l.b16 %v789
      %v3137 = vunpack.c.h.b16 %v789
      %v3138 = vunpack.c.l.b16 %v790
      %v3139 = vunpack.c.h.b16 %v790
      %v3140 = vunpack.c.l.b16 %v791
      %v3141 = vunpack.c.h.b16 %v791
      %v3142 = vunpack.c.l.b16 %v792
      %v3143 = vunpack.c.h.b16 %v792
      %v3144 = vunpack.c.l.b16 %v793
      %v3145 = vunpack.c.h.b16 %v793
      %v3146 = vunpack.c.l.b16 %v794
      %v3147 = vunpack.c.h.b16 %v794
      %v3148 = vunpack.c.l.b16 %v795
      %v3149 = vunpack.c.h.b16 %v795
      %v3150 = vunpack.c.l.b16 %v796
      %v3151 = vunpack.c.h.b16 %v796
      %v3152 = vunpack.c.l.b16 %v797
      %v3153 = vunpack.c.h.b16 %v797
      %v3154 = vunpack.c.l.b16 %v798
      %v3155 = vunpack.c.h.b16 %v798
      %v3156 = vunpack.c.l.b16 %v799
      %v3157 = vunpack.c.h.b16 %v799
      %v3158 = vunpack.c.l.b16 %v800
      %v3159 = vunpack.c.h.b16 %v800
      %v3160 = vunpack.c.l.b16 %v801
      %v3161 = vunpack.c.h.b16 %v801
      %v3162 = vunpack.c.l.b16 %v802
      %v3163 = vunpack.c.h.b16 %v802
      %v3164 = vunpack.c.l.b16 %v803
      %v3165 = vunpack.c.h.b16 %v803
      %v3166 = vunpack.c.l.b16 %v804
      %v3167 = vunpack.c.h.b16 %v804
      %v3168 = vunpack.c.l.b16 %v805
      %v3169 = vunpack.c.h.b16 %v805
      %v3170 = vunpack.c.l.b16 %v806
      %v3171 = vunpack.c.h.b16 %v806
      %v3172 = vunpack.c.l.b16 %v807
      %v3173 = vunpack.c.h.b16 %v807
      %v3174 = vunpack.c.l.b16 %v808
      %v3175 = vunpack.c.h.b16 %v808
      %v3176 = vunpack.c.l.b16 %v809
      %v3177 = vunpack.c.h.b16 %v809
      %v3178 = vunpack.c.l.b16 %v810
      %v3179 = vunpack.c.h.b16 %v810
      %v3180 = vunpack.c.l.b16 %v811
      %v3181 = vunpack.c.h.b16 %v811
      %v3182 = vunpack.c.l.b16 %v812
      %v3183 = vunpack.c.h.b16 %v812
      %v3184 = vunpack.c.l.b16 %v813
      %v3185 = vunpack.c.h.b16 %v813
      %v3186 = vunpack.c.l.b16 %v814
      %v3187 = vunpack.c.h.b16 %v814
      %v3188 = vunpack.c.l.b16 %v815
      %v3189 = vunpack.c.h.b16 %v815
      %v3190 = vunpack.c.l.b16 %v816
      %v3191 = vunpack.c.h.b16 %v816
      %v3192 = vunpack.c.l.b16 %v817
      %v3193 = vunpack.c.h.b16 %v817
      %v3194 = vunpack.c.l.b16 %v818
      %v3195 = vunpack.c.h.b16 %v818
      %v3196 = vunpack.c.l.b16 %v819
      %v3197 = vunpack.c.h.b16 %v819
      %v3198 = vunpack.c.l.b16 %v820
      %v3199 = vunpack.c.h.b16 %v820
      %v3200 = vunpack.c.l.b16 %v821
      %v3201 = vunpack.c.h.b16 %v821
      %v3202 = vunpack.c.l.b16 %v822
      %v3203 = vunpack.c.h.b16 %v822
      %v3204 = vunpack.c.l.b16 %v823
      %v3205 = vunpack.c.h.b16 %v823
      %v3206 = vunpack.c.l.b16 %v824
      %v3207 = vunpack.c.h.b16 %v824
      %v3208 = vunpack.c.l.b16 %v825
      %v3209 = vunpack.c.h.b16 %v825
      %v3210 = vunpack.c.l.b16 %v826
      %v3211 = vunpack.c.h.b16 %v826
      %v3212 = vunpack.c.l.b16 %v827
      %v3213 = vunpack.c.h.b16 %v827
      %v3214 = vunpack.c.l.b16 %v828
      %v3215 = vunpack.c.h.b16 %v828
      %v3216 = vunpack.c.l.b16 %v829
      %v3217 = vunpack.c.h.b16 %v829
      %v3218 = vunpack.c.l.b16 %v830
      %v3219 = vunpack.c.h.b16 %v830
      %v3220 = vunpack.c.l.b16 %v831
      %v3221 = vunpack.c.h.b16 %v831
      %v3222 = vunpack.c.l.b16 %v832
      %v3223 = vunpack.c.h.b16 %v832
      %v3224 = vunpack.c.l.b16 %v833
      %v3225 = vunpack.c.h.b16 %v833
      %v3226 = vunpack.c.l.b16 %v834
      %v3227 = vunpack.c.h.b16 %v834
      %v3228 = vunpack.c.l.b16 %v835
      %v3229 = vunpack.c.h.b16 %v835
      %v3230 = vunpack.c.l.b16 %v836
      %v3231 = vunpack.c.h.b16 %v836
      %v3232 = vunpack.c.l.b16 %v837
      %v3233 = vunpack.c.h.b16 %v837
      %v3234 = vunpack.c.l.b16 %v838
      %v3235 = vunpack.c.h.b16 %v838
      %v3236 = vunpack.c.l.b16 %v839
      %v3237 = vunpack.c.h.b16 %v839
      %v3238 = vunpack.c.l.b16 %v840
      %v3239 = vunpack.c.h.b16 %v840
      %v3240 = vunpack.c.l.b16 %v841
      %v3241 = vunpack.c.h.b16 %v841
      %v3242 = vunpack.c.l.b16 %v842
      %v3243 = vunpack.c.h.b16 %v842
      %v3244 = vunpack.c.l.b16 %v843
      %v3245 = vunpack.c.h.b16 %v843
      %v3246 = vunpack.c.l.b16 %v844
      %v3247 = vunpack.c.h.b16 %v844
      %v3248 = vunpack.c.l.b16 %v845
      %v3249 = vunpack.c.h.b16 %v845
      %v3250 = vunpack.c.l.b16 %v846
      %v3251 = vunpack.c.h.b16 %v846
      %v3252 = vunpack.c.l.b16 %v847
      %v3253 = vunpack.c.h.b16 %v847
      %v3254 = vunpack.c.l.b16 %v848
      %v3255 = vunpack.c.h.b16 %v848
      %v3256 = vunpack.c.l.b16 %v849
      %v3257 = vunpack.c.h.b16 %v849
      %v3258 = vunpack.c.l.b16 %v850
      %v3259 = vunpack.c.h.b16 %v850
      %v3260 = vunpack.c.l.b16 %v851
      %v3261 = vunpack.c.h.b16 %v851
      %v3262 = vunpack.c.l.b16 %v852
      %v3263 = vunpack.c.h.b16 %v852
      %v3264 = vunpack.c.l.b16 %v853
      %v3265 = vunpack.c.h.b16 %v853
      %v3266 = vunpack.c.l.b16 %v854
      %v3267 = vunpack.c.h.b16 %v854
      %v3268 = vunpack.c.l.b16 %v855
      %v3269 = vunpack.c.h.b16 %v855
      %v3270 = vunpack.c.l.b16 %v856
      %v3271 = vunpack.c.h.b16 %v856
      %v3272 = vunpack.c.l.b16 %v857
      %v3273 = vunpack.c.h.b16 %v857
      %v3274 = vunpack.c.l.b16 %v858
      %v3275 = vunpack.c.h.b16 %v858
      %v3276 = vunpack.c.l.b16 %v859
      %v3277 = vunpack.c.h.b16 %v859
      %v3278 = vunpack.c.l.b16 %v860
      %v3279 = vunpack.c.h.b16 %v860
      %v3280 = vunpack.c.l.b16 %v861
      %v3281 = vunpack.c.h.b16 %v861
      %v3282 = vunpack.c.l.b16 %v862
      %v3283 = vunpack.c.h.b16 %v862
      %v3284 = vunpack.c.l.b16 %v863
      %v3285 = vunpack.c.h.b16 %v863
      %v3286 = vunpack.c.l.b16 %v864
      %v3287 = vunpack.c.h.b16 %v864
      %v3288 = vunpack.c.l.b16 %v865
      %v3289 = vunpack.c.h.b16 %v865
      %v3290 = vunpack.c.l.b16 %v866
      %v3291 = vunpack.c.h.b16 %v866
      %v3292 = vunpack.c.l.b16 %v867
      %v3293 = vunpack.c.h.b16 %v867
      %v3294 = vunpack.c.l.b16 %v868
      %v3295 = vunpack.c.h.b16 %v868
      %v3296 = vunpack.c.l.b16 %v869
      %v3297 = vunpack.c.h.b16 %v869
      %v3298 = vunpack.c.l.b16 %v870
      %v3299 = vunpack.c.h.b16 %v870
      %v3300 = vunpack.c.l.b16 %v871
      %v3301 = vunpack.c.h.b16 %v871
      %v3302 = vunpack.c.l.b16 %v872
      %v3303 = vunpack.c.h.b16 %v872
      %v3304 = vunpack.c.l.b16 %v873
      %v3305 = vunpack.c.h.b16 %v873
      %v3306 = vunpack.c.l.b16 %v874
      %v3307 = vunpack.c.h.b16 %v874
      %v3308 = vunpack.c.l.b16 %v875
      %v3309 = vunpack.c.h.b16 %v875
      %v3310 = vunpack.c.l.b16 %v876
      %v3311 = vunpack.c.h.b16 %v876
      %v3312 = vunpack.c.l.b16 %v877
      %v3313 = vunpack.c.h.b16 %v877
      %v3314 = vunpack.c.l.b16 %v878
      %v3315 = vunpack.c.h.b16 %v878
      %v3316 = vunpack.c.l.b16 %v879
      %v3317 = vunpack.c.h.b16 %v879
      %v3318 = vunpack.c.l.b16 %v880
      %v3319 = vunpack.c.h.b16 %v880
      %v3320 = vunpack.c.l.b16 %v881
      %v3321 = vunpack.c.h.b16 %v881
      %v3322 = vunpack.c.l.b16 %v882
      %v3323 = vunpack.c.h.b16 %v882
      %v3324 = vunpack.c.l.b16 %v883
      %v3325 = vunpack.c.h.b16 %v883
      %v3326 = vunpack.c.l.b16 %v884
      %v3327 = vunpack.c.h.b16 %v884
      %v3328 = vunpack.c.l.b16 %v885
      %v3329 = vunpack.c.h.b16 %v885
      %v3330 = vunpack.c.l.b16 %v886
      %v3331 = vunpack.c.h.b16 %v886
      %v3332 = vunpack.c.l.b16 %v887
      %v3333 = vunpack.c.h.b16 %v887
      %v3334 = vunpack.c.l.b16 %v888
      %v3335 = vunpack.c.h.b16 %v888
      %v3336 = vunpack.c.l.b16 %v889
      %v3337 = vunpack.c.h.b16 %v889
      %v3338 = vunpack.c.l.b16 %v890
      %v3339 = vunpack.c.h.b16 %v890
      %v3340 = vunpack.c.l.b16 %v891
      %v3341 = vunpack.c.h.b16 %v891
      %v3342 = vunpack.c.l.b16 %v892
      %v3343 = vunpack.c.h.b16 %v892
      %v3344 = vunpack.c.l.b16 %v893
      %v3345 = vunpack.c.h.b16 %v893
      %v3346 = vunpack.c.l.b16 %v894
      %v3347 = vunpack.c.h.b16 %v894
      %v3348 = vunpack.c.l.b16 %v895
      %v3349 = vunpack.c.h.b16 %v895
      %v3350 = vunpack.c.l.b16 %v896
      %v3351 = vunpack.c.h.b16 %v896
      %v3352 = vunpack.c.l.b16 %v897
      %v3353 = vunpack.c.h.b16 %v897
      %v3354 = vunpack.c.l.b16 %v898
      %v3355 = vunpack.c.h.b16 %v898
      %v3356 = vunpack.c.l.b16 %v899
      %v3357 = vunpack.c.h.b16 %v899
      %v3358 = vunpack.c.l.b16 %v900
      %v3359 = vunpack.c.h.b16 %v900
      %v3360 = vunpack.c.l.b16 %v901
      %v3361 = vunpack.c.h.b16 %v901
      %v3362 = vunpack.c.l.b16 %v902
      %v3363 = vunpack.c.h.b16 %v902
      %v3364 = vunpack.c.l.b16 %v903
      %v3365 = vunpack.c.h.b16 %v903
      %v3366 = vunpack.c.l.b16 %v904
      %v3367 = vunpack.c.h.b16 %v904
      %v3368 = vunpack.c.l.b16 %v905
      %v3369 = vunpack.c.h.b16 %v905
      %v3370 = vunpack.c.l.b16 %v906
      %v3371 = vunpack.c.h.b16 %v906
      %v3372 = vunpack.c.l.b16 %v907
      %v3373 = vunpack.c.h.b16 %v907
      %v3374 = vunpack.c.l.b16 %v908
      %v3375 = vunpack.c.h.b16 %v908
      %v3376 = vunpack.c.l.b16 %v909
      %v3377 = vunpack.c.h.b16 %v909
      %v3378 = vunpack.c.l.b16 %v910
      %v3379 = vunpack.c.h.b16 %v910
      %v3380 = vunpack.c.l.b16 %v911
      %v3381 = vunpack.c.h.b16 %v911
      %v3382 = vunpack.c.l.b16 %v912
      %v3383 = vunpack.c.h.b16 %v912
      %v3384 = vunpack.c.l.b16 %v913
      %v3385 = vunpack.c.h.b16 %v913
      %v3386 = vunpack.c.l.b16 %v914
      %v3387 = vunpack.c.h.b16 %v914
      %v3388 = vunpack.c.l.b16 %v915
      %v3389 = vunpack.c.h.b16 %v915
      %v3390 = vunpack.c.l.b16 %v916
      %v3391 = vunpack.c.h.b16 %v916
      %v3392 = vunpack.c.l.b16 %v917
      %v3393 = vunpack.c.h.b16 %v917
      %v3394 = vunpack.c.l.b16 %v918
      %v3395 = vunpack.c.h.b16 %v918
      %v3396 = vunpack.c.l.b16 %v919
      %v3397 = vunpack.c.h.b16 %v919
      %v3398 = vunpack.c.l.b16 %v920
      %v3399 = vunpack.c.h.b16 %v920
      %v3400 = vunpack.c.l.b16 %v921
      %v3401 = vunpack.c.h.b16 %v921
      %v3402 = vunpack.c.l.b16 %v922
      %v3403 = vunpack.c.h.b16 %v922
      %v3404 = vunpack.c.l.b16 %v923
      %v3405 = vunpack.c.h.b16 %v923
      %v3406 = vunpack.c.l.b16 %v924
      %v3407 = vunpack.c.h.b16 %v924
      %v3408 = vunpack.c.l.b16 %v925
      %v3409 = vunpack.c.h.b16 %v925
      %v3410 = vunpack.c.l.b16 %v926
      %v3411 = vunpack.c.h.b16 %v926
      %v3412 = vunpack.c.l.b16 %v927
      %v3413 = vunpack.c.h.b16 %v927
      %v3414 = vunpack.c.l.b16 %v928
      %v3415 = vunpack.c.h.b16 %v928
      %v3416 = vunpack.c.l.b16 %v929
      %v3417 = vunpack.c.h.b16 %v929
      %v3418 = vunpack.c.l.b16 %v930
      %v3419 = vunpack.c.h.b16 %v930
      %v3420 = vunpack.c.l.b16 %v931
      %v3421 = vunpack.c.h.b16 %v931
      %v3422 = vunpack.c.l.b16 %v932
      %v3423 = vunpack.c.h.b16 %v932
      %v3424 = vunpack.c.l.b16 %v933
      %v3425 = vunpack.c.h.b16 %v933
      %v3426 = vunpack.c.l.b16 %v934
      %v3427 = vunpack.c.h.b16 %v934
      %v3428 = vunpack.c.l.b16 %v935
      %v3429 = vunpack.c.h.b16 %v935
      %v3430 = vunpack.c.l.b16 %v936
      %v3431 = vunpack.c.h.b16 %v936
      %v3432 = vunpack.c.l.b16 %v937
      %v3433 = vunpack.c.h.b16 %v937
      %v3434 = vunpack.c.l.b16 %v938
      %v3435 = vunpack.c.h.b16 %v938
      %v3436 = vunpack.c.l.b16 %v939
      %v3437 = vunpack.c.h.b16 %v939
      %v3438 = vunpack.c.l.b16 %v940
      %v3439 = vunpack.c.h.b16 %v940
      %v3440 = vunpack.c.l.b16 %v941
      %v3441 = vunpack.c.h.b16 %v941
      %v3442 = vunpack.c.l.b16 %v942
      %v3443 = vunpack.c.h.b16 %v942
      %v3444 = vunpack.c.l.b16 %v943
      %v3445 = vunpack.c.h.b16 %v943
      %v3446 = vunpack.c.l.b16 %v944
      %v3447 = vunpack.c.h.b16 %v944
      %v3448 = vunpack.c.l.b16 %v945
      %v3449 = vunpack.c.h.b16 %v945
      %v3450 = vunpack.c.l.b16 %v946
      %v3451 = vunpack.c.h.b16 %v946
      %v3452 = vunpack.c.l.b16 %v947
      %v3453 = vunpack.c.h.b16 %v947
      %v3454 = vunpack.c.l.b16 %v948
      %v3455 = vunpack.c.h.b16 %v948
      %v3456 = vunpack.c.l.b16 %v949
      %v3457 = vunpack.c.h.b16 %v949
      %v3458 = vunpack.c.l.b16 %v950
      %v3459 = vunpack.c.h.b16 %v950
      %v3460 = vunpack.c.l.b16 %v951
      %v3461 = vunpack.c.h.b16 %v951
      %v3462 = vunpack.c.l.b16 %v952
      %v3463 = vunpack.c.h.b16 %v952
      %v3464 = vunpack.c.l.b16 %v953
      %v3465 = vunpack.c.h.b16 %v953
      %v3466 = vunpack.c.l.b16 %v954
      %v3467 = vunpack.c.h.b16 %v954
      %v3468 = vunpack.c.l.b16 %v955
      %v3469 = vunpack.c.h.b16 %v955
      %v3470 = vunpack.c.l.b16 %v956
      %v3471 = vunpack.c.h.b16 %v956
      %v3472 = vunpack.c.l.b16 %v957
      %v3473 = vunpack.c.h.b16 %v957
      %v3474 = vunpack.c.l.b16 %v958
      %v3475 = vunpack.c.h.b16 %v958
      %v3476 = vunpack.c.l.b16 %v959
      %v3477 = vunpack.c.h.b16 %v959
      %v3478 = vunpack.c.l.b16 %v960
      %v3479 = vunpack.c.h.b16 %v960
      %v3480 = vunpack.c.l.b16 %v961
      %v3481 = vunpack.c.h.b16 %v961
      %v3482 = vunpack.c.l.b16 %v962
      %v3483 = vunpack.c.h.b16 %v962
      %v3484 = vunpack.c.l.b16 %v963
      %v3485 = vunpack.c.h.b16 %v963
      %v3486 = vunpack.c.l.b16 %v964
      %v3487 = vunpack.c.h.b16 %v964
      %v3488 = vunpack.c.l.b16 %v965
      %v3489 = vunpack.c.h.b16 %v965
      %v3490 = vunpack.c.l.b16 %v966
      %v3491 = vunpack.c.h.b16 %v966
      %v3492 = vunpack.c.l.b16 %v967
      %v3493 = vunpack.c.h.b16 %v967
      %v3494 = vunpack.c.l.b16 %v968
      %v3495 = vunpack.c.h.b16 %v968
      %v3496 = vunpack.c.l.b16 %v969
      %v3497 = vunpack.c.h.b16 %v969
      %v3498 = vunpack.c.l.b16 %v970
      %v3499 = vunpack.c.h.b16 %v970
      %v3500 = vunpack.c.l.b16 %v971
      %v3501 = vunpack.c.h.b16 %v971
      %v3502 = vunpack.c.l.b16 %v972
      %v3503 = vunpack.c.h.b16 %v972
      %v3504 = vunpack.c.l.b16 %v973
      %v3505 = vunpack.c.h.b16 %v973
      %v3506 = vunpack.c.l.b16 %v974
      %v3507 = vunpack.c.h.b16 %v974
      %v3508 = vunpack.c.l.b16 %v975
      %v3509 = vunpack.c.h.b16 %v975
      %v3510 = vunpack.c.l.b16 %v976
      %v3511 = vunpack.c.h.b16 %v976
      %v3512 = vunpack.c.l.b16 %v977
      %v3513 = vunpack.c.h.b16 %v977
      %v3514 = vunpack.c.l.b16 %v978
      %v3515 = vunpack.c.h.b16 %v978
      %v3516 = vunpack.c.l.b16 %v979
      %v3517 = vunpack.c.h.b16 %v979
      %v3518 = vunpack.c.l.b16 %v980
      %v3519 = vunpack.c.h.b16 %v980
      %v3520 = vunpack.c.l.b16 %v981
      %v3521 = vunpack.c.h.b16 %v981
      %v3522 = vunpack.c.l.b16 %v982
      %v3523 = vunpack.c.h.b16 %v982
      %v3524 = vunpack.c.l.b16 %v983
      %v3525 = vunpack.c.h.b16 %v983
      %v3526 = vunpack.c.l.b16 %v984
      %v3527 = vunpack.c.h.b16 %v984
      %v3528 = vunpack.c.l.b16 %v985
      %v3529 = vunpack.c.h.b16 %v985
      %v3530 = vunpack.c.l.b16 %v986
      %v3531 = vunpack.c.h.b16 %v986
      %v3532 = vunpack.c.l.b16 %v987
      %v3533 = vunpack.c.h.b16 %v987
      %v3534 = vunpack.c.l.b16 %v988
      %v3535 = vunpack.c.h.b16 %v988
      %v3536 = vunpack.c.l.b16 %v989
      %v3537 = vunpack.c.h.b16 %v989
      %v3538 = vunpack.c.l.b16 %v990
      %v3539 = vunpack.c.h.b16 %v990
      %v3540 = vunpack.c.l.b16 %v991
      %v3541 = vunpack.c.h.b16 %v991
      %v3542 = vunpack.c.l.b16 %v992
      %v3543 = vunpack.c.h.b16 %v992
      %v3544 = vunpack.c.l.b16 %v993
      %v3545 = vunpack.c.h.b16 %v993
      %v3546 = vunpack.c.l.b16 %v994
      %v3547 = vunpack.c.h.b16 %v994
      %v3548 = vunpack.c.l.b16 %v995
      %v3549 = vunpack.c.h.b16 %v995
      %v3550 = vunpack.c.l.b16 %v996
      %v3551 = vunpack.c.h.b16 %v996
      %v3552 = vunpack.c.l.b16 %v997
      %v3553 = vunpack.c.h.b16 %v997
      %v3554 = vunpack.c.l.b16 %v998
      %v3555 = vunpack.c.h.b16 %v998
      %v3556 = vunpack.c.l.b16 %v999
      %v3557 = vunpack.c.h.b16 %v999
      %v3558 = vunpack.c.l.b16 %v1000
      %v3559 = vunpack.c.h.b16 %v1000
      %v3560 = vunpack.c.l.b16 %v1001
      %v3561 = vunpack.c.h.b16 %v1001
      %v3562 = vunpack.c.l.b16 %v1002
      %v3563 = vunpack.c.h.b16 %v1002
      %v3564 = vunpack.c.l.b16 %v1003
      %v3565 = vunpack.c.h.b16 %v1003
      %v3566 = vunpack.c.l.b16 %v1004
      %v3567 = vunpack.c.h.b16 %v1004
      %v3568 = vunpack.c.l.b16 %v1005
      %v3569 = vunpack.c.h.b16 %v1005
      %v3570 = vunpack.c.l.b16 %v1006
      %v3571 = vunpack.c.h.b16 %v1006
      %v3572 = vunpack.c.l.b16 %v1007
      %v3573 = vunpack.c.h.b16 %v1007
      %v3574 = vunpack.c.l.b16 %v1008
      %v3575 = vunpack.c.h.b16 %v1008
      %v3576 = vunpack.c.l.b16 %v1009
      %v3577 = vunpack.c.h.b16 %v1009
      %v3578 = vunpack.c.l.b16 %v1010
      %v3579 = vunpack.c.h.b16 %v1010
      %v3580 = vunpack.c.l.b16 %v1011
      %v3581 = vunpack.c.h.b16 %v1011
      %v3582 = vunpack.c.l.b16 %v1012
      %v3583 = vunpack.c.h.b16 %v1012
      %v3584 = vunpack.c.l.b16 %v1013
      %v3585 = vunpack.c.h.b16 %v1013
      %v3586 = vunpack.c.l.b16 %v1014
      %v3587 = vunpack.c.h.b16 %v1014
      %v3588 = vunpack.c.l.b16 %v1015
      %v3589 = vunpack.c.h.b16 %v1015
      %v3590 = vunpack.c.l.b16 %v1016
      %v3591 = vunpack.c.h.b16 %v1016
      %v3592 = vunpack.c.l.b16 %v1017
      %v3593 = vunpack.c.h.b16 %v1017
      %v3594 = vunpack.c.l.b16 %v1018
      %v3595 = vunpack.c.h.b16 %v1018
      %v3596 = vunpack.c.l.b16 %v1019
      %v3597 = vunpack.c.h.b16 %v1019
      %v3598 = vunpack.c.l.b16 %v1020
      %v3599 = vunpack.c.h.b16 %v1020
      %v3600 = vunpack.c.l.b16 %v1021
      %v3601 = vunpack.c.h.b16 %v1021
      %v3602 = vunpack.c.l.b16 %v1022
      %v3603 = vunpack.c.h.b16 %v1022
      %v3604 = vunpack.c.l.b16 %v1023
      %v3605 = vunpack.c.h.b16 %v1023
      %v3606 = vunpack.c.l.b16 %v1024
      %v3607 = vunpack.c.h.b16 %v1024
      %v3608 = vunpack.c.l.b16 %v1025
      %v3609 = vunpack.c.h.b16 %v1025
      %v3610 = vunpack.c.l.b16 %v1026
      %v3611 = vunpack.c.h.b16 %v1026
      %v3612 = vunpack.c.l.b16 %v1027
      %v3613 = vunpack.c.h.b16 %v1027
      %v3614 = vunpack.c.l.b16 %v1028
      %v3615 = vunpack.c.h.b16 %v1028
      %v3616 = vunpack.c.l.b16 %v1029
      %v3617 = vunpack.c.h.b16 %v1029
      %v3618 = vunpack.c.l.b16 %v1030
      %v3619 = vunpack.c.h.b16 %v1030
      %v3620 = vunpack.c.l.b16 %v1031
      %v3621 = vunpack.c.h.b16 %v1031
      %v3622 = vpack.c.b16 %v2026, %v2022
      %v3623 = vpack.c.b16 %v2027, %v2023
      %v3624 = vpack.c.b16 %v2028, %v2024
      %v3625 = vpack.c.b16 %v2029, %v2025
      %v3626 = vpack.c.b16 %v2034, %v2030
      %v3627 = vpack.c.b16 %v2035, %v2031
      %v3628 = vpack.c.b16 %v2036, %v2032
      %v3629 = vpack.c.b16 %v2037, %v2033
      %v3630 = vpack.c.b16 %v2042, %v2038
      %v3631 = vpack.c.b16 %v2043, %v2039
      %v3632 = vpack.c.b16 %v2044, %v2040
      %v3633 = vpack.c.b16 %v2045, %v2041
      %v3634 = vpack.c.b16 %v2050, %v2046
      %v3635 = vpack.c.b16 %v2051, %v2047
      %v3636 = vpack.c.b16 %v2052, %v2048
      %v3637 = vpack.c.b16 %v2053, %v2049
      %v3638 = vpack.c.b16 %v2058, %v2054
      %v3639 = vpack.c.b16 %v2059, %v2055
      %v3640 = vpack.c.b16 %v2060, %v2056
      %v3641 = vpack.c.b16 %v2061, %v2057
      %v3642 = vpack.c.b16 %v2066, %v2062
      %v3643 = vpack.c.b16 %v2067, %v2063
      %v3644 = vpack.c.b16 %v2068, %v2064
      %v3645 = vpack.c.b16 %v2069, %v2065
      %v3646 = vpack.c.b16 %v2074, %v2070
      %v3647 = vpack.c.b16 %v2075, %v2071
      %v3648 = vpack.c.b16 %v2076, %v2072
      %v3649 = vpack.c.b16 %v2077, %v2073
      %v3650 = vpack.c.b16 %v2082, %v2078
      %v3651 = vpack.c.b16 %v2083, %v2079
      %v3652 = vpack.c.b16 %v2084, %v2080
      %v3653 = vpack.c.b16 %v2085, %v2081
      %v3654 = vpack.c.b16 %v2090, %v2086
      %v3655 = vpack.c.b16 %v2091, %v2087
      %v3656 = vpack.c.b16 %v2092, %v2088
      %v3657 = vpack.c.b16 %v2093, %v2089
      %v3658 = vpack.c.b16 %v2098, %v2094
      %v3659 = vpack.c.b16 %v2099, %v2095
      %v3660 = vpack.c.b16 %v2100, %v2096
      %v3661 = vpack.c.b16 %v2101, %v2097
      %v3662 = vpack.c.b16 %v2106, %v2102
      %v3663 = vpack.c.b16 %v2107, %v2103
      %v3664 = vpack.c.b16 %v2108, %v2104
      %v3665 = vpack.c.b16 %v2109, %v2105
      %v3666 = vpack.c.b16 %v2114, %v2110
      %v3667 = vpack.c.b16 %v2115, %v2111
      %v3668 = vpack.c.b16 %v2116, %v2112
      %v3669 = vpack.c.b16 %v2117, %v2113
      %v3670 = vpack.c.b16 %v2122, %v2118
      %v3671 = vpack.c.b16 %v2123, %v2119
      %v3672 = vpack.c.b16 %v2124, %v2120
      %v3673 = vpack.c.b16 %v2125, %v2121
      %v3674 = vpack.c.b16 %v2130, %v2126
      %v3675 = vpack.c.b16 %v2131, %v2127
      %v3676 = vpack.c.b16 %v2132, %v2128
      %v3677 = vpack.c.b16 %v2133, %v2129
      %v3678 = vpack.c.b16 %v2138, %v2134
      %v3679 = vpack.c.b16 %v2139, %v2135
      %v3680 = vpack.c.b16 %v2140, %v2136
      %v3681 = vpack.c.b16 %v2141, %v2137
      %v3682 = vpack.c.b16 %v2146, %v2142
      %v3683 = vpack.c.b16 %v2147, %v2143
      %v3684 = vpack.c.b16 %v2148, %v2144
      %v3685 = vpack.c.b16 %v2149, %v2145
      %v3686 = vpack.c.b16 %v2154, %v2150
      %v3687 = vpack.c.b16 %v2155, %v2151
      %v3688 = vpack.c.b16 %v2156, %v2152
      %v3689 = vpack.c.b16 %v2157, %v2153
      %v3690 = vpack.c.b16 %v2162, %v2158
      %v3691 = vpack.c.b16 %v2163, %v2159
      %v3692 = vpack.c.b16 %v2164, %v2160
      %v3693 = vpack.c.b16 %v2165, %v2161
      %v3694 = vpack.c.b16 %v2170, %v2166
      %v3695 = vpack.c.b16 %v2171, %v2167
      %v3696 = vpack.c.b16 %v2172, %v2168
      %v3697 = vpack.c.b16 %v2173, %v2169
      %v3698 = vpack.c.b16 %v2178, %v2174
      %v3699 = vpack.c.b16 %v2179, %v2175
      %v3700 = vpack.c.b16 %v2180, %v2176
      %v3701 = vpack.c.b16 %v2181, %v2177
      %v3702 = vpack.c.b16 %v2186, %v2182
      %v3703 = vpack.c.b16 %v2187, %v2183
      %v3704 = vpack.c.b16 %v2188, %v2184
      %v3705 = vpack.c.b16 %v2189, %v2185
      %v3706 = vpack.c.b16 %v2194, %v2190
      %v3707 = vpack.c.b16 %v2195, %v2191
      %v3708 = vpack.c.b16 %v2196, %v2192
      %v3709 = vpack.c.b16 %v2197, %v2193
      %v3710 = vpack.c.b16 %v2202, %v2198
      %v3711 = vpack.c.b16 %v2203, %v2199
      %v3712 = vpack.c.b16 %v2204, %v2200
      %v3713 = vpack.c.b16 %v2205, %v2201
      %v3714 = vpack.c.b16 %v2210, %v2206
      %v3715 = vpack.c.b16 %v2211, %v2207
      %v3716 = vpack.c.b16 %v2212, %v2208
      %v3717 = vpack.c.b16 %v2213, %v2209
      %v3718 = vpack.c.b16 %v2218, %v2214
      %v3719 = vpack.c.b16 %v2219, %v2215
      %v3720 = vpack.c.b16 %v2220, %v2216
      %v3721 = vpack.c.b16 %v2221, %v2217
      %v3722 = vpack.c.b16 %v2226, %v2222
      %v3723 = vpack.c.b16 %v2227, %v2223
      %v3724 = vpack.c.b16 %v2228, %v2224
      %v3725 = vpack.c.b16 %v2229, %v2225
      %v3726 = vpack.c.b16 %v2234, %v2230
      %v3727 = vpack.c.b16 %v2235, %v2231
      %v3728 = vpack.c.b16 %v2236, %v2232
      %v3729 = vpack.c.b16 %v2237, %v2233
      %v3730 = vpack.c.b16 %v2242, %v2238
      %v3731 = vpack.c.b16 %v2243, %v2239
      %v3732 = vpack.c.b16 %v2244, %v2240
      %v3733 = vpack.c.b16 %v2245, %v2241
      %v3734 = vpack.c.b16 %v2250, %v2246
      %v3735 = vpack.c.b16 %v2251, %v2247
      %v3736 = vpack.c.b16 %v2252, %v2248
      %v3737 = vpack.c.b16 %v2253, %v2249
      %v3738 = vpack.c.b16 %v2258, %v2254
      %v3739 = vpack.c.b16 %v2259, %v2255
      %v3740 = vpack.c.b16 %v2260, %v2256
      %v3741 = vpack.c.b16 %v2261, %v2257
      %v3742 = vpack.c.b16 %v2266, %v2262
      %v3743 = vpack.c.b16 %v2267, %v2263
      %v3744 = vpack.c.b16 %v2268, %v2264
      %v3745 = vpack.c.b16 %v2269, %v2265
      %v3746 = vpack.c.b16 %v2274, %v2270
      %v3747 = vpack.c.b16 %v2275, %v2271
      %v3748 = vpack.c.b16 %v2276, %v2272
      %v3749 = vpack.c.b16 %v2277, %v2273
      %v3750 = vpack.c.b16 %v2282, %v2278
      %v3751 = vpack.c.b16 %v2283, %v2279
      %v3752 = vpack.c.b16 %v2284, %v2280
      %v3753 = vpack.c.b16 %v2285, %v2281
      %v3754 = vpack.c.b16 %v2290, %v2286
      %v3755 = vpack.c.b16 %v2291, %v2287
      %v3756 = vpack.c.b16 %v2292, %v2288
      %v3757 = vpack.c.b16 %v2293, %v2289
      %v3758 = vpack.c.b16 %v2298, %v2294
      %v3759 = vpack.c.b16 %v2299, %v2295
      %v3760 = vpack.c.b16 %v2300, %v2296
      %v3761 = vpack.c.b16 %v2301, %v2297
      %v3762 = vpack.c.b16 %v2306, %v2302
      %v3763 = vpack.c.b16 %v2307, %v2303
      %v3764 = vpack.c.b16 %v2308, %v2304
      %v3765 = vpack.c.b16 %v2309, %v2305
      %v3766 = vpack.c.b16 %v2314, %v2310
      %v3767 = vpack.c.b16 %v2315, %v2311
      %v3768 = vpack.c.b16 %v2316, %v2312
      %v3769 = vpack.c.b16 %v2317, %v2313
      %v3770 = vpack.c.b16 %v2322, %v2318
      %v3771 = vpack.c.b16 %v2323, %v2319
      %v3772 = vpack.c.b16 %v2324, %v2320
      %v3773 = vpack.c.b16 %v2325, %v2321
      %v3774 = vpack.c.b16 %v2330, %v2326
      %v3775 = vpack.c.b16 %v2331, %v2327
      %v3776 = vpack.c.b16 %v2332, %v2328
      %v3777 = vpack.c.b16 %v2333, %v2329
      %v3778 = vpack.c.b16 %v2338, %v2334
      %v3779 = vpack.c.b16 %v2339, %v2335
      %v3780 = vpack.c.b16 %v2340, %v2336
      %v3781 = vpack.c.b16 %v2341, %v2337
      %v3782 = vpack.c.b16 %v2346, %v2342
      %v3783 = vpack.c.b16 %v2347, %v2343
      %v3784 = vpack.c.b16 %v2348, %v2344
      %v3785 = vpack.c.b16 %v2349, %v2345
      %v3786 = vpack.c.b16 %v2354, %v2350
      %v3787 = vpack.c.b16 %v2355, %v2351
      %v3788 = vpack.c.b16 %v2356, %v2352
      %v3789 = vpack.c.b16 %v2357, %v2353
      %v3790 = vpack.c.b16 %v2362, %v2358
      %v3791 = vpack.c.b16 %v2363, %v2359
      %v3792 = vpack.c.b16 %v2364, %v2360
      %v3793 = vpack.c.b16 %v2365, %v2361
      %v3794 = vpack.c.b16 %v2370, %v2366
      %v3795 = vpack.c.b16 %v2371, %v2367
      %v3796 = vpack.c.b16 %v2372, %v2368
      %v3797 = vpack.c.b16 %v2373, %v2369
      %v3798 = vpack.c.b16 %v2378, %v2374
      %v3799 = vpack.c.b16 %v2379, %v2375
      %v3800 = vpack.c.b16 %v2380, %v2376
      %v3801 = vpack.c.b16 %v2381, %v2377
      %v3802 = vpack.c.b16 %v2386, %v2382
      %v3803 = vpack.c.b16 %v2387, %v2383
      %v3804 = vpack.c.b16 %v2388, %v2384
      %v3805 = vpack.c.b16 %v2389, %v2385
      %v3806 = vpack.c.b16 %v2394, %v2390
      %v3807 = vpack.c.b16 %v2395, %v2391
      %v3808 = vpack.c.b16 %v2396, %v2392
      %v3809 = vpack.c.b16 %v2397, %v2393
      %v3810 = vpack.c.b16 %v2402, %v2398
      %v3811 = vpack.c.b16 %v2403, %v2399
      %v3812 = vpack.c.b16 %v2404, %v2400
      %v3813 = vpack.c.b16 %v2405, %v2401
      %v3814 = vpack.c.b16 %v2410, %v2406
      %v3815 = vpack.c.b16 %v2411, %v2407
      %v3816 = vpack.c.b16 %v2412, %v2408
      %v3817 = vpack.c.b16 %v2413, %v2409
      %v3818 = vpack.c.b16 %v2418, %v2414
      %v3819 = vpack.c.b16 %v2419, %v2415
      %v3820 = vpack.c.b16 %v2420, %v2416
      %v3821 = vpack.c.b16 %v2421, %v2417
      %v3822 = vpack.c.b16 %v2426, %v2422
      %v3823 = vpack.c.b16 %v2427, %v2423
      %v3824 = vpack.c.b16 %v2428, %v2424
      %v3825 = vpack.c.b16 %v2429, %v2425
      %v3826 = vpack.c.b16 %v2434, %v2430
      %v3827 = vpack.c.b16 %v2435, %v2431
      %v3828 = vpack.c.b16 %v2436, %v2432
      %v3829 = vpack.c.b16 %v2437, %v2433
      %v3830 = vpack.c.b16 %v2442, %v2438
      %v3831 = vpack.c.b16 %v2443, %v2439
      %v3832 = vpack.c.b16 %v2444, %v2440
      %v3833 = vpack.c.b16 %v2445, %v2441
      %v3834 = vpack.c.b16 %v2450, %v2446
      %v3835 = vpack.c.b16 %v2451, %v2447
      %v3836 = vpack.c.b16 %v2452, %v2448
      %v3837 = vpack.c.b16 %v2453, %v2449
      %v3838 = vpack.c.b16 %v2458, %v2454
      %v3839 = vpack.c.b16 %v2459, %v2455
      %v3840 = vpack.c.b16 %v2460, %v2456
      %v3841 = vpack.c.b16 %v2461, %v2457
      %v3842 = vpack.c.b16 %v2466, %v2462
      %v3843 = vpack.c.b16 %v2467, %v2463
      %v3844 = vpack.c.b16 %v2468, %v2464
      %v3845 = vpack.c.b16 %v2469, %v2465
      %v3846 = vpack.c.b16 %v2474, %v2470
      %v3847 = vpack.c.b16 %v2475, %v2471
      %v3848 = vpack.c.b16 %v2476, %v2472
      %v3849 = vpack.c.b16 %v2477, %v2473
      %v3850 = vpack.c.b16 %v2482, %v2478
      %v3851 = vpack.c.b16 %v2483, %v2479
      %v3852 = vpack.c.b16 %v2484, %v2480
      %v3853 = vpack.c.b16 %v2485, %v2481
      %v3854 = vpack.c.b16 %v2490, %v2486
      %v3855 = vpack.c.b16 %v2491, %v2487
      %v3856 = vpack.c.b16 %v2492, %v2488
      %v3857 = vpack.c.b16 %v2493, %v2489
      %v3858 = vpack.c.b16 %v2498, %v2494
      %v3859 = vpack.c.b16 %v2499, %v2495
      %v3860 = vpack.c.b16 %v2500, %v2496
      %v3861 = vpack.c.b16 %v2501, %v2497
      %v3862 = vpack.c.b16 %v2506, %v2502
      %v3863 = vpack.c.b16 %v2507, %v2503
      %v3864 = vpack.c.b16 %v2508, %v2504
      %v3865 = vpack.c.b16 %v2509, %v2505
      %v3866 = vpack.c.b16 %v2514, %v2510
      %v3867 = vpack.c.b16 %v2515, %v2511
      %v3868 = vpack.c.b16 %v2516, %v2512
      %v3869 = vpack.c.b16 %v2517, %v2513
      %v3870 = vpack.c.b16 %v2522, %v2518
      %v3871 = vpack.c.b16 %v2523, %v2519
      %v3872 = vpack.c.b16 %v2524, %v2520
      %v3873 = vpack.c.b16 %v2525, %v2521
      %v3874 = vpack.c.b16 %v2530, %v2526
      %v3875 = vpack.c.b16 %v2531, %v2527
      %v3876 = vpack.c.b16 %v2532, %v2528
      %v3877 = vpack.c.b16 %v2533, %v2529
      %v3878 = vpack.c.b16 %v2538, %v2534
      %v3879 = vpack.c.b16 %v2539, %v2535
      %v3880 = vpack.c.b16 %v2540, %v2536
      %v3881 = vpack.c.b16 %v2541, %v2537
      %v3882 = vpack.c.b16 %v2546, %v2542
      %v3883 = vpack.c.b16 %v2547, %v2543
      %v3884 = vpack.c.b16 %v2548, %v2544
      %v3885 = vpack.c.b16 %v2549, %v2545
      %v3886 = vpack.c.b16 %v2554, %v2550
      %v3887 = vpack.c.b16 %v2555, %v2551
      %v3888 = vpack.c.b16 %v2556, %v2552
      %v3889 = vpack.c.b16 %v2557, %v2553
      %v3890 = vpack.c.b16 %v2562, %v2558
      %v3891 = vpack.c.b16 %v2563, %v2559
      %v3892 = vpack.c.b16 %v2564, %v2560
      %v3893 = vpack.c.b16 %v2565, %v2561
      %v3894 = vpack.c.b16 %v2570, %v2566
      %v3895 = vpack.c.b16 %v2571, %v2567
      %v3896 = vpack.c.b16 %v2572, %v2568
      %v3897 = vpack.c.b16 %v2573, %v2569
      %v3898 = vpack.c.b16 %v2578, %v2574
      %v3899 = vpack.c.b16 %v2579, %v2575
      %v3900 = vpack.c.b16 %v2580, %v2576
      %v3901 = vpack.c.b16 %v2581, %v2577
      %v3902 = vpack.c.b16 %v2586, %v2582
      %v3903 = vpack.c.b16 %v2587, %v2583
      %v3904 = vpack.c.b16 %v2588, %v2584
      %v3905 = vpack.c.b16 %v2589, %v2585
      %v3906 = vpack.c.b16 %v2594, %v2590
      %v3907 = vpack.c.b16 %v2595, %v2591
      %v3908 = vpack.c.b16 %v2596, %v2592
      %v3909 = vpack.c.b16 %v2597, %v2593
      %v3910 = vpack.c.b16 %v2602, %v2598
      %v3911 = vpack.c.b16 %v2603, %v2599
      %v3912 = vpack.c.b16 %v2604, %v2600
      %v3913 = vpack.c.b16 %v2605, %v2601
      %v3914 = vpack.c.b16 %v2610, %v2606
      %v3915 = vpack.c.b16 %v2611, %v2607
      %v3916 = vpack.c.b16 %v2612, %v2608
      %v3917 = vpack.c.b16 %v2613, %v2609
      %v3918 = vpack.c.b16 %v2618, %v2614
      %v3919 = vpack.c.b16 %v2619, %v2615
      %v3920 = vpack.c.b16 %v2620, %v2616
      %v3921 = vpack.c.b16 %v2621, %v2617
      %v3922 = vpack.c.b16 %v2626, %v2622
      %v3923 = vpack.c.b16 %v2627, %v2623
      %v3924 = vpack.c.b16 %v2628, %v2624
      %v3925 = vpack.c.b16 %v2629, %v2625
      %v3926 = vpack.c.b16 %v2634, %v2630
      %v3927 = vpack.c.b16 %v2635, %v2631
      %v3928 = vpack.c.b16 %v2636, %v2632
      %v3929 = vpack.c.b16 %v2637, %v2633
      %v3930 = vpack.c.b16 %v2642, %v2638
      %v3931 = vpack.c.b16 %v2643, %v2639
      %v3932 = vpack.c.b16 %v2644, %v2640
      %v3933 = vpack.c.b16 %v2645, %v2641
      %v3934 = vpack.c.b16 %v2650, %v2646
      %v3935 = vpack.c.b16 %v2651, %v2647
      %v3936 = vpack.c.b16 %v2652, %v2648
      %v3937 = vpack.c.b16 %v2653, %v2649
      %v3938 = vpack.c.b16 %v2658, %v2654
      %v3939 = vpack.c.b16 %v2659, %v2655
      %v3940 = vpack.c.b16 %v2660, %v2656
      %v3941 = vpack.c.b16 %v2661, %v2657
      %v3942 = vpack.c.b16 %v2666, %v2662
      %v3943 = vpack.c.b16 %v2667, %v2663
      %v3944 = vpack.c.b16 %v2668, %v2664
      %v3945 = vpack.c.b16 %v2669, %v2665
      %v3946 = vpack.c.b16 %v2674, %v2670
      %v3947 = vpack.c.b16 %v2675, %v2671
      %v3948 = vpack.c.b16 %v2676, %v2672
      %v3949 = vpack.c.b16 %v2677, %v2673
      %v3950 = vpack.c.b16 %v2682, %v2678
      %v3951 = vpack.c.b16 %v2683, %v2679
      %v3952 = vpack.c.b16 %v2684, %v2680
      %v3953 = vpack.c.b16 %v2685, %v2681
      %v3954 = vpack.c.b16 %v2690, %v2686
      %v3955 = vpack.c.b16 %v2691, %v2687
      %v3956 = vpack.c.b16 %v2692, %v2688
      %v3957 = vpack.c.b16 %v2693, %v2689
      %v3958 = vpack.c.b16 %v2698, %v2694
      %v3959 = vpack.c.b16 %v2699, %v2695
      %v3960 = vpack.c.b16 %v2700, %v2696
      %v3961 = vpack.c.b16 %v2701, %v2697
      %v3962 = vpack.c.b16 %v2706, %v2702
      %v3963 = vpack.c.b16 %v2707, %v2703
      %v3964 = vpack.c.b16 %v2708, %v2704
      %v3965 = vpack.c.b16 %v2709, %v2705
      %v3966 = vpack.c.b16 %v2714, %v2710
      %v3967 = vpack.c.b16 %v2715, %v2711
      %v3968 = vpack.c.b16 %v2716, %v2712
      %v3969 = vpack.c.b16 %v2717, %v2713
      %v3970 = vpack.c.b16 %v2722, %v2718
      %v3971 = vpack.c.b16 %v2723, %v2719
      %v3972 = vpack.c.b16 %v2724, %v2720
      %v3973 = vpack.c.b16 %v2725, %v2721
      %v3974 = vpack.c.b16 %v2730, %v2726
      %v3975 = vpack.c.b16 %v2731, %v2727
      %v3976 = vpack.c.b16 %v2732, %v2728
      %v3977 = vpack.c.b16 %v2733, %v2729
      %v3978 = vpack.c.b16 %v2738, %v2734
      %v3979 = vpack.c.b16 %v2739, %v2735
      %v3980 = vpack.c.b16 %v2740, %v2736
      %v3981 = vpack.c.b16 %v2741, %v2737
      %v3982 = vpack.c.b16 %v2746, %v2742
      %v3983 = vpack.c.b16 %v2747, %v2743
      %v3984 = vpack.c.b16 %v2748, %v2744
      %v3985 = vpack.c.b16 %v2749, %v2745
      %v3986 = vpack.c.b16 %v2754, %v2750
      %v3987 = vpack.c.b16 %v2755, %v2751
      %v3988 = vpack.c.b16 %v2756, %v2752
      %v3989 = vpack.c.b16 %v2757, %v2753
      %v3990 = vpack.c.b16 %v2762, %v2758
      %v3991 = vpack.c.b16 %v2763, %v2759
      %v3992 = vpack.c.b16 %v2764, %v2760
      %v3993 = vpack.c.b16 %v2765, %v2761
      %v3994 = vpack.c.b16 %v2770, %v2766
      %v3995 = vpack.c.b16 %v2771, %v2767
      %v3996 = vpack.c.b16 %v2772, %v2768
      %v3997 = vpack.c.b16 %v2773, %v2769
      %v3998 = vpack.c.b16 %v2778, %v2774
      %v3999 = vpack.c.b16 %v2779, %v2775
      %v4000 = vpack.c.b16 %v2780, %v2776
      %v4001 = vpack.c.b16 %v2781, %v2777
      %v4002 = vpack.c.b16 %v2786, %v2782
      %v4003 = vpack.c.b16 %v2787, %v2783
      %v4004 = vpack.c.b16 %v2788, %v2784
      %v4005 = vpack.c.b16 %v2789, %v2785
      %v4006 = vpack.c.b16 %v2794, %v2790
      %v4007 = vpack.c.b16 %v2795, %v2791
      %v4008 = vpack.c.b16 %v2796, %v2792
      %v4009 = vpack.c.b16 %v2797, %v2793
      %v4010 = vpack.c.b16 %v2802, %v2798
      %v4011 = vpack.c.b16 %v2803, %v2799
      %v4012 = vpack.c.b16 %v2804, %v2800
      %v4013 = vpack.c.b16 %v2805, %v2801
      %v4014 = vpack.c.b16 %v2810, %v2806
      %v4015 = vpack.c.b16 %v2811, %v2807
      %v4016 = vpack.c.b16 %v2812, %v2808
      %v4017 = vpack.c.b16 %v2813, %v2809
      %v4018 = vpack.c.b16 %v2818, %v2814
      %v4019 = vpack.c.b16 %v2819, %v2815
      %v4020 = vpack.c.b16 %v2820, %v2816
      %v4021 = vpack.c.b16 %v2821, %v2817
      %v4022 = vpack.c.b16 %v2826, %v2822
      %v4023 = vpack.c.b16 %v2827, %v2823
      %v4024 = vpack.c.b16 %v2828, %v2824
      %v4025 = vpack.c.b16 %v2829, %v2825
      %v4026 = vpack.c.b16 %v2834, %v2830
      %v4027 = vpack.c.b16 %v2835, %v2831
      %v4028 = vpack.c.b16 %v2836, %v2832
      %v4029 = vpack.c.b16 %v2837, %v2833
      %v4030 = vpack.c.b16 %v2842, %v2838
      %v4031 = vpack.c.b16 %v2843, %v2839
      %v4032 = vpack.c.b16 %v2844, %v2840
      %v4033 = vpack.c.b16 %v2845, %v2841
      %v4034 = vpack.c.b16 %v2850, %v2846
      %v4035 = vpack.c.b16 %v2851, %v2847
      %v4036 = vpack.c.b16 %v2852, %v2848
      %v4037 = vpack.c.b16 %v2853, %v2849
      %v4038 = vpack.c.b16 %v2858, %v2854
      %v4039 = vpack.c.b16 %v2859, %v2855
      %v4040 = vpack.c.b16 %v2860, %v2856
      %v4041 = vpack.c.b16 %v2861, %v2857
      %v4042 = vpack.c.b16 %v2866, %v2862
      %v4043 = vpack.c.b16 %v2867, %v2863
      %v4044 = vpack.c.b16 %v2868, %v2864
      %v4045 = vpack.c.b16 %v2869, %v2865
      %v4046 = vpack.c.b16 %v2874, %v2870
      %v4047 = vpack.c.b16 %v2875, %v2871
      %v4048 = vpack.c.b16 %v2876, %v2872
      %v4049 = vpack.c.b16 %v2877, %v2873
      %v4050 = vpack.c.b16 %v2882, %v2878
      %v4051 = vpack.c.b16 %v2883, %v2879
      %v4052 = vpack.c.b16 %v2884, %v2880
      %v4053 = vpack.c.b16 %v2885, %v2881
      %v4054 = vpack.c.b16 %v2890, %v2886
      %v4055 = vpack.c.b16 %v2891, %v2887
      %v4056 = vpack.c.b16 %v2892, %v2888
      %v4057 = vpack.c.b16 %v2893, %v2889
      %v4058 = vpack.c.b16 %v2898, %v2894
      %v4059 = vpack.c.b16 %v2899, %v2895
      %v4060 = vpack.c.b16 %v2900, %v2896
      %v4061 = vpack.c.b16 %v2901, %v2897
      %v4062 = vpack.c.b16 %v2906, %v2902
      %v4063 = vpack.c.b16 %v2907, %v2903
      %v4064 = vpack.c.b16 %v2908, %v2904
      %v4065 = vpack.c.b16 %v2909, %v2905
      %v4066 = vpack.c.b16 %v2914, %v2910
      %v4067 = vpack.c.b16 %v2915, %v2911
      %v4068 = vpack.c.b16 %v2916, %v2912
      %v4069 = vpack.c.b16 %v2917, %v2913
      %v4070 = vpack.c.b16 %v2922, %v2918
      %v4071 = vpack.c.b16 %v2923, %v2919
      %v4072 = vpack.c.b16 %v2924, %v2920
      %v4073 = vpack.c.b16 %v2925, %v2921
      %v4074 = vpack.c.b16 %v2930, %v2926
      %v4075 = vpack.c.b16 %v2931, %v2927
      %v4076 = vpack.c.b16 %v2932, %v2928
      %v4077 = vpack.c.b16 %v2933, %v2929
      %v4078 = vpack.c.b16 %v2938, %v2934
      %v4079 = vpack.c.b16 %v2939, %v2935
      %v4080 = vpack.c.b16 %v2940, %v2936
      %v4081 = vpack.c.b16 %v2941, %v2937
      %v4082 = vpack.c.b16 %v2946, %v2942
      %v4083 = vpack.c.b16 %v2947, %v2943
      %v4084 = vpack.c.b16 %v2948, %v2944
      %v4085 = vpack.c.b16 %v2949, %v2945
      %v4086 = vpack.c.b16 %v2954, %v2950
      %v4087 = vpack.c.b16 %v2955, %v2951
      %v4088 = vpack.c.b16 %v2956, %v2952
      %v4089 = vpack.c.b16 %v2957, %v2953
      %v4090 = vpack.c.b16 %v2962, %v2958
      %v4091 = vpack.c.b16 %v2963, %v2959
      %v4092 = vpack.c.b16 %v2964, %v2960
      %v4093 = vpack.c.b16 %v2965, %v2961
      %v4094 = vpack.c.b16 %v2970, %v2966
      %v4095 = vpack.c.b16 %v2971, %v2967
      %v4096 = vpack.c.b16 %v2972, %v2968
      %v4097 = vpack.c.b16 %v2973, %v2969
      %v4098 = vpack.c.b16 %v2978, %v2974
      %v4099 = vpack.c.b16 %v2979, %v2975
      %v4100 = vpack.c.b16 %v2980, %v2976
      %v4101 = vpack.c.b16 %v2981, %v2977
      %v4102 = vpack.c.b16 %v2986, %v2982
      %v4103 = vpack.c.b16 %v2987, %v2983
      %v4104 = vpack.c.b16 %v2988, %v2984
      %v4105 = vpack.c.b16 %v2989, %v2985
      %v4106 = vpack.c.b16 %v2994, %v2990
      %v4107 = vpack.c.b16 %v2995, %v2991
      %v4108 = vpack.c.b16 %v2996, %v2992
      %v4109 = vpack.c.b16 %v2997, %v2993
      %v4110 = vpack.c.b16 %v3002, %v2998
      %v4111 = vpack.c.b16 %v3003, %v2999
      %v4112 = vpack.c.b16 %v3004, %v3000
      %v4113 = vpack.c.b16 %v3005, %v3001
      %v4114 = vpack.c.b16 %v3010, %v3006
      %v4115 = vpack.c.b16 %v3011, %v3007
      %v4116 = vpack.c.b16 %v3012, %v3008
      %v4117 = vpack.c.b16 %v3013, %v3009
      %v4118 = vpack.c.b16 %v3018, %v3014
      %v4119 = vpack.c.b16 %v3019, %v3015
      %v4120 = vpack.c.b16 %v3020, %v3016
      %v4121 = vpack.c.b16 %v3021, %v3017
      %v4122 = vpack.c.b16 %v3026, %v3022
      %v4123 = vpack.c.b16 %v3027, %v3023
      %v4124 = vpack.c.b16 %v3028, %v3024
      %v4125 = vpack.c.b16 %v3029, %v3025
      %v4126 = vpack.c.b16 %v3034, %v3030
      %v4127 = vpack.c.b16 %v3035, %v3031
      %v4128 = vpack.c.b16 %v3036, %v3032
      %v4129 = vpack.c.b16 %v3037, %v3033
      %v4130 = vpack.c.b16 %v3042, %v3038
      %v4131 = vpack.c.b16 %v3043, %v3039
      %v4132 = vpack.c.b16 %v3044, %v3040
      %v4133 = vpack.c.b16 %v3045, %v3041
      %v4134 = vpack.c.b16 %v3050, %v3046
      %v4135 = vpack.c.b16 %v3051, %v3047
      %v4136 = vpack.c.b16 %v3052, %v3048
      %v4137 = vpack.c.b16 %v3053, %v3049
      %v4138 = vpack.c.b16 %v3058, %v3054
      %v4139 = vpack.c.b16 %v3059, %v3055
      %v4140 = vpack.c.b16 %v3060, %v3056
      %v4141 = vpack.c.b16 %v3061, %v3057
      %v4142 = vpack.c.b16 %v3066, %v3062
      %v4143 = vpack.c.b16 %v3067, %v3063
      %v4144 = vpack.c.b16 %v3068, %v3064
      %v4145 = vpack.c.b16 %v3069, %v3065
      %v4146 = vpack.c.b16 %v3074, %v3070
      %v4147 = vpack.c.b16 %v3075, %v3071
      %v4148 = vpack.c.b16 %v3076, %v3072
      %v4149 = vpack.c.b16 %v3077, %v3073
      %v4150 = vpack.c.b16 %v3082, %v3078
      %v4151 = vpack.c.b16 %v3083, %v3079
      %v4152 = vpack.c.b16 %v3084, %v3080
      %v4153 = vpack.c.b16 %v3085, %v3081
      %v4154 = vpack.c.b16 %v3090, %v3086
      %v4155 = vpack.c.b16 %v3091, %v3087
      %v4156 = vpack.c.b16 %v3092, %v3088
      %v4157 = vpack.c.b16 %v3093, %v3089
      %v4158 = vpack.c.b16 %v3098, %v3094
      %v4159 = vpack.c.b16 %v3099, %v3095
      %v4160 = vpack.c.b16 %v3100, %v3096
      %v4161 = vpack.c.b16 %v3101, %v3097
      %v4162 = vpack.c.b16 %v3106, %v3102
      %v4163 = vpack.c.b16 %v3107, %v3103
      %v4164 = vpack.c.b16 %v3108, %v3104
      %v4165 = vpack.c.b16 %v3109, %v3105
      %v4166 = vpack.c.b16 %v3114, %v3110
      %v4167 = vpack.c.b16 %v3115, %v3111
      %v4168 = vpack.c.b16 %v3116, %v3112
      %v4169 = vpack.c.b16 %v3117, %v3113
      %v4170 = vpack.c.b16 %v3122, %v3118
      %v4171 = vpack.c.b16 %v3123, %v3119
      %v4172 = vpack.c.b16 %v3124, %v3120
      %v4173 = vpack.c.b16 %v3125, %v3121
      %v4174 = vpack.c.b16 %v3130, %v3126
      %v4175 = vpack.c.b16 %v3131, %v3127
      %v4176 = vpack.c.b16 %v3132, %v3128
      %v4177 = vpack.c.b16 %v3133, %v3129
      %v4178 = vpack.c.b16 %v3138, %v3134
      %v4179 = vpack.c.b16 %v3139, %v3135
      %v4180 = vpack.c.b16 %v3140, %v3136
      %v4181 = vpack.c.b16 %v3141, %v3137
      %v4182 = vpack.c.b16 %v3146, %v3142
      %v4183 = vpack.c.b16 %v3147, %v3143
      %v4184 = vpack.c.b16 %v3148, %v3144
      %v4185 = vpack.c.b16 %v3149, %v3145
      %v4186 = vpack.c.b16 %v3154, %v3150
      %v4187 = vpack.c.b16 %v3155, %v3151
      %v4188 = vpack.c.b16 %v3156, %v3152
      %v4189 = vpack.c.b16 %v3157, %v3153
      %v4190 = vpack.c.b16 %v3162, %v3158
      %v4191 = vpack.c.b16 %v3163, %v3159
      %v4192 = vpack.c.b16 %v3164, %v3160
      %v4193 = vpack.c.b16 %v3165, %v3161
      %v4194 = vpack.c.b16 %v3170, %v3166
      %v4195 = vpack.c.b16 %v3171, %v3167
      %v4196 = vpack.c.b16 %v3172, %v3168
      %v4197 = vpack.c.b16 %v3173, %v3169
      %v4198 = vpack.c.b16 %v3178, %v3174
      %v4199 = vpack.c.b16 %v3179, %v3175
      %v4200 = vpack.c.b16 %v3180, %v3176
      %v4201 = vpack.c.b16 %v3181, %v3177
      %v4202 = vpack.c.b16 %v3186, %v3182
      %v4203 = vpack.c.b16 %v3187, %v3183
      %v4204 = vpack.c.b16 %v3188, %v3184
      %v4205 = vpack.c.b16 %v3189, %v3185
      %v4206 = vpack.c.b16 %v3194, %v3190
      %v4207 = vpack.c.b16 %v3195, %v3191
      %v4208 = vpack.c.b16 %v3196, %v3192
      %v4209 = vpack.c.b16 %v3197, %v3193
      %v4210 = vpack.c.b16 %v3202, %v3198
      %v4211 = vpack.c.b16 %v3203, %v3199
      %v4212 = vpack.c.b16 %v3204, %v3200
      %v4213 = vpack.c.b16 %v3205, %v3201
      %v4214 = vpack.c.b16 %v3210, %v3206
      %v4215 = vpack.c.b16 %v3211, %v3207
      %v4216 = vpack.c.b16 %v3212, %v3208
      %v4217 = vpack.c.b16 %v3213, %v3209
      %v4218 = vpack.c.b16 %v3218, %v3214
      %v4219 = vpack.c.b16 %v3219, %v3215
      %v4220 = vpack.c.b16 %v3220, %v3216
      %v4221 = vpack.c.b16 %v3221, %v3217
      %v4222 = vpack.c.b16 %v3226, %v3222
      %v4223 = vpack.c.b16 %v3227, %v3223
      %v4224 = vpack.c.b16 %v3228, %v3224
      %v4225 = vpack.c.b16 %v3229, %v3225
      %v4226 = vpack.c.b16 %v3234, %v3230
      %v4227 = vpack.c.b16 %v3235, %v3231
      %v4228 = vpack.c.b16 %v3236, %v3232
      %v4229 = vpack.c.b16 %v3237, %v3233
      %v4230 = vpack.c.b16 %v3242, %v3238
      %v4231 = vpack.c.b16 %v3243, %v3239
      %v4232 = vpack.c.b16 %v3244, %v3240
      %v4233 = vpack.c.b16 %v3245, %v3241
      %v4234 = vpack.c.b16 %v3250, %v3246
      %v4235 = vpack.c.b16 %v3251, %v3247
      %v4236 = vpack.c.b16 %v3252, %v3248
      %v4237 = vpack.c.b16 %v3253, %v3249
      %v4238 = vpack.c.b16 %v3258, %v3254
      %v4239 = vpack.c.b16 %v3259, %v3255
      %v4240 = vpack.c.b16 %v3260, %v3256
      %v4241 = vpack.c.b16 %v3261, %v3257
      %v4242 = vpack.c.b16 %v3266, %v3262
      %v4243 = vpack.c.b16 %v3267, %v3263
      %v4244 = vpack.c.b16 %v3268, %v3264
      %v4245 = vpack.c.b16 %v3269, %v3265
      %v4246 = vpack.c.b16 %v3274, %v3270
      %v4247 = vpack.c.b16 %v3275, %v3271
      %v4248 = vpack.c.b16 %v3276, %v3272
      %v4249 = vpack.c.b16 %v3277, %v3273
      %v4250 = vpack.c.b16 %v3282, %v3278
      %v4251 = vpack.c.b16 %v3283, %v3279
      %v4252 = vpack.c.b16 %v3284, %v3280
      %v4253 = vpack.c.b16 %v3285, %v3281
      %v4254 = vpack.c.b16 %v3290, %v3286
      %v4255 = vpack.c.b16 %v3291, %v3287
      %v4256 = vpack.c.b16 %v3292, %v3288
      %v4257 = vpack.c.b16 %v3293, %v3289
      %v4258 = vpack.c.b16 %v3298, %v3294
      %v4259 = vpack.c.b16 %v3299, %v3295
      %v4260 = vpack.c.b16 %v3300, %v3296
      %v4261 = vpack.c.b16 %v3301, %v3297
      %v4262 = vpack.c.b16 %v3306, %v3302
      %v4263 = vpack.c.b16 %v3307, %v3303
      %v4264 = vpack.c.b16 %v3308, %v3304
      %v4265 = vpack.c.b16 %v3309, %v3305
      %v4266 = vpack.c.b16 %v3314, %v3310
      %v4267 = vpack.c.b16 %v3315, %v3311
      %v4268 = vpack.c.b16 %v3316, %v3312
      %v4269 = vpack.c.b16 %v3317, %v3313
      %v4270 = vpack.c.b16 %v3322, %v3318
      %v4271 = vpack.c.b16 %v3323, %v3319
      %v4272 = vpack.c.b16 %v3324, %v3320
      %v4273 = vpack.c.b16 %v3325, %v3321
      %v4274 = vpack.c.b16 %v3330, %v3326
      %v4275 = vpack.c.b16 %v3331, %v3327
      %v4276 = vpack.c.b16 %v3332, %v3328
      %v4277 = vpack.c.b16 %v3333, %v3329
      %v4278 = vpack.c.b16 %v3338, %v3334
      %v4279 = vpack.c.b16 %v3339, %v3335
      %v4280 = vpack.c.b16 %v3340, %v3336
      %v4281 = vpack.c.b16 %v3341, %v3337
      %v4282 = vpack.c.b16 %v3346, %v3342
      %v4283 = vpack.c.b16 %v3347, %v3343
      %v4284 = vpack.c.b16 %v3348, %v3344
      %v4285 = vpack.c.b16 %v3349, %v3345
      %v4286 = vpack.c.b16 %v3354, %v3350
      %v4287 = vpack.c.b16 %v3355, %v3351
      %v4288 = vpack.c.b16 %v3356, %v3352
      %v4289 = vpack.c.b16 %v3357, %v3353
      %v4290 = vpack.c.b16 %v3362, %v3358
      %v4291 = vpack.c.b16 %v3363, %v3359
      %v4292 = vpack.c.b16 %v3364, %v3360
      %v4293 = vpack.c.b16 %v3365, %v3361
      %v4294 = vpack.c.b16 %v3370, %v3366
      %v4295 = vpack.c.b16 %v3371, %v3367
      %v4296 = vpack.c.b16 %v3372, %v3368
      %v4297 = vpack.c.b16 %v3373, %v3369
      %v4298 = vpack.c.b16 %v3378, %v3374
      %v4299 = vpack.c.b16 %v3379, %v3375
      %v4300 = vpack.c.b16 %v3380, %v3376
      %v4301 = vpack.c.b16 %v3381, %v3377
      %v4302 = vpack.c.b16 %v3386, %v3382
      %v4303 = vpack.c.b16 %v3387, %v3383
      %v4304 = vpack.c.b16 %v3388, %v3384
      %v4305 = vpack.c.b16 %v3389, %v3385
      %v4306 = vpack.c.b16 %v3394, %v3390
      %v4307 = vpack.c.b16 %v3395, %v3391
      %v4308 = vpack.c.b16 %v3396, %v3392
      %v4309 = vpack.c.b16 %v3397, %v3393
      %v4310 = vpack.c.b16 %v3402, %v3398
      %v4311 = vpack.c.b16 %v3403, %v3399
      %v4312 = vpack.c.b16 %v3404, %v3400
      %v4313 = vpack.c.b16 %v3405, %v3401
      %v4314 = vpack.c.b16 %v3410, %v3406
      %v4315 = vpack.c.b16 %v3411, %v3407
      %v4316 = vpack.c.b16 %v3412, %v3408
      %v4317 = vpack.c.b16 %v3413, %v3409
      %v4318 = vpack.c.b16 %v3418, %v3414
      %v4319 = vpack.c.b16 %v3419, %v3415
      %v4320 = vpack.c.b16 %v3420, %v3416
      %v4321 = vpack.c.b16 %v3421, %v3417
      %v4322 = vpack.c.b16 %v3426, %v3422
      %v4323 = vpack.c.b16 %v3427, %v3423
      %v4324 = vpack.c.b16 %v3428, %v3424
      %v4325 = vpack.c.b16 %v3429, %v3425
      %v4326 = vpack.c.b16 %v3434, %v3430
      %v4327 = vpack.c.b16 %v3435, %v3431
      %v4328 = vpack.c.b16 %v3436, %v3432
      %v4329 = vpack.c.b16 %v3437, %v3433
      %v4330 = vpack.c.b16 %v3442, %v3438
      %v4331 = vpack.c.b16 %v3443, %v3439
      %v4332 = vpack.c.b16 %v3444, %v3440
      %v4333 = vpack.c.b16 %v3445, %v3441
      %v4334 = vpack.c.b16 %v3450, %v3446
      %v4335 = vpack.c.b16 %v3451, %v3447
      %v4336 = vpack.c.b16 %v3452, %v3448
      %v4337 = vpack.c.b16 %v3453, %v3449
      %v4338 = vpack.c.b16 %v3458, %v3454
      %v4339 = vpack.c.b16 %v3459, %v3455
      %v4340 = vpack.c.b16 %v3460, %v3456
      %v4341 = vpack.c.b16 %v3461, %v3457
      %v4342 = vpack.c.b16 %v3466, %v3462
      %v4343 = vpack.c.b16 %v3467, %v3463
      %v4344 = vpack.c.b16 %v3468, %v3464
      %v4345 = vpack.c.b16 %v3469, %v3465
      %v4346 = vpack.c.b16 %v3474, %v3470
      %v4347 = vpack.c.b16 %v3475, %v3471
      %v4348 = vpack.c.b16 %v3476, %v3472
      %v4349 = vpack.c.b16 %v3477, %v3473
      %v4350 = vpack.c.b16 %v3482, %v3478
      %v4351 = vpack.c.b16 %v3483, %v3479
      %v4352 = vpack.c.b16 %v3484, %v3480
      %v4353 = vpack.c.b16 %v3485, %v3481
      %v4354 = vpack.c.b16 %v3490, %v3486
      %v4355 = vpack.c.b16 %v3491, %v3487
      %v4356 = vpack.c.b16 %v3492, %v3488
      %v4357 = vpack.c.b16 %v3493, %v3489
      %v4358 = vpack.c.b16 %v3498, %v3494
      %v4359 = vpack.c.b16 %v3499, %v3495
      %v4360 = vpack.c.b16 %v3500, %v3496
      %v4361 = vpack.c.b16 %v3501, %v3497
      %v4362 = vpack.c.b16 %v3506, %v3502
      %v4363 = vpack.c.b16 %v3507, %v3503
      %v4364 = vpack.c.b16 %v3508, %v3504
      %v4365 = vpack.c.b16 %v3509, %v3505
      %v4366 = vpack.c.b16 %v3514, %v3510
      %v4367 = vpack.c.b16 %v3515, %v3511
      %v4368 = vpack.c.b16 %v3516, %v3512
      %v4369 = vpack.c.b16 %v3517, %v3513
      %v4370 = vpack.c.b16 %v3522, %v3518
      %v4371 = vpack.c.b16 %v3523, %v3519
      %v4372 = vpack.c.b16 %v3524, %v3520
      %v4373 = vpack.c.b16 %v3525, %v3521
      %v4374 = vpack.c.b16 %v3530, %v3526
      %v4375 = vpack.c.b16 %v3531, %v3527
      %v4376 = vpack.c.b16 %v3532, %v3528
      %v4377 = vpack.c.b16 %v3533, %v3529
      %v4378 = vpack.c.b16 %v3538, %v3534
      %v4379 = vpack.c.b16 %v3539, %v3535
      %v4380 = vpack.c.b16 %v3540, %v3536
      %v4381 = vpack.c.b16 %v3541, %v3537
      %v4382 = vpack.c.b16 %v3546, %v3542
      %v4383 = vpack.c.b16 %v3547, %v3543
      %v4384 = vpack.c.b16 %v3548, %v3544
      %v4385 = vpack.c.b16 %v3549, %v3545
      %v4386 = vpack.c.b16 %v3554, %v3550
      %v4387 = vpack.c.b16 %v3555, %v3551
      %v4388 = vpack.c.b16 %v3556, %v3552
      %v4389 = vpack.c.b16 %v3557, %v3553
      %v4390 = vpack.c.b16 %v3562, %v3558
      %v4391 = vpack.c.b16 %v3563, %v3559
      %v4392 = vpack.c.b16 %v3564, %v3560
      %v4393 = vpack.c.b16 %v3565, %v3561
      %v4394 = vpack.c.b16 %v3570, %v3566
      %v4395 = vpack.c.b16 %v3571, %v3567
      %v4396 = vpack.c.b16 %v3572, %v3568
      %v4397 = vpack.c.b16 %v3573, %v3569
      %v4398 = vpack.c.b16 %v3578, %v3574
      %v4399 = vpack.c.b16 %v3579, %v3575
      %v4400 = vpack.c.b16 %v3580, %v3576
      %v4401 = vpack.c.b16 %v3581, %v3577
      %v4402 = vpack.c.b16 %v3586, %v3582
      %v4403 = vpack.c.b16 %v3587, %v3583
      %v4404 = vpack.c.b16 %v3588, %v3584
      %v4405 = vpack.c.b16 %v3589, %v3585
      %v4406 = vpack.c.b16 %v3594, %v3590
      %v4407 = vpack.c.b16 %v3595, %v3591
      %v4408 = vpack.c.b16 %v3596, %v3592
      %v4409 = vpack.c.b16 %v3597, %v3593
      %v4410 = vpack.c.b16 %v3602, %v3598
      %v4411 = vpack.c.b16 %v3603, %v3599
      %v4412 = vpack.c.b16 %v3604, %v3600
      %v4413 = vpack.c.b16 %v3605, %v3601
      %v4414 = vpack.c.b16 %v3610, %v3606
      %v4415 = vpack.c.b16 %v3611, %v3607
      %v4416 = vpack.c.b16 %v3612, %v3608
      %v4417 = vpack.c.b16 %v3613, %v3609
      %v4418 = vpack.c.b16 %v3618, %v3614
      %v4419 = vpack.c.b16 %v3619, %v3615
      %v4420 = vpack.c.b16 %v3620, %v3616
      %v4421 = vpack.c.b16 %v3621, %v3617
      %5222 = vmatprep.subr.bf16.mxu0 %v3623
      %5223 = vmatpush1.bf16.msra.mxu0 %v3622
      %5224 = vmatprep.subr.bf16.mxu0 %v3627
      %5225 = vmatpush1.bf16.msra.mxu0 %v3626
      %5226 = vmatprep.subr.bf16.mxu0 %v3631
      %5227 = vmatpush1.bf16.msra.mxu0 %v3630
      %5228 = vmatprep.subr.bf16.mxu0 %v3635
      %5229 = vmatpush1.bf16.msra.mxu0 %v3634
      %5230 = vmatprep.subr.bf16.mxu0 %v3639
      %5231 = vmatpush1.bf16.msra.mxu0 %v3638
      %5232 = vmatprep.subr.bf16.mxu0 %v3643
      %5233 = vmatpush1.bf16.msra.mxu0 %v3642
      %5234 = vmatprep.subr.bf16.mxu0 %v3647
      %5235 = vmatpush1.bf16.msra.mxu0 %v3646
      %5236 = vmatprep.subr.bf16.mxu0 %v3651
      %5237 = vmatpush1.bf16.msra.mxu0 %v3650
      %5238 = vmatprep.subr.bf16.mxu0 %v3655
      %5239 = vmatpush1.bf16.msra.mxu0 %v3654
      %5240 = vmatprep.subr.bf16.mxu0 %v3659
      %5241 = vmatpush1.bf16.msra.mxu0 %v3658
      %5242 = vmatprep.subr.bf16.mxu0 %v3663
      %5243 = vmatpush1.bf16.msra.mxu0 %v3662
      %5244 = vmatprep.subr.bf16.mxu0 %v3667
      %5245 = vmatpush1.bf16.msra.mxu0 %v3666
      %5246 = vmatprep.subr.bf16.mxu0 %v3671
      %5247 = vmatpush1.bf16.msra.mxu0 %v3670
      %5248 = vmatprep.subr.bf16.mxu0 %v3675
      %5249 = vmatpush1.bf16.msra.mxu0 %v3674
      %5250 = vmatprep.subr.bf16.mxu0 %v3679
      %5251 = vmatpush1.bf16.msra.mxu0 %v3678
      %5252 = vmatprep.subr.bf16.mxu0 %v3683
      %5253 = vmatpush1.bf16.msra.mxu0 %v3682
      %5254 = vmatprep.mubr.bf16.mxu0 %v1073
      %5255 = vmatmul.mubr.bf16.gmra.mrb[0].mxu0 %v1059
      %v5256 = vpop.f32.mrb[0].mxu0
      %v5257 = vadd.f32 0.0, %v5256
      %v5258 = vpop.f32.mrb[0].mxu0
      %v5259 = vadd.f32 0.0, %v5258
      %v5260 = vpop.f32.mrb[0].mxu0
      %v5261 = vpop.f32.mrb[0].mxu0
      %5262 = vdwg.mxu0
      %5263 = vmatprep.subr.bf16.mxu0 %v3687
      %5264 = vmatpush1.bf16.msra.mxu0 %v3686
      %5265 = vmatprep.subr.bf16.mxu0 %v3691
      %5266 = vmatpush1.bf16.msra.mxu0 %v3690
      %5267 = vmatprep.subr.bf16.mxu0 %v3695
      %5268 = vmatpush1.bf16.msra.mxu0 %v3694
      %5269 = vmatprep.subr.bf16.mxu0 %v3699
      %5270 = vmatpush1.bf16.msra.mxu0 %v3698
      %5271 = vmatprep.subr.bf16.mxu0 %v3703
      %5272 = vmatpush1.bf16.msra.mxu0 %v3702
      %5273 = vmatprep.subr.bf16.mxu0 %v3707
      %5274 = vmatpush1.bf16.msra.mxu0 %v3706
      %5275 = vmatprep.subr.bf16.mxu0 %v3711
      %5276 = vmatpush1.bf16.msra.mxu0 %v3710
      %5277 = vmatprep.subr.bf16.mxu0 %v3715
      %5278 = vmatpush1.bf16.msra.mxu0 %v3714
      %5279 = vmatprep.subr.bf16.mxu0 %v3719
      %5280 = vmatpush1.bf16.msra.mxu0 %v3718
      %5281 = vmatprep.subr.bf16.mxu0 %v3723
      %5282 = vmatpush1.bf16.msra.mxu0 %v3722
      %5283 = vmatprep.subr.bf16.mxu0 %v3727
      %5284 = vmatpush1.bf16.msra.mxu0 %v3726
      %5285 = vmatprep.subr.bf16.mxu0 %v3731
      %5286 = vmatpush1.bf16.msra.mxu0 %v3730
      %5287 = vmatprep.subr.bf16.mxu0 %v3735
      %5288 = vmatpush1.bf16.msra.mxu0 %v3734
      %5289 = vmatprep.subr.bf16.mxu0 %v3739
      %5290 = vmatpush1.bf16.msra.mxu0 %v3738
      %5291 = vmatprep.subr.bf16.mxu0 %v3743
      %5292 = vmatpush1.bf16.msra.mxu0 %v3742
      %5293 = vmatprep.subr.bf16.mxu0 %v3747
      %5294 = vmatpush1.bf16.msra.mxu0 %v3746
      %5295 = vmatprep.mubr.bf16.mxu0 %v1083
      %5296 = vmatmul.mubr.bf16.gmra.mrb[0].mxu0 %v1081
      %v5297 = vpop.f32.mrb[0].mxu0
      %v5298 = vadd.f32 %v5257, %v5297
      %v5299 = vpop.f32.mrb[0].mxu0
      %v5300 = vadd.f32 %v5259, %v5299
      %v5301 = vpop.f32.mrb[0].mxu0
      %v5302 = vpop.f32.mrb[0].mxu0
      %5303 = vdwg.mxu0
      %5304 = vmatprep.subr.bf16.mxu0 %v3751
      %5305 = vmatpush1.bf16.msra.mxu0 %v3750
      %5306 = vmatprep.subr.bf16.mxu0 %v3755
      %5307 = vmatpush1.bf16.msra.mxu0 %v3754
      %5308 = vmatprep.subr.bf16.mxu0 %v3759
      %5309 = vmatpush1.bf16.msra.mxu0 %v3758
      %5310 = vmatprep.subr.bf16.mxu0 %v3763
      %5311 = vmatpush1.bf16.msra.mxu0 %v3762
      %5312 = vmatprep.subr.bf16.mxu0 %v3767
      %5313 = vmatpush1.bf16.msra.mxu0 %v3766
      %5314 = vmatprep.subr.bf16.mxu0 %v3771
      %5315 = vmatpush1.bf16.msra.mxu0 %v3770
      %5316 = vmatprep.subr.bf16.mxu0 %v3775
      %5317 = vmatpush1.bf16.msra.mxu0 %v3774
      %5318 = vmatprep.subr.bf16.mxu0 %v3779
      %5319 = vmatpush1.bf16.msra.mxu0 %v3778
      %5320 = vmatprep.subr.bf16.mxu0 %v3783
      %5321 = vmatpush1.bf16.msra.mxu0 %v3782
      %5322 = vmatprep.subr.bf16.mxu0 %v3787
      %5323 = vmatpush1.bf16.msra.mxu0 %v3786
      %5324 = vmatprep.subr.bf16.mxu0 %v3791
      %5325 = vmatpush1.bf16.msra.mxu0 %v3790
      %5326 = vmatprep.subr.bf16.mxu0 %v3795
      %5327 = vmatpush1.bf16.msra.mxu0 %v3794
      %5328 = vmatprep.subr.bf16.mxu0 %v3799
      %5329 = vmatpush1.bf16.msra.mxu0 %v3798
      %5330 = vmatprep.subr.bf16.mxu0 %v3803
      %5331 = vmatpush1.bf16.msra.mxu0 %v3802
      %5332 = vmatprep.subr.bf16.mxu0 %v3807
      %5333 = vmatpush1.bf16.msra.mxu0 %v3806
      %5334 = vmatprep.subr.bf16.mxu0 %v3811
      %5335 = vmatpush1.bf16.msra.mxu0 %v3810
      %5336 = vmatprep.mubr.bf16.mxu0 %v1080
      %5337 = vmatmul.mubr.bf16.gmra.mrb[0].mxu0 %v1066
      %v5338 = vpop.f32.mrb[0].mxu0
      %v5339 = vadd.f32 %v5298, %v5338
      %v5340 = vpop.f32.mrb[0].mxu0
      %v5341 = vadd.f32 %v5300, %v5340
      %v5342 = vpop.f32.mrb[0].mxu0
      %v5343 = vpop.f32.mrb[0].mxu0
      %5344 = vdwg.mxu0
      %5345 = vmatprep.subr.bf16.mxu0 %v3815
      %5346 = vmatpush1.bf16.msra.mxu0 %v3814
      %5347 = vmatprep.subr.bf16.mxu0 %v3819
      %5348 = vmatpush1.bf16.msra.mxu0 %v3818
      %5349 = vmatprep.subr.bf16.mxu0 %v3823
      %5350 = vmatpush1.bf16.msra.mxu0 %v3822
      %5351 = vmatprep.subr.bf16.mxu0 %v3827
      %5352 = vmatpush1.bf16.msra.mxu0 %v3826
      %5353 = vmatprep.subr.bf16.mxu0 %v3831
      %5354 = vmatpush1.bf16.msra.mxu0 %v3830
      %5355 = vmatprep.subr.bf16.mxu0 %v3835
      %5356 = vmatpush1.bf16.msra.mxu0 %v3834
      %5357 = vmatprep.subr.bf16.mxu0 %v3839
      %5358 = vmatpush1.bf16.msra.mxu0 %v3838
      %5359 = vmatprep.subr.bf16.mxu0 %v3843
      %5360 = vmatpush1.bf16.msra.mxu0 %v3842
      %5361 = vmatprep.subr.bf16.mxu0 %v3847
      %5362 = vmatpush1.bf16.msra.mxu0 %v3846
      %5363 = vmatprep.subr.bf16.mxu0 %v3851
      %5364 = vmatpush1.bf16.msra.mxu0 %v3850
      %5365 = vmatprep.subr.bf16.mxu0 %v3855
      %5366 = vmatpush1.bf16.msra.mxu0 %v3854
      %5367 = vmatprep.subr.bf16.mxu0 %v3859
      %5368 = vmatpush1.bf16.msra.mxu0 %v3858
      %5369 = vmatprep.subr.bf16.mxu0 %v3863
      %5370 = vmatpush1.bf16.msra.mxu0 %v3862
      %5371 = vmatprep.subr.bf16.mxu0 %v3867
      %5372 = vmatpush1.bf16.msra.mxu0 %v3866
      %5373 = vmatprep.subr.bf16.mxu0 %v3871
      %5374 = vmatpush1.bf16.msra.mxu0 %v3870
      %5375 = vmatprep.subr.bf16.mxu0 %v3875
      %5376 = vmatpush1.bf16.msra.mxu0 %v3874
      %5377 = vmatprep.mubr.bf16.mxu0 %v1084
      %5378 = vmatmul.mubr.bf16.gmra.mrb[0].mxu0 %v1082
      %v5379 = vpop.f32.mrb[0].mxu0
      %v5380 = vadd.f32 %v5339, %v5379
      %v5381 = vpop.f32.mrb[0].mxu0
      %v5382 = vadd.f32 %v5341, %v5381
      %v5383 = vpop.f32.mrb[0].mxu0
      %v5384 = vpop.f32.mrb[0].mxu0
      %5385 = vdwg.mxu0
      %5386 = vmatprep.subr.bf16.mxu0 %v3879
      %5387 = vmatpush1.bf16.msra.mxu0 %v3878
      %5388 = vmatprep.subr.bf16.mxu0 %v3883
      %5389 = vmatpush1.bf16.msra.mxu0 %v3882
      %5390 = vmatprep.subr.bf16.mxu0 %v3887
      %5391 = vmatpush1.bf16.msra.mxu0 %v3886
      %5392 = vmatprep.subr.bf16.mxu0 %v3891
      %5393 = vmatpush1.bf16.msra.mxu0 %v3890
      %5394 = vmatprep.subr.bf16.mxu0 %v3895
      %5395 = vmatpush1.bf16.msra.mxu0 %v3894
      %5396 = vmatprep.subr.bf16.mxu0 %v3899
      %5397 = vmatpush1.bf16.msra.mxu0 %v3898
      %5398 = vmatprep.subr.bf16.mxu0 %v3903
      %5399 = vmatpush1.bf16.msra.mxu0 %v3902
      %5400 = vmatprep.subr.bf16.mxu0 %v3907
      %5401 = vmatpush1.bf16.msra.mxu0 %v3906
      %5402 = vmatprep.subr.bf16.mxu0 %v3911
      %5403 = vmatpush1.bf16.msra.mxu0 %v3910
      %5404 = vmatprep.subr.bf16.mxu0 %v3915
      %5405 = vmatpush1.bf16.msra.mxu0 %v3914
      %5406 = vmatprep.subr.bf16.mxu0 %v3919
      %5407 = vmatpush1.bf16.msra.mxu0 %v3918
      %5408 = vmatprep.subr.bf16.mxu0 %v3923
      %5409 = vmatpush1.bf16.msra.mxu0 %v3922
      %5410 = vmatprep.subr.bf16.mxu0 %v3927
      %5411 = vmatpush1.bf16.msra.mxu0 %v3926
      %5412 = vmatprep.subr.bf16.mxu0 %v3931
      %5413 = vmatpush1.bf16.msra.mxu0 %v3930
      %5414 = vmatprep.subr.bf16.mxu0 %v3935
      %5415 = vmatpush1.bf16.msra.mxu0 %v3934
      %5416 = vmatprep.subr.bf16.mxu0 %v3939
      %5417 = vmatpush1.bf16.msra.mxu0 %v3938
      %5418 = vmatprep.mubr.bf16.mxu0 %v1122
      %5419 = vmatmul.mubr.bf16.gmra.mrb[0].mxu0 %v1108
      %v5420 = vpop.f32.mrb[0].mxu0
      %v5421 = vadd.f32 %v5380, %v5420
      %v5422 = vpop.f32.mrb[0].mxu0
      %v5423 = vadd.f32 %v5382, %v5422
      %v5424 = vpop.f32.mrb[0].mxu0
      %v5425 = vpop.f32.mrb[0].mxu0
      %5426 = vdwg.mxu0
      %5427 = vmatprep.subr.bf16.mxu0 %v3943
      %5428 = vmatpush1.bf16.msra.mxu0 %v3942
      %5429 = vmatprep.subr.bf16.mxu0 %v3947
      %5430 = vmatpush1.bf16.msra.mxu0 %v3946
      %5431 = vmatprep.subr.bf16.mxu0 %v3951
      %5432 = vmatpush1.bf16.msra.mxu0 %v3950
      %5433 = vmatprep.subr.bf16.mxu0 %v3955
      %5434 = vmatpush1.bf16.msra.mxu0 %v3954
      %5435 = vmatprep.subr.bf16.mxu0 %v3959
      %5436 = vmatpush1.bf16.msra.mxu0 %v3958
      %5437 = vmatprep.subr.bf16.mxu0 %v3963
      %5438 = vmatpush1.bf16.msra.mxu0 %v3962
      %5439 = vmatprep.subr.bf16.mxu0 %v3967
      %5440 = vmatpush1.bf16.msra.mxu0 %v3966
      %5441 = vmatprep.subr.bf16.mxu0 %v3971
      %5442 = vmatpush1.bf16.msra.mxu0 %v3970
      %5443 = vmatprep.subr.bf16.mxu0 %v3975
      %5444 = vmatpush1.bf16.msra.mxu0 %v3974
      %5445 = vmatprep.subr.bf16.mxu0 %v3979
      %5446 = vmatpush1.bf16.msra.mxu0 %v3978
      %5447 = vmatprep.subr.bf16.mxu0 %v3983
      %5448 = vmatpush1.bf16.msra.mxu0 %v3982
      %5449 = vmatprep.subr.bf16.mxu0 %v3987
      %5450 = vmatpush1.bf16.msra.mxu0 %v3986
      %5451 = vmatprep.subr.bf16.mxu0 %v3991
      %5452 = vmatpush1.bf16.msra.mxu0 %v3990
      %5453 = vmatprep.subr.bf16.mxu0 %v3995
      %5454 = vmatpush1.bf16.msra.mxu0 %v3994
      %5455 = vmatprep.subr.bf16.mxu0 %v3999
      %5456 = vmatpush1.bf16.msra.mxu0 %v3998
      %5457 = vmatprep.subr.bf16.mxu0 %v4003
      %5458 = vmatpush1.bf16.msra.mxu0 %v4002
      %5459 = vmatprep.mubr.bf16.mxu0 %v1132
      %5460 = vmatmul.mubr.bf16.gmra.mrb[0].mxu0 %v1130
      %v5461 = vpop.f32.mrb[0].mxu0
      %v5462 = vadd.f32 %v5421, %v5461
      %v5463 = vpop.f32.mrb[0].mxu0
      %v5464 = vadd.f32 %v5423, %v5463
      %v5465 = vpop.f32.mrb[0].mxu0
      %v5466 = vpop.f32.mrb[0].mxu0
      %5467 = vdwg.mxu0
      %5468 = vmatprep.subr.bf16.mxu0 %v4007
      %5469 = vmatpush1.bf16.msra.mxu0 %v4006
      %5470 = vmatprep.subr.bf16.mxu0 %v4011
      %5471 = vmatpush1.bf16.msra.mxu0 %v4010
      %5472 = vmatprep.subr.bf16.mxu0 %v4015
      %5473 = vmatpush1.bf16.msra.mxu0 %v4014
      %5474 = vmatprep.subr.bf16.mxu0 %v4019
      %5475 = vmatpush1.bf16.msra.mxu0 %v4018
      %5476 = vmatprep.subr.bf16.mxu0 %v4023
      %5477 = vmatpush1.bf16.msra.mxu0 %v4022
      %5478 = vmatprep.subr.bf16.mxu0 %v4027
      %5479 = vmatpush1.bf16.msra.mxu0 %v4026
      %5480 = vmatprep.subr.bf16.mxu0 %v4031
      %5481 = vmatpush1.bf16.msra.mxu0 %v4030
      %5482 = vmatprep.subr.bf16.mxu0 %v4035
      %5483 = vmatpush1.bf16.msra.mxu0 %v4034
      %5484 = vmatprep.subr.bf16.mxu0 %v4039
      %5485 = vmatpush1.bf16.msra.mxu0 %v4038
      %5486 = vmatprep.subr.bf16.mxu0 %v4043
      %5487 = vmatpush1.bf16.msra.mxu0 %v4042
      %5488 = vmatprep.subr.bf16.mxu0 %v4047
      %5489 = vmatpush1.bf16.msra.mxu0 %v4046
      %5490 = vmatprep.subr.bf16.mxu0 %v4051
      %5491 = vmatpush1.bf16.msra.mxu0 %v4050
      %5492 = vmatprep.subr.bf16.mxu0 %v4055
      %5493 = vmatpush1.bf16.msra.mxu0 %v4054
      %5494 = vmatprep.subr.bf16.mxu0 %v4059
      %5495 = vmatpush1.bf16.msra.mxu0 %v4058
      %5496 = vmatprep.subr.bf16.mxu0 %v4063
      %5497 = vmatpush1.bf16.msra.mxu0 %v4062
      %5498 = vmatprep.subr.bf16.mxu0 %v4067
      %5499 = vmatpush1.bf16.msra.mxu0 %v4066
      %5500 = vmatprep.mubr.bf16.mxu0 %v1129
      %5501 = vmatmul.mubr.bf16.gmra.mrb[0].mxu0 %v1115
      %v5502 = vpop.f32.mrb[0].mxu0
      %v5503 = vadd.f32 %v5462, %v5502
      %v5504 = vpop.f32.mrb[0].mxu0
      %v5505 = vadd.f32 %v5464, %v5504
      %v5506 = vpop.f32.mrb[0].mxu0
      %v5507 = vpop.f32.mrb[0].mxu0
      %5508 = vdwg.mxu0
      %5509 = vmatprep.subr.bf16.mxu0 %v4071
      %5510 = vmatpush1.bf16.msra.mxu0 %v4070
      %5511 = vmatprep.subr.bf16.mxu0 %v4075
      %5512 = vmatpush1.bf16.msra.mxu0 %v4074
      %5513 = vmatprep.subr.bf16.mxu0 %v4079
      %5514 = vmatpush1.bf16.msra.mxu0 %v4078
      %5515 = vmatprep.subr.bf16.mxu0 %v4083
      %5516 = vmatpush1.bf16.msra.mxu0 %v4082
      %5517 = vmatprep.subr.bf16.mxu0 %v4087
      %5518 = vmatpush1.bf16.msra.mxu0 %v4086
      %5519 = vmatprep.subr.bf16.mxu0 %v4091
      %5520 = vmatpush1.bf16.msra.mxu0 %v4090
      %5521 = vmatprep.subr.bf16.mxu0 %v4095
      %5522 = vmatpush1.bf16.msra.mxu0 %v4094
      %5523 = vmatprep.subr.bf16.mxu0 %v4099
      %5524 = vmatpush1.bf16.msra.mxu0 %v4098
      %5525 = vmatprep.subr.bf16.mxu0 %v4103
      %5526 = vmatpush1.bf16.msra.mxu0 %v4102
      %5527 = vmatprep.subr.bf16.mxu0 %v4107
      %5528 = vmatpush1.bf16.msra.mxu0 %v4106
      %5529 = vmatprep.subr.bf16.mxu0 %v4111
      %5530 = vmatpush1.bf16.msra.mxu0 %v4110
      %5531 = vmatprep.subr.bf16.mxu0 %v4115
      %5532 = vmatpush1.bf16.msra.mxu0 %v4114
      %5533 = vmatprep.subr.bf16.mxu0 %v4119
      %5534 = vmatpush1.bf16.msra.mxu0 %v4118
      %5535 = vmatprep.subr.bf16.mxu0 %v4123
      %5536 = vmatpush1.bf16.msra.mxu0 %v4122
      %5537 = vmatprep.subr.bf16.mxu0 %v4127
      %5538 = vmatpush1.bf16.msra.mxu0 %v4126
      %5539 = vmatprep.subr.bf16.mxu0 %v4131
      %5540 = vmatpush1.bf16.msra.mxu0 %v4130
      %5541 = vmatprep.mubr.bf16.mxu0 %v1133
      %5542 = vmatmul.mubr.bf16.gmra.mrb[0].mxu0 %v1131
      %v5543 = vpop.f32.mrb[0].mxu0
      %v5544 = vadd.f32 %v5503, %v5543
      %v5545 = vpop.f32.mrb[0].mxu0
      %v5546 = vadd.f32 %v5505, %v5545
      %v5547 = vpop.f32.mrb[0].mxu0
      %v5548 = vpop.f32.mrb[0].mxu0
      %5549 = vdwg.mxu0
      %5550 = vmatprep.subr.bf16.mxu0 %v4135
      %5551 = vmatpush1.bf16.msra.mxu0 %v4134
      %5552 = vmatprep.subr.bf16.mxu0 %v4139
      %5553 = vmatpush1.bf16.msra.mxu0 %v4138
      %5554 = vmatprep.subr.bf16.mxu0 %v4143
      %5555 = vmatpush1.bf16.msra.mxu0 %v4142
      %5556 = vmatprep.subr.bf16.mxu0 %v4147
      %5557 = vmatpush1.bf16.msra.mxu0 %v4146
      %5558 = vmatprep.subr.bf16.mxu0 %v4151
      %5559 = vmatpush1.bf16.msra.mxu0 %v4150
      %5560 = vmatprep.subr.bf16.mxu0 %v4155
      %5561 = vmatpush1.bf16.msra.mxu0 %v4154
      %5562 = vmatprep.subr.bf16.mxu0 %v4159
      %5563 = vmatpush1.bf16.msra.mxu0 %v4158
      %5564 = vmatprep.subr.bf16.mxu0 %v4163
      %5565 = vmatpush1.bf16.msra.mxu0 %v4162
      %5566 = vmatprep.subr.bf16.mxu0 %v4167
      %5567 = vmatpush1.bf16.msra.mxu0 %v4166
      %5568 = vmatprep.subr.bf16.mxu0 %v4171
      %5569 = vmatpush1.bf16.msra.mxu0 %v4170
      %5570 = vmatprep.subr.bf16.mxu0 %v4175
      %5571 = vmatpush1.bf16.msra.mxu0 %v4174
      %5572 = vmatprep.subr.bf16.mxu0 %v4179
      %5573 = vmatpush1.bf16.msra.mxu0 %v4178
      %5574 = vmatprep.subr.bf16.mxu0 %v4183
      %5575 = vmatpush1.bf16.msra.mxu0 %v4182
      %5576 = vmatprep.subr.bf16.mxu0 %v4187
      %5577 = vmatpush1.bf16.msra.mxu0 %v4186
      %5578 = vmatprep.subr.bf16.mxu0 %v4191
      %5579 = vmatpush1.bf16.msra.mxu0 %v4190
      %5580 = vmatprep.subr.bf16.mxu0 %v4195
      %5581 = vmatpush1.bf16.msra.mxu0 %v4194
      %5582 = vmatprep.mubr.bf16.mxu0 %v1171
      %5583 = vmatmul.mubr.bf16.gmra.mrb[0].mxu0 %v1157
      %v5584 = vpop.f32.mrb[0].mxu0
      %v5585 = vadd.f32 %v5544, %v5584
      %v5586 = vpop.f32.mrb[0].mxu0
      %v5587 = vadd.f32 %v5546, %v5586
      %v5588 = vpop.f32.mrb[0].mxu0
      %v5589 = vpop.f32.mrb[0].mxu0
      %5590 = vdwg.mxu0
      %5591 = vmatprep.subr.bf16.mxu0 %v4199
      %5592 = vmatpush1.bf16.msra.mxu0 %v4198
      %5593 = vmatprep.subr.bf16.mxu0 %v4203
      %5594 = vmatpush1.bf16.msra.mxu0 %v4202
      %5595 = vmatprep.subr.bf16.mxu0 %v4207
      %5596 = vmatpush1.bf16.msra.mxu0 %v4206
      %5597 = vmatprep.subr.bf16.mxu0 %v4211
      %5598 = vmatpush1.bf16.msra.mxu0 %v4210
      %5599 = vmatprep.subr.bf16.mxu0 %v4215
      %5600 = vmatpush1.bf16.msra.mxu0 %v4214
      %5601 = vmatprep.subr.bf16.mxu0 %v4219
      %5602 = vmatpush1.bf16.msra.mxu0 %v4218
      %5603 = vmatprep.subr.bf16.mxu0 %v4223
      %5604 = vmatpush1.bf16.msra.mxu0 %v4222
      %5605 = vmatprep.subr.bf16.mxu0 %v4227
      %5606 = vmatpush1.bf16.msra.mxu0 %v4226
      %5607 = vmatprep.subr.bf16.mxu0 %v4231
      %5608 = vmatpush1.bf16.msra.mxu0 %v4230
      %5609 = vmatprep.subr.bf16.mxu0 %v4235
      %5610 = vmatpush1.bf16.msra.mxu0 %v4234
      %5611 = vmatprep.subr.bf16.mxu0 %v4239
      %5612 = vmatpush1.bf16.msra.mxu0 %v4238
      %5613 = vmatprep.subr.bf16.mxu0 %v4243
      %5614 = vmatpush1.bf16.msra.mxu0 %v4242
      %5615 = vmatprep.subr.bf16.mxu0 %v4247
      %5616 = vmatpush1.bf16.msra.mxu0 %v4246
      %5617 = vmatprep.subr.bf16.mxu0 %v4251
      %5618 = vmatpush1.bf16.msra.mxu0 %v4250
      %5619 = vmatprep.subr.bf16.mxu0 %v4255
      %5620 = vmatpush1.bf16.msra.mxu0 %v4254
      %5621 = vmatprep.subr.bf16.mxu0 %v4259
      %5622 = vmatpush1.bf16.msra.mxu0 %v4258
      %5623 = vmatprep.mubr.bf16.mxu0 %v1181
      %5624 = vmatmul.mubr.bf16.gmra.mrb[0].mxu0 %v1179
      %v5625 = vpop.f32.mrb[0].mxu0
      %v5626 = vadd.f32 %v5585, %v5625
      %v5627 = vpop.f32.mrb[0].mxu0
      %v5628 = vadd.f32 %v5587, %v5627
      %v5629 = vpop.f32.mrb[0].mxu0
      %v5630 = vpop.f32.mrb[0].mxu0
      %5631 = vdwg.mxu0
      %5632 = vmatprep.subr.bf16.mxu0 %v4263
      %5633 = vmatpush1.bf16.msra.mxu0 %v4262
      %5634 = vmatprep.subr.bf16.mxu0 %v4267
      %5635 = vmatpush1.bf16.msra.mxu0 %v4266
      %5636 = vmatprep.subr.bf16.mxu0 %v4271
      %5637 = vmatpush1.bf16.msra.mxu0 %v4270
      %5638 = vmatprep.subr.bf16.mxu0 %v4275
      %5639 = vmatpush1.bf16.msra.mxu0 %v4274
      %5640 = vmatprep.subr.bf16.mxu0 %v4279
      %5641 = vmatpush1.bf16.msra.mxu0 %v4278
      %5642 = vmatprep.subr.bf16.mxu0 %v4283
      %5643 = vmatpush1.bf16.msra.mxu0 %v4282
      %5644 = vmatprep.subr.bf16.mxu0 %v4287
      %5645 = vmatpush1.bf16.msra.mxu0 %v4286
      %5646 = vmatprep.subr.bf16.mxu0 %v4291
      %5647 = vmatpush1.bf16.msra.mxu0 %v4290
      %5648 = vmatprep.subr.bf16.mxu0 %v4295
      %5649 = vmatpush1.bf16.msra.mxu0 %v4294
      %5650 = vmatprep.subr.bf16.mxu0 %v4299
      %5651 = vmatpush1.bf16.msra.mxu0 %v4298
      %5652 = vmatprep.subr.bf16.mxu0 %v4303
      %5653 = vmatpush1.bf16.msra.mxu0 %v4302
      %5654 = vmatprep.subr.bf16.mxu0 %v4307
      %5655 = vmatpush1.bf16.msra.mxu0 %v4306
      %5656 = vmatprep.subr.bf16.mxu0 %v4311
      %5657 = vmatpush1.bf16.msra.mxu0 %v4310
      %5658 = vmatprep.subr.bf16.mxu0 %v4315
      %5659 = vmatpush1.bf16.msra.mxu0 %v4314
      %5660 = vmatprep.subr.bf16.mxu0 %v4319
      %5661 = vmatpush1.bf16.msra.mxu0 %v4318
      %5662 = vmatprep.subr.bf16.mxu0 %v4323
      %5663 = vmatpush1.bf16.msra.mxu0 %v4322
      %5664 = vmatprep.mubr.bf16.mxu0 %v1178
      %5665 = vmatmul.mubr.bf16.gmra.mrb[0].mxu0 %v1164
      %v5666 = vpop.f32.mrb[0].mxu0
      %v5667 = vadd.f32 %v5626, %v5666
      %v5668 = vpop.f32.mrb[0].mxu0
      %v5669 = vadd.f32 %v5628, %v5668
      %v5670 = vpop.f32.mrb[0].mxu0
      %v5671 = vpop.f32.mrb[0].mxu0
      %5672 = vdwg.mxu0
      %5673 = vmatprep.subr.bf16.mxu0 %v4327
      %5674 = vmatpush1.bf16.msra.mxu0 %v4326
      %5675 = vmatprep.subr.bf16.mxu0 %v4331
      %5676 = vmatpush1.bf16.msra.mxu0 %v4330
      %5677 = vmatprep.subr.bf16.mxu0 %v4335
      %5678 = vmatpush1.bf16.msra.mxu0 %v4334
      %5679 = vmatprep.subr.bf16.mxu0 %v4339
      %5680 = vmatpush1.bf16.msra.mxu0 %v4338
      %5681 = vmatprep.subr.bf16.mxu0 %v4343
      %5682 = vmatpush1.bf16.msra.mxu0 %v4342
      %5683 = vmatprep.subr.bf16.mxu0 %v4347
      %5684 = vmatpush1.bf16.msra.mxu0 %v4346
      %5685 = vmatprep.subr.bf16.mxu0 %v4351
      %5686 = vmatpush1.bf16.msra.mxu0 %v4350
      %5687 = vmatprep.subr.bf16.mxu0 %v4355
      %5688 = vmatpush1.bf16.msra.mxu0 %v4354
      %5689 = vmatprep.subr.bf16.mxu0 %v4359
      %5690 = vmatpush1.bf16.msra.mxu0 %v4358
      %5691 = vmatprep.subr.bf16.mxu0 %v4363
      %5692 = vmatpush1.bf16.msra.mxu0 %v4362
      %5693 = vmatprep.subr.bf16.mxu0 %v4367
      %5694 = vmatpush1.bf16.msra.mxu0 %v4366
      %5695 = vmatprep.subr.bf16.mxu0 %v4371
      %5696 = vmatpush1.bf16.msra.mxu0 %v4370
      %5697 = vmatprep.subr.bf16.mxu0 %v4375
      %5698 = vmatpush1.bf16.msra.mxu0 %v4374
      %5699 = vmatprep.subr.bf16.mxu0 %v4379
      %5700 = vmatpush1.bf16.msra.mxu0 %v4378
      %5701 = vmatprep.subr.bf16.mxu0 %v4383
      %5702 = vmatpush1.bf16.msra.mxu0 %v4382
      %5703 = vmatprep.subr.bf16.mxu0 %v4387
      %5704 = vmatpush1.bf16.msra.mxu0 %v4386
      %5705 = vmatprep.mubr.bf16.mxu0 %v1182
      %5706 = vmatmul.mubr.bf16.gmra.mrb[0].mxu0 %v1180
      %v5707 = vpop.f32.mrb[0].mxu0
      %v5708 = vadd.f32 %v5667, %v5707
      %v5709 = vpop.f32.mrb[0].mxu0
      %v5710 = vadd.f32 %v5669, %v5709
      %v5711 = vpop.f32.mrb[0].mxu0
      %v5712 = vpop.f32.mrb[0].mxu0
      %5713 = vdwg.mxu0
      %5714 = vmatprep.subr.bf16.mxu0 %v4391
      %5715 = vmatpush1.bf16.msra.mxu0 %v4390
      %5716 = vmatprep.subr.bf16.mxu0 %v4395
      %5717 = vmatpush1.bf16.msra.mxu0 %v4394
      %5718 = vmatprep.subr.bf16.mxu0 %v4399
      %5719 = vmatpush1.bf16.msra.mxu0 %v4398
      %5720 = vmatprep.subr.bf16.mxu0 %v4403
      %5721 = vmatpush1.bf16.msra.mxu0 %v4402
      %5722 = vmatprep.subr.bf16.mxu0 %v4407
      %5723 = vmatpush1.bf16.msra.mxu0 %v4406
      %5724 = vmatprep.subr.bf16.mxu0 %v4411
      %5725 = vmatpush1.bf16.msra.mxu0 %v4410
      %5726 = vmatprep.subr.bf16.mxu0 %v4415
      %5727 = vmatpush1.bf16.msra.mxu0 %v4414
      %5728 = vmatprep.subr.bf16.mxu0 %v4419
      %5729 = vmatpush1.bf16.msra.mxu0 %v4418
      %5730 = vmatprep.subr.bf16.mxu0 0
      %5731 = vmatpush1.bf16.msra.mxu0 0
      %5732 = vmatprep.subr.bf16.mxu0 0
      %5733 = vmatpush1.bf16.msra.mxu0 0
      %5734 = vmatprep.subr.bf16.mxu0 0
      %5735 = vmatpush1.bf16.msra.mxu0 0
      %5736 = vmatprep.subr.bf16.mxu0 0
      %5737 = vmatpush1.bf16.msra.mxu0 0
      %5738 = vmatprep.subr.bf16.mxu0 0
      %5739 = vmatpush1.bf16.msra.mxu0 0
      %5740 = vmatprep.subr.bf16.mxu0 0
      %5741 = vmatpush1.bf16.msra.mxu0 0
      %5742 = vmatprep.subr.bf16.mxu0 0
      %5743 = vmatpush1.bf16.msra.mxu0 0
      %5744 = vmatprep.subr.bf16.mxu0 0
      %5745 = vmatpush1.bf16.msra.mxu0 0
      %5746 = vmatprep.mubr.bf16.mxu0 0
      %5747 = vmatmul.mubr.bf16.gmra.mrb[0].mxu0 %v1196
      %v5748 = vpop.f32.mrb[0].mxu0
      %v5749 = vadd.f32 %v5708, %v5748
      %v5750 = vpop.f32.mrb[0].mxu0
      %v5751 = vadd.f32 %v5710, %v5750
      %v5752 = vpop.f32.mrb[0].mxu0
      %v5753 = vpop.f32.mrb[0].mxu0
      %5754 = vdwg.mxu0
      %5755 = vmatprep.subr.bf16.mxu0 %v3625
      %5756 = vmatpush1.bf16.msra.mxu0 %v3624
      %5757 = vmatprep.subr.bf16.mxu0 %v3629
      %5758 = vmatpush1.bf16.msra.mxu0 %v3628
      %5759 = vmatprep.subr.bf16.mxu0 %v3633
      %5760 = vmatpush1.bf16.msra.mxu0 %v3632
      %5761 = vmatprep.subr.bf16.mxu0 %v3637
      %5762 = vmatpush1.bf16.msra.mxu0 %v3636
      %5763 = vmatprep.subr.bf16.mxu0 %v3641
      %5764 = vmatpush1.bf16.msra.mxu0 %v3640
      %5765 = vmatprep.subr.bf16.mxu0 %v3645
      %5766 = vmatpush1.bf16.msra.mxu0 %v3644
      %5767 = vmatprep.subr.bf16.mxu0 %v3649
      %5768 = vmatpush1.bf16.msra.mxu0 %v3648
      %5769 = vmatprep.subr.bf16.mxu0 %v3653
      %5770 = vmatpush1.bf16.msra.mxu0 %v3652
      %5771 = vmatprep.subr.bf16.mxu0 %v3657
      %5772 = vmatpush1.bf16.msra.mxu0 %v3656
      %5773 = vmatprep.subr.bf16.mxu0 %v3661
      %5774 = vmatpush1.bf16.msra.mxu0 %v3660
      %5775 = vmatprep.subr.bf16.mxu0 %v3665
      %5776 = vmatpush1.bf16.msra.mxu0 %v3664
      %5777 = vmatprep.subr.bf16.mxu0 %v3669
      %5778 = vmatpush1.bf16.msra.mxu0 %v3668
      %5779 = vmatprep.subr.bf16.mxu0 %v3673
      %5780 = vmatpush1.bf16.msra.mxu0 %v3672
      %5781 = vmatprep.subr.bf16.mxu0 %v3677
      %5782 = vmatpush1.bf16.msra.mxu0 %v3676
      %5783 = vmatprep.subr.bf16.mxu0 %v3681
      %5784 = vmatpush1.bf16.msra.mxu0 %v3680
      %5785 = vmatprep.subr.bf16.mxu0 %v3685
      %5786 = vmatpush1.bf16.msra.mxu0 %v3684
      %5787 = vmatprep.mubr.bf16.mxu0 %v1073
      %5788 = vmatmul.mubr.bf16.gmra.mrb[0].mxu0 %v1059
      %v5789 = vpop.f32.mrb[0].mxu0
      %v5790 = vadd.f32 0.0, %v5789
      %v5791 = vpop.f32.mrb[0].mxu0
      %v5792 = vadd.f32 0.0, %v5791
      %v5793 = vpop.f32.mrb[0].mxu0
      %v5794 = vpop.f32.mrb[0].mxu0
      %5795 = vdwg.mxu0
      %5796 = vmatprep.subr.bf16.mxu0 %v3689
      %5797 = vmatpush1.bf16.msra.mxu0 %v3688
      %5798 = vmatprep.subr.bf16.mxu0 %v3693
      %5799 = vmatpush1.bf16.msra.mxu0 %v3692
      %5800 = vmatprep.subr.bf16.mxu0 %v3697
      %5801 = vmatpush1.bf16.msra.mxu0 %v3696
      %5802 = vmatprep.subr.bf16.mxu0 %v3701
      %5803 = vmatpush1.bf16.msra.mxu0 %v3700
      %5804 = vmatprep.subr.bf16.mxu0 %v3705
      %5805 = vmatpush1.bf16.msra.mxu0 %v3704
      %5806 = vmatprep.subr.bf16.mxu0 %v3709
      %5807 = vmatpush1.bf16.msra.mxu0 %v3708
      %5808 = vmatprep.subr.bf16.mxu0 %v3713
      %5809 = vmatpush1.bf16.msra.mxu0 %v3712
      %5810 = vmatprep.subr.bf16.mxu0 %v3717
      %5811 = vmatpush1.bf16.msra.mxu0 %v3716
      %5812 = vmatprep.subr.bf16.mxu0 %v3721
      %5813 = vmatpush1.bf16.msra.mxu0 %v3720
      %5814 = vmatprep.subr.bf16.mxu0 %v3725
      %5815 = vmatpush1.bf16.msra.mxu0 %v3724
      %5816 = vmatprep.subr.bf16.mxu0 %v3729
      %5817 = vmatpush1.bf16.msra.mxu0 %v3728
      %5818 = vmatprep.subr.bf16.mxu0 %v3733
      %5819 = vmatpush1.bf16.msra.mxu0 %v3732
      %5820 = vmatprep.subr.bf16.mxu0 %v3737
      %5821 = vmatpush1.bf16.msra.mxu0 %v3736
      %5822 = vmatprep.subr.bf16.mxu0 %v3741
      %5823 = vmatpush1.bf16.msra.mxu0 %v3740
      %5824 = vmatprep.subr.bf16.mxu0 %v3745
      %5825 = vmatpush1.bf16.msra.mxu0 %v3744
      %5826 = vmatprep.subr.bf16.mxu0 %v3749
      %5827 = vmatpush1.bf16.msra.mxu0 %v3748
      %5828 = vmatprep.mubr.bf16.mxu0 %v1083
      %5829 = vmatmul.mubr.bf16.gmra.mrb[0].mxu0 %v1081
      %v5830 = vpop.f32.mrb[0].mxu0
      %v5831 = vadd.f32 %v5790, %v5830
      %v5832 = vpop.f32.mrb[0].mxu0
      %v5833 = vadd.f32 %v5792, %v5832
      %v5834 = vpop.f32.mrb[0].mxu0
      %v5835 = vpop.f32.mrb[0].mxu0
      %5836 = vdwg.mxu0
      %5837 = vmatprep.subr.bf16.mxu0 %v3753
      %5838 = vmatpush1.bf16.msra.mxu0 %v3752
      %5839 = vmatprep.subr.bf16.mxu0 %v3757
      %5840 = vmatpush1.bf16.msra.mxu0 %v3756
      %5841 = vmatprep.subr.bf16.mxu0 %v3761
      %5842 = vmatpush1.bf16.msra.mxu0 %v3760
      %5843 = vmatprep.subr.bf16.mxu0 %v3765
      %5844 = vmatpush1.bf16.msra.mxu0 %v3764
      %5845 = vmatprep.subr.bf16.mxu0 %v3769
      %5846 = vmatpush1.bf16.msra.mxu0 %v3768
      %5847 = vmatprep.subr.bf16.mxu0 %v3773
      %5848 = vmatpush1.bf16.msra.mxu0 %v3772
      %5849 = vmatprep.subr.bf16.mxu0 %v3777
      %5850 = vmatpush1.bf16.msra.mxu0 %v3776
      %5851 = vmatprep.subr.bf16.mxu0 %v3781
      %5852 = vmatpush1.bf16.msra.mxu0 %v3780
      %5853 = vmatprep.subr.bf16.mxu0 %v3785
      %5854 = vmatpush1.bf16.msra.mxu0 %v3784
      %5855 = vmatprep.subr.bf16.mxu0 %v3789
      %5856 = vmatpush1.bf16.msra.mxu0 %v3788
      %5857 = vmatprep.subr.bf16.mxu0 %v3793
      %5858 = vmatpush1.bf16.msra.mxu0 %v3792
      %5859 = vmatprep.subr.bf16.mxu0 %v3797
      %5860 = vmatpush1.bf16.msra.mxu0 %v3796
      %5861 = vmatprep.subr.bf16.mxu0 %v3801
      %5862 = vmatpush1.bf16.msra.mxu0 %v3800
      %5863 = vmatprep.subr.bf16.mxu0 %v3805
      %5864 = vmatpush1.bf16.msra.mxu0 %v3804
      %5865 = vmatprep.subr.bf16.mxu0 %v3809
      %5866 = vmatpush1.bf16.msra.mxu0 %v3808
      %5867 = vmatprep.subr.bf16.mxu0 %v3813
      %5868 = vmatpush1.bf16.msra.mxu0 %v3812
      %5869 = vmatprep.mubr.bf16.mxu0 %v1080
      %5870 = vmatmul.mubr.bf16.gmra.mrb[0].mxu0 %v1066
      %v5871 = vpop.f32.mrb[0].mxu0
      %v5872 = vadd.f32 %v5831, %v5871
      %v5873 = vpop.f32.mrb[0].mxu0
      %v5874 = vadd.f32 %v5833, %v5873
      %v5875 = vpop.f32.mrb[0].mxu0
      %v5876 = vpop.f32.mrb[0].mxu0
      %5877 = vdwg.mxu0
      %5878 = vmatprep.subr.bf16.mxu0 %v3817
      %5879 = vmatpush1.bf16.msra.mxu0 %v3816
      %5880 = vmatprep.subr.bf16.mxu0 %v3821
      %5881 = vmatpush1.bf16.msra.mxu0 %v3820
      %5882 = vmatprep.subr.bf16.mxu0 %v3825
      %5883 = vmatpush1.bf16.msra.mxu0 %v3824
      %5884 = vmatprep.subr.bf16.mxu0 %v3829
      %5885 = vmatpush1.bf16.msra.mxu0 %v3828
      %5886 = vmatprep.subr.bf16.mxu0 %v3833
      %5887 = vmatpush1.bf16.msra.mxu0 %v3832
      %5888 = vmatprep.subr.bf16.mxu0 %v3837
      %5889 = vmatpush1.bf16.msra.mxu0 %v3836
      %5890 = vmatprep.subr.bf16.mxu0 %v3841
      %5891 = vmatpush1.bf16.msra.mxu0 %v3840
      %5892 = vmatprep.subr.bf16.mxu0 %v3845
      %5893 = vmatpush1.bf16.msra.mxu0 %v3844
      %5894 = vmatprep.subr.bf16.mxu0 %v3849
      %5895 = vmatpush1.bf16.msra.mxu0 %v3848
      %5896 = vmatprep.subr.bf16.mxu0 %v3853
      %5897 = vmatpush1.bf16.msra.mxu0 %v3852
      %5898 = vmatprep.subr.bf16.mxu0 %v3857
      %5899 = vmatpush1.bf16.msra.mxu0 %v3856
      %5900 = vmatprep.subr.bf16.mxu0 %v3861
      %5901 = vmatpush1.bf16.msra.mxu0 %v3860
      %5902 = vmatprep.subr.bf16.mxu0 %v3865
      %5903 = vmatpush1.bf16.msra.mxu0 %v3864
      %5904 = vmatprep.subr.bf16.mxu0 %v3869
      %5905 = vmatpush1.bf16.msra.mxu0 %v3868
      %5906 = vmatprep.subr.bf16.mxu0 %v3873
      %5907 = vmatpush1.bf16.msra.mxu0 %v3872
      %5908 = vmatprep.subr.bf16.mxu0 %v3877
      %5909 = vmatpush1.bf16.msra.mxu0 %v3876
      %5910 = vmatprep.mubr.bf16.mxu0 %v1084
      %5911 = vmatmul.mubr.bf16.gmra.mrb[0].mxu0 %v1082
      %v5912 = vpop.f32.mrb[0].mxu0
      %v5913 = vadd.f32 %v5872, %v5912
      %v5914 = vpop.f32.mrb[0].mxu0
      %v5915 = vadd.f32 %v5874, %v5914
      %v5916 = vpop.f32.mrb[0].mxu0
      %v5917 = vpop.f32.mrb[0].mxu0
      %5918 = vdwg.mxu0
      %5919 = vmatprep.subr.bf16.mxu0 %v3881
      %5920 = vmatpush1.bf16.msra.mxu0 %v3880
      %5921 = vmatprep.subr.bf16.mxu0 %v3885
      %5922 = vmatpush1.bf16.msra.mxu0 %v3884
      %5923 = vmatprep.subr.bf16.mxu0 %v3889
      %5924 = vmatpush1.bf16.msra.mxu0 %v3888
      %5925 = vmatprep.subr.bf16.mxu0 %v3893
      %5926 = vmatpush1.bf16.msra.mxu0 %v3892
      %5927 = vmatprep.subr.bf16.mxu0 %v3897
      %5928 = vmatpush1.bf16.msra.mxu0 %v3896
      %5929 = vmatprep.subr.bf16.mxu0 %v3901
      %5930 = vmatpush1.bf16.msra.mxu0 %v3900
      %5931 = vmatprep.subr.bf16.mxu0 %v3905
      %5932 = vmatpush1.bf16.msra.mxu0 %v3904
      %5933 = vmatprep.subr.bf16.mxu0 %v3909
      %5934 = vmatpush1.bf16.msra.mxu0 %v3908
      %5935 = vmatprep.subr.bf16.mxu0 %v3913
      %5936 = vmatpush1.bf16.msra.mxu0 %v3912
      %5937 = vmatprep.subr.bf16.mxu0 %v3917
      %5938 = vmatpush1.bf16.msra.mxu0 %v3916
      %5939 = vmatprep.subr.bf16.mxu0 %v3921
      %5940 = vmatpush1.bf16.msra.mxu0 %v3920
      %5941 = vmatprep.subr.bf16.mxu0 %v3925
      %5942 = vmatpush1.bf16.msra.mxu0 %v3924
      %5943 = vmatprep.subr.bf16.mxu0 %v3929
      %5944 = vmatpush1.bf16.msra.mxu0 %v3928
      %5945 = vmatprep.subr.bf16.mxu0 %v3933
      %5946 = vmatpush1.bf16.msra.mxu0 %v3932
      %5947 = vmatprep.subr.bf16.mxu0 %v3937
      %5948 = vmatpush1.bf16.msra.mxu0 %v3936
      %5949 = vmatprep.subr.bf16.mxu0 %v3941
      %5950 = vmatpush1.bf16.msra.mxu0 %v3940
      %5951 = vmatprep.mubr.bf16.mxu0 %v1122
      %5952 = vmatmul.mubr.bf16.gmra.mrb[0].mxu0 %v1108
      %v5953 = vpop.f32.mrb[0].mxu0
      %v5954 = vadd.f32 %v5913, %v5953
      %v5955 = vpop.f32.mrb[0].mxu0
      %v5956 = vadd.f32 %v5915, %v5955
      %v5957 = vpop.f32.mrb[0].mxu0
      %v5958 = vpop.f32.mrb[0].mxu0
      %5959 = vdwg.mxu0
      %5960 = vmatprep.subr.bf16.mxu0 %v3945
      %5961 = vmatpush1.bf16.msra.mxu0 %v3944
      %5962 = vmatprep.subr.bf16.mxu0 %v3949
      %5963 = vmatpush1.bf16.msra.mxu0 %v3948
      %5964 = vmatprep.subr.bf16.mxu0 %v3953
      %5965 = vmatpush1.bf16.msra.mxu0 %v3952
      %5966 = vmatprep.subr.bf16.mxu0 %v3957
      %5967 = vmatpush1.bf16.msra.mxu0 %v3956
      %5968 = vmatprep.subr.bf16.mxu0 %v3961
      %5969 = vmatpush1.bf16.msra.mxu0 %v3960
      %5970 = vmatprep.subr.bf16.mxu0 %v3965
      %5971 = vmatpush1.bf16.msra.mxu0 %v3964
      %5972 = vmatprep.subr.bf16.mxu0 %v3969
      %5973 = vmatpush1.bf16.msra.mxu0 %v3968
      %5974 = vmatprep.subr.bf16.mxu0 %v3973
      %5975 = vmatpush1.bf16.msra.mxu0 %v3972
      %5976 = vmatprep.subr.bf16.mxu0 %v3977
      %5977 = vmatpush1.bf16.msra.mxu0 %v3976
      %5978 = vmatprep.subr.bf16.mxu0 %v3981
      %5979 = vmatpush1.bf16.msra.mxu0 %v3980
      %5980 = vmatprep.subr.bf16.mxu0 %v3985
      %5981 = vmatpush1.bf16.msra.mxu0 %v3984
      %5982 = vmatprep.subr.bf16.mxu0 %v3989
      %5983 = vmatpush1.bf16.msra.mxu0 %v3988
      %5984 = vmatprep.subr.bf16.mxu0 %v3993
      %5985 = vmatpush1.bf16.msra.mxu0 %v3992
      %5986 = vmatprep.subr.bf16.mxu0 %v3997
      %5987 = vmatpush1.bf16.msra.mxu0 %v3996
      %5988 = vmatprep.subr.bf16.mxu0 %v4001
      %5989 = vmatpush1.bf16.msra.mxu0 %v4000
      %5990 = vmatprep.subr.bf16.mxu0 %v4005
      %5991 = vmatpush1.bf16.msra.mxu0 %v4004
      %5992 = vmatprep.mubr.bf16.mxu0 %v1132
      %5993 = vmatmul.mubr.bf16.gmra.mrb[0].mxu0 %v1130
      %v5994 = vpop.f32.mrb[0].mxu0
      %v5995 = vadd.f32 %v5954, %v5994
      %v5996 = vpop.f32.mrb[0].mxu0
      %v5997 = vadd.f32 %v5956, %v5996
      %v5998 = vpop.f32.mrb[0].mxu0
      %v5999 = vpop.f32.mrb[0].mxu0
      %6000 = vdwg.mxu0
      %6001 = vmatprep.subr.bf16.mxu0 %v4009
      %6002 = vmatpush1.bf16.msra.mxu0 %v4008
      %6003 = vmatprep.subr.bf16.mxu0 %v4013
      %6004 = vmatpush1.bf16.msra.mxu0 %v4012
      %6005 = vmatprep.subr.bf16.mxu0 %v4017
      %6006 = vmatpush1.bf16.msra.mxu0 %v4016
      %6007 = vmatprep.subr.bf16.mxu0 %v4021
      %6008 = vmatpush1.bf16.msra.mxu0 %v4020
      %6009 = vmatprep.subr.bf16.mxu0 %v4025
      %6010 = vmatpush1.bf16.msra.mxu0 %v4024
      %6011 = vmatprep.subr.bf16.mxu0 %v4029
      %6012 = vmatpush1.bf16.msra.mxu0 %v4028
      %6013 = vmatprep.subr.bf16.mxu0 %v4033
      %6014 = vmatpush1.bf16.msra.mxu0 %v4032
      %6015 = vmatprep.subr.bf16.mxu0 %v4037
      %6016 = vmatpush1.bf16.msra.mxu0 %v4036
      %6017 = vmatprep.subr.bf16.mxu0 %v4041
      %6018 = vmatpush1.bf16.msra.mxu0 %v4040
      %6019 = vmatprep.subr.bf16.mxu0 %v4045
      %6020 = vmatpush1.bf16.msra.mxu0 %v4044
      %6021 = vmatprep.subr.bf16.mxu0 %v4049
      %6022 = vmatpush1.bf16.msra.mxu0 %v4048
      %6023 = vmatprep.subr.bf16.mxu0 %v4053
      %6024 = vmatpush1.bf16.msra.mxu0 %v4052
      %6025 = vmatprep.subr.bf16.mxu0 %v4057
      %6026 = vmatpush1.bf16.msra.mxu0 %v4056
      %6027 = vmatprep.subr.bf16.mxu0 %v4061
      %6028 = vmatpush1.bf16.msra.mxu0 %v4060
      %6029 = vmatprep.subr.bf16.mxu0 %v4065
      %6030 = vmatpush1.bf16.msra.mxu0 %v4064
      %6031 = vmatprep.subr.bf16.mxu0 %v4069
      %6032 = vmatpush1.bf16.msra.mxu0 %v4068
      %6033 = vmatprep.mubr.bf16.mxu0 %v1129
      %6034 = vmatmul.mubr.bf16.gmra.mrb[0].mxu0 %v1115
      %v6035 = vpop.f32.mrb[0].mxu0
      %v6036 = vadd.f32 %v5995, %v6035
      %v6037 = vpop.f32.mrb[0].mxu0
      %v6038 = vadd.f32 %v5997, %v6037
      %v6039 = vpop.f32.mrb[0].mxu0
      %v6040 = vpop.f32.mrb[0].mxu0
      %6041 = vdwg.mxu0
      %6042 = vmatprep.subr.bf16.mxu0 %v4073
      %6043 = vmatpush1.bf16.msra.mxu0 %v4072
      %6044 = vmatprep.subr.bf16.mxu0 %v4077
      %6045 = vmatpush1.bf16.msra.mxu0 %v4076
      %6046 = vmatprep.subr.bf16.mxu0 %v4081
      %6047 = vmatpush1.bf16.msra.mxu0 %v4080
      %6048 = vmatprep.subr.bf16.mxu0 %v4085
      %6049 = vmatpush1.bf16.msra.mxu0 %v4084
      %6050 = vmatprep.subr.bf16.mxu0 %v4089
      %6051 = vmatpush1.bf16.msra.mxu0 %v4088
      %6052 = vmatprep.subr.bf16.mxu0 %v4093
      %6053 = vmatpush1.bf16.msra.mxu0 %v4092
      %6054 = vmatprep.subr.bf16.mxu0 %v4097
      %6055 = vmatpush1.bf16.msra.mxu0 %v4096
      %6056 = vmatprep.subr.bf16.mxu0 %v4101
      %6057 = vmatpush1.bf16.msra.mxu0 %v4100
      %6058 = vmatprep.subr.bf16.mxu0 %v4105
      %6059 = vmatpush1.bf16.msra.mxu0 %v4104
      %6060 = vmatprep.subr.bf16.mxu0 %v4109
      %6061 = vmatpush1.bf16.msra.mxu0 %v4108
      %6062 = vmatprep.subr.bf16.mxu0 %v4113
      %6063 = vmatpush1.bf16.msra.mxu0 %v4112
      %6064 = vmatprep.subr.bf16.mxu0 %v4117
      %6065 = vmatpush1.bf16.msra.mxu0 %v4116
      %6066 = vmatprep.subr.bf16.mxu0 %v4121
      %6067 = vmatpush1.bf16.msra.mxu0 %v4120
      %6068 = vmatprep.subr.bf16.mxu0 %v4125
      %6069 = vmatpush1.bf16.msra.mxu0 %v4124
      %6070 = vmatprep.subr.bf16.mxu0 %v4129
      %6071 = vmatpush1.bf16.msra.mxu0 %v4128
      %6072 = vmatprep.subr.bf16.mxu0 %v4133
      %6073 = vmatpush1.bf16.msra.mxu0 %v4132
      %6074 = vmatprep.mubr.bf16.mxu0 %v1133
      %6075 = vmatmul.mubr.bf16.gmra.mrb[0].mxu0 %v1131
      %v6076 = vpop.f32.mrb[0].mxu0
      %v6077 = vadd.f32 %v6036, %v6076
      %v6078 = vpop.f32.mrb[0].mxu0
      %v6079 = vadd.f32 %v6038, %v6078
      %v6080 = vpop.f32.mrb[0].mxu0
      %v6081 = vpop.f32.mrb[0].mxu0
      %6082 = vdwg.mxu0
      %6083 = vmatprep.subr.bf16.mxu0 %v4137
      %6084 = vmatpush1.bf16.msra.mxu0 %v4136
      %6085 = vmatprep.subr.bf16.mxu0 %v4141
      %6086 = vmatpush1.bf16.msra.mxu0 %v4140
      %6087 = vmatprep.subr.bf16.mxu0 %v4145
      %6088 = vmatpush1.bf16.msra.mxu0 %v4144
      %6089 = vmatprep.subr.bf16.mxu0 %v4149
      %6090 = vmatpush1.bf16.msra.mxu0 %v4148
      %6091 = vmatprep.subr.bf16.mxu0 %v4153
      %6092 = vmatpush1.bf16.msra.mxu0 %v4152
      %6093 = vmatprep.subr.bf16.mxu0 %v4157
      %6094 = vmatpush1.bf16.msra.mxu0 %v4156
      %6095 = vmatprep.subr.bf16.mxu0 %v4161
      %6096 = vmatpush1.bf16.msra.mxu0 %v4160
      %6097 = vmatprep.subr.bf16.mxu0 %v4165
      %6098 = vmatpush1.bf16.msra.mxu0 %v4164
      %6099 = vmatprep.subr.bf16.mxu0 %v4169
      %6100 = vmatpush1.bf16.msra.mxu0 %v4168
      %6101 = vmatprep.subr.bf16.mxu0 %v4173
      %6102 = vmatpush1.bf16.msra.mxu0 %v4172
      %6103 = vmatprep.subr.bf16.mxu0 %v4177
      %6104 = vmatpush1.bf16.msra.mxu0 %v4176
      %6105 = vmatprep.subr.bf16.mxu0 %v4181
      %6106 = vmatpush1.bf16.msra.mxu0 %v4180
      %6107 = vmatprep.subr.bf16.mxu0 %v4185
      %6108 = vmatpush1.bf16.msra.mxu0 %v4184
      %6109 = vmatprep.subr.bf16.mxu0 %v4189
      %6110 = vmatpush1.bf16.msra.mxu0 %v4188
      %6111 = vmatprep.subr.bf16.mxu0 %v4193
      %6112 = vmatpush1.bf16.msra.mxu0 %v4192
      %6113 = vmatprep.subr.bf16.mxu0 %v4197
      %6114 = vmatpush1.bf16.msra.mxu0 %v4196
      %6115 = vmatprep.mubr.bf16.mxu0 %v1171
      %6116 = vmatmul.mubr.bf16.gmra.mrb[0].mxu0 %v1157
      %v6117 = vpop.f32.mrb[0].mxu0
      %v6118 = vadd.f32 %v6077, %v6117
      %v6119 = vpop.f32.mrb[0].mxu0
      %v6120 = vadd.f32 %v6079, %v6119
      %v6121 = vpop.f32.mrb[0].mxu0
      %v6122 = vpop.f32.mrb[0].mxu0
      %6123 = vdwg.mxu0
      %6124 = vmatprep.subr.bf16.mxu0 %v4201
      %6125 = vmatpush1.bf16.msra.mxu0 %v4200
      %6126 = vmatprep.subr.bf16.mxu0 %v4205
      %6127 = vmatpush1.bf16.msra.mxu0 %v4204
      %6128 = vmatprep.subr.bf16.mxu0 %v4209
      %6129 = vmatpush1.bf16.msra.mxu0 %v4208
      %6130 = vmatprep.subr.bf16.mxu0 %v4213
      %6131 = vmatpush1.bf16.msra.mxu0 %v4212
      %6132 = vmatprep.subr.bf16.mxu0 %v4217
      %6133 = vmatpush1.bf16.msra.mxu0 %v4216
      %6134 = vmatprep.subr.bf16.mxu0 %v4221
      %6135 = vmatpush1.bf16.msra.mxu0 %v4220
      %6136 = vmatprep.subr.bf16.mxu0 %v4225
      %6137 = vmatpush1.bf16.msra.mxu0 %v4224
      %6138 = vmatprep.subr.bf16.mxu0 %v4229
      %6139 = vmatpush1.bf16.msra.mxu0 %v4228
      %6140 = vmatprep.subr.bf16.mxu0 %v4233
      %6141 = vmatpush1.bf16.msra.mxu0 %v4232
      %6142 = vmatprep.subr.bf16.mxu0 %v4237
      %6143 = vmatpush1.bf16.msra.mxu0 %v4236
      %6144 = vmatprep.subr.bf16.mxu0 %v4241
      %6145 = vmatpush1.bf16.msra.mxu0 %v4240
      %6146 = vmatprep.subr.bf16.mxu0 %v4245
      %6147 = vmatpush1.bf16.msra.mxu0 %v4244
      %6148 = vmatprep.subr.bf16.mxu0 %v4249
      %6149 = vmatpush1.bf16.msra.mxu0 %v4248
      %6150 = vmatprep.subr.bf16.mxu0 %v4253
      %6151 = vmatpush1.bf16.msra.mxu0 %v4252
      %6152 = vmatprep.subr.bf16.mxu0 %v4257
      %6153 = vmatpush1.bf16.msra.mxu0 %v4256
      %6154 = vmatprep.subr.bf16.mxu0 %v4261
      %6155 = vmatpush1.bf16.msra.mxu0 %v4260
      %6156 = vmatprep.mubr.bf16.mxu0 %v1181
      %6157 = vmatmul.mubr.bf16.gmra.mrb[0].mxu0 %v1179
      %v6158 = vpop.f32.mrb[0].mxu0
      %v6159 = vadd.f32 %v6118, %v6158
      %v6160 = vpop.f32.mrb[0].mxu0
      %v6161 = vadd.f32 %v6120, %v6160
      %v6162 = vpop.f32.mrb[0].mxu0
      %v6163 = vpop.f32.mrb[0].mxu0
      %6164 = vdwg.mxu0
      %6165 = vmatprep.subr.bf16.mxu0 %v4265
      %6166 = vmatpush1.bf16.msra.mxu0 %v4264
      %6167 = vmatprep.subr.bf16.mxu0 %v4269
      %6168 = vmatpush1.bf16.msra.mxu0 %v4268
      %6169 = vmatprep.subr.bf16.mxu0 %v4273
      %6170 = vmatpush1.bf16.msra.mxu0 %v4272
      %6171 = vmatprep.subr.bf16.mxu0 %v4277
      %6172 = vmatpush1.bf16.msra.mxu0 %v4276
      %6173 = vmatprep.subr.bf16.mxu0 %v4281
      %6174 = vmatpush1.bf16.msra.mxu0 %v4280
      %6175 = vmatprep.subr.bf16.mxu0 %v4285
      %6176 = vmatpush1.bf16.msra.mxu0 %v4284
      %6177 = vmatprep.subr.bf16.mxu0 %v4289
      %6178 = vmatpush1.bf16.msra.mxu0 %v4288
      %6179 = vmatprep.subr.bf16.mxu0 %v4293
      %6180 = vmatpush1.bf16.msra.mxu0 %v4292
      %6181 = vmatprep.subr.bf16.mxu0 %v4297
      %6182 = vmatpush1.bf16.msra.mxu0 %v4296
      %6183 = vmatprep.subr.bf16.mxu0 %v4301
      %6184 = vmatpush1.bf16.msra.mxu0 %v4300
      %6185 = vmatprep.subr.bf16.mxu0 %v4305
      %6186 = vmatpush1.bf16.msra.mxu0 %v4304
      %6187 = vmatprep.subr.bf16.mxu0 %v4309
      %6188 = vmatpush1.bf16.msra.mxu0 %v4308
      %6189 = vmatprep.subr.bf16.mxu0 %v4313
      %6190 = vmatpush1.bf16.msra.mxu0 %v4312
      %6191 = vmatprep.subr.bf16.mxu0 %v4317
      %6192 = vmatpush1.bf16.msra.mxu0 %v4316
      %6193 = vmatprep.subr.bf16.mxu0 %v4321
      %6194 = vmatpush1.bf16.msra.mxu0 %v4320
      %6195 = vmatprep.subr.bf16.mxu0 %v4325
      %6196 = vmatpush1.bf16.msra.mxu0 %v4324
      %6197 = vmatprep.mubr.bf16.mxu0 %v1178
      %6198 = vmatmul.mubr.bf16.gmra.mrb[0].mxu0 %v1164
      %v6199 = vpop.f32.mrb[0].mxu0
      %v6200 = vadd.f32 %v6159, %v6199
      %v6201 = vpop.f32.mrb[0].mxu0
      %v6202 = vadd.f32 %v6161, %v6201
      %v6203 = vpop.f32.mrb[0].mxu0
      %v6204 = vpop.f32.mrb[0].mxu0
      %6205 = vdwg.mxu0
      %6206 = vmatprep.subr.bf16.mxu0 %v4329
      %6207 = vmatpush1.bf16.msra.mxu0 %v4328
      %6208 = vmatprep.subr.bf16.mxu0 %v4333
      %6209 = vmatpush1.bf16.msra.mxu0 %v4332
      %6210 = vmatprep.subr.bf16.mxu0 %v4337
      %6211 = vmatpush1.bf16.msra.mxu0 %v4336
      %6212 = vmatprep.subr.bf16.mxu0 %v4341
      %6213 = vmatpush1.bf16.msra.mxu0 %v4340
      %6214 = vmatprep.subr.bf16.mxu0 %v4345
      %6215 = vmatpush1.bf16.msra.mxu0 %v4344
      %6216 = vmatprep.subr.bf16.mxu0 %v4349
      %6217 = vmatpush1.bf16.msra.mxu0 %v4348
      %6218 = vmatprep.subr.bf16.mxu0 %v4353
      %6219 = vmatpush1.bf16.msra.mxu0 %v4352
      %6220 = vmatprep.subr.bf16.mxu0 %v4357
      %6221 = vmatpush1.bf16.msra.mxu0 %v4356
      %6222 = vmatprep.subr.bf16.mxu0 %v4361
      %6223 = vmatpush1.bf16.msra.mxu0 %v4360
      %6224 = vmatprep.subr.bf16.mxu0 %v4365
      %6225 = vmatpush1.bf16.msra.mxu0 %v4364
      %6226 = vmatprep.subr.bf16.mxu0 %v4369
      %6227 = vmatpush1.bf16.msra.mxu0 %v4368
      %6228 = vmatprep.subr.bf16.mxu0 %v4373
      %6229 = vmatpush1.bf16.msra.mxu0 %v4372
      %6230 = vmatprep.subr.bf16.mxu0 %v4377
      %6231 = vmatpush1.bf16.msra.mxu0 %v4376
      %6232 = vmatprep.subr.bf16.mxu0 %v4381
      %6233 = vmatpush1.bf16.msra.mxu0 %v4380
      %6234 = vmatprep.subr.bf16.mxu0 %v4385
      %6235 = vmatpush1.bf16.msra.mxu0 %v4384
      %6236 = vmatprep.subr.bf16.mxu0 %v4389
      %6237 = vmatpush1.bf16.msra.mxu0 %v4388
      %6238 = vmatprep.mubr.bf16.mxu0 %v1182
      %6239 = vmatmul.mubr.bf16.gmra.mrb[0].mxu0 %v1180
      %v6240 = vpop.f32.mrb[0].mxu0
      %v6241 = vadd.f32 %v6200, %v6240
      %v6242 = vpop.f32.mrb[0].mxu0
      %v6243 = vadd.f32 %v6202, %v6242
      %v6244 = vpop.f32.mrb[0].mxu0
      %v6245 = vpop.f32.mrb[0].mxu0
      %6246 = vdwg.mxu0
      %6247 = vmatprep.subr.bf16.mxu0 %v4393
      %6248 = vmatpush1.bf16.msra.mxu0 %v4392
      %6249 = vmatprep.subr.bf16.mxu0 %v4397
      %6250 = vmatpush1.bf16.msra.mxu0 %v4396
      %6251 = vmatprep.subr.bf16.mxu0 %v4401
      %6252 = vmatpush1.bf16.msra.mxu0 %v4400
      %6253 = vmatprep.subr.bf16.mxu0 %v4405
      %6254 = vmatpush1.bf16.msra.mxu0 %v4404
      %6255 = vmatprep.subr.bf16.mxu0 %v4409
      %6256 = vmatpush1.bf16.msra.mxu0 %v4408
      %6257 = vmatprep.subr.bf16.mxu0 %v4413
      %6258 = vmatpush1.bf16.msra.mxu0 %v4412
      %6259 = vmatprep.subr.bf16.mxu0 %v4417
      %6260 = vmatpush1.bf16.msra.mxu0 %v4416
      %6261 = vmatprep.subr.bf16.mxu0 %v4421
      %6262 = vmatpush1.bf16.msra.mxu0 %v4420
      %6263 = vmatprep.subr.bf16.mxu0 0
      %6264 = vmatpush1.bf16.msra.mxu0 0
      %6265 = vmatprep.subr.bf16.mxu0 0
      %6266 = vmatpush1.bf16.msra.mxu0 0
      %6267 = vmatprep.subr.bf16.mxu0 0
      %6268 = vmatpush1.bf16.msra.mxu0 0
      %6269 = vmatprep.subr.bf16.mxu0 0
      %6270 = vmatpush1.bf16.msra.mxu0 0
      %6271 = vmatprep.subr.bf16.mxu0 0
      %6272 = vmatpush1.bf16.msra.mxu0 0
      %6273 = vmatprep.subr.bf16.mxu0 0
      %6274 = vmatpush1.bf16.msra.mxu0 0
      %6275 = vmatprep.subr.bf16.mxu0 0
      %6276 = vmatpush1.bf16.msra.mxu0 0
      %6277 = vmatprep.subr.bf16.mxu0 0
      %6278 = vmatpush1.bf16.msra.mxu0 0
      %6279 = vmatprep.mubr.bf16.mxu0 0
      %6280 = vmatmul.mubr.bf16.gmra.mrb[0].mxu0 %v1196
      %v6281 = vpop.f32.mrb[0].mxu0
      %v6282 = vadd.f32 %v6241, %v6281
      %v6283 = vpop.f32.mrb[0].mxu0
      %v6284 = vadd.f32 %v6243, %v6283
      %v6285 = vpop.f32.mrb[0].mxu0
      %v6286 = vpop.f32.mrb[0].mxu0
      %6287 = vdwg.mxu0
      %v6292 = vcombine.low %v5749, %v5751
      %v6293 = vcombine.low %v6282, %v6284
      %v6295 = vunpack.c.l.s4 1983009808
      %v6296 = vunpack.c.0.s8 %v6295
      %v6297 = vlaneseq
      %v6298 = vshrl.u32 %v6297, 7
      %v6299 = vsub.s32 %v6296, %v6298
      %v6300 = vrot.slane %v6292, %v6299
      %v6302 = vunpack.c.l.s4 1983009808
      %v6303 = vunpack.c.0.s8 %v6302
      %v6304 = vlaneseq
      %v6305 = vshrl.u32 %v6304, 7
      %v6306 = vsub.s32 %v6303, %v6305
      %v6307 = vrot.slane %v6293, %v6306
      %v6308 = vcombine.low %v6300, %v6307
      %v6310 = vadd.f32 %v231, %v6308
      %6311 = vst [vmem:[#allocation2] sm:$0xff] %v6310
      %p6312 = scmp.eq.s32.totalorder %s19, 7
      // Predicated region
      $region37: #{net_forward.6} parent=31 // pred_check
        %p6313 = pneg %p6312
      $region38: #{net_forward.6} parent=31 // pred_check_branch
        %6315 = sbr.rel (%p6313) target = $region40
      $region39: #{net_forward.6} parent=31 // pred_region
        %v6316 = vld [vmem:[#allocation2] sm:$0xff]
        %v6317 = vld [vmem:[%s2] sm:$0xf]
        %v6319 = vlaneseq
        %v6320 = vshrl.u32 %v6319, 7
        %v6321 = vsub.s32 0, %v6320
        %v6322 = vrot.slane %v6317, %v6321
        %v6323 = vlaneseq
        %v6324 = vshrl.u32 %v6323, 7
        %v6325 = vsub.s32 1, %v6324
        %v6326 = vrot.slane %v6317, %v6325
        %v6327 = vlaneseq
        %v6328 = vshrl.u32 %v6327, 7
        %v6329 = vsub.s32 2, %v6328
        %v6330 = vrot.slane %v6317, %v6329
        %v6331 = vlaneseq
        %v6332 = vshrl.u32 %v6331, 7
        %v6333 = vsub.s32 3, %v6332
        %v6334 = vrot.slane %v6317, %v6333
        %v6335 = vcombine.low %v6322, %v6326
        %v6336 = vcombine.low %v6330, %v6334
        %v6338 = vunpack.c.l.s4 1983009808
        %v6339 = vunpack.c.0.s8 %v6338
        %v6340 = vlaneseq
        %v6341 = vshrl.u32 %v6340, 7
        %v6342 = vsub.s32 %v6339, %v6341
        %v6343 = vrot.slane %v6335, %v6342
        %v6345 = vunpack.c.l.s4 1983009808
        %v6346 = vunpack.c.0.s8 %v6345
        %v6347 = vlaneseq
        %v6348 = vshrl.u32 %v6347, 7
        %v6349 = vsub.s32 %v6346, %v6348
        %v6350 = vrot.slane %v6336, %v6349
        %v6351 = vcombine.low %v6343, %v6350
        %v6353 = vadd.f32 %v6316, %v6351
        %v6354 = vmax.f32 %v6353, 0.0
        %6355 = vst [vmem:[%s220] sm:$0xff] %v6354
      $region40: #{net_forward.6} parent=31 // pred_fallthru
        _
      %p6356 = scmp.lt.s32.totalorder %s18, 0
      %s6357 = scalar_select %p6356, %s18, 0
      %s6358 = smul.addr %s6357, 4
      %s6359 = smul.addr %s6358, 2
      %s6360 = scalar_lea.vmem %s3, %s6359
      // Predicated region
      $region41: #{net_forward.6} parent=31 // pred_check
        %p6361 = pneg %p119
      $region42: #{net_forward.6} parent=31 // pred_check_branch
        %6363 = sbr.rel (%p6361) target = $region44
      $region43: #{net_forward.6} parent=31 // pred_region
        _
      $region44: #{net_forward.6} parent=31 // pred_fallthru
        _
      // Predicated region
      $region45: #{net_forward.6} parent=31 // pred_check
        %p6364 = pneg %p119
      $region46: #{net_forward.6} parent=31 // pred_check_branch
        %6366 = sbr.rel (%p6364) target = $region48
      $region47: #{net_forward.6} parent=31 // pred_region
        %p6367 = scmp.lt.s32.totalorder %s18, 0
        %s6368 = scalar_select %p6367, %s18, 0
        %s6369 = smul.addr %s6368, 4
        %s6370 = smul.addr %s6369, 2
        %s6371 = scalar_lea.vmem %s3, %s6370
      $region48: #{net_forward.6} parent=31 // pred_fallthru
        _
    $region32: #{net_forward.6} parent=5 // pred_fallthru
      _
    %p6372 = scmp.le.s32.totalorder 2, %s9
    // Predicated region
    $region49: #{net_forward.6} parent=5 // pred_check
      %p6373 = pneg %p6372
    $region50: #{net_forward.6} parent=5 // pred_check_branch
      %6375 = sbr.rel (%p6373) target = $region52
    $region51: #{net_forward.6} parent=5 // pred_region
      %s6376 = ssub.s32 %s9, 2
    $region52: #{net_forward.6} parent=5 // pred_fallthru
      _
  $region6: #{net_forward.6} parent=0 // loop_footer
    %s13 = sadd.s32 1, %s9
  $region7: #{net_forward.6} parent=0 // loop_footer_branch
    %8 = sbr.rel target = $region3
  $region8: #{net_forward.6} parent=0 // loop_exit
    _

</llo_original>
